<compile_context>
chip_gen: v7x
topology: tpu7x:2x2x1
jax: 0.10.0
libtpu: 0.0.40
codegen_flags: <defaults>
</compile_context>

<pallas_src>
import math

import jax
import jax.numpy as jnp
import numpy as np
from jax.experimental import pallas as pl
from jax.experimental.pallas import tpu as pltpu


# ---------------------------------------------------------------------------
# Kernel
# ---------------------------------------------------------------------------
def _gcn_kernel(w1_ref, alpha_ref, x_ref, w2t_ref, o_ref):
    """Fused GCN forward on one (1, N, TH, C) tile.

    w1_ref   : (N*N,) f32, SMEM  -- conv1 1x1 weight, row-major (out, in)
    alpha_ref: (N,)   f32, SMEM  -- PReLU slope per node
    x_ref    : (1, N, TH, C) f32, VMEM -- input tile
    w2t_ref  : (C, C) f32, VMEM  -- Linear weight, pre-transposed to (in, out)
    o_ref    : (1, N, TH, C) f32, VMEM -- output tile
    """
    n = x_ref.shape[1]
    w2t = w2t_ref[...]
    # TODO(synk): for very large num_node the unrolled VPU node-mixing loop
    # below should become an MXU matmul over a node-minor layout.
    for o in range(n):
        # conv1 (1x1 node mixing) + residual: unrolled scalar*tile FMAs (VPU).
        acc = x_ref[0, o, :, :]
        for i in range(n):
            acc = acc + w1_ref[o * n + i] * x_ref[0, i, :, :]
        # Per-node PReLU.
        a = alpha_ref[o]
        z = jnp.where(acc >= 0.0, acc, a * acc)
        # Linear over the trailing channel axis (MXU); epilogue writes the
        # output tile directly -- no HBM round trip for the intermediate.
        o_ref[0, o, :, :] = jnp.dot(
            z,
            w2t,
            preferred_element_type=jnp.float32,
            precision=jax.lax.Precision.HIGHEST,
        ).astype(o_ref.dtype)


# ---------------------------------------------------------------------------
# Host wrapper
# ---------------------------------------------------------------------------
def _choose_h_tile(H, num_node, num_channel, budget_bytes=4 * 1024 * 1024):
    """Largest H tile that (a) divides H, (b) is a multiple of 8 or equals H,
    and (c) keeps one x tile under ~budget_bytes so input+output double
    buffering stays well inside scoped VMEM on every chip (incl. v7x)."""
    bytes_per_row = max(num_node * num_channel * 4, 1)
    max_rows = max(8, budget_bytes // bytes_per_row)
    if H <= max_rows:
        return H
    th = min((max_rows // 8) * 8, (H // 8) * 8)
    while th >= 8:
        if H % th == 0:
            return th
        th -= 8
    return H  # block == full dim is always legal


def gcn_forward(x, conv1_w, prelu_alpha, linear_w):
    """GCN forward pass, fully fused in one Pallas kernel.

    x           : (B, num_node, H, num_channel) float32
    conv1_w     : (num_node, num_node, 1, 1) or (num_node, num_node)
    prelu_alpha : (num_node,)
    linear_w    : (num_channel, num_channel)   -- nn.Linear weight (out, in)
    """
    x = x.astype(jnp.float32)
    B, N, H, C = x.shape
    w1_flat = jnp.reshape(conv1_w, (N * N,)).astype(jnp.float32)
    alpha = jnp.reshape(prelu_alpha, (N,)).astype(jnp.float32)
    # Pre-transpose the tiny (C, C) Linear weight once so the in-kernel matmul
    # is a plain z @ W2^T with the contraction on the lane axis.
    w2t = jnp.transpose(jnp.reshape(linear_w, (C, C))).astype(jnp.float32)

    th = _choose_h_tile(H, N, C)
    grid = (B, H // th)

    return pl.pallas_call(
        _gcn_kernel,
        out_shape=jax.ShapeDtypeStruct((B, N, H, C), jnp.float32),
        grid=grid,
        in_specs=[
            # Small scalar parameters live in SMEM (cheap scalar reads).
            pl.BlockSpec(memory_space=pltpu.MemorySpace.SMEM),   # w1 (N*N,)
            pl.BlockSpec(memory_space=pltpu.MemorySpace.SMEM),   # alpha (N,)
            # Activation tile: last two dims (th, C) satisfy the (8,128)/full
            # rule; no host transpose or pad needed.
            pl.BlockSpec((1, N, th, C), lambda b, h: (b, 0, h, 0)),
            # Linear weight: resident, same block every step.
            pl.BlockSpec((C, C), lambda b, h: (0, 0)),
        ],
        out_specs=pl.BlockSpec((1, N, th, C), lambda b, h: (b, 0, h, 0)),
        compiler_params=pltpu.CompilerParams(
            dimension_semantics=("parallel", "parallel"),
        ),
    )(w1_flat, alpha, x, w2t)


# ---------------------------------------------------------------------------
# Pure-JAX reference (for correctness check)
# ---------------------------------------------------------------------------
def gcn_reference(x, conv1_w, prelu_alpha, linear_w):
    B, N, H, C = x.shape
    w1 = jnp.reshape(conv1_w, (N, N)).astype(jnp.float32)
    y = jnp.einsum("oi,bihc->bohc", w1, x,
                   precision=jax.lax.Precision.HIGHEST) + x
    alpha = jnp.reshape(prelu_alpha, (1, N, 1, 1)).astype(jnp.float32)
    z = jnp.where(y >= 0.0, y, alpha * y)
    w2 = jnp.reshape(linear_w, (C, C)).astype(jnp.float32)
    return jnp.einsum("bnhc,dc->bnhd", z, w2,
                      precision=jax.lax.Precision.HIGHEST)


# ---------------------------------------------------------------------------
if __name__ == "__main__":
    # Small shapes consistent with GCN(num_node, num_channel):
    # x is (batch, num_node, H, num_channel); the Linear acts on the last dim.
    B, num_node, H, num_channel = 2, 8, 16, 128

    key = jax.random.PRNGKey(0)
    kx, k1, k2, k3 = jax.random.split(key, 4)
    x = jax.random.normal(kx, (B, num_node, H, num_channel), jnp.float32)
    conv1_w = (jax.random.normal(k1, (num_node, num_node, 1, 1), jnp.float32)
               / math.sqrt(num_node))
    prelu_alpha = jax.random.uniform(k2, (num_node,), jnp.float32, 0.1, 0.4)
    linear_w = (jax.random.normal(k3, (num_channel, num_channel), jnp.float32)
                / math.sqrt(num_channel))

    out = jax.jit(gcn_forward)(x, conv1_w, prelu_alpha, linear_w)
    jax.block_until_ready(out)

    assert out.shape == (B, num_node, H, num_channel)

    ref = gcn_reference(x, conv1_w, prelu_alpha, linear_w)
    np.testing.assert_allclose(np.asarray(out), np.asarray(ref),
                               rtol=2e-2, atol=2e-2)

    print("KERNEL_OK")
</pallas_src>

<mosaic_0001>
module attributes {stable_mosaic.version = 11 : i64} {
  func.func @_gcn_kernel(%arg0: i32, %arg1: i32, %arg2: memref<64xf32, #tpu.memory_space<smem>>, %arg3: memref<8xf32, #tpu.memory_space<smem>>, %arg4: memref<1x8x16x128xf32, #tpu.memory_space<vmem>>, %arg5: memref<128x128xf32, #tpu.memory_space<vmem>>, %arg6: memref<1x8x16x128xf32, #tpu.memory_space<vmem>>) attributes {dimension_semantics = [#tpu.dimension_semantics<parallel>, #tpu.dimension_semantics<parallel>], iteration_bounds = array<i64: 2, 1>, scalar_prefetch = 0 : i64, scratch_operands = 0 : i64, tpu.core_type = #tpu.core_type<tc>, window_params = [{transform_indices = @transform_0, window_bounds = array<i64: 64>}, {transform_indices = @transform_1, window_bounds = array<i64: 8>}, {transform_indices = @transform_2, window_bounds = array<i64: 1, 8, 16, 128>}, {pipeline_mode = #tpu.pipeline_mode<synchronous>, transform_indices = @transform_3, window_bounds = array<i64: 128, 128>}, {transform_indices = @transform_4, window_bounds = array<i64: 1, 8, 16, 128>}]} {
    %c0 = arith.constant 0 : index
    %c0_0 = arith.constant 0 : index
    %0 = vector.load %arg5[%c0, %c0_0] : memref<128x128xf32, #tpu.memory_space<vmem>>, vector<128x128xf32>
    %c0_1 = arith.constant 0 : index
    %c0_2 = arith.constant 0 : index
    %c0_3 = arith.constant 0 : index
    %c0_4 = arith.constant 0 : index
    %1 = vector.load %arg4[%c0_1, %c0_2, %c0_3, %c0_4] : memref<1x8x16x128xf32, #tpu.memory_space<vmem>>, vector<1x1x16x128xf32>
    %2 = vector.shape_cast %1 : vector<1x1x16x128xf32> to vector<16x128xf32>
    %c0_5 = arith.constant 0 : index
    %3 = memref.load %arg2[%c0_5] : memref<64xf32, #tpu.memory_space<smem>>
    %c0_6 = arith.constant 0 : index
    %c0_7 = arith.constant 0 : index
    %c0_8 = arith.constant 0 : index
    %c0_9 = arith.constant 0 : index
    %4 = vector.load %arg4[%c0_6, %c0_7, %c0_8, %c0_9] : memref<1x8x16x128xf32, #tpu.memory_space<vmem>>, vector<1x1x16x128xf32>
    %5 = vector.shape_cast %4 : vector<1x1x16x128xf32> to vector<16x128xf32>
    %6 = vector.broadcast %3 : f32 to vector<16x128xf32>
    %7 = arith.mulf %6, %5 : vector<16x128xf32>
    %8 = arith.addf %2, %7 : vector<16x128xf32>
    %c1 = arith.constant 1 : index
    %9 = memref.load %arg2[%c1] : memref<64xf32, #tpu.memory_space<smem>>
    %c0_10 = arith.constant 0 : index
    %c1_11 = arith.constant 1 : index
    %c0_12 = arith.constant 0 : index
    %c0_13 = arith.constant 0 : index
    %10 = vector.load %arg4[%c0_10, %c1_11, %c0_12, %c0_13] : memref<1x8x16x128xf32, #tpu.memory_space<vmem>>, vector<1x1x16x128xf32>
    %11 = vector.shape_cast %10 : vector<1x1x16x128xf32> to vector<16x128xf32>
    %12 = vector.broadcast %9 : f32 to vector<16x128xf32>
    %13 = arith.mulf %12, %11 : vector<16x128xf32>
    %14 = arith.addf %8, %13 : vector<16x128xf32>
    %c2 = arith.constant 2 : index
    %15 = memref.load %arg2[%c2] : memref<64xf32, #tpu.memory_space<smem>>
    %c0_14 = arith.constant 0 : index
    %c2_15 = arith.constant 2 : index
    %c0_16 = arith.constant 0 : index
    %c0_17 = arith.constant 0 : index
    %16 = vector.load %arg4[%c0_14, %c2_15, %c0_16, %c0_17] : memref<1x8x16x128xf32, #tpu.memory_space<vmem>>, vector<1x1x16x128xf32>
    %17 = vector.shape_cast %16 : vector<1x1x16x128xf32> to vector<16x128xf32>
    %18 = vector.broadcast %15 : f32 to vector<16x128xf32>
    %19 = arith.mulf %18, %17 : vector<16x128xf32>
    %20 = arith.addf %14, %19 : vector<16x128xf32>
    %c3 = arith.constant 3 : index
    %21 = memref.load %arg2[%c3] : memref<64xf32, #tpu.memory_space<smem>>
    %c0_18 = arith.constant 0 : index
    %c3_19 = arith.constant 3 : index
    %c0_20 = arith.constant 0 : index
    %c0_21 = arith.constant 0 : index
    %22 = vector.load %arg4[%c0_18, %c3_19, %c0_20, %c0_21] : memref<1x8x16x128xf32, #tpu.memory_space<vmem>>, vector<1x1x16x128xf32>
    %23 = vector.shape_cast %22 : vector<1x1x16x128xf32> to vector<16x128xf32>
    %24 = vector.broadcast %21 : f32 to vector<16x128xf32>
    %25 = arith.mulf %24, %23 : vector<16x128xf32>
    %26 = arith.addf %20, %25 : vector<16x128xf32>
    %c4 = arith.constant 4 : index
    %27 = memref.load %arg2[%c4] : memref<64xf32, #tpu.memory_space<smem>>
    %c0_22 = arith.constant 0 : index
    %c4_23 = arith.constant 4 : index
    %c0_24 = arith.constant 0 : index
    %c0_25 = arith.constant 0 : index
    %28 = vector.load %arg4[%c0_22, %c4_23, %c0_24, %c0_25] : memref<1x8x16x128xf32, #tpu.memory_space<vmem>>, vector<1x1x16x128xf32>
    %29 = vector.shape_cast %28 : vector<1x1x16x128xf32> to vector<16x128xf32>
    %30 = vector.broadcast %27 : f32 to vector<16x128xf32>
    %31 = arith.mulf %30, %29 : vector<16x128xf32>
    %32 = arith.addf %26, %31 : vector<16x128xf32>
    %c5 = arith.constant 5 : index
    %33 = memref.load %arg2[%c5] : memref<64xf32, #tpu.memory_space<smem>>
    %c0_26 = arith.constant 0 : index
    %c5_27 = arith.constant 5 : index
    %c0_28 = arith.constant 0 : index
    %c0_29 = arith.constant 0 : index
    %34 = vector.load %arg4[%c0_26, %c5_27, %c0_28, %c0_29] : memref<1x8x16x128xf32, #tpu.memory_space<vmem>>, vector<1x1x16x128xf32>
    %35 = vector.shape_cast %34 : vector<1x1x16x128xf32> to vector<16x128xf32>
    %36 = vector.broadcast %33 : f32 to vector<16x128xf32>
    %37 = arith.mulf %36, %35 : vector<16x128xf32>
    %38 = arith.addf %32, %37 : vector<16x128xf32>
    %c6 = arith.constant 6 : index
    %39 = memref.load %arg2[%c6] : memref<64xf32, #tpu.memory_space<smem>>
    %c0_30 = arith.constant 0 : index
    %c6_31 = arith.constant 6 : index
    %c0_32 = arith.constant 0 : index
    %c0_33 = arith.constant 0 : index
    %40 = vector.load %arg4[%c0_30, %c6_31, %c0_32, %c0_33] : memref<1x8x16x128xf32, #tpu.memory_space<vmem>>, vector<1x1x16x128xf32>
    %41 = vector.shape_cast %40 : vector<1x1x16x128xf32> to vector<16x128xf32>
    %42 = vector.broadcast %39 : f32 to vector<16x128xf32>
    %43 = arith.mulf %42, %41 : vector<16x128xf32>
    %44 = arith.addf %38, %43 : vector<16x128xf32>
    %c7 = arith.constant 7 : index
    %45 = memref.load %arg2[%c7] : memref<64xf32, #tpu.memory_space<smem>>
    %c0_34 = arith.constant 0 : index
    %c7_35 = arith.constant 7 : index
    %c0_36 = arith.constant 0 : index
    %c0_37 = arith.constant 0 : index
    %46 = vector.load %arg4[%c0_34, %c7_35, %c0_36, %c0_37] : memref<1x8x16x128xf32, #tpu.memory_space<vmem>>, vector<1x1x16x128xf32>
    %47 = vector.shape_cast %46 : vector<1x1x16x128xf32> to vector<16x128xf32>
    %48 = vector.broadcast %45 : f32 to vector<16x128xf32>
    %49 = arith.mulf %48, %47 : vector<16x128xf32>
    %50 = arith.addf %44, %49 : vector<16x128xf32>
    %c0_38 = arith.constant 0 : index
    %51 = memref.load %arg3[%c0_38] : memref<8xf32, #tpu.memory_space<smem>>
    %cst = arith.constant 0.000000e+00 : f32
    %52 = vector.broadcast %cst : f32 to vector<16x128xf32>
    %53 = arith.cmpf oge, %50, %52 : vector<16x128xf32>
    %54 = vector.broadcast %51 : f32 to vector<16x128xf32>
    %55 = arith.mulf %54, %50 : vector<16x128xf32>
    %56 = arith.select %53, %50, %55 : vector<16x128xi1>, vector<16x128xf32>
    %cst_39 = arith.constant dense<0.000000e+00> : vector<16x128xf32>
    %57 = tpu.matmul %56, %0, %cst_39 {dimension_numbers = #tpu.dot_dimension_numbers<[1], [0], [0], [1], [0, 0, 1, 1], [], []>, precision = #tpu.contract_precision<fp32>} : vector<16x128xf32>, vector<128x128xf32>, vector<16x128xf32> -> vector<16x128xf32>
    %c0_40 = arith.constant 0 : index
    %c0_41 = arith.constant 0 : index
    %c0_42 = arith.constant 0 : index
    %c0_43 = arith.constant 0 : index
    %58 = vector.load %arg6[%c0_40, %c0_41, %c0_42, %c0_43] : memref<1x8x16x128xf32, #tpu.memory_space<vmem>>, vector<1x1x16x128xf32>
    %59 = vector.shape_cast %58 : vector<1x1x16x128xf32> to vector<16x128xf32>
    %60 = vector.shape_cast %57 : vector<16x128xf32> to vector<1x1x16x128xf32>
    tpu.vector_store %arg6[%c0_40, %c0_41, %c0_42, %c0_43], %60 {strides = array<i32>} : memref<1x8x16x128xf32, #tpu.memory_space<vmem>>, vector<1x1x16x128xf32>,
    %c0_44 = arith.constant 0 : index
    %c1_45 = arith.constant 1 : index
    %c0_46 = arith.constant 0 : index
    %c0_47 = arith.constant 0 : index
    %61 = vector.load %arg4[%c0_44, %c1_45, %c0_46, %c0_47] : memref<1x8x16x128xf32, #tpu.memory_space<vmem>>, vector<1x1x16x128xf32>
    %62 = vector.shape_cast %61 : vector<1x1x16x128xf32> to vector<16x128xf32>
    %c8 = arith.constant 8 : index
    %63 = memref.load %arg2[%c8] : memref<64xf32, #tpu.memory_space<smem>>
    %c0_48 = arith.constant 0 : index
    %c0_49 = arith.constant 0 : index
    %c0_50 = arith.constant 0 : index
    %c0_51 = arith.constant 0 : index
    %64 = vector.load %arg4[%c0_48, %c0_49, %c0_50, %c0_51] : memref<1x8x16x128xf32, #tpu.memory_space<vmem>>, vector<1x1x16x128xf32>
    %65 = vector.shape_cast %64 : vector<1x1x16x128xf32> to vector<16x128xf32>
    %66 = vector.broadcast %63 : f32 to vector<16x128xf32>
    %67 = arith.mulf %66, %65 : vector<16x128xf32>
    %68 = arith.addf %62, %67 : vector<16x128xf32>
    %c9 = arith.constant 9 : index
    %69 = memref.load %arg2[%c9] : memref<64xf32, #tpu.memory_space<smem>>
    %c0_52 = arith.constant 0 : index
    %c1_53 = arith.constant 1 : index
    %c0_54 = arith.constant 0 : index
    %c0_55 = arith.constant 0 : index
    %70 = vector.load %arg4[%c0_52, %c1_53, %c0_54, %c0_55] : memref<1x8x16x128xf32, #tpu.memory_space<vmem>>, vector<1x1x16x128xf32>
    %71 = vector.shape_cast %70 : vector<1x1x16x128xf32> to vector<16x128xf32>
    %72 = vector.broadcast %69 : f32 to vector<16x128xf32>
    %73 = arith.mulf %72, %71 : vector<16x128xf32>
    %74 = arith.addf %68, %73 : vector<16x128xf32>
    %c10 = arith.constant 10 : index
    %75 = memref.load %arg2[%c10] : memref<64xf32, #tpu.memory_space<smem>>
    %c0_56 = arith.constant 0 : index
    %c2_57 = arith.constant 2 : index
    %c0_58 = arith.constant 0 : index
    %c0_59 = arith.constant 0 : index
    %76 = vector.load %arg4[%c0_56, %c2_57, %c0_58, %c0_59] : memref<1x8x16x128xf32, #tpu.memory_space<vmem>>, vector<1x1x16x128xf32>
    %77 = vector.shape_cast %76 : vector<1x1x16x128xf32> to vector<16x128xf32>
    %78 = vector.broadcast %75 : f32 to vector<16x128xf32>
    %79 = arith.mulf %78, %77 : vector<16x128xf32>
    %80 = arith.addf %74, %79 : vector<16x128xf32>
    %c11 = arith.constant 11 : index
    %81 = memref.load %arg2[%c11] : memref<64xf32, #tpu.memory_space<smem>>
    %c0_60 = arith.constant 0 : index
    %c3_61 = arith.constant 3 : index
    %c0_62 = arith.constant 0 : index
    %c0_63 = arith.constant 0 : index
    %82 = vector.load %arg4[%c0_60, %c3_61, %c0_62, %c0_63] : memref<1x8x16x128xf32, #tpu.memory_space<vmem>>, vector<1x1x16x128xf32>
    %83 = vector.shape_cast %82 : vector<1x1x16x128xf32> to vector<16x128xf32>
    %84 = vector.broadcast %81 : f32 to vector<16x128xf32>
    %85 = arith.mulf %84, %83 : vector<16x128xf32>
    %86 = arith.addf %80, %85 : vector<16x128xf32>
    %c12 = arith.constant 12 : index
    %87 = memref.load %arg2[%c12] : memref<64xf32, #tpu.memory_space<smem>>
    %c0_64 = arith.constant 0 : index
    %c4_65 = arith.constant 4 : index
    %c0_66 = arith.constant 0 : index
    %c0_67 = arith.constant 0 : index
    %88 = vector.load %arg4[%c0_64, %c4_65, %c0_66, %c0_67] : memref<1x8x16x128xf32, #tpu.memory_space<vmem>>, vector<1x1x16x128xf32>
    %89 = vector.shape_cast %88 : vector<1x1x16x128xf32> to vector<16x128xf32>
    %90 = vector.broadcast %87 : f32 to vector<16x128xf32>
    %91 = arith.mulf %90, %89 : vector<16x128xf32>
    %92 = arith.addf %86, %91 : vector<16x128xf32>
    %c13 = arith.constant 13 : index
    %93 = memref.load %arg2[%c13] : memref<64xf32, #tpu.memory_space<smem>>
    %c0_68 = arith.constant 0 : index
    %c5_69 = arith.constant 5 : index
    %c0_70 = arith.constant 0 : index
    %c0_71 = arith.constant 0 : index
    %94 = vector.load %arg4[%c0_68, %c5_69, %c0_70, %c0_71] : memref<1x8x16x128xf32, #tpu.memory_space<vmem>>, vector<1x1x16x128xf32>
    %95 = vector.shape_cast %94 : vector<1x1x16x128xf32> to vector<16x128xf32>
    %96 = vector.broadcast %93 : f32 to vector<16x128xf32>
    %97 = arith.mulf %96, %95 : vector<16x128xf32>
    %98 = arith.addf %92, %97 : vector<16x128xf32>
    %c14 = arith.constant 14 : index
    %99 = memref.load %arg2[%c14] : memref<64xf32, #tpu.memory_space<smem>>
    %c0_72 = arith.constant 0 : index
    %c6_73 = arith.constant 6 : index
    %c0_74 = arith.constant 0 : index
    %c0_75 = arith.constant 0 : index
    %100 = vector.load %arg4[%c0_72, %c6_73, %c0_74, %c0_75] : memref<1x8x16x128xf32, #tpu.memory_space<vmem>>, vector<1x1x16x128xf32>
    %101 = vector.shape_cast %100 : vector<1x1x16x128xf32> to vector<16x128xf32>
    %102 = vector.broadcast %99 : f32 to vector<16x128xf32>
    %103 = arith.mulf %102, %101 : vector<16x128xf32>
    %104 = arith.addf %98, %103 : vector<16x128xf32>
    %c15 = arith.constant 15 : index
    %105 = memref.load %arg2[%c15] : memref<64xf32, #tpu.memory_space<smem>>
    %c0_76 = arith.constant 0 : index
    %c7_77 = arith.constant 7 : index
    %c0_78 = arith.constant 0 : index
    %c0_79 = arith.constant 0 : index
    %106 = vector.load %arg4[%c0_76, %c7_77, %c0_78, %c0_79] : memref<1x8x16x128xf32, #tpu.memory_space<vmem>>, vector<1x1x16x128xf32>
    %107 = vector.shape_cast %106 : vector<1x1x16x128xf32> to vector<16x128xf32>
    %108 = vector.broadcast %105 : f32 to vector<16x128xf32>
    %109 = arith.mulf %108, %107 : vector<16x128xf32>
    %110 = arith.addf %104, %109 : vector<16x128xf32>
    %c1_80 = arith.constant 1 : index
    %111 = memref.load %arg3[%c1_80] : memref<8xf32, #tpu.memory_space<smem>>
    %cst_81 = arith.constant 0.000000e+00 : f32
    %112 = vector.broadcast %cst_81 : f32 to vector<16x128xf32>
    %113 = arith.cmpf oge, %110, %112 : vector<16x128xf32>
    %114 = vector.broadcast %111 : f32 to vector<16x128xf32>
    %115 = arith.mulf %114, %110 : vector<16x128xf32>
    %116 = arith.select %113, %110, %115 : vector<16x128xi1>, vector<16x128xf32>
    %cst_82 = arith.constant dense<0.000000e+00> : vector<16x128xf32>
    %117 = tpu.matmul %116, %0, %cst_82 {dimension_numbers = #tpu.dot_dimension_numbers<[1], [0], [0], [1], [0, 0, 1, 1], [], []>, precision = #tpu.contract_precision<fp32>} : vector<16x128xf32>, vector<128x128xf32>, vector<16x128xf32> -> vector<16x128xf32>
    %c0_83 = arith.constant 0 : index
    %c1_84 = arith.constant 1 : index
    %c0_85 = arith.constant 0 : index
    %c0_86 = arith.constant 0 : index
    %118 = vector.load %arg6[%c0_83, %c1_84, %c0_85, %c0_86] : memref<1x8x16x128xf32, #tpu.memory_space<vmem>>, vector<1x1x16x128xf32>
    %119 = vector.shape_cast %118 : vector<1x1x16x128xf32> to vector<16x128xf32>
    %120 = vector.shape_cast %117 : vector<16x128xf32> to vector<1x1x16x128xf32>
    tpu.vector_store %arg6[%c0_83, %c1_84, %c0_85, %c0_86], %120 {strides = array<i32>} : memref<1x8x16x128xf32, #tpu.memory_space<vmem>>, vector<1x1x16x128xf32>,
    %c0_87 = arith.constant 0 : index
    %c2_88 = arith.constant 2 : index
    %c0_89 = arith.constant 0 : index
    %c0_90 = arith.constant 0 : index
    %121 = vector.load %arg4[%c0_87, %c2_88, %c0_89, %c0_90] : memref<1x8x16x128xf32, #tpu.memory_space<vmem>>, vector<1x1x16x128xf32>
    %122 = vector.shape_cast %121 : vector<1x1x16x128xf32> to vector<16x128xf32>
    %c16 = arith.constant 16 : index
    %123 = memref.load %arg2[%c16] : memref<64xf32, #tpu.memory_space<smem>>
    %c0_91 = arith.constant 0 : index
    %c0_92 = arith.constant 0 : index
    %c0_93 = arith.constant 0 : index
    %c0_94 = arith.constant 0 : index
    %124 = vector.load %arg4[%c0_91, %c0_92, %c0_93, %c0_94] : memref<1x8x16x128xf32, #tpu.memory_space<vmem>>, vector<1x1x16x128xf32>
    %125 = vector.shape_cast %124 : vector<1x1x16x128xf32> to vector<16x128xf32>
    %126 = vector.broadcast %123 : f32 to vector<16x128xf32>
    %127 = arith.mulf %126, %125 : vector<16x128xf32>
    %128 = arith.addf %122, %127 : vector<16x128xf32>
    %c17 = arith.constant 17 : index
    %129 = memref.load %arg2[%c17] : memref<64xf32, #tpu.memory_space<smem>>
    %c0_95 = arith.constant 0 : index
    %c1_96 = arith.constant 1 : index
    %c0_97 = arith.constant 0 : index
    %c0_98 = arith.constant 0 : index
    %130 = vector.load %arg4[%c0_95, %c1_96, %c0_97, %c0_98] : memref<1x8x16x128xf32, #tpu.memory_space<vmem>>, vector<1x1x16x128xf32>
    %131 = vector.shape_cast %130 : vector<1x1x16x128xf32> to vector<16x128xf32>
    %132 = vector.broadcast %129 : f32 to vector<16x128xf32>
    %133 = arith.mulf %132, %131 : vector<16x128xf32>
    %134 = arith.addf %128, %133 : vector<16x128xf32>
    %c18 = arith.constant 18 : index
    %135 = memref.load %arg2[%c18] : memref<64xf32, #tpu.memory_space<smem>>
    %c0_99 = arith.constant 0 : index
    %c2_100 = arith.constant 2 : index
    %c0_101 = arith.constant 0 : index
    %c0_102 = arith.constant 0 : index
    %136 = vector.load %arg4[%c0_99, %c2_100, %c0_101, %c0_102] : memref<1x8x16x128xf32, #tpu.memory_space<vmem>>, vector<1x1x16x128xf32>
    %137 = vector.shape_cast %136 : vector<1x1x16x128xf32> to vector<16x128xf32>
    %138 = vector.broadcast %135 : f32 to vector<16x128xf32>
    %139 = arith.mulf %138, %137 : vector<16x128xf32>
    %140 = arith.addf %134, %139 : vector<16x128xf32>
    %c19 = arith.constant 19 : index
    %141 = memref.load %arg2[%c19] : memref<64xf32, #tpu.memory_space<smem>>
    %c0_103 = arith.constant 0 : index
    %c3_104 = arith.constant 3 : index
    %c0_105 = arith.constant 0 : index
    %c0_106 = arith.constant 0 : index
    %142 = vector.load %arg4[%c0_103, %c3_104, %c0_105, %c0_106] : memref<1x8x16x128xf32, #tpu.memory_space<vmem>>, vector<1x1x16x128xf32>
    %143 = vector.shape_cast %142 : vector<1x1x16x128xf32> to vector<16x128xf32>
    %144 = vector.broadcast %141 : f32 to vector<16x128xf32>
    %145 = arith.mulf %144, %143 : vector<16x128xf32>
    %146 = arith.addf %140, %145 : vector<16x128xf32>
    %c20 = arith.constant 20 : index
    %147 = memref.load %arg2[%c20] : memref<64xf32, #tpu.memory_space<smem>>
    %c0_107 = arith.constant 0 : index
    %c4_108 = arith.constant 4 : index
    %c0_109 = arith.constant 0 : index
    %c0_110 = arith.constant 0 : index
    %148 = vector.load %arg4[%c0_107, %c4_108, %c0_109, %c0_110] : memref<1x8x16x128xf32, #tpu.memory_space<vmem>>, vector<1x1x16x128xf32>
    %149 = vector.shape_cast %148 : vector<1x1x16x128xf32> to vector<16x128xf32>
    %150 = vector.broadcast %147 : f32 to vector<16x128xf32>
    %151 = arith.mulf %150, %149 : vector<16x128xf32>
    %152 = arith.addf %146, %151 : vector<16x128xf32>
    %c21 = arith.constant 21 : index
    %153 = memref.load %arg2[%c21] : memref<64xf32, #tpu.memory_space<smem>>
    %c0_111 = arith.constant 0 : index
    %c5_112 = arith.constant 5 : index
    %c0_113 = arith.constant 0 : index
    %c0_114 = arith.constant 0 : index
    %154 = vector.load %arg4[%c0_111, %c5_112, %c0_113, %c0_114] : memref<1x8x16x128xf32, #tpu.memory_space<vmem>>, vector<1x1x16x128xf32>
    %155 = vector.shape_cast %154 : vector<1x1x16x128xf32> to vector<16x128xf32>
    %156 = vector.broadcast %153 : f32 to vector<16x128xf32>
    %157 = arith.mulf %156, %155 : vector<16x128xf32>
    %158 = arith.addf %152, %157 : vector<16x128xf32>
    %c22 = arith.constant 22 : index
    %159 = memref.load %arg2[%c22] : memref<64xf32, #tpu.memory_space<smem>>
    %c0_115 = arith.constant 0 : index
    %c6_116 = arith.constant 6 : index
    %c0_117 = arith.constant 0 : index
    %c0_118 = arith.constant 0 : index
    %160 = vector.load %arg4[%c0_115, %c6_116, %c0_117, %c0_118] : memref<1x8x16x128xf32, #tpu.memory_space<vmem>>, vector<1x1x16x128xf32>
    %161 = vector.shape_cast %160 : vector<1x1x16x128xf32> to vector<16x128xf32>
    %162 = vector.broadcast %159 : f32 to vector<16x128xf32>
    %163 = arith.mulf %162, %161 : vector<16x128xf32>
    %164 = arith.addf %158, %163 : vector<16x128xf32>
    %c23 = arith.constant 23 : index
    %165 = memref.load %arg2[%c23] : memref<64xf32, #tpu.memory_space<smem>>
    %c0_119 = arith.constant 0 : index
    %c7_120 = arith.constant 7 : index
    %c0_121 = arith.constant 0 : index
    %c0_122 = arith.constant 0 : index
    %166 = vector.load %arg4[%c0_119, %c7_120, %c0_121, %c0_122] : memref<1x8x16x128xf32, #tpu.memory_space<vmem>>, vector<1x1x16x128xf32>
    %167 = vector.shape_cast %166 : vector<1x1x16x128xf32> to vector<16x128xf32>
    %168 = vector.broadcast %165 : f32 to vector<16x128xf32>
    %169 = arith.mulf %168, %167 : vector<16x128xf32>
    %170 = arith.addf %164, %169 : vector<16x128xf32>
    %c2_123 = arith.constant 2 : index
    %171 = memref.load %arg3[%c2_123] : memref<8xf32, #tpu.memory_space<smem>>
    %cst_124 = arith.constant 0.000000e+00 : f32
    %172 = vector.broadcast %cst_124 : f32 to vector<16x128xf32>
    %173 = arith.cmpf oge, %170, %172 : vector<16x128xf32>
    %174 = vector.broadcast %171 : f32 to vector<16x128xf32>
    %175 = arith.mulf %174, %170 : vector<16x128xf32>
    %176 = arith.select %173, %170, %175 : vector<16x128xi1>, vector<16x128xf32>
    %cst_125 = arith.constant dense<0.000000e+00> : vector<16x128xf32>
    %177 = tpu.matmul %176, %0, %cst_125 {dimension_numbers = #tpu.dot_dimension_numbers<[1], [0], [0], [1], [0, 0, 1, 1], [], []>, precision = #tpu.contract_precision<fp32>} : vector<16x128xf32>, vector<128x128xf32>, vector<16x128xf32> -> vector<16x128xf32>
    %c0_126 = arith.constant 0 : index
    %c2_127 = arith.constant 2 : index
    %c0_128 = arith.constant 0 : index
    %c0_129 = arith.constant 0 : index
    %178 = vector.load %arg6[%c0_126, %c2_127, %c0_128, %c0_129] : memref<1x8x16x128xf32, #tpu.memory_space<vmem>>, vector<1x1x16x128xf32>
    %179 = vector.shape_cast %178 : vector<1x1x16x128xf32> to vector<16x128xf32>
    %180 = vector.shape_cast %177 : vector<16x128xf32> to vector<1x1x16x128xf32>
    tpu.vector_store %arg6[%c0_126, %c2_127, %c0_128, %c0_129], %180 {strides = array<i32>} : memref<1x8x16x128xf32, #tpu.memory_space<vmem>>, vector<1x1x16x128xf32>,
    %c0_130 = arith.constant 0 : index
    %c3_131 = arith.constant 3 : index
    %c0_132 = arith.constant 0 : index
    %c0_133 = arith.constant 0 : index
    %181 = vector.load %arg4[%c0_130, %c3_131, %c0_132, %c0_133] : memref<1x8x16x128xf32, #tpu.memory_space<vmem>>, vector<1x1x16x128xf32>
    %182 = vector.shape_cast %181 : vector<1x1x16x128xf32> to vector<16x128xf32>
    %c24 = arith.constant 24 : index
    %183 = memref.load %arg2[%c24] : memref<64xf32, #tpu.memory_space<smem>>
    %c0_134 = arith.constant 0 : index
    %c0_135 = arith.constant 0 : index
    %c0_136 = arith.constant 0 : index
    %c0_137 = arith.constant 0 : index
    %184 = vector.load %arg4[%c0_134, %c0_135, %c0_136, %c0_137] : memref<1x8x16x128xf32, #tpu.memory_space<vmem>>, vector<1x1x16x128xf32>
    %185 = vector.shape_cast %184 : vector<1x1x16x128xf32> to vector<16x128xf32>
    %186 = vector.broadcast %183 : f32 to vector<16x128xf32>
    %187 = arith.mulf %186, %185 : vector<16x128xf32>
    %188 = arith.addf %182, %187 : vector<16x128xf32>
    %c25 = arith.constant 25 : index
    %189 = memref.load %arg2[%c25] : memref<64xf32, #tpu.memory_space<smem>>
    %c0_138 = arith.constant 0 : index
    %c1_139 = arith.constant 1 : index
    %c0_140 = arith.constant 0 : index
    %c0_141 = arith.constant 0 : index
    %190 = vector.load %arg4[%c0_138, %c1_139, %c0_140, %c0_141] : memref<1x8x16x128xf32, #tpu.memory_space<vmem>>, vector<1x1x16x128xf32>
    %191 = vector.shape_cast %190 : vector<1x1x16x128xf32> to vector<16x128xf32>
    %192 = vector.broadcast %189 : f32 to vector<16x128xf32>
    %193 = arith.mulf %192, %191 : vector<16x128xf32>
    %194 = arith.addf %188, %193 : vector<16x128xf32>
    %c26 = arith.constant 26 : index
    %195 = memref.load %arg2[%c26] : memref<64xf32, #tpu.memory_space<smem>>
    %c0_142 = arith.constant 0 : index
    %c2_143 = arith.constant 2 : index
    %c0_144 = arith.constant 0 : index
    %c0_145 = arith.constant 0 : index
    %196 = vector.load %arg4[%c0_142, %c2_143, %c0_144, %c0_145] : memref<1x8x16x128xf32, #tpu.memory_space<vmem>>, vector<1x1x16x128xf32>
    %197 = vector.shape_cast %196 : vector<1x1x16x128xf32> to vector<16x128xf32>
    %198 = vector.broadcast %195 : f32 to vector<16x128xf32>
    %199 = arith.mulf %198, %197 : vector<16x128xf32>
    %200 = arith.addf %194, %199 : vector<16x128xf32>
    %c27 = arith.constant 27 : index
    %201 = memref.load %arg2[%c27] : memref<64xf32, #tpu.memory_space<smem>>
    %c0_146 = arith.constant 0 : index
    %c3_147 = arith.constant 3 : index
    %c0_148 = arith.constant 0 : index
    %c0_149 = arith.constant 0 : index
    %202 = vector.load %arg4[%c0_146, %c3_147, %c0_148, %c0_149] : memref<1x8x16x128xf32, #tpu.memory_space<vmem>>, vector<1x1x16x128xf32>
    %203 = vector.shape_cast %202 : vector<1x1x16x128xf32> to vector<16x128xf32>
    %204 = vector.broadcast %201 : f32 to vector<16x128xf32>
    %205 = arith.mulf %204, %203 : vector<16x128xf32>
    %206 = arith.addf %200, %205 : vector<16x128xf32>
    %c28 = arith.constant 28 : index
    %207 = memref.load %arg2[%c28] : memref<64xf32, #tpu.memory_space<smem>>
    %c0_150 = arith.constant 0 : index
    %c4_151 = arith.constant 4 : index
    %c0_152 = arith.constant 0 : index
    %c0_153 = arith.constant 0 : index
    %208 = vector.load %arg4[%c0_150, %c4_151, %c0_152, %c0_153] : memref<1x8x16x128xf32, #tpu.memory_space<vmem>>, vector<1x1x16x128xf32>
    %209 = vector.shape_cast %208 : vector<1x1x16x128xf32> to vector<16x128xf32>
    %210 = vector.broadcast %207 : f32 to vector<16x128xf32>
    %211 = arith.mulf %210, %209 : vector<16x128xf32>
    %212 = arith.addf %206, %211 : vector<16x128xf32>
    %c29 = arith.constant 29 : index
    %213 = memref.load %arg2[%c29] : memref<64xf32, #tpu.memory_space<smem>>
    %c0_154 = arith.constant 0 : index
    %c5_155 = arith.constant 5 : index
    %c0_156 = arith.constant 0 : index
    %c0_157 = arith.constant 0 : index
    %214 = vector.load %arg4[%c0_154, %c5_155, %c0_156, %c0_157] : memref<1x8x16x128xf32, #tpu.memory_space<vmem>>, vector<1x1x16x128xf32>
    %215 = vector.shape_cast %214 : vector<1x1x16x128xf32> to vector<16x128xf32>
    %216 = vector.broadcast %213 : f32 to vector<16x128xf32>
    %217 = arith.mulf %216, %215 : vector<16x128xf32>
    %218 = arith.addf %212, %217 : vector<16x128xf32>
    %c30 = arith.constant 30 : index
    %219 = memref.load %arg2[%c30] : memref<64xf32, #tpu.memory_space<smem>>
    %c0_158 = arith.constant 0 : index
    %c6_159 = arith.constant 6 : index
    %c0_160 = arith.constant 0 : index
    %c0_161 = arith.constant 0 : index
    %220 = vector.load %arg4[%c0_158, %c6_159, %c0_160, %c0_161] : memref<1x8x16x128xf32, #tpu.memory_space<vmem>>, vector<1x1x16x128xf32>
    %221 = vector.shape_cast %220 : vector<1x1x16x128xf32> to vector<16x128xf32>
    %222 = vector.broadcast %219 : f32 to vector<16x128xf32>
    %223 = arith.mulf %222, %221 : vector<16x128xf32>
    %224 = arith.addf %218, %223 : vector<16x128xf32>
    %c31 = arith.constant 31 : index
    %225 = memref.load %arg2[%c31] : memref<64xf32, #tpu.memory_space<smem>>
    %c0_162 = arith.constant 0 : index
    %c7_163 = arith.constant 7 : index
    %c0_164 = arith.constant 0 : index
    %c0_165 = arith.constant 0 : index
    %226 = vector.load %arg4[%c0_162, %c7_163, %c0_164, %c0_165] : memref<1x8x16x128xf32, #tpu.memory_space<vmem>>, vector<1x1x16x128xf32>
    %227 = vector.shape_cast %226 : vector<1x1x16x128xf32> to vector<16x128xf32>
    %228 = vector.broadcast %225 : f32 to vector<16x128xf32>
    %229 = arith.mulf %228, %227 : vector<16x128xf32>
    %230 = arith.addf %224, %229 : vector<16x128xf32>
    %c3_166 = arith.constant 3 : index
    %231 = memref.load %arg3[%c3_166] : memref<8xf32, #tpu.memory_space<smem>>
    %cst_167 = arith.constant 0.000000e+00 : f32
    %232 = vector.broadcast %cst_167 : f32 to vector<16x128xf32>
    %233 = arith.cmpf oge, %230, %232 : vector<16x128xf32>
    %234 = vector.broadcast %231 : f32 to vector<16x128xf32>
    %235 = arith.mulf %234, %230 : vector<16x128xf32>
    %236 = arith.select %233, %230, %235 : vector<16x128xi1>, vector<16x128xf32>
    %cst_168 = arith.constant dense<0.000000e+00> : vector<16x128xf32>
    %237 = tpu.matmul %236, %0, %cst_168 {dimension_numbers = #tpu.dot_dimension_numbers<[1], [0], [0], [1], [0, 0, 1, 1], [], []>, precision = #tpu.contract_precision<fp32>} : vector<16x128xf32>, vector<128x128xf32>, vector<16x128xf32> -> vector<16x128xf32>
    %c0_169 = arith.constant 0 : index
    %c3_170 = arith.constant 3 : index
    %c0_171 = arith.constant 0 : index
    %c0_172 = arith.constant 0 : index
    %238 = vector.load %arg6[%c0_169, %c3_170, %c0_171, %c0_172] : memref<1x8x16x128xf32, #tpu.memory_space<vmem>>, vector<1x1x16x128xf32>
    %239 = vector.shape_cast %238 : vector<1x1x16x128xf32> to vector<16x128xf32>
    %240 = vector.shape_cast %237 : vector<16x128xf32> to vector<1x1x16x128xf32>
    tpu.vector_store %arg6[%c0_169, %c3_170, %c0_171, %c0_172], %240 {strides = array<i32>} : memref<1x8x16x128xf32, #tpu.memory_space<vmem>>, vector<1x1x16x128xf32>,
    %c0_173 = arith.constant 0 : index
    %c4_174 = arith.constant 4 : index
    %c0_175 = arith.constant 0 : index
    %c0_176 = arith.constant 0 : index
    %241 = vector.load %arg4[%c0_173, %c4_174, %c0_175, %c0_176] : memref<1x8x16x128xf32, #tpu.memory_space<vmem>>, vector<1x1x16x128xf32>
    %242 = vector.shape_cast %241 : vector<1x1x16x128xf32> to vector<16x128xf32>
    %c32 = arith.constant 32 : index
    %243 = memref.load %arg2[%c32] : memref<64xf32, #tpu.memory_space<smem>>
    %c0_177 = arith.constant 0 : index
    %c0_178 = arith.constant 0 : index
    %c0_179 = arith.constant 0 : index
    %c0_180 = arith.constant 0 : index
    %244 = vector.load %arg4[%c0_177, %c0_178, %c0_179, %c0_180] : memref<1x8x16x128xf32, #tpu.memory_space<vmem>>, vector<1x1x16x128xf32>
    %245 = vector.shape_cast %244 : vector<1x1x16x128xf32> to vector<16x128xf32>
    %246 = vector.broadcast %243 : f32 to vector<16x128xf32>
    %247 = arith.mulf %246, %245 : vector<16x128xf32>
    %248 = arith.addf %242, %247 : vector<16x128xf32>
    %c33 = arith.constant 33 : index
    %249 = memref.load %arg2[%c33] : memref<64xf32, #tpu.memory_space<smem>>
    %c0_181 = arith.constant 0 : index
    %c1_182 = arith.constant 1 : index
    %c0_183 = arith.constant 0 : index
    %c0_184 = arith.constant 0 : index
    %250 = vector.load %arg4[%c0_181, %c1_182, %c0_183, %c0_184] : memref<1x8x16x128xf32, #tpu.memory_space<vmem>>, vector<1x1x16x128xf32>
    %251 = vector.shape_cast %250 : vector<1x1x16x128xf32> to vector<16x128xf32>
    %252 = vector.broadcast %249 : f32 to vector<16x128xf32>
    %253 = arith.mulf %252, %251 : vector<16x128xf32>
    %254 = arith.addf %248, %253 : vector<16x128xf32>
    %c34 = arith.constant 34 : index
    %255 = memref.load %arg2[%c34] : memref<64xf32, #tpu.memory_space<smem>>
    %c0_185 = arith.constant 0 : index
    %c2_186 = arith.constant 2 : index
    %c0_187 = arith.constant 0 : index
    %c0_188 = arith.constant 0 : index
    %256 = vector.load %arg4[%c0_185, %c2_186, %c0_187, %c0_188] : memref<1x8x16x128xf32, #tpu.memory_space<vmem>>, vector<1x1x16x128xf32>
    %257 = vector.shape_cast %256 : vector<1x1x16x128xf32> to vector<16x128xf32>
    %258 = vector.broadcast %255 : f32 to vector<16x128xf32>
    %259 = arith.mulf %258, %257 : vector<16x128xf32>
    %260 = arith.addf %254, %259 : vector<16x128xf32>
    %c35 = arith.constant 35 : index
    %261 = memref.load %arg2[%c35] : memref<64xf32, #tpu.memory_space<smem>>
    %c0_189 = arith.constant 0 : index
    %c3_190 = arith.constant 3 : index
    %c0_191 = arith.constant 0 : index
    %c0_192 = arith.constant 0 : index
    %262 = vector.load %arg4[%c0_189, %c3_190, %c0_191, %c0_192] : memref<1x8x16x128xf32, #tpu.memory_space<vmem>>, vector<1x1x16x128xf32>
    %263 = vector.shape_cast %262 : vector<1x1x16x128xf32> to vector<16x128xf32>
    %264 = vector.broadcast %261 : f32 to vector<16x128xf32>
    %265 = arith.mulf %264, %263 : vector<16x128xf32>
    %266 = arith.addf %260, %265 : vector<16x128xf32>
    %c36 = arith.constant 36 : index
    %267 = memref.load %arg2[%c36] : memref<64xf32, #tpu.memory_space<smem>>
    %c0_193 = arith.constant 0 : index
    %c4_194 = arith.constant 4 : index
    %c0_195 = arith.constant 0 : index
    %c0_196 = arith.constant 0 : index
    %268 = vector.load %arg4[%c0_193, %c4_194, %c0_195, %c0_196] : memref<1x8x16x128xf32, #tpu.memory_space<vmem>>, vector<1x1x16x128xf32>
    %269 = vector.shape_cast %268 : vector<1x1x16x128xf32> to vector<16x128xf32>
    %270 = vector.broadcast %267 : f32 to vector<16x128xf32>
    %271 = arith.mulf %270, %269 : vector<16x128xf32>
    %272 = arith.addf %266, %271 : vector<16x128xf32>
    %c37 = arith.constant 37 : index
    %273 = memref.load %arg2[%c37] : memref<64xf32, #tpu.memory_space<smem>>
    %c0_197 = arith.constant 0 : index
    %c5_198 = arith.constant 5 : index
    %c0_199 = arith.constant 0 : index
    %c0_200 = arith.constant 0 : index
    %274 = vector.load %arg4[%c0_197, %c5_198, %c0_199, %c0_200] : memref<1x8x16x128xf32, #tpu.memory_space<vmem>>, vector<1x1x16x128xf32>
    %275 = vector.shape_cast %274 : vector<1x1x16x128xf32> to vector<16x128xf32>
    %276 = vector.broadcast %273 : f32 to vector<16x128xf32>
    %277 = arith.mulf %276, %275 : vector<16x128xf32>
    %278 = arith.addf %272, %277 : vector<16x128xf32>
    %c38 = arith.constant 38 : index
    %279 = memref.load %arg2[%c38] : memref<64xf32, #tpu.memory_space<smem>>
    %c0_201 = arith.constant 0 : index
    %c6_202 = arith.constant 6 : index
    %c0_203 = arith.constant 0 : index
    %c0_204 = arith.constant 0 : index
    %280 = vector.load %arg4[%c0_201, %c6_202, %c0_203, %c0_204] : memref<1x8x16x128xf32, #tpu.memory_space<vmem>>, vector<1x1x16x128xf32>
    %281 = vector.shape_cast %280 : vector<1x1x16x128xf32> to vector<16x128xf32>
    %282 = vector.broadcast %279 : f32 to vector<16x128xf32>
    %283 = arith.mulf %282, %281 : vector<16x128xf32>
    %284 = arith.addf %278, %283 : vector<16x128xf32>
    %c39 = arith.constant 39 : index
    %285 = memref.load %arg2[%c39] : memref<64xf32, #tpu.memory_space<smem>>
    %c0_205 = arith.constant 0 : index
    %c7_206 = arith.constant 7 : index
    %c0_207 = arith.constant 0 : index
    %c0_208 = arith.constant 0 : index
    %286 = vector.load %arg4[%c0_205, %c7_206, %c0_207, %c0_208] : memref<1x8x16x128xf32, #tpu.memory_space<vmem>>, vector<1x1x16x128xf32>
    %287 = vector.shape_cast %286 : vector<1x1x16x128xf32> to vector<16x128xf32>
    %288 = vector.broadcast %285 : f32 to vector<16x128xf32>
    %289 = arith.mulf %288, %287 : vector<16x128xf32>
    %290 = arith.addf %284, %289 : vector<16x128xf32>
    %c4_209 = arith.constant 4 : index
    %291 = memref.load %arg3[%c4_209] : memref<8xf32, #tpu.memory_space<smem>>
    %cst_210 = arith.constant 0.000000e+00 : f32
    %292 = vector.broadcast %cst_210 : f32 to vector<16x128xf32>
    %293 = arith.cmpf oge, %290, %292 : vector<16x128xf32>
    %294 = vector.broadcast %291 : f32 to vector<16x128xf32>
    %295 = arith.mulf %294, %290 : vector<16x128xf32>
    %296 = arith.select %293, %290, %295 : vector<16x128xi1>, vector<16x128xf32>
    %cst_211 = arith.constant dense<0.000000e+00> : vector<16x128xf32>
    %297 = tpu.matmul %296, %0, %cst_211 {dimension_numbers = #tpu.dot_dimension_numbers<[1], [0], [0], [1], [0, 0, 1, 1], [], []>, precision = #tpu.contract_precision<fp32>} : vector<16x128xf32>, vector<128x128xf32>, vector<16x128xf32> -> vector<16x128xf32>
    %c0_212 = arith.constant 0 : index
    %c4_213 = arith.constant 4 : index
    %c0_214 = arith.constant 0 : index
    %c0_215 = arith.constant 0 : index
    %298 = vector.load %arg6[%c0_212, %c4_213, %c0_214, %c0_215] : memref<1x8x16x128xf32, #tpu.memory_space<vmem>>, vector<1x1x16x128xf32>
    %299 = vector.shape_cast %298 : vector<1x1x16x128xf32> to vector<16x128xf32>
    %300 = vector.shape_cast %297 : vector<16x128xf32> to vector<1x1x16x128xf32>
    tpu.vector_store %arg6[%c0_212, %c4_213, %c0_214, %c0_215], %300 {strides = array<i32>} : memref<1x8x16x128xf32, #tpu.memory_space<vmem>>, vector<1x1x16x128xf32>,
    %c0_216 = arith.constant 0 : index
    %c5_217 = arith.constant 5 : index
    %c0_218 = arith.constant 0 : index
    %c0_219 = arith.constant 0 : index
    %301 = vector.load %arg4[%c0_216, %c5_217, %c0_218, %c0_219] : memref<1x8x16x128xf32, #tpu.memory_space<vmem>>, vector<1x1x16x128xf32>
    %302 = vector.shape_cast %301 : vector<1x1x16x128xf32> to vector<16x128xf32>
    %c40 = arith.constant 40 : index
    %303 = memref.load %arg2[%c40] : memref<64xf32, #tpu.memory_space<smem>>
    %c0_220 = arith.constant 0 : index
    %c0_221 = arith.constant 0 : index
    %c0_222 = arith.constant 0 : index
    %c0_223 = arith.constant 0 : index
    %304 = vector.load %arg4[%c0_220, %c0_221, %c0_222, %c0_223] : memref<1x8x16x128xf32, #tpu.memory_space<vmem>>, vector<1x1x16x128xf32>
    %305 = vector.shape_cast %304 : vector<1x1x16x128xf32> to vector<16x128xf32>
    %306 = vector.broadcast %303 : f32 to vector<16x128xf32>
    %307 = arith.mulf %306, %305 : vector<16x128xf32>
    %308 = arith.addf %302, %307 : vector<16x128xf32>
    %c41 = arith.constant 41 : index
    %309 = memref.load %arg2[%c41] : memref<64xf32, #tpu.memory_space<smem>>
    %c0_224 = arith.constant 0 : index
    %c1_225 = arith.constant 1 : index
    %c0_226 = arith.constant 0 : index
    %c0_227 = arith.constant 0 : index
    %310 = vector.load %arg4[%c0_224, %c1_225, %c0_226, %c0_227] : memref<1x8x16x128xf32, #tpu.memory_space<vmem>>, vector<1x1x16x128xf32>
    %311 = vector.shape_cast %310 : vector<1x1x16x128xf32> to vector<16x128xf32>
    %312 = vector.broadcast %309 : f32 to vector<16x128xf32>
    %313 = arith.mulf %312, %311 : vector<16x128xf32>
    %314 = arith.addf %308, %313 : vector<16x128xf32>
    %c42 = arith.constant 42 : index
    %315 = memref.load %arg2[%c42] : memref<64xf32, #tpu.memory_space<smem>>
    %c0_228 = arith.constant 0 : index
    %c2_229 = arith.constant 2 : index
    %c0_230 = arith.constant 0 : index
    %c0_231 = arith.constant 0 : index
    %316 = vector.load %arg4[%c0_228, %c2_229, %c0_230, %c0_231] : memref<1x8x16x128xf32, #tpu.memory_space<vmem>>, vector<1x1x16x128xf32>
    %317 = vector.shape_cast %316 : vector<1x1x16x128xf32> to vector<16x128xf32>
    %318 = vector.broadcast %315 : f32 to vector<16x128xf32>
    %319 = arith.mulf %318, %317 : vector<16x128xf32>
    %320 = arith.addf %314, %319 : vector<16x128xf32>
    %c43 = arith.constant 43 : index
    %321 = memref.load %arg2[%c43] : memref<64xf32, #tpu.memory_space<smem>>
    %c0_232 = arith.constant 0 : index
    %c3_233 = arith.constant 3 : index
    %c0_234 = arith.constant 0 : index
    %c0_235 = arith.constant 0 : index
    %322 = vector.load %arg4[%c0_232, %c3_233, %c0_234, %c0_235] : memref<1x8x16x128xf32, #tpu.memory_space<vmem>>, vector<1x1x16x128xf32>
    %323 = vector.shape_cast %322 : vector<1x1x16x128xf32> to vector<16x128xf32>
    %324 = vector.broadcast %321 : f32 to vector<16x128xf32>
    %325 = arith.mulf %324, %323 : vector<16x128xf32>
    %326 = arith.addf %320, %325 : vector<16x128xf32>
    %c44 = arith.constant 44 : index
    %327 = memref.load %arg2[%c44] : memref<64xf32, #tpu.memory_space<smem>>
    %c0_236 = arith.constant 0 : index
    %c4_237 = arith.constant 4 : index
    %c0_238 = arith.constant 0 : index
    %c0_239 = arith.constant 0 : index
    %328 = vector.load %arg4[%c0_236, %c4_237, %c0_238, %c0_239] : memref<1x8x16x128xf32, #tpu.memory_space<vmem>>, vector<1x1x16x128xf32>
    %329 = vector.shape_cast %328 : vector<1x1x16x128xf32> to vector<16x128xf32>
    %330 = vector.broadcast %327 : f32 to vector<16x128xf32>
    %331 = arith.mulf %330, %329 : vector<16x128xf32>
    %332 = arith.addf %326, %331 : vector<16x128xf32>
    %c45 = arith.constant 45 : index
    %333 = memref.load %arg2[%c45] : memref<64xf32, #tpu.memory_space<smem>>
    %c0_240 = arith.constant 0 : index
    %c5_241 = arith.constant 5 : index
    %c0_242 = arith.constant 0 : index
    %c0_243 = arith.constant 0 : index
    %334 = vector.load %arg4[%c0_240, %c5_241, %c0_242, %c0_243] : memref<1x8x16x128xf32, #tpu.memory_space<vmem>>, vector<1x1x16x128xf32>
    %335 = vector.shape_cast %334 : vector<1x1x16x128xf32> to vector<16x128xf32>
    %336 = vector.broadcast %333 : f32 to vector<16x128xf32>
    %337 = arith.mulf %336, %335 : vector<16x128xf32>
    %338 = arith.addf %332, %337 : vector<16x128xf32>
    %c46 = arith.constant 46 : index
    %339 = memref.load %arg2[%c46] : memref<64xf32, #tpu.memory_space<smem>>
    %c0_244 = arith.constant 0 : index
    %c6_245 = arith.constant 6 : index
    %c0_246 = arith.constant 0 : index
    %c0_247 = arith.constant 0 : index
    %340 = vector.load %arg4[%c0_244, %c6_245, %c0_246, %c0_247] : memref<1x8x16x128xf32, #tpu.memory_space<vmem>>, vector<1x1x16x128xf32>
    %341 = vector.shape_cast %340 : vector<1x1x16x128xf32> to vector<16x128xf32>
    %342 = vector.broadcast %339 : f32 to vector<16x128xf32>
    %343 = arith.mulf %342, %341 : vector<16x128xf32>
    %344 = arith.addf %338, %343 : vector<16x128xf32>
    %c47 = arith.constant 47 : index
    %345 = memref.load %arg2[%c47] : memref<64xf32, #tpu.memory_space<smem>>
    %c0_248 = arith.constant 0 : index
    %c7_249 = arith.constant 7 : index
    %c0_250 = arith.constant 0 : index
    %c0_251 = arith.constant 0 : index
    %346 = vector.load %arg4[%c0_248, %c7_249, %c0_250, %c0_251] : memref<1x8x16x128xf32, #tpu.memory_space<vmem>>, vector<1x1x16x128xf32>
    %347 = vector.shape_cast %346 : vector<1x1x16x128xf32> to vector<16x128xf32>
    %348 = vector.broadcast %345 : f32 to vector<16x128xf32>
    %349 = arith.mulf %348, %347 : vector<16x128xf32>
    %350 = arith.addf %344, %349 : vector<16x128xf32>
    %c5_252 = arith.constant 5 : index
    %351 = memref.load %arg3[%c5_252] : memref<8xf32, #tpu.memory_space<smem>>
    %cst_253 = arith.constant 0.000000e+00 : f32
    %352 = vector.broadcast %cst_253 : f32 to vector<16x128xf32>
    %353 = arith.cmpf oge, %350, %352 : vector<16x128xf32>
    %354 = vector.broadcast %351 : f32 to vector<16x128xf32>
    %355 = arith.mulf %354, %350 : vector<16x128xf32>
    %356 = arith.select %353, %350, %355 : vector<16x128xi1>, vector<16x128xf32>
    %cst_254 = arith.constant dense<0.000000e+00> : vector<16x128xf32>
    %357 = tpu.matmul %356, %0, %cst_254 {dimension_numbers = #tpu.dot_dimension_numbers<[1], [0], [0], [1], [0, 0, 1, 1], [], []>, precision = #tpu.contract_precision<fp32>} : vector<16x128xf32>, vector<128x128xf32>, vector<16x128xf32> -> vector<16x128xf32>
    %c0_255 = arith.constant 0 : index
    %c5_256 = arith.constant 5 : index
    %c0_257 = arith.constant 0 : index
    %c0_258 = arith.constant 0 : index
    %358 = vector.load %arg6[%c0_255, %c5_256, %c0_257, %c0_258] : memref<1x8x16x128xf32, #tpu.memory_space<vmem>>, vector<1x1x16x128xf32>
    %359 = vector.shape_cast %358 : vector<1x1x16x128xf32> to vector<16x128xf32>
    %360 = vector.shape_cast %357 : vector<16x128xf32> to vector<1x1x16x128xf32>
    tpu.vector_store %arg6[%c0_255, %c5_256, %c0_257, %c0_258], %360 {strides = array<i32>} : memref<1x8x16x128xf32, #tpu.memory_space<vmem>>, vector<1x1x16x128xf32>,
    %c0_259 = arith.constant 0 : index
    %c6_260 = arith.constant 6 : index
    %c0_261 = arith.constant 0 : index
    %c0_262 = arith.constant 0 : index
    %361 = vector.load %arg4[%c0_259, %c6_260, %c0_261, %c0_262] : memref<1x8x16x128xf32, #tpu.memory_space<vmem>>, vector<1x1x16x128xf32>
    %362 = vector.shape_cast %361 : vector<1x1x16x128xf32> to vector<16x128xf32>
    %c48 = arith.constant 48 : index
    %363 = memref.load %arg2[%c48] : memref<64xf32, #tpu.memory_space<smem>>
    %c0_263 = arith.constant 0 : index
    %c0_264 = arith.constant 0 : index
    %c0_265 = arith.constant 0 : index
    %c0_266 = arith.constant 0 : index
    %364 = vector.load %arg4[%c0_263, %c0_264, %c0_265, %c0_266] : memref<1x8x16x128xf32, #tpu.memory_space<vmem>>, vector<1x1x16x128xf32>
    %365 = vector.shape_cast %364 : vector<1x1x16x128xf32> to vector<16x128xf32>
    %366 = vector.broadcast %363 : f32 to vector<16x128xf32>
    %367 = arith.mulf %366, %365 : vector<16x128xf32>
    %368 = arith.addf %362, %367 : vector<16x128xf32>
    %c49 = arith.constant 49 : index
    %369 = memref.load %arg2[%c49] : memref<64xf32, #tpu.memory_space<smem>>
    %c0_267 = arith.constant 0 : index
    %c1_268 = arith.constant 1 : index
    %c0_269 = arith.constant 0 : index
    %c0_270 = arith.constant 0 : index
    %370 = vector.load %arg4[%c0_267, %c1_268, %c0_269, %c0_270] : memref<1x8x16x128xf32, #tpu.memory_space<vmem>>, vector<1x1x16x128xf32>
    %371 = vector.shape_cast %370 : vector<1x1x16x128xf32> to vector<16x128xf32>
    %372 = vector.broadcast %369 : f32 to vector<16x128xf32>
    %373 = arith.mulf %372, %371 : vector<16x128xf32>
    %374 = arith.addf %368, %373 : vector<16x128xf32>
    %c50 = arith.constant 50 : index
    %375 = memref.load %arg2[%c50] : memref<64xf32, #tpu.memory_space<smem>>
    %c0_271 = arith.constant 0 : index
    %c2_272 = arith.constant 2 : index
    %c0_273 = arith.constant 0 : index
    %c0_274 = arith.constant 0 : index
    %376 = vector.load %arg4[%c0_271, %c2_272, %c0_273, %c0_274] : memref<1x8x16x128xf32, #tpu.memory_space<vmem>>, vector<1x1x16x128xf32>
    %377 = vector.shape_cast %376 : vector<1x1x16x128xf32> to vector<16x128xf32>
    %378 = vector.broadcast %375 : f32 to vector<16x128xf32>
    %379 = arith.mulf %378, %377 : vector<16x128xf32>
    %380 = arith.addf %374, %379 : vector<16x128xf32>
    %c51 = arith.constant 51 : index
    %381 = memref.load %arg2[%c51] : memref<64xf32, #tpu.memory_space<smem>>
    %c0_275 = arith.constant 0 : index
    %c3_276 = arith.constant 3 : index
    %c0_277 = arith.constant 0 : index
    %c0_278 = arith.constant 0 : index
    %382 = vector.load %arg4[%c0_275, %c3_276, %c0_277, %c0_278] : memref<1x8x16x128xf32, #tpu.memory_space<vmem>>, vector<1x1x16x128xf32>
    %383 = vector.shape_cast %382 : vector<1x1x16x128xf32> to vector<16x128xf32>
    %384 = vector.broadcast %381 : f32 to vector<16x128xf32>
    %385 = arith.mulf %384, %383 : vector<16x128xf32>
    %386 = arith.addf %380, %385 : vector<16x128xf32>
    %c52 = arith.constant 52 : index
    %387 = memref.load %arg2[%c52] : memref<64xf32, #tpu.memory_space<smem>>
    %c0_279 = arith.constant 0 : index
    %c4_280 = arith.constant 4 : index
    %c0_281 = arith.constant 0 : index
    %c0_282 = arith.constant 0 : index
    %388 = vector.load %arg4[%c0_279, %c4_280, %c0_281, %c0_282] : memref<1x8x16x128xf32, #tpu.memory_space<vmem>>, vector<1x1x16x128xf32>
    %389 = vector.shape_cast %388 : vector<1x1x16x128xf32> to vector<16x128xf32>
    %390 = vector.broadcast %387 : f32 to vector<16x128xf32>
    %391 = arith.mulf %390, %389 : vector<16x128xf32>
    %392 = arith.addf %386, %391 : vector<16x128xf32>
    %c53 = arith.constant 53 : index
    %393 = memref.load %arg2[%c53] : memref<64xf32, #tpu.memory_space<smem>>
    %c0_283 = arith.constant 0 : index
    %c5_284 = arith.constant 5 : index
    %c0_285 = arith.constant 0 : index
    %c0_286 = arith.constant 0 : index
    %394 = vector.load %arg4[%c0_283, %c5_284, %c0_285, %c0_286] : memref<1x8x16x128xf32, #tpu.memory_space<vmem>>, vector<1x1x16x128xf32>
    %395 = vector.shape_cast %394 : vector<1x1x16x128xf32> to vector<16x128xf32>
    %396 = vector.broadcast %393 : f32 to vector<16x128xf32>
    %397 = arith.mulf %396, %395 : vector<16x128xf32>
    %398 = arith.addf %392, %397 : vector<16x128xf32>
    %c54 = arith.constant 54 : index
    %399 = memref.load %arg2[%c54] : memref<64xf32, #tpu.memory_space<smem>>
    %c0_287 = arith.constant 0 : index
    %c6_288 = arith.constant 6 : index
    %c0_289 = arith.constant 0 : index
    %c0_290 = arith.constant 0 : index
    %400 = vector.load %arg4[%c0_287, %c6_288, %c0_289, %c0_290] : memref<1x8x16x128xf32, #tpu.memory_space<vmem>>, vector<1x1x16x128xf32>
    %401 = vector.shape_cast %400 : vector<1x1x16x128xf32> to vector<16x128xf32>
    %402 = vector.broadcast %399 : f32 to vector<16x128xf32>
    %403 = arith.mulf %402, %401 : vector<16x128xf32>
    %404 = arith.addf %398, %403 : vector<16x128xf32>
    %c55 = arith.constant 55 : index
    %405 = memref.load %arg2[%c55] : memref<64xf32, #tpu.memory_space<smem>>
    %c0_291 = arith.constant 0 : index
    %c7_292 = arith.constant 7 : index
    %c0_293 = arith.constant 0 : index
    %c0_294 = arith.constant 0 : index
    %406 = vector.load %arg4[%c0_291, %c7_292, %c0_293, %c0_294] : memref<1x8x16x128xf32, #tpu.memory_space<vmem>>, vector<1x1x16x128xf32>
    %407 = vector.shape_cast %406 : vector<1x1x16x128xf32> to vector<16x128xf32>
    %408 = vector.broadcast %405 : f32 to vector<16x128xf32>
    %409 = arith.mulf %408, %407 : vector<16x128xf32>
    %410 = arith.addf %404, %409 : vector<16x128xf32>
    %c6_295 = arith.constant 6 : index
    %411 = memref.load %arg3[%c6_295] : memref<8xf32, #tpu.memory_space<smem>>
    %cst_296 = arith.constant 0.000000e+00 : f32
    %412 = vector.broadcast %cst_296 : f32 to vector<16x128xf32>
    %413 = arith.cmpf oge, %410, %412 : vector<16x128xf32>
    %414 = vector.broadcast %411 : f32 to vector<16x128xf32>
    %415 = arith.mulf %414, %410 : vector<16x128xf32>
    %416 = arith.select %413, %410, %415 : vector<16x128xi1>, vector<16x128xf32>
    %cst_297 = arith.constant dense<0.000000e+00> : vector<16x128xf32>
    %417 = tpu.matmul %416, %0, %cst_297 {dimension_numbers = #tpu.dot_dimension_numbers<[1], [0], [0], [1], [0, 0, 1, 1], [], []>, precision = #tpu.contract_precision<fp32>} : vector<16x128xf32>, vector<128x128xf32>, vector<16x128xf32> -> vector<16x128xf32>
    %c0_298 = arith.constant 0 : index
    %c6_299 = arith.constant 6 : index
    %c0_300 = arith.constant 0 : index
    %c0_301 = arith.constant 0 : index
    %418 = vector.load %arg6[%c0_298, %c6_299, %c0_300, %c0_301] : memref<1x8x16x128xf32, #tpu.memory_space<vmem>>, vector<1x1x16x128xf32>
    %419 = vector.shape_cast %418 : vector<1x1x16x128xf32> to vector<16x128xf32>
    %420 = vector.shape_cast %417 : vector<16x128xf32> to vector<1x1x16x128xf32>
    tpu.vector_store %arg6[%c0_298, %c6_299, %c0_300, %c0_301], %420 {strides = array<i32>} : memref<1x8x16x128xf32, #tpu.memory_space<vmem>>, vector<1x1x16x128xf32>,
    %c0_302 = arith.constant 0 : index
    %c7_303 = arith.constant 7 : index
    %c0_304 = arith.constant 0 : index
    %c0_305 = arith.constant 0 : index
    %421 = vector.load %arg4[%c0_302, %c7_303, %c0_304, %c0_305] : memref<1x8x16x128xf32, #tpu.memory_space<vmem>>, vector<1x1x16x128xf32>
    %422 = vector.shape_cast %421 : vector<1x1x16x128xf32> to vector<16x128xf32>
    %c56 = arith.constant 56 : index
    %423 = memref.load %arg2[%c56] : memref<64xf32, #tpu.memory_space<smem>>
    %c0_306 = arith.constant 0 : index
    %c0_307 = arith.constant 0 : index
    %c0_308 = arith.constant 0 : index
    %c0_309 = arith.constant 0 : index
    %424 = vector.load %arg4[%c0_306, %c0_307, %c0_308, %c0_309] : memref<1x8x16x128xf32, #tpu.memory_space<vmem>>, vector<1x1x16x128xf32>
    %425 = vector.shape_cast %424 : vector<1x1x16x128xf32> to vector<16x128xf32>
    %426 = vector.broadcast %423 : f32 to vector<16x128xf32>
    %427 = arith.mulf %426, %425 : vector<16x128xf32>
    %428 = arith.addf %422, %427 : vector<16x128xf32>
    %c57 = arith.constant 57 : index
    %429 = memref.load %arg2[%c57] : memref<64xf32, #tpu.memory_space<smem>>
    %c0_310 = arith.constant 0 : index
    %c1_311 = arith.constant 1 : index
    %c0_312 = arith.constant 0 : index
    %c0_313 = arith.constant 0 : index
    %430 = vector.load %arg4[%c0_310, %c1_311, %c0_312, %c0_313] : memref<1x8x16x128xf32, #tpu.memory_space<vmem>>, vector<1x1x16x128xf32>
    %431 = vector.shape_cast %430 : vector<1x1x16x128xf32> to vector<16x128xf32>
    %432 = vector.broadcast %429 : f32 to vector<16x128xf32>
    %433 = arith.mulf %432, %431 : vector<16x128xf32>
    %434 = arith.addf %428, %433 : vector<16x128xf32>
    %c58 = arith.constant 58 : index
    %435 = memref.load %arg2[%c58] : memref<64xf32, #tpu.memory_space<smem>>
    %c0_314 = arith.constant 0 : index
    %c2_315 = arith.constant 2 : index
    %c0_316 = arith.constant 0 : index
    %c0_317 = arith.constant 0 : index
    %436 = vector.load %arg4[%c0_314, %c2_315, %c0_316, %c0_317] : memref<1x8x16x128xf32, #tpu.memory_space<vmem>>, vector<1x1x16x128xf32>
    %437 = vector.shape_cast %436 : vector<1x1x16x128xf32> to vector<16x128xf32>
    %438 = vector.broadcast %435 : f32 to vector<16x128xf32>
    %439 = arith.mulf %438, %437 : vector<16x128xf32>
    %440 = arith.addf %434, %439 : vector<16x128xf32>
    %c59 = arith.constant 59 : index
    %441 = memref.load %arg2[%c59] : memref<64xf32, #tpu.memory_space<smem>>
    %c0_318 = arith.constant 0 : index
    %c3_319 = arith.constant 3 : index
    %c0_320 = arith.constant 0 : index
    %c0_321 = arith.constant 0 : index
    %442 = vector.load %arg4[%c0_318, %c3_319, %c0_320, %c0_321] : memref<1x8x16x128xf32, #tpu.memory_space<vmem>>, vector<1x1x16x128xf32>
    %443 = vector.shape_cast %442 : vector<1x1x16x128xf32> to vector<16x128xf32>
    %444 = vector.broadcast %441 : f32 to vector<16x128xf32>
    %445 = arith.mulf %444, %443 : vector<16x128xf32>
    %446 = arith.addf %440, %445 : vector<16x128xf32>
    %c60 = arith.constant 60 : index
    %447 = memref.load %arg2[%c60] : memref<64xf32, #tpu.memory_space<smem>>
    %c0_322 = arith.constant 0 : index
    %c4_323 = arith.constant 4 : index
    %c0_324 = arith.constant 0 : index
    %c0_325 = arith.constant 0 : index
    %448 = vector.load %arg4[%c0_322, %c4_323, %c0_324, %c0_325] : memref<1x8x16x128xf32, #tpu.memory_space<vmem>>, vector<1x1x16x128xf32>
    %449 = vector.shape_cast %448 : vector<1x1x16x128xf32> to vector<16x128xf32>
    %450 = vector.broadcast %447 : f32 to vector<16x128xf32>
    %451 = arith.mulf %450, %449 : vector<16x128xf32>
    %452 = arith.addf %446, %451 : vector<16x128xf32>
    %c61 = arith.constant 61 : index
    %453 = memref.load %arg2[%c61] : memref<64xf32, #tpu.memory_space<smem>>
    %c0_326 = arith.constant 0 : index
    %c5_327 = arith.constant 5 : index
    %c0_328 = arith.constant 0 : index
    %c0_329 = arith.constant 0 : index
    %454 = vector.load %arg4[%c0_326, %c5_327, %c0_328, %c0_329] : memref<1x8x16x128xf32, #tpu.memory_space<vmem>>, vector<1x1x16x128xf32>
    %455 = vector.shape_cast %454 : vector<1x1x16x128xf32> to vector<16x128xf32>
    %456 = vector.broadcast %453 : f32 to vector<16x128xf32>
    %457 = arith.mulf %456, %455 : vector<16x128xf32>
    %458 = arith.addf %452, %457 : vector<16x128xf32>
    %c62 = arith.constant 62 : index
    %459 = memref.load %arg2[%c62] : memref<64xf32, #tpu.memory_space<smem>>
    %c0_330 = arith.constant 0 : index
    %c6_331 = arith.constant 6 : index
    %c0_332 = arith.constant 0 : index
    %c0_333 = arith.constant 0 : index
    %460 = vector.load %arg4[%c0_330, %c6_331, %c0_332, %c0_333] : memref<1x8x16x128xf32, #tpu.memory_space<vmem>>, vector<1x1x16x128xf32>
    %461 = vector.shape_cast %460 : vector<1x1x16x128xf32> to vector<16x128xf32>
    %462 = vector.broadcast %459 : f32 to vector<16x128xf32>
    %463 = arith.mulf %462, %461 : vector<16x128xf32>
    %464 = arith.addf %458, %463 : vector<16x128xf32>
    %c63 = arith.constant 63 : index
    %465 = memref.load %arg2[%c63] : memref<64xf32, #tpu.memory_space<smem>>
    %c0_334 = arith.constant 0 : index
    %c7_335 = arith.constant 7 : index
    %c0_336 = arith.constant 0 : index
    %c0_337 = arith.constant 0 : index
    %466 = vector.load %arg4[%c0_334, %c7_335, %c0_336, %c0_337] : memref<1x8x16x128xf32, #tpu.memory_space<vmem>>, vector<1x1x16x128xf32>
    %467 = vector.shape_cast %466 : vector<1x1x16x128xf32> to vector<16x128xf32>
    %468 = vector.broadcast %465 : f32 to vector<16x128xf32>
    %469 = arith.mulf %468, %467 : vector<16x128xf32>
    %470 = arith.addf %464, %469 : vector<16x128xf32>
    %c7_338 = arith.constant 7 : index
    %471 = memref.load %arg3[%c7_338] : memref<8xf32, #tpu.memory_space<smem>>
    %cst_339 = arith.constant 0.000000e+00 : f32
    %472 = vector.broadcast %cst_339 : f32 to vector<16x128xf32>
    %473 = arith.cmpf oge, %470, %472 : vector<16x128xf32>
    %474 = vector.broadcast %471 : f32 to vector<16x128xf32>
    %475 = arith.mulf %474, %470 : vector<16x128xf32>
    %476 = arith.select %473, %470, %475 : vector<16x128xi1>, vector<16x128xf32>
    %cst_340 = arith.constant dense<0.000000e+00> : vector<16x128xf32>
    %477 = tpu.matmul %476, %0, %cst_340 {dimension_numbers = #tpu.dot_dimension_numbers<[1], [0], [0], [1], [0, 0, 1, 1], [], []>, precision = #tpu.contract_precision<fp32>} : vector<16x128xf32>, vector<128x128xf32>, vector<16x128xf32> -> vector<16x128xf32>
    %c0_341 = arith.constant 0 : index
    %c7_342 = arith.constant 7 : index
    %c0_343 = arith.constant 0 : index
    %c0_344 = arith.constant 0 : index
    %478 = vector.load %arg6[%c0_341, %c7_342, %c0_343, %c0_344] : memref<1x8x16x128xf32, #tpu.memory_space<vmem>>, vector<1x1x16x128xf32>
    %479 = vector.shape_cast %478 : vector<1x1x16x128xf32> to vector<16x128xf32>
    %480 = vector.shape_cast %477 : vector<16x128xf32> to vector<1x1x16x128xf32>
    tpu.vector_store %arg6[%c0_341, %c7_342, %c0_343, %c0_344], %480 {strides = array<i32>} : memref<1x8x16x128xf32, #tpu.memory_space<vmem>>, vector<1x1x16x128xf32>,
    return
  }
  func.func @transform_0(%arg0: i32, %arg1: i32) -> i32 {
    %c0_i32 = arith.constant 0 : i32
    %c0_i32_0 = arith.constant 0 : i32
    return %c0_i32 : i32
  }
  func.func @transform_1(%arg0: i32, %arg1: i32) -> i32 {
    %c0_i32 = arith.constant 0 : i32
    %c0_i32_0 = arith.constant 0 : i32
    return %c0_i32 : i32
  }
  func.func @transform_2(%arg0: i32, %arg1: i32) -> (i32, i32, i32, i32) {
    %c0_i32 = arith.constant 0 : i32
    %c0_i32_0 = arith.constant 0 : i32
    %c0_i32_1 = arith.constant 0 : i32
    return %arg0, %c0_i32, %arg1, %c0_i32_0 : i32, i32, i32, i32
  }
  func.func @transform_3(%arg0: i32, %arg1: i32) -> (i32, i32) {
    %c0_i32 = arith.constant 0 : i32
    %c0_i32_0 = arith.constant 0 : i32
    %c0_i32_1 = arith.constant 0 : i32
    return %c0_i32, %c0_i32_0 : i32, i32
  }
  func.func @transform_4(%arg0: i32, %arg1: i32) -> (i32, i32, i32, i32) {
    %c0_i32 = arith.constant 0 : i32
    %c0_i32_0 = arith.constant 0 : i32
    %c0_i32_1 = arith.constant 0 : i32
    return %arg0, %c0_i32, %arg1, %c0_i32_0 : i32, i32, i32, i32
  }
}

</mosaic_0001>

<llo_original>
// kernel: gcn_forward.1
$region0: #{gcn_forward.1}
  #allocation0 [shape = 'u32[]', space=smem, size = 0x4, offset = 0x4, fixed_abs, tag = 'smem constant byte address 0x4 - core index']
  #allocation1 [shape = 'u32[144,128]{1,0:T(1,128)}', space=vmem, size = 0x12000, scoped, tag = 'internal scratch']
  %s0 = inlined_call_operand.vmem [shape: f32[64], index: 0, kind: input, shape index: {}]
  %s1 = inlined_call_operand.vmem [shape: f32[8], index: 1, kind: input, shape index: {}]
  %s2 = inlined_call_operand.vmem [shape: f32[2,8,16,128], index: 2, kind: input, shape index: {}]
  %s3 = inlined_call_operand.vmem [shape: f32[128,128], index: 3, kind: input, shape index: {}]
  %s4 = inlined_call_operand.hbm [shape: f32[2,8,16,128], index: 4, kind: output, shape index: {}]
  %s5 = sld [smem:[#allocation0]]
  $region57: #{gcn_forward.1} parent=0
    _
  %s7 = ssub.s32 1, %s5
  %s8 = scalar_select 0, %s7, %s5
  $region1: #{gcn_forward.1} parent=0
    #allocation2 [shape = 'u8[512]{0}', space=smem, size = 0x200, scoped, tag = 'input window, operand 0, single buffered']
    #allocation3 [shape = 's32[2]{0}', space=sflag, size = 0x8, scoped, tag = 'scoped memory for gcn_forward.1']
    #allocation4 [shape = 's32[2]{0}', space=sflag, size = 0x8, scoped, tag = 'scoped memory for gcn_forward.1']
    #allocation5 [shape = 'u8[512]{0}', space=smem, size = 0x200, scoped, tag = 'input window, operand 1, single buffered']
    #allocation6 [shape = 's32[1]{0}', space=sflag, size = 0x4, scoped, tag = 'scoped memory for gcn_forward.1']
    #allocation7 [shape = 'u8[131072]{0}', space=vmem, size = 0x20000, scoped, tag = 'output window, operand 0']
    %9 = vsyncpa [#allocation4], 0
    %10 = vsyncpa [#allocation6], 0
    %11 = vsyncpa [#allocation3], 0
    %s12 = scalar_lea.sflag [#allocation3], 1
    %13 = vsyncpa %s12, 0
    loop: start=0, step=1, limit=4
    $region2: #{gcn_forward.1} parent=1 // loop_pre_header
      _
    $region3: #{gcn_forward.1} parent=1 // loop_header
      %s15 = sphi 0, %s19
      %p16 = scmp.ge.s32.totalorder %s15, 4
      %s22 = sphi 0, %s34
      %s23 = sphi 0, %s30
      %s24 = sphi 0, %s22
      %s25 = sphi 0, %s23
      %s26 = sphi 0, %s24
      %s27 = sphi 0, %s25
      %s35 = sphi 0, %s35
      %s37 = sphi 0, %s35
      %s38 = sphi 0, %s37
      %s52 = sphi 0, %s38
      %s56 = sphi 0, %s56
      %s58 = sphi 0, %s56
      %s59 = sphi 0, %s58
      %s73 = sphi 0, %s59
      %s81 = sphi 0, %s83
      %s84 = sphi 0, %s81
      %s85 = sphi 0, %s84
      %s101 = sphi 0, %s85
      %s105 = sphi 0, %s105
      %s107 = sphi 0, %s105
      %s108 = sphi 0, %s107
      %s122 = sphi 0, %s108
      %s130 = sphi 0, %s132
      %s133 = sphi 0, %s130
      %s134 = sphi 0, %s133
      %s150 = sphi 0, %s134
    $region4: #{gcn_forward.1} parent=1 // loop_header_branch
      %18 = sbr.rel (%p16) target = $region8
    $region5: #{gcn_forward.1} parent=1 // loop_body
      %s20 = ssub.s32 %s15, 1
      %s21 = ssub.s32 %s15, 2
      %s28 = sadd.s32 1, %s23
      %p29 = scmp.ge.s32.totalorder %s28, 1
      %s30 = scalar_select %p29, 0, %s28
      %s31 = sadd.s32 1, %s22
      %s32 = scalar_select %p29, %s31, %s22
      %p33 = scmp.ge.s32.totalorder %s32, 2
      %s34 = scalar_select %p33, 0, %s32
      %s36 = sadd.s32 %s35, 1
      %p39 = scmp.eq.s32.totalorder %s15, 1
      %p40 = scmp.ne.s32.totalorder %s35, %s37
      %p41 = scmp.eq.s32.totalorder %s15, 0
      %p42 = por %p40, %p41
      %p43 = scmp.ne.s32.totalorder %s35, %s37
      %p44 = scmp.eq.s32.totalorder %s20, 1
      %p45 = por %p43, %p44
      %p46 = scmp.ne.s32.totalorder %s37, %s38
      %p47 = scmp.eq.s32.totalorder %s20, 0
      %p48 = por %p46, %p47
      %p49 = scmp.ne.s32.totalorder %s37, %s38
      %p50 = scmp.eq.s32.totalorder %s21, 1
      %p51 = por %p49, %p50
      %p53 = scmp.ne.s32.totalorder %s38, %s52
      %p54 = scmp.eq.s32.totalorder %s21, 0
      %p55 = por %p53, %p54
      %s57 = sadd.s32 %s56, 1
      %p60 = scmp.eq.s32.totalorder %s15, 1
      %p61 = scmp.ne.s32.totalorder %s56, %s58
      %p62 = scmp.eq.s32.totalorder %s15, 0
      %p63 = por %p61, %p62
      %p64 = scmp.ne.s32.totalorder %s56, %s58
      %p65 = scmp.eq.s32.totalorder %s20, 1
      %p66 = por %p64, %p65
      %p67 = scmp.ne.s32.totalorder %s58, %s59
      %p68 = scmp.eq.s32.totalorder %s20, 0
      %p69 = por %p67, %p68
      %p70 = scmp.ne.s32.totalorder %s58, %s59
      %p71 = scmp.eq.s32.totalorder %s21, 1
      %p72 = por %p70, %p71
      %p74 = scmp.ne.s32.totalorder %s59, %s73
      %p75 = scmp.eq.s32.totalorder %s21, 0
      %p76 = por %p74, %p75
      %s77 = ssub.s32 %s22, %s34
      %s78 = ssub.s32 %s23, %s30
      %s79 = sor.u32 %s77, %s78
      %p80 = scmp.eq.s32.totalorder %s79, 0
      %s82 = sadd.s32 %s81, 1
      %s83 = scalar_select %p80, %s81, %s82
      %p86 = pneg %p80
      %p87 = scmp.eq.s32.totalorder %s15, 1
      %p88 = por %p86, %p87
      %p89 = scmp.ne.s32.totalorder %s81, %s84
      %p90 = scmp.eq.s32.totalorder %s15, 0
      %p91 = por %p89, %p90
      %p92 = scmp.ne.s32.totalorder %s81, %s84
      %p93 = scmp.eq.s32.totalorder %s20, 1
      %p94 = por %p92, %p93
      %p95 = scmp.ne.s32.totalorder %s84, %s85
      %p96 = scmp.eq.s32.totalorder %s20, 0
      %p97 = por %p95, %p96
      %p98 = scmp.ne.s32.totalorder %s84, %s85
      %p99 = scmp.eq.s32.totalorder %s21, 1
      %p100 = por %p98, %p99
      %p102 = scmp.ne.s32.totalorder %s85, %s101
      %p103 = scmp.eq.s32.totalorder %s21, 0
      %p104 = por %p102, %p103
      %s106 = sadd.s32 %s105, 1
      %p109 = scmp.eq.s32.totalorder %s15, 1
      %p110 = scmp.ne.s32.totalorder %s105, %s107
      %p111 = scmp.eq.s32.totalorder %s15, 0
      %p112 = por %p110, %p111
      %p113 = scmp.ne.s32.totalorder %s105, %s107
      %p114 = scmp.eq.s32.totalorder %s20, 1
      %p115 = por %p113, %p114
      %p116 = scmp.ne.s32.totalorder %s107, %s108
      %p117 = scmp.eq.s32.totalorder %s20, 0
      %p118 = por %p116, %p117
      %p119 = scmp.ne.s32.totalorder %s107, %s108
      %p120 = scmp.eq.s32.totalorder %s21, 1
      %p121 = por %p119, %p120
      %p123 = scmp.ne.s32.totalorder %s108, %s122
      %p124 = scmp.eq.s32.totalorder %s21, 0
      %p125 = por %p123, %p124
      %s126 = ssub.s32 %s22, %s34
      %s127 = ssub.s32 %s23, %s30
      %s128 = sor.u32 %s126, %s127
      %p129 = scmp.eq.s32.totalorder %s128, 0
      %s131 = sadd.s32 %s130, 1
      %s132 = scalar_select %p129, %s130, %s131
      %p135 = pneg %p129
      %p136 = scmp.eq.s32.totalorder %s15, 1
      %p137 = por %p135, %p136
      %p138 = scmp.ne.s32.totalorder %s130, %s133
      %p139 = scmp.eq.s32.totalorder %s15, 0
      %p140 = por %p138, %p139
      %p141 = scmp.ne.s32.totalorder %s130, %s133
      %p142 = scmp.eq.s32.totalorder %s20, 1
      %p143 = por %p141, %p142
      %p144 = scmp.ne.s32.totalorder %s133, %s134
      %p145 = scmp.eq.s32.totalorder %s20, 0
      %p146 = por %p144, %p145
      %p147 = scmp.ne.s32.totalorder %s133, %s134
      %p148 = scmp.eq.s32.totalorder %s21, 1
      %p149 = por %p147, %p148
      %p151 = scmp.ne.s32.totalorder %s134, %s150
      %p152 = scmp.eq.s32.totalorder %s21, 0
      %p153 = por %p151, %p152
      %p154 = scmp.le.s32.totalorder 1, %s15
      %p155 = scmp.lt.s32.totalorder %s15, 3
      %p156 = pnand %p154, %p155
      %p157 = pneg %p156
      // Predicated region
      $region9: #{gcn_forward.1} parent=5 // pred_check
        _
      $region10: #{gcn_forward.1} parent=5 // pred_check_branch
        %159 = sbr.rel (%p156) target = $region12
      $region11: #{gcn_forward.1} parent=5 // pred_region
        %s160 = ssub.s32 %s15, 1
        // Predicated region
        $region13: #{gcn_forward.1} parent=11 // pred_check
          %p161 = pneg %p48
        $region14: #{gcn_forward.1} parent=11 // pred_check_branch
          %163 = sbr.rel (%p161) target = $region16
        $region15: #{gcn_forward.1} parent=11 // pred_region
          %s165 = ssub.s32 16, 16
          %166 = vsyncadd [#allocation4], %s165
          %s168 = sshll.u32 %s0, 4
          %s169 = int_to_ptr.vmem [resolvable:$true] %s168
          %171 = dma.vmem_to_smem %s169, 16, [#allocation2], [#allocation4]
        $region16: #{gcn_forward.1} parent=11 // pred_fallthru
          _
        // Predicated region
        $region17: #{gcn_forward.1} parent=11 // pred_check
          %p172 = pneg %p69
        $region18: #{gcn_forward.1} parent=11 // pred_check_branch
          %174 = sbr.rel (%p172) target = $region20
        $region19: #{gcn_forward.1} parent=11 // pred_region
          %s176 = ssub.s32 16, 16
          %177 = vsyncadd [#allocation6], %s176
          %s179 = sshll.u32 %s1, 4
          %s180 = int_to_ptr.vmem [resolvable:$true] %s179
          %182 = dma.vmem_to_smem %s180, 16, [#allocation5], [#allocation6]
        $region20: #{gcn_forward.1} parent=11 // pred_fallthru
          _
        // Predicated region
        $region21: #{gcn_forward.1} parent=11 // pred_check
          %p183 = pneg %p118
        $region22: #{gcn_forward.1} parent=11 // pred_check_branch
          %185 = sbr.rel (%p183) target = $region24
        $region23: #{gcn_forward.1} parent=11 // pred_region
          _
        $region24: #{gcn_forward.1} parent=11 // pred_fallthru
          _
      $region12: #{gcn_forward.1} parent=5 // pred_fallthru
        _
      %p186 = scmp.lt.s32.totalorder %s15, 2
      // Predicated region
      $region25: #{gcn_forward.1} parent=5 // pred_check
        %p187 = pneg %p186
      $region26: #{gcn_forward.1} parent=5 // pred_check_branch
        %189 = sbr.rel (%p187) target = $region28
      $region27: #{gcn_forward.1} parent=5 // pred_region
        // Predicated region
        $region29: #{gcn_forward.1} parent=27 // pred_check
          %p190 = pneg %p91
        $region30: #{gcn_forward.1} parent=27 // pred_check_branch
          %192 = sbr.rel (%p190) target = $region32
        $region31: #{gcn_forward.1} parent=27 // pred_region
          %s193 = smul.u32 2, %s23
          %p194 = scmp.lt.s32.totalorder %s22, 1
          %s195 = scalar_select %p194, %s22, 1
          %p196 = scmp.lt.s32.totalorder %s193, 1
          %s197 = scalar_select %p196, %s193, 1
          %s198 = smul.addr %s195, 16
          %s199 = sadd.s32 %s197, %s198
          %s200 = smul.addr %s199, 8
          %s201 = scalar_lea.vmem %s2, %s200
          %s202 = smul.u32 2, %s23
        $region32: #{gcn_forward.1} parent=27 // pred_fallthru
          _
      $region28: #{gcn_forward.1} parent=5 // pred_fallthru
        _
      %p203 = scmp.le.s32.totalorder 1, %s15
      %p204 = scmp.lt.s32.totalorder %s15, 3
      %p205 = pnand %p203, %p204
      %p206 = pneg %p205
      // Predicated region
      $region33: #{gcn_forward.1} parent=5 // pred_check
        _
      $region34: #{gcn_forward.1} parent=5 // pred_check_branch
        %208 = sbr.rel (%p205) target = $region36
      $region35: #{gcn_forward.1} parent=5 // pred_region
        %s209 = ssub.s32 %s15, 1
        // Predicated region
        $region37: #{gcn_forward.1} parent=35 // pred_check
          %p210 = pneg %p48
        $region38: #{gcn_forward.1} parent=35 // pred_check_branch
          %212 = sbr.rel (%p210) target = $region40
        $region39: #{gcn_forward.1} parent=35 // pred_region
          %213 = dma.done [#allocation4], 16
        $region40: #{gcn_forward.1} parent=35 // pred_fallthru
          _
        // Predicated region
        $region41: #{gcn_forward.1} parent=35 // pred_check
          %p214 = pneg %p69
        $region42: #{gcn_forward.1} parent=35 // pred_check_branch
          %216 = sbr.rel (%p214) target = $region44
        $region43: #{gcn_forward.1} parent=35 // pred_region
          %217 = dma.done [#allocation6], 16
        $region44: #{gcn_forward.1} parent=35 // pred_fallthru
          _
        %218 = sfence
        %p219 = pneg %p48
        %p220 = pneg %p45
        %p221 = pneg %p69
        %p222 = pneg %p66
        %s223 = smul.u32 2, %s25
        %p224 = scmp.lt.s32.totalorder %s24, 1
        %s225 = scalar_select %p224, %s24, 1
        %p226 = scmp.lt.s32.totalorder %s223, 1
        %s227 = scalar_select %p226, %s223, 1
        %s228 = smul.addr %s225, 16
        %s229 = sadd.s32 %s227, %s228
        %s230 = smul.addr %s229, 8
        %s231 = scalar_lea.vmem %s2, %s230
        %p232 = pneg %p97
        %p233 = pneg %p94
        %p234 = pneg %p118
        %p235 = pneg %p115
        %p236 = pneg %p146
        %p237 = pneg %p143
        %s238 = sand.u32 %s133, 1
        %s239 = scalar_lea.sflag [#allocation3], %s238
        %s240 = sand.u32 %s133, 1
        %s241 = smul.addr %s240, 128
        %s242 = scalar_lea.vmem [#allocation7], %s241
        %s243 = smul.u32 2, %s25
        %p244 = scmp.lt.s32.totalorder %s24, 1
        %s245 = scalar_select %p244, %s24, 1
        %p246 = scmp.lt.s32.totalorder %s243, 1
        %s247 = scalar_select %p246, %s243, 1
        %s248 = smul.addr %s245, 16
        %s249 = sadd.s32 %s247, %s248
        %s250 = smul.addr %s249, 8
        %s251 = scalar_lea.vmem %s2, %s250
        %s252 = smul.u32 2, %s25
        %s253 = smul.u32 2, %s25
        %v254 = vld [vmem:[%s3] sm:$0xff]
        %v255 = vld [vmem:[%s3 + $0x8] sm:$0xff]
        %v256 = vld [vmem:[%s3 + $0x10] sm:$0xff]
        %v257 = vld [vmem:[%s3 + $0x18] sm:$0xff]
        %v258 = vld [vmem:[%s3 + $0x20] sm:$0xff]
        %v259 = vld [vmem:[%s3 + $0x28] sm:$0xff]
        %v260 = vld [vmem:[%s3 + $0x30] sm:$0xff]
        %v261 = vld [vmem:[%s3 + $0x38] sm:$0xff]
        %v262 = vld [vmem:[%s3 + $0x40] sm:$0xff]
        %v263 = vld [vmem:[%s3 + $0x48] sm:$0xff]
        %v264 = vld [vmem:[%s3 + $0x50] sm:$0xff]
        %v265 = vld [vmem:[%s3 + $0x58] sm:$0xff]
        %v266 = vld [vmem:[%s3 + $0x60] sm:$0xff]
        %v267 = vld [vmem:[%s3 + $0x68] sm:$0xff]
        %v268 = vld [vmem:[%s3 + $0x70] sm:$0xff]
        %v269 = vld [vmem:[%s3 + $0x78] sm:$0xff]
        %v270 = vld [vmem:[%s251] sm:$0xff]
        %v271 = vld [vmem:[%s251 + $0x8] sm:$0xff]
        %s272 = sld [smem:[#allocation2]]
        %v273 = vstv %s272
        %v274 = vmul.f32 %v273, %v270
        %v275 = vmul.f32 %v273, %v271
        %v276 = vadd.f32 %v270, %v274
        %v277 = vadd.f32 %v271, %v275
        %s278 = sld [smem:[#allocation2 + $0x1]]
        %s279 = scalar_lea.vmem %s251, 16
        %v280 = vld [vmem:[%s279] sm:$0xff]
        %v281 = vld [vmem:[%s279 + $0x8] sm:$0xff]
        %v282 = vstv %s278
        %v283 = vmul.f32 %v282, %v280
        %v284 = vmul.f32 %v282, %v281
        %v285 = vadd.f32 %v276, %v283
        %v286 = vadd.f32 %v277, %v284
        %s287 = sld [smem:[#allocation2 + $0x2]]
        %s288 = scalar_lea.vmem %s251, 32
        %v289 = vld [vmem:[%s288] sm:$0xff]
        %v290 = vld [vmem:[%s288 + $0x8] sm:$0xff]
        %v291 = vstv %s287
        %v292 = vmul.f32 %v291, %v289
        %v293 = vmul.f32 %v291, %v290
        %v294 = vadd.f32 %v285, %v292
        %v295 = vadd.f32 %v286, %v293
        %s296 = sld [smem:[#allocation2 + $0x3]]
        %s297 = scalar_lea.vmem %s251, 48
        %v298 = vld [vmem:[%s297] sm:$0xff]
        %v299 = vld [vmem:[%s297 + $0x8] sm:$0xff]
        %v300 = vstv %s296
        %v301 = vmul.f32 %v300, %v298
        %v302 = vmul.f32 %v300, %v299
        %v303 = vadd.f32 %v294, %v301
        %v304 = vadd.f32 %v295, %v302
        %s305 = sld [smem:[#allocation2 + $0x4]]
        %s306 = scalar_lea.vmem %s251, 64
        %v307 = vld [vmem:[%s306] sm:$0xff]
        %v308 = vld [vmem:[%s306 + $0x8] sm:$0xff]
        %v309 = vstv %s305
        %v310 = vmul.f32 %v309, %v307
        %v311 = vmul.f32 %v309, %v308
        %v312 = vadd.f32 %v303, %v310
        %v313 = vadd.f32 %v304, %v311
        %s314 = sld [smem:[#allocation2 + $0x5]]
        %s315 = scalar_lea.vmem %s251, 80
        %v316 = vld [vmem:[%s315] sm:$0xff]
        %v317 = vld [vmem:[%s315 + $0x8] sm:$0xff]
        %v318 = vstv %s314
        %v319 = vmul.f32 %v318, %v316
        %v320 = vmul.f32 %v318, %v317
        %v321 = vadd.f32 %v312, %v319
        %v322 = vadd.f32 %v313, %v320
        %s323 = sld [smem:[#allocation2 + $0x6]]
        %s324 = scalar_lea.vmem %s251, 96
        %v325 = vld [vmem:[%s324] sm:$0xff]
        %v326 = vld [vmem:[%s324 + $0x8] sm:$0xff]
        %v327 = vstv %s323
        %v328 = vmul.f32 %v327, %v325
        %v329 = vmul.f32 %v327, %v326
        %v330 = vadd.f32 %v321, %v328
        %v331 = vadd.f32 %v322, %v329
        %s332 = sld [smem:[#allocation2 + $0x7]]
        %s333 = scalar_lea.vmem %s251, 112
        %v334 = vld [vmem:[%s333] sm:$0xff]
        %v335 = vld [vmem:[%s333 + $0x8] sm:$0xff]
        %v336 = vstv %s332
        %v337 = vmul.f32 %v336, %v334
        %v338 = vmul.f32 %v336, %v335
        %v339 = vadd.f32 %v330, %v337
        %v340 = vadd.f32 %v331, %v338
        %s341 = sld [smem:[#allocation5]]
        %vm342 = vcmp.ge.f32.partialorder %v339, 0.0
        %vm343 = vcmp.ge.f32.partialorder %v340, 0.0
        %v344 = vstv %s341
        %v345 = vmul.f32 %v344, %v339
        %v346 = vmul.f32 %v344, %v340
        %v347 = vsel %vm342, %v339, %v345
        %v348 = vsel %vm343, %v340, %v346
        %349 = vmatprep.subr.mxu0 0.0
        %v350 = vand.u32 %v254, 4294901760
        %351 = vmatpush1.msra.mxu0 %v350
        %352 = vmatprep.subr.mxu0 0.0
        %v353 = vand.u32 %v255, 4294901760
        %354 = vmatpush1.msra.mxu0 %v353
        %355 = vmatprep.subr.mxu0 0.0
        %v356 = vand.u32 %v256, 4294901760
        %357 = vmatpush1.msra.mxu0 %v356
        %358 = vmatprep.subr.mxu0 0.0
        %v359 = vand.u32 %v257, 4294901760
        %360 = vmatpush1.msra.mxu0 %v359
        %361 = vmatprep.subr.mxu0 0.0
        %v362 = vand.u32 %v258, 4294901760
        %363 = vmatpush1.msra.mxu0 %v362
        %364 = vmatprep.subr.mxu0 0.0
        %v365 = vand.u32 %v259, 4294901760
        %366 = vmatpush1.msra.mxu0 %v365
        %367 = vmatprep.subr.mxu0 0.0
        %v368 = vand.u32 %v260, 4294901760
        %369 = vmatpush1.msra.mxu0 %v368
        %370 = vmatprep.subr.mxu0 0.0
        %v371 = vand.u32 %v261, 4294901760
        %372 = vmatpush1.msra.mxu0 %v371
        %373 = vmatprep.subr.mxu0 0.0
        %v374 = vand.u32 %v262, 4294901760
        %375 = vmatpush1.msra.mxu0 %v374
        %376 = vmatprep.subr.mxu0 0.0
        %v377 = vand.u32 %v263, 4294901760
        %378 = vmatpush1.msra.mxu0 %v377
        %379 = vmatprep.subr.mxu0 0.0
        %v380 = vand.u32 %v264, 4294901760
        %381 = vmatpush1.msra.mxu0 %v380
        %382 = vmatprep.subr.mxu0 0.0
        %v383 = vand.u32 %v265, 4294901760
        %384 = vmatpush1.msra.mxu0 %v383
        %385 = vmatprep.subr.mxu0 0.0
        %v386 = vand.u32 %v266, 4294901760
        %387 = vmatpush1.msra.mxu0 %v386
        %388 = vmatprep.subr.mxu0 0.0
        %v389 = vand.u32 %v267, 4294901760
        %390 = vmatpush1.msra.mxu0 %v389
        %391 = vmatprep.subr.mxu0 0.0
        %v392 = vand.u32 %v268, 4294901760
        %393 = vmatpush1.msra.mxu0 %v392
        %394 = vmatprep.subr.mxu0 0.0
        %v395 = vand.u32 %v269, 4294901760
        %396 = vmatpush1.msra.mxu0 %v395
        %397 = vmatprep.subr.mxu0 0.0
        %398 = vmatpush1.msra.mxu0 0.0
        %399 = vmatprep.subr.mxu0 0.0
        %400 = vmatpush1.msra.mxu0 0.0
        %401 = vmatprep.subr.mxu0 0.0
        %402 = vmatpush1.msra.mxu0 0.0
        %403 = vmatprep.subr.mxu0 0.0
        %404 = vmatpush1.msra.mxu0 0.0
        %405 = vmatprep.subr.mxu0 0.0
        %406 = vmatpush1.msra.mxu0 0.0
        %407 = vmatprep.subr.mxu0 0.0
        %408 = vmatpush1.msra.mxu0 0.0
        %409 = vmatprep.subr.mxu0 0.0
        %410 = vmatpush1.msra.mxu0 0.0
        %411 = vmatprep.subr.mxu0 0.0
        %412 = vmatpush1.msra.mxu0 0.0
        %413 = vmatprep.subr.mxu0 0.0
        %414 = vmatpush1.msra.mxu0 0.0
        %415 = vmatprep.subr.mxu0 0.0
        %416 = vmatpush1.msra.mxu0 0.0
        %417 = vmatprep.subr.mxu0 0.0
        %418 = vmatpush1.msra.mxu0 0.0
        %419 = vmatprep.subr.mxu0 0.0
        %420 = vmatpush1.msra.mxu0 0.0
        %421 = vmatprep.subr.mxu0 0.0
        %422 = vmatpush1.msra.mxu0 0.0
        %423 = vmatprep.subr.mxu0 0.0
        %424 = vmatpush1.msra.mxu0 0.0
        %425 = vmatprep.subr.mxu0 0.0
        %426 = vmatpush1.msra.mxu0 0.0
        %427 = vmatprep.subr.mxu0 0.0
        %428 = vmatpush1.msra.mxu0 0.0
        %429 = vmatprep.mubr.f32.mxu0 0.0
        %v430 = vand.u32 %v347, 4294901760
        %v431 = vsub.f32 %v347, %v430
        %v432 = vand.u32 %v431, 4294901760
        %v433 = vsub.f32 %v431, %v432
        %v434 = vand.u32 %v433, 4294901760
        %435 = vmatmul.mubr.f32.gmra.mrb[0].mxu0 %v434
        %v436 = vpop.f32.mrb[0].mxu0
        %v437 = vadd.f32 0.0, %v436
        %v438 = vpop.f32.mrb[0].mxu0
        %439 = vmatprep.mubr.f32.mxu0 0.0
        %v440 = vand.u32 %v348, 4294901760
        %v441 = vsub.f32 %v348, %v440
        %v442 = vand.u32 %v441, 4294901760
        %v443 = vsub.f32 %v441, %v442
        %v444 = vand.u32 %v443, 4294901760
        %445 = vmatmul.mubr.f32.gmra.mrb[0].mxu0 %v444
        %v446 = vpop.f32.mrb[0].mxu0
        %v447 = vadd.f32 0.0, %v446
        %v448 = vpop.f32.mrb[0].mxu0
        %449 = vdwg.mxu0
        %450 = vmatprep.subr.mxu0 0.0
        %v451 = vand.u32 %v254, 4294901760
        %v452 = vsub.f32 %v254, %v451
        %v453 = vand.u32 %v452, 4294901760
        %v454 = vsub.f32 %v452, %v453
        %v455 = vand.u32 %v454, 4294901760
        %456 = vmatpush1.msra.mxu0 %v455
        %457 = vmatprep.subr.mxu0 0.0
        %v458 = vand.u32 %v255, 4294901760
        %v459 = vsub.f32 %v255, %v458
        %v460 = vand.u32 %v459, 4294901760
        %v461 = vsub.f32 %v459, %v460
        %v462 = vand.u32 %v461, 4294901760
        %463 = vmatpush1.msra.mxu0 %v462
        %464 = vmatprep.subr.mxu0 0.0
        %v465 = vand.u32 %v256, 4294901760
        %v466 = vsub.f32 %v256, %v465
        %v467 = vand.u32 %v466, 4294901760
        %v468 = vsub.f32 %v466, %v467
        %v469 = vand.u32 %v468, 4294901760
        %470 = vmatpush1.msra.mxu0 %v469
        %471 = vmatprep.subr.mxu0 0.0
        %v472 = vand.u32 %v257, 4294901760
        %v473 = vsub.f32 %v257, %v472
        %v474 = vand.u32 %v473, 4294901760
        %v475 = vsub.f32 %v473, %v474
        %v476 = vand.u32 %v475, 4294901760
        %477 = vmatpush1.msra.mxu0 %v476
        %478 = vmatprep.subr.mxu0 0.0
        %v479 = vand.u32 %v258, 4294901760
        %v480 = vsub.f32 %v258, %v479
        %v481 = vand.u32 %v480, 4294901760
        %v482 = vsub.f32 %v480, %v481
        %v483 = vand.u32 %v482, 4294901760
        %484 = vmatpush1.msra.mxu0 %v483
        %485 = vmatprep.subr.mxu0 0.0
        %v486 = vand.u32 %v259, 4294901760
        %v487 = vsub.f32 %v259, %v486
        %v488 = vand.u32 %v487, 4294901760
        %v489 = vsub.f32 %v487, %v488
        %v490 = vand.u32 %v489, 4294901760
        %491 = vmatpush1.msra.mxu0 %v490
        %492 = vmatprep.subr.mxu0 0.0
        %v493 = vand.u32 %v260, 4294901760
        %v494 = vsub.f32 %v260, %v493
        %v495 = vand.u32 %v494, 4294901760
        %v496 = vsub.f32 %v494, %v495
        %v497 = vand.u32 %v496, 4294901760
        %498 = vmatpush1.msra.mxu0 %v497
        %499 = vmatprep.subr.mxu0 0.0
        %v500 = vand.u32 %v261, 4294901760
        %v501 = vsub.f32 %v261, %v500
        %v502 = vand.u32 %v501, 4294901760
        %v503 = vsub.f32 %v501, %v502
        %v504 = vand.u32 %v503, 4294901760
        %505 = vmatpush1.msra.mxu0 %v504
        %506 = vmatprep.subr.mxu0 0.0
        %v507 = vand.u32 %v262, 4294901760
        %v508 = vsub.f32 %v262, %v507
        %v509 = vand.u32 %v508, 4294901760
        %v510 = vsub.f32 %v508, %v509
        %v511 = vand.u32 %v510, 4294901760
        %512 = vmatpush1.msra.mxu0 %v511
        %513 = vmatprep.subr.mxu0 0.0
        %v514 = vand.u32 %v263, 4294901760
        %v515 = vsub.f32 %v263, %v514
        %v516 = vand.u32 %v515, 4294901760
        %v517 = vsub.f32 %v515, %v516
        %v518 = vand.u32 %v517, 4294901760
        %519 = vmatpush1.msra.mxu0 %v518
        %520 = vmatprep.subr.mxu0 0.0
        %v521 = vand.u32 %v264, 4294901760
        %v522 = vsub.f32 %v264, %v521
        %v523 = vand.u32 %v522, 4294901760
        %v524 = vsub.f32 %v522, %v523
        %v525 = vand.u32 %v524, 4294901760
        %526 = vmatpush1.msra.mxu0 %v525
        %527 = vmatprep.subr.mxu0 0.0
        %v528 = vand.u32 %v265, 4294901760
        %v529 = vsub.f32 %v265, %v528
        %v530 = vand.u32 %v529, 4294901760
        %v531 = vsub.f32 %v529, %v530
        %v532 = vand.u32 %v531, 4294901760
        %533 = vmatpush1.msra.mxu0 %v532
        %534 = vmatprep.subr.mxu0 0.0
        %v535 = vand.u32 %v266, 4294901760
        %v536 = vsub.f32 %v266, %v535
        %v537 = vand.u32 %v536, 4294901760
        %v538 = vsub.f32 %v536, %v537
        %v539 = vand.u32 %v538, 4294901760
        %540 = vmatpush1.msra.mxu0 %v539
        %541 = vmatprep.subr.mxu0 0.0
        %v542 = vand.u32 %v267, 4294901760
        %v543 = vsub.f32 %v267, %v542
        %v544 = vand.u32 %v543, 4294901760
        %v545 = vsub.f32 %v543, %v544
        %v546 = vand.u32 %v545, 4294901760
        %547 = vmatpush1.msra.mxu0 %v546
        %548 = vmatprep.subr.mxu0 0.0
        %v549 = vand.u32 %v268, 4294901760
        %v550 = vsub.f32 %v268, %v549
        %v551 = vand.u32 %v550, 4294901760
        %v552 = vsub.f32 %v550, %v551
        %v553 = vand.u32 %v552, 4294901760
        %554 = vmatpush1.msra.mxu0 %v553
        %555 = vmatprep.subr.mxu0 0.0
        %v556 = vand.u32 %v269, 4294901760
        %v557 = vsub.f32 %v269, %v556
        %v558 = vand.u32 %v557, 4294901760
        %v559 = vsub.f32 %v557, %v558
        %v560 = vand.u32 %v559, 4294901760
        %561 = vmatpush1.msra.mxu0 %v560
        %562 = vmatprep.subr.mxu0 0.0
        %563 = vmatpush1.msra.mxu0 0.0
        %564 = vmatprep.subr.mxu0 0.0
        %565 = vmatpush1.msra.mxu0 0.0
        %566 = vmatprep.subr.mxu0 0.0
        %567 = vmatpush1.msra.mxu0 0.0
        %568 = vmatprep.subr.mxu0 0.0
        %569 = vmatpush1.msra.mxu0 0.0
        %570 = vmatprep.subr.mxu0 0.0
        %571 = vmatpush1.msra.mxu0 0.0
        %572 = vmatprep.subr.mxu0 0.0
        %573 = vmatpush1.msra.mxu0 0.0
        %574 = vmatprep.subr.mxu0 0.0
        %575 = vmatpush1.msra.mxu0 0.0
        %576 = vmatprep.subr.mxu0 0.0
        %577 = vmatpush1.msra.mxu0 0.0
        %578 = vmatprep.subr.mxu0 0.0
        %579 = vmatpush1.msra.mxu0 0.0
        %580 = vmatprep.subr.mxu0 0.0
        %581 = vmatpush1.msra.mxu0 0.0
        %582 = vmatprep.subr.mxu0 0.0
        %583 = vmatpush1.msra.mxu0 0.0
        %584 = vmatprep.subr.mxu0 0.0
        %585 = vmatpush1.msra.mxu0 0.0
        %586 = vmatprep.subr.mxu0 0.0
        %587 = vmatpush1.msra.mxu0 0.0
        %588 = vmatprep.subr.mxu0 0.0
        %589 = vmatpush1.msra.mxu0 0.0
        %590 = vmatprep.subr.mxu0 0.0
        %591 = vmatpush1.msra.mxu0 0.0
        %592 = vmatprep.subr.mxu0 0.0
        %593 = vmatpush1.msra.mxu0 0.0
        %594 = vmatprep.mubr.f32.mxu0 0.0
        %v595 = vand.u32 %v347, 4294901760
        %596 = vmatmul.mubr.f32.gmra.mrb[0].mxu0 %v595
        %v597 = vpop.f32.mrb[0].mxu0
        %v598 = vadd.f32 %v437, %v597
        %v599 = vpop.f32.mrb[0].mxu0
        %600 = vmatprep.mubr.f32.mxu0 0.0
        %v601 = vand.u32 %v348, 4294901760
        %602 = vmatmul.mubr.f32.gmra.mrb[0].mxu0 %v601
        %v603 = vpop.f32.mrb[0].mxu0
        %v604 = vadd.f32 %v447, %v603
        %v605 = vpop.f32.mrb[0].mxu0
        %606 = vdwg.mxu0
        %607 = vmatprep.subr.mxu0 0.0
        %v608 = vand.u32 %v254, 4294901760
        %v609 = vsub.f32 %v254, %v608
        %610 = vmatpush1.msra.mxu0 %v609
        %611 = vmatprep.subr.mxu0 0.0
        %v612 = vand.u32 %v255, 4294901760
        %v613 = vsub.f32 %v255, %v612
        %614 = vmatpush1.msra.mxu0 %v613
        %615 = vmatprep.subr.mxu0 0.0
        %v616 = vand.u32 %v256, 4294901760
        %v617 = vsub.f32 %v256, %v616
        %618 = vmatpush1.msra.mxu0 %v617
        %619 = vmatprep.subr.mxu0 0.0
        %v620 = vand.u32 %v257, 4294901760
        %v621 = vsub.f32 %v257, %v620
        %622 = vmatpush1.msra.mxu0 %v621
        %623 = vmatprep.subr.mxu0 0.0
        %v624 = vand.u32 %v258, 4294901760
        %v625 = vsub.f32 %v258, %v624
        %626 = vmatpush1.msra.mxu0 %v625
        %627 = vmatprep.subr.mxu0 0.0
        %v628 = vand.u32 %v259, 4294901760
        %v629 = vsub.f32 %v259, %v628
        %630 = vmatpush1.msra.mxu0 %v629
        %631 = vmatprep.subr.mxu0 0.0
        %v632 = vand.u32 %v260, 4294901760
        %v633 = vsub.f32 %v260, %v632
        %634 = vmatpush1.msra.mxu0 %v633
        %635 = vmatprep.subr.mxu0 0.0
        %v636 = vand.u32 %v261, 4294901760
        %v637 = vsub.f32 %v261, %v636
        %638 = vmatpush1.msra.mxu0 %v637
        %639 = vmatprep.subr.mxu0 0.0
        %v640 = vand.u32 %v262, 4294901760
        %v641 = vsub.f32 %v262, %v640
        %642 = vmatpush1.msra.mxu0 %v641
        %643 = vmatprep.subr.mxu0 0.0
        %v644 = vand.u32 %v263, 4294901760
        %v645 = vsub.f32 %v263, %v644
        %646 = vmatpush1.msra.mxu0 %v645
        %647 = vmatprep.subr.mxu0 0.0
        %v648 = vand.u32 %v264, 4294901760
        %v649 = vsub.f32 %v264, %v648
        %650 = vmatpush1.msra.mxu0 %v649
        %651 = vmatprep.subr.mxu0 0.0
        %v652 = vand.u32 %v265, 4294901760
        %v653 = vsub.f32 %v265, %v652
        %654 = vmatpush1.msra.mxu0 %v653
        %655 = vmatprep.subr.mxu0 0.0
        %v656 = vand.u32 %v266, 4294901760
        %v657 = vsub.f32 %v266, %v656
        %658 = vmatpush1.msra.mxu0 %v657
        %659 = vmatprep.subr.mxu0 0.0
        %v660 = vand.u32 %v267, 4294901760
        %v661 = vsub.f32 %v267, %v660
        %662 = vmatpush1.msra.mxu0 %v661
        %663 = vmatprep.subr.mxu0 0.0
        %v664 = vand.u32 %v268, 4294901760
        %v665 = vsub.f32 %v268, %v664
        %666 = vmatpush1.msra.mxu0 %v665
        %667 = vmatprep.subr.mxu0 0.0
        %v668 = vand.u32 %v269, 4294901760
        %v669 = vsub.f32 %v269, %v668
        %670 = vmatpush1.msra.mxu0 %v669
        %671 = vmatprep.subr.mxu0 0.0
        %672 = vmatpush1.msra.mxu0 0.0
        %673 = vmatprep.subr.mxu0 0.0
        %674 = vmatpush1.msra.mxu0 0.0
        %675 = vmatprep.subr.mxu0 0.0
        %676 = vmatpush1.msra.mxu0 0.0
        %677 = vmatprep.subr.mxu0 0.0
        %678 = vmatpush1.msra.mxu0 0.0
        %679 = vmatprep.subr.mxu0 0.0
        %680 = vmatpush1.msra.mxu0 0.0
        %681 = vmatprep.subr.mxu0 0.0
        %682 = vmatpush1.msra.mxu0 0.0
        %683 = vmatprep.subr.mxu0 0.0
        %684 = vmatpush1.msra.mxu0 0.0
        %685 = vmatprep.subr.mxu0 0.0
        %686 = vmatpush1.msra.mxu0 0.0
        %687 = vmatprep.subr.mxu0 0.0
        %688 = vmatpush1.msra.mxu0 0.0
        %689 = vmatprep.subr.mxu0 0.0
        %690 = vmatpush1.msra.mxu0 0.0
        %691 = vmatprep.subr.mxu0 0.0
        %692 = vmatpush1.msra.mxu0 0.0
        %693 = vmatprep.subr.mxu0 0.0
        %694 = vmatpush1.msra.mxu0 0.0
        %695 = vmatprep.subr.mxu0 0.0
        %696 = vmatpush1.msra.mxu0 0.0
        %697 = vmatprep.subr.mxu0 0.0
        %698 = vmatpush1.msra.mxu0 0.0
        %699 = vmatprep.subr.mxu0 0.0
        %700 = vmatpush1.msra.mxu0 0.0
        %701 = vmatprep.subr.mxu0 0.0
        %702 = vmatpush1.msra.mxu0 0.0
        %703 = vmatprep.mubr.f32.mxu0 0.0
        %v704 = vand.u32 %v347, 4294901760
        %v705 = vsub.f32 %v347, %v704
        %706 = vmatmul.mubr.f32.gmra.mrb[0].mxu0 %v705
        %v707 = vpop.f32.mrb[0].mxu0
        %v708 = vadd.f32 %v598, %v707
        %v709 = vpop.f32.mrb[0].mxu0
        %710 = vmatprep.mubr.f32.mxu0 0.0
        %v711 = vand.u32 %v348, 4294901760
        %v712 = vsub.f32 %v348, %v711
        %713 = vmatmul.mubr.f32.gmra.mrb[0].mxu0 %v712
        %v714 = vpop.f32.mrb[0].mxu0
        %v715 = vadd.f32 %v604, %v714
        %v716 = vpop.f32.mrb[0].mxu0
        %717 = vdwg.mxu0
        %718 = vmatprep.subr.mxu0 0.0
        %v719 = vand.u32 %v254, 4294901760
        %720 = vmatpush1.msra.mxu0 %v719
        %721 = vmatprep.subr.mxu0 0.0
        %v722 = vand.u32 %v255, 4294901760
        %723 = vmatpush1.msra.mxu0 %v722
        %724 = vmatprep.subr.mxu0 0.0
        %v725 = vand.u32 %v256, 4294901760
        %726 = vmatpush1.msra.mxu0 %v725
        %727 = vmatprep.subr.mxu0 0.0
        %v728 = vand.u32 %v257, 4294901760
        %729 = vmatpush1.msra.mxu0 %v728
        %730 = vmatprep.subr.mxu0 0.0
        %v731 = vand.u32 %v258, 4294901760
        %732 = vmatpush1.msra.mxu0 %v731
        %733 = vmatprep.subr.mxu0 0.0
        %v734 = vand.u32 %v259, 4294901760
        %735 = vmatpush1.msra.mxu0 %v734
        %736 = vmatprep.subr.mxu0 0.0
        %v737 = vand.u32 %v260, 4294901760
        %738 = vmatpush1.msra.mxu0 %v737
        %739 = vmatprep.subr.mxu0 0.0
        %v740 = vand.u32 %v261, 4294901760
        %741 = vmatpush1.msra.mxu0 %v740
        %742 = vmatprep.subr.mxu0 0.0
        %v743 = vand.u32 %v262, 4294901760
        %744 = vmatpush1.msra.mxu0 %v743
        %745 = vmatprep.subr.mxu0 0.0
        %v746 = vand.u32 %v263, 4294901760
        %747 = vmatpush1.msra.mxu0 %v746
        %748 = vmatprep.subr.mxu0 0.0
        %v749 = vand.u32 %v264, 4294901760
        %750 = vmatpush1.msra.mxu0 %v749
        %751 = vmatprep.subr.mxu0 0.0
        %v752 = vand.u32 %v265, 4294901760
        %753 = vmatpush1.msra.mxu0 %v752
        %754 = vmatprep.subr.mxu0 0.0
        %v755 = vand.u32 %v266, 4294901760
        %756 = vmatpush1.msra.mxu0 %v755
        %757 = vmatprep.subr.mxu0 0.0
        %v758 = vand.u32 %v267, 4294901760
        %759 = vmatpush1.msra.mxu0 %v758
        %760 = vmatprep.subr.mxu0 0.0
        %v761 = vand.u32 %v268, 4294901760
        %762 = vmatpush1.msra.mxu0 %v761
        %763 = vmatprep.subr.mxu0 0.0
        %v764 = vand.u32 %v269, 4294901760
        %765 = vmatpush1.msra.mxu0 %v764
        %766 = vmatprep.subr.mxu0 0.0
        %767 = vmatpush1.msra.mxu0 0.0
        %768 = vmatprep.subr.mxu0 0.0
        %769 = vmatpush1.msra.mxu0 0.0
        %770 = vmatprep.subr.mxu0 0.0
        %771 = vmatpush1.msra.mxu0 0.0
        %772 = vmatprep.subr.mxu0 0.0
        %773 = vmatpush1.msra.mxu0 0.0
        %774 = vmatprep.subr.mxu0 0.0
        %775 = vmatpush1.msra.mxu0 0.0
        %776 = vmatprep.subr.mxu0 0.0
        %777 = vmatpush1.msra.mxu0 0.0
        %778 = vmatprep.subr.mxu0 0.0
        %779 = vmatpush1.msra.mxu0 0.0
        %780 = vmatprep.subr.mxu0 0.0
        %781 = vmatpush1.msra.mxu0 0.0
        %782 = vmatprep.subr.mxu0 0.0
        %783 = vmatpush1.msra.mxu0 0.0
        %784 = vmatprep.subr.mxu0 0.0
        %785 = vmatpush1.msra.mxu0 0.0
        %786 = vmatprep.subr.mxu0 0.0
        %787 = vmatpush1.msra.mxu0 0.0
        %788 = vmatprep.subr.mxu0 0.0
        %789 = vmatpush1.msra.mxu0 0.0
        %790 = vmatprep.subr.mxu0 0.0
        %791 = vmatpush1.msra.mxu0 0.0
        %792 = vmatprep.subr.mxu0 0.0
        %793 = vmatpush1.msra.mxu0 0.0
        %794 = vmatprep.subr.mxu0 0.0
        %795 = vmatpush1.msra.mxu0 0.0
        %796 = vmatprep.subr.mxu0 0.0
        %797 = vmatpush1.msra.mxu0 0.0
        %798 = vmatprep.mubr.f32.mxu0 0.0
        %v799 = vand.u32 %v347, 4294901760
        %v800 = vsub.f32 %v347, %v799
        %v801 = vand.u32 %v800, 4294901760
        %802 = vmatmul.mubr.f32.gmra.mrb[0].mxu0 %v801
        %v803 = vpop.f32.mrb[0].mxu0
        %v804 = vadd.f32 %v708, %v803
        %v805 = vpop.f32.mrb[0].mxu0
        %806 = vmatprep.mubr.f32.mxu0 0.0
        %v807 = vand.u32 %v348, 4294901760
        %v808 = vsub.f32 %v348, %v807
        %v809 = vand.u32 %v808, 4294901760
        %810 = vmatmul.mubr.f32.gmra.mrb[0].mxu0 %v809
        %v811 = vpop.f32.mrb[0].mxu0
        %v812 = vadd.f32 %v715, %v811
        %v813 = vpop.f32.mrb[0].mxu0
        %814 = vdwg.mxu0
        %815 = vmatprep.subr.mxu0 0.0
        %v816 = vand.u32 %v254, 4294901760
        %v817 = vsub.f32 %v254, %v816
        %v818 = vand.u32 %v817, 4294901760
        %819 = vmatpush1.msra.mxu0 %v818
        %820 = vmatprep.subr.mxu0 0.0
        %v821 = vand.u32 %v255, 4294901760
        %v822 = vsub.f32 %v255, %v821
        %v823 = vand.u32 %v822, 4294901760
        %824 = vmatpush1.msra.mxu0 %v823
        %825 = vmatprep.subr.mxu0 0.0
        %v826 = vand.u32 %v256, 4294901760
        %v827 = vsub.f32 %v256, %v826
        %v828 = vand.u32 %v827, 4294901760
        %829 = vmatpush1.msra.mxu0 %v828
        %830 = vmatprep.subr.mxu0 0.0
        %v831 = vand.u32 %v257, 4294901760
        %v832 = vsub.f32 %v257, %v831
        %v833 = vand.u32 %v832, 4294901760
        %834 = vmatpush1.msra.mxu0 %v833
        %835 = vmatprep.subr.mxu0 0.0
        %v836 = vand.u32 %v258, 4294901760
        %v837 = vsub.f32 %v258, %v836
        %v838 = vand.u32 %v837, 4294901760
        %839 = vmatpush1.msra.mxu0 %v838
        %840 = vmatprep.subr.mxu0 0.0
        %v841 = vand.u32 %v259, 4294901760
        %v842 = vsub.f32 %v259, %v841
        %v843 = vand.u32 %v842, 4294901760
        %844 = vmatpush1.msra.mxu0 %v843
        %845 = vmatprep.subr.mxu0 0.0
        %v846 = vand.u32 %v260, 4294901760
        %v847 = vsub.f32 %v260, %v846
        %v848 = vand.u32 %v847, 4294901760
        %849 = vmatpush1.msra.mxu0 %v848
        %850 = vmatprep.subr.mxu0 0.0
        %v851 = vand.u32 %v261, 4294901760
        %v852 = vsub.f32 %v261, %v851
        %v853 = vand.u32 %v852, 4294901760
        %854 = vmatpush1.msra.mxu0 %v853
        %855 = vmatprep.subr.mxu0 0.0
        %v856 = vand.u32 %v262, 4294901760
        %v857 = vsub.f32 %v262, %v856
        %v858 = vand.u32 %v857, 4294901760
        %859 = vmatpush1.msra.mxu0 %v858
        %860 = vmatprep.subr.mxu0 0.0
        %v861 = vand.u32 %v263, 4294901760
        %v862 = vsub.f32 %v263, %v861
        %v863 = vand.u32 %v862, 4294901760
        %864 = vmatpush1.msra.mxu0 %v863
        %865 = vmatprep.subr.mxu0 0.0
        %v866 = vand.u32 %v264, 4294901760
        %v867 = vsub.f32 %v264, %v866
        %v868 = vand.u32 %v867, 4294901760
        %869 = vmatpush1.msra.mxu0 %v868
        %870 = vmatprep.subr.mxu0 0.0
        %v871 = vand.u32 %v265, 4294901760
        %v872 = vsub.f32 %v265, %v871
        %v873 = vand.u32 %v872, 4294901760
        %874 = vmatpush1.msra.mxu0 %v873
        %875 = vmatprep.subr.mxu0 0.0
        %v876 = vand.u32 %v266, 4294901760
        %v877 = vsub.f32 %v266, %v876
        %v878 = vand.u32 %v877, 4294901760
        %879 = vmatpush1.msra.mxu0 %v878
        %880 = vmatprep.subr.mxu0 0.0
        %v881 = vand.u32 %v267, 4294901760
        %v882 = vsub.f32 %v267, %v881
        %v883 = vand.u32 %v882, 4294901760
        %884 = vmatpush1.msra.mxu0 %v883
        %885 = vmatprep.subr.mxu0 0.0
        %v886 = vand.u32 %v268, 4294901760
        %v887 = vsub.f32 %v268, %v886
        %v888 = vand.u32 %v887, 4294901760
        %889 = vmatpush1.msra.mxu0 %v888
        %890 = vmatprep.subr.mxu0 0.0
        %v891 = vand.u32 %v269, 4294901760
        %v892 = vsub.f32 %v269, %v891
        %v893 = vand.u32 %v892, 4294901760
        %894 = vmatpush1.msra.mxu0 %v893
        %895 = vmatprep.subr.mxu0 0.0
        %896 = vmatpush1.msra.mxu0 0.0
        %897 = vmatprep.subr.mxu0 0.0
        %898 = vmatpush1.msra.mxu0 0.0
        %899 = vmatprep.subr.mxu0 0.0
        %900 = vmatpush1.msra.mxu0 0.0
        %901 = vmatprep.subr.mxu0 0.0
        %902 = vmatpush1.msra.mxu0 0.0
        %903 = vmatprep.subr.mxu0 0.0
        %904 = vmatpush1.msra.mxu0 0.0
        %905 = vmatprep.subr.mxu0 0.0
        %906 = vmatpush1.msra.mxu0 0.0
        %907 = vmatprep.subr.mxu0 0.0
        %908 = vmatpush1.msra.mxu0 0.0
        %909 = vmatprep.subr.mxu0 0.0
        %910 = vmatpush1.msra.mxu0 0.0
        %911 = vmatprep.subr.mxu0 0.0
        %912 = vmatpush1.msra.mxu0 0.0
        %913 = vmatprep.subr.mxu0 0.0
        %914 = vmatpush1.msra.mxu0 0.0
        %915 = vmatprep.subr.mxu0 0.0
        %916 = vmatpush1.msra.mxu0 0.0
        %917 = vmatprep.subr.mxu0 0.0
        %918 = vmatpush1.msra.mxu0 0.0
        %919 = vmatprep.subr.mxu0 0.0
        %920 = vmatpush1.msra.mxu0 0.0
        %921 = vmatprep.subr.mxu0 0.0
        %922 = vmatpush1.msra.mxu0 0.0
        %923 = vmatprep.subr.mxu0 0.0
        %924 = vmatpush1.msra.mxu0 0.0
        %925 = vmatprep.subr.mxu0 0.0
        %926 = vmatpush1.msra.mxu0 0.0
        %927 = vmatprep.mubr.f32.mxu0 0.0
        %v928 = vand.u32 %v347, 4294901760
        %929 = vmatmul.mubr.f32.gmra.mrb[0].mxu0 %v928
        %v930 = vpop.f32.mrb[0].mxu0
        %v931 = vadd.f32 %v804, %v930
        %v932 = vpop.f32.mrb[0].mxu0
        %933 = vmatprep.mubr.f32.mxu0 0.0
        %v934 = vand.u32 %v348, 4294901760
        %935 = vmatmul.mubr.f32.gmra.mrb[0].mxu0 %v934
        %v936 = vpop.f32.mrb[0].mxu0
        %v937 = vadd.f32 %v812, %v936
        %v938 = vpop.f32.mrb[0].mxu0
        %939 = vdwg.mxu0
        %940 = vmatprep.subr.mxu0 0.0
        %v941 = vand.u32 %v254, 4294901760
        %942 = vmatpush1.msra.mxu0 %v941
        %943 = vmatprep.subr.mxu0 0.0
        %v944 = vand.u32 %v255, 4294901760
        %945 = vmatpush1.msra.mxu0 %v944
        %946 = vmatprep.subr.mxu0 0.0
        %v947 = vand.u32 %v256, 4294901760
        %948 = vmatpush1.msra.mxu0 %v947
        %949 = vmatprep.subr.mxu0 0.0
        %v950 = vand.u32 %v257, 4294901760
        %951 = vmatpush1.msra.mxu0 %v950
        %952 = vmatprep.subr.mxu0 0.0
        %v953 = vand.u32 %v258, 4294901760
        %954 = vmatpush1.msra.mxu0 %v953
        %955 = vmatprep.subr.mxu0 0.0
        %v956 = vand.u32 %v259, 4294901760
        %957 = vmatpush1.msra.mxu0 %v956
        %958 = vmatprep.subr.mxu0 0.0
        %v959 = vand.u32 %v260, 4294901760
        %960 = vmatpush1.msra.mxu0 %v959
        %961 = vmatprep.subr.mxu0 0.0
        %v962 = vand.u32 %v261, 4294901760
        %963 = vmatpush1.msra.mxu0 %v962
        %964 = vmatprep.subr.mxu0 0.0
        %v965 = vand.u32 %v262, 4294901760
        %966 = vmatpush1.msra.mxu0 %v965
        %967 = vmatprep.subr.mxu0 0.0
        %v968 = vand.u32 %v263, 4294901760
        %969 = vmatpush1.msra.mxu0 %v968
        %970 = vmatprep.subr.mxu0 0.0
        %v971 = vand.u32 %v264, 4294901760
        %972 = vmatpush1.msra.mxu0 %v971
        %973 = vmatprep.subr.mxu0 0.0
        %v974 = vand.u32 %v265, 4294901760
        %975 = vmatpush1.msra.mxu0 %v974
        %976 = vmatprep.subr.mxu0 0.0
        %v977 = vand.u32 %v266, 4294901760
        %978 = vmatpush1.msra.mxu0 %v977
        %979 = vmatprep.subr.mxu0 0.0
        %v980 = vand.u32 %v267, 4294901760
        %981 = vmatpush1.msra.mxu0 %v980
        %982 = vmatprep.subr.mxu0 0.0
        %v983 = vand.u32 %v268, 4294901760
        %984 = vmatpush1.msra.mxu0 %v983
        %985 = vmatprep.subr.mxu0 0.0
        %v986 = vand.u32 %v269, 4294901760
        %987 = vmatpush1.msra.mxu0 %v986
        %988 = vmatprep.subr.mxu0 0.0
        %989 = vmatpush1.msra.mxu0 0.0
        %990 = vmatprep.subr.mxu0 0.0
        %991 = vmatpush1.msra.mxu0 0.0
        %992 = vmatprep.subr.mxu0 0.0
        %993 = vmatpush1.msra.mxu0 0.0
        %994 = vmatprep.subr.mxu0 0.0
        %995 = vmatpush1.msra.mxu0 0.0
        %996 = vmatprep.subr.mxu0 0.0
        %997 = vmatpush1.msra.mxu0 0.0
        %998 = vmatprep.subr.mxu0 0.0
        %999 = vmatpush1.msra.mxu0 0.0
        %1000 = vmatprep.subr.mxu0 0.0
        %1001 = vmatpush1.msra.mxu0 0.0
        %1002 = vmatprep.subr.mxu0 0.0
        %1003 = vmatpush1.msra.mxu0 0.0
        %1004 = vmatprep.subr.mxu0 0.0
        %1005 = vmatpush1.msra.mxu0 0.0
        %1006 = vmatprep.subr.mxu0 0.0
        %1007 = vmatpush1.msra.mxu0 0.0
        %1008 = vmatprep.subr.mxu0 0.0
        %1009 = vmatpush1.msra.mxu0 0.0
        %1010 = vmatprep.subr.mxu0 0.0
        %1011 = vmatpush1.msra.mxu0 0.0
        %1012 = vmatprep.subr.mxu0 0.0
        %1013 = vmatpush1.msra.mxu0 0.0
        %1014 = vmatprep.subr.mxu0 0.0
        %1015 = vmatpush1.msra.mxu0 0.0
        %1016 = vmatprep.subr.mxu0 0.0
        %1017 = vmatpush1.msra.mxu0 0.0
        %1018 = vmatprep.subr.mxu0 0.0
        %1019 = vmatpush1.msra.mxu0 0.0
        %1020 = vmatprep.mubr.f32.mxu0 0.0
        %v1021 = vand.u32 %v347, 4294901760
        %1022 = vmatmul.mubr.f32.gmra.mrb[0].mxu0 %v1021
        %v1023 = vpop.f32.mrb[0].mxu0
        %v1024 = vadd.f32 %v931, %v1023
        %v1025 = vpop.f32.mrb[0].mxu0
        %1026 = vmatprep.mubr.f32.mxu0 0.0
        %v1027 = vand.u32 %v348, 4294901760
        %1028 = vmatmul.mubr.f32.gmra.mrb[0].mxu0 %v1027
        %v1029 = vpop.f32.mrb[0].mxu0
        %v1030 = vadd.f32 %v937, %v1029
        %v1031 = vpop.f32.mrb[0].mxu0
        %1032 = vdwg.mxu0
        %1033 = vst [vmem:[%s242] sm:$0xff] %v1024
        %1034 = vst [vmem:[%s242 + $0x8] sm:$0xff] %v1030
        %v1035 = vld [vmem:[%s279] sm:$0xff]
        %v1036 = vld [vmem:[%s279 + $0x8] sm:$0xff]
        %s1037 = sld [smem:[#allocation2 + $0x8]]
        %v1038 = vld [vmem:[%s251] sm:$0xff]
        %v1039 = vld [vmem:[%s251 + $0x8] sm:$0xff]
        %v1040 = vstv %s1037
        %v1041 = vmul.f32 %v1040, %v1038
        %v1042 = vmul.f32 %v1040, %v1039
        %v1043 = vadd.f32 %v1035, %v1041
        %v1044 = vadd.f32 %v1036, %v1042
        %s1045 = sld [smem:[#allocation2 + $0x9]]
        %v1046 = vstv %s1045
        %v1047 = vmul.f32 %v1046, %v1035
        %v1048 = vmul.f32 %v1046, %v1036
        %v1049 = vadd.f32 %v1043, %v1047
        %v1050 = vadd.f32 %v1044, %v1048
        %s1051 = sld [smem:[#allocation2 + $0xa]]
        %v1052 = vld [vmem:[%s288] sm:$0xff]
        %v1053 = vld [vmem:[%s288 + $0x8] sm:$0xff]
        %v1054 = vstv %s1051
        %v1055 = vmul.f32 %v1054, %v1052
        %v1056 = vmul.f32 %v1054, %v1053
        %v1057 = vadd.f32 %v1049, %v1055
        %v1058 = vadd.f32 %v1050, %v1056
        %s1059 = sld [smem:[#allocation2 + $0xb]]
        %v1060 = vld [vmem:[%s297] sm:$0xff]
        %v1061 = vld [vmem:[%s297 + $0x8] sm:$0xff]
        %v1062 = vstv %s1059
        %v1063 = vmul.f32 %v1062, %v1060
        %v1064 = vmul.f32 %v1062, %v1061
        %v1065 = vadd.f32 %v1057, %v1063
        %v1066 = vadd.f32 %v1058, %v1064
        %s1067 = sld [smem:[#allocation2 + $0xc]]
        %v1068 = vld [vmem:[%s306] sm:$0xff]
        %v1069 = vld [vmem:[%s306 + $0x8] sm:$0xff]
        %v1070 = vstv %s1067
        %v1071 = vmul.f32 %v1070, %v1068
        %v1072 = vmul.f32 %v1070, %v1069
        %v1073 = vadd.f32 %v1065, %v1071
        %v1074 = vadd.f32 %v1066, %v1072
        %s1075 = sld [smem:[#allocation2 + $0xd]]
        %v1076 = vld [vmem:[%s315] sm:$0xff]
        %v1077 = vld [vmem:[%s315 + $0x8] sm:$0xff]
        %v1078 = vstv %s1075
        %v1079 = vmul.f32 %v1078, %v1076
        %v1080 = vmul.f32 %v1078, %v1077
        %v1081 = vadd.f32 %v1073, %v1079
        %v1082 = vadd.f32 %v1074, %v1080
        %s1083 = sld [smem:[#allocation2 + $0xe]]
        %v1084 = vld [vmem:[%s324] sm:$0xff]
        %v1085 = vld [vmem:[%s324 + $0x8] sm:$0xff]
        %v1086 = vstv %s1083
        %v1087 = vmul.f32 %v1086, %v1084
        %v1088 = vmul.f32 %v1086, %v1085
        %v1089 = vadd.f32 %v1081, %v1087
        %v1090 = vadd.f32 %v1082, %v1088
        %s1091 = sld [smem:[#allocation2 + $0xf]]
        %v1092 = vld [vmem:[%s333] sm:$0xff]
        %v1093 = vld [vmem:[%s333 + $0x8] sm:$0xff]
        %v1094 = vstv %s1091
        %v1095 = vmul.f32 %v1094, %v1092
        %v1096 = vmul.f32 %v1094, %v1093
        %v1097 = vadd.f32 %v1089, %v1095
        %v1098 = vadd.f32 %v1090, %v1096
        %s1099 = sld [smem:[#allocation5 + $0x1]]
        %vm1100 = vcmp.ge.f32.partialorder %v1097, 0.0
        %vm1101 = vcmp.ge.f32.partialorder %v1098, 0.0
        %v1102 = vstv %s1099
        %v1103 = vmul.f32 %v1102, %v1097
        %v1104 = vmul.f32 %v1102, %v1098
        %v1105 = vsel %vm1100, %v1097, %v1103
        %v1106 = vsel %vm1101, %v1098, %v1104
        %1107 = vmatprep.subr.mxu0 0.0
        %v1108 = vand.u32 %v254, 4294901760
        %1109 = vmatpush1.msra.mxu0 %v1108
        %1110 = vmatprep.subr.mxu0 0.0
        %v1111 = vand.u32 %v255, 4294901760
        %1112 = vmatpush1.msra.mxu0 %v1111
        %1113 = vmatprep.subr.mxu0 0.0
        %v1114 = vand.u32 %v256, 4294901760
        %1115 = vmatpush1.msra.mxu0 %v1114
        %1116 = vmatprep.subr.mxu0 0.0
        %v1117 = vand.u32 %v257, 4294901760
        %1118 = vmatpush1.msra.mxu0 %v1117
        %1119 = vmatprep.subr.mxu0 0.0
        %v1120 = vand.u32 %v258, 4294901760
        %1121 = vmatpush1.msra.mxu0 %v1120
        %1122 = vmatprep.subr.mxu0 0.0
        %v1123 = vand.u32 %v259, 4294901760
        %1124 = vmatpush1.msra.mxu0 %v1123
        %1125 = vmatprep.subr.mxu0 0.0
        %v1126 = vand.u32 %v260, 4294901760
        %1127 = vmatpush1.msra.mxu0 %v1126
        %1128 = vmatprep.subr.mxu0 0.0
        %v1129 = vand.u32 %v261, 4294901760
        %1130 = vmatpush1.msra.mxu0 %v1129
        %1131 = vmatprep.subr.mxu0 0.0
        %v1132 = vand.u32 %v262, 4294901760
        %1133 = vmatpush1.msra.mxu0 %v1132
        %1134 = vmatprep.subr.mxu0 0.0
        %v1135 = vand.u32 %v263, 4294901760
        %1136 = vmatpush1.msra.mxu0 %v1135
        %1137 = vmatprep.subr.mxu0 0.0
        %v1138 = vand.u32 %v264, 4294901760
        %1139 = vmatpush1.msra.mxu0 %v1138
        %1140 = vmatprep.subr.mxu0 0.0
        %v1141 = vand.u32 %v265, 4294901760
        %1142 = vmatpush1.msra.mxu0 %v1141
        %1143 = vmatprep.subr.mxu0 0.0
        %v1144 = vand.u32 %v266, 4294901760
        %1145 = vmatpush1.msra.mxu0 %v1144
        %1146 = vmatprep.subr.mxu0 0.0
        %v1147 = vand.u32 %v267, 4294901760
        %1148 = vmatpush1.msra.mxu0 %v1147
        %1149 = vmatprep.subr.mxu0 0.0
        %v1150 = vand.u32 %v268, 4294901760
        %1151 = vmatpush1.msra.mxu0 %v1150
        %1152 = vmatprep.subr.mxu0 0.0
        %v1153 = vand.u32 %v269, 4294901760
        %1154 = vmatpush1.msra.mxu0 %v1153
        %1155 = vmatprep.subr.mxu0 0.0
        %1156 = vmatpush1.msra.mxu0 0.0
        %1157 = vmatprep.subr.mxu0 0.0
        %1158 = vmatpush1.msra.mxu0 0.0
        %1159 = vmatprep.subr.mxu0 0.0
        %1160 = vmatpush1.msra.mxu0 0.0
        %1161 = vmatprep.subr.mxu0 0.0
        %1162 = vmatpush1.msra.mxu0 0.0
        %1163 = vmatprep.subr.mxu0 0.0
        %1164 = vmatpush1.msra.mxu0 0.0
        %1165 = vmatprep.subr.mxu0 0.0
        %1166 = vmatpush1.msra.mxu0 0.0
        %1167 = vmatprep.subr.mxu0 0.0
        %1168 = vmatpush1.msra.mxu0 0.0
        %1169 = vmatprep.subr.mxu0 0.0
        %1170 = vmatpush1.msra.mxu0 0.0
        %1171 = vmatprep.subr.mxu0 0.0
        %1172 = vmatpush1.msra.mxu0 0.0
        %1173 = vmatprep.subr.mxu0 0.0
        %1174 = vmatpush1.msra.mxu0 0.0
        %1175 = vmatprep.subr.mxu0 0.0
        %1176 = vmatpush1.msra.mxu0 0.0
        %1177 = vmatprep.subr.mxu0 0.0
        %1178 = vmatpush1.msra.mxu0 0.0
        %1179 = vmatprep.subr.mxu0 0.0
        %1180 = vmatpush1.msra.mxu0 0.0
        %1181 = vmatprep.subr.mxu0 0.0
        %1182 = vmatpush1.msra.mxu0 0.0
        %1183 = vmatprep.subr.mxu0 0.0
        %1184 = vmatpush1.msra.mxu0 0.0
        %1185 = vmatprep.subr.mxu0 0.0
        %1186 = vmatpush1.msra.mxu0 0.0
        %1187 = vmatprep.mubr.f32.mxu0 0.0
        %v1188 = vand.u32 %v1105, 4294901760
        %v1189 = vsub.f32 %v1105, %v1188
        %v1190 = vand.u32 %v1189, 4294901760
        %v1191 = vsub.f32 %v1189, %v1190
        %v1192 = vand.u32 %v1191, 4294901760
        %1193 = vmatmul.mubr.f32.gmra.mrb[0].mxu0 %v1192
        %v1194 = vpop.f32.mrb[0].mxu0
        %v1195 = vadd.f32 0.0, %v1194
        %v1196 = vpop.f32.mrb[0].mxu0
        %1197 = vmatprep.mubr.f32.mxu0 0.0
        %v1198 = vand.u32 %v1106, 4294901760
        %v1199 = vsub.f32 %v1106, %v1198
        %v1200 = vand.u32 %v1199, 4294901760
        %v1201 = vsub.f32 %v1199, %v1200
        %v1202 = vand.u32 %v1201, 4294901760
        %1203 = vmatmul.mubr.f32.gmra.mrb[0].mxu0 %v1202
        %v1204 = vpop.f32.mrb[0].mxu0
        %v1205 = vadd.f32 0.0, %v1204
        %v1206 = vpop.f32.mrb[0].mxu0
        %1207 = vdwg.mxu0
        %1208 = vmatprep.subr.mxu0 0.0
        %v1209 = vand.u32 %v254, 4294901760
        %v1210 = vsub.f32 %v254, %v1209
        %v1211 = vand.u32 %v1210, 4294901760
        %v1212 = vsub.f32 %v1210, %v1211
        %v1213 = vand.u32 %v1212, 4294901760
        %1214 = vmatpush1.msra.mxu0 %v1213
        %1215 = vmatprep.subr.mxu0 0.0
        %v1216 = vand.u32 %v255, 4294901760
        %v1217 = vsub.f32 %v255, %v1216
        %v1218 = vand.u32 %v1217, 4294901760
        %v1219 = vsub.f32 %v1217, %v1218
        %v1220 = vand.u32 %v1219, 4294901760
        %1221 = vmatpush1.msra.mxu0 %v1220
        %1222 = vmatprep.subr.mxu0 0.0
        %v1223 = vand.u32 %v256, 4294901760
        %v1224 = vsub.f32 %v256, %v1223
        %v1225 = vand.u32 %v1224, 4294901760
        %v1226 = vsub.f32 %v1224, %v1225
        %v1227 = vand.u32 %v1226, 4294901760
        %1228 = vmatpush1.msra.mxu0 %v1227
        %1229 = vmatprep.subr.mxu0 0.0
        %v1230 = vand.u32 %v257, 4294901760
        %v1231 = vsub.f32 %v257, %v1230
        %v1232 = vand.u32 %v1231, 4294901760
        %v1233 = vsub.f32 %v1231, %v1232
        %v1234 = vand.u32 %v1233, 4294901760
        %1235 = vmatpush1.msra.mxu0 %v1234
        %1236 = vmatprep.subr.mxu0 0.0
        %v1237 = vand.u32 %v258, 4294901760
        %v1238 = vsub.f32 %v258, %v1237
        %v1239 = vand.u32 %v1238, 4294901760
        %v1240 = vsub.f32 %v1238, %v1239
        %v1241 = vand.u32 %v1240, 4294901760
        %1242 = vmatpush1.msra.mxu0 %v1241
        %1243 = vmatprep.subr.mxu0 0.0
        %v1244 = vand.u32 %v259, 4294901760
        %v1245 = vsub.f32 %v259, %v1244
        %v1246 = vand.u32 %v1245, 4294901760
        %v1247 = vsub.f32 %v1245, %v1246
        %v1248 = vand.u32 %v1247, 4294901760
        %1249 = vmatpush1.msra.mxu0 %v1248
        %1250 = vmatprep.subr.mxu0 0.0
        %v1251 = vand.u32 %v260, 4294901760
        %v1252 = vsub.f32 %v260, %v1251
        %v1253 = vand.u32 %v1252, 4294901760
        %v1254 = vsub.f32 %v1252, %v1253
        %v1255 = vand.u32 %v1254, 4294901760
        %1256 = vmatpush1.msra.mxu0 %v1255
        %1257 = vmatprep.subr.mxu0 0.0
        %v1258 = vand.u32 %v261, 4294901760
        %v1259 = vsub.f32 %v261, %v1258
        %v1260 = vand.u32 %v1259, 4294901760
        %v1261 = vsub.f32 %v1259, %v1260
        %v1262 = vand.u32 %v1261, 4294901760
        %1263 = vmatpush1.msra.mxu0 %v1262
        %1264 = vmatprep.subr.mxu0 0.0
        %v1265 = vand.u32 %v262, 4294901760
        %v1266 = vsub.f32 %v262, %v1265
        %v1267 = vand.u32 %v1266, 4294901760
        %v1268 = vsub.f32 %v1266, %v1267
        %v1269 = vand.u32 %v1268, 4294901760
        %1270 = vmatpush1.msra.mxu0 %v1269
        %1271 = vmatprep.subr.mxu0 0.0
        %v1272 = vand.u32 %v263, 4294901760
        %v1273 = vsub.f32 %v263, %v1272
        %v1274 = vand.u32 %v1273, 4294901760
        %v1275 = vsub.f32 %v1273, %v1274
        %v1276 = vand.u32 %v1275, 4294901760
        %1277 = vmatpush1.msra.mxu0 %v1276
        %1278 = vmatprep.subr.mxu0 0.0
        %v1279 = vand.u32 %v264, 4294901760
        %v1280 = vsub.f32 %v264, %v1279
        %v1281 = vand.u32 %v1280, 4294901760
        %v1282 = vsub.f32 %v1280, %v1281
        %v1283 = vand.u32 %v1282, 4294901760
        %1284 = vmatpush1.msra.mxu0 %v1283
        %1285 = vmatprep.subr.mxu0 0.0
        %v1286 = vand.u32 %v265, 4294901760
        %v1287 = vsub.f32 %v265, %v1286
        %v1288 = vand.u32 %v1287, 4294901760
        %v1289 = vsub.f32 %v1287, %v1288
        %v1290 = vand.u32 %v1289, 4294901760
        %1291 = vmatpush1.msra.mxu0 %v1290
        %1292 = vmatprep.subr.mxu0 0.0
        %v1293 = vand.u32 %v266, 4294901760
        %v1294 = vsub.f32 %v266, %v1293
        %v1295 = vand.u32 %v1294, 4294901760
        %v1296 = vsub.f32 %v1294, %v1295
        %v1297 = vand.u32 %v1296, 4294901760
        %1298 = vmatpush1.msra.mxu0 %v1297
        %1299 = vmatprep.subr.mxu0 0.0
        %v1300 = vand.u32 %v267, 4294901760
        %v1301 = vsub.f32 %v267, %v1300
        %v1302 = vand.u32 %v1301, 4294901760
        %v1303 = vsub.f32 %v1301, %v1302
        %v1304 = vand.u32 %v1303, 4294901760
        %1305 = vmatpush1.msra.mxu0 %v1304
        %1306 = vmatprep.subr.mxu0 0.0
        %v1307 = vand.u32 %v268, 4294901760
        %v1308 = vsub.f32 %v268, %v1307
        %v1309 = vand.u32 %v1308, 4294901760
        %v1310 = vsub.f32 %v1308, %v1309
        %v1311 = vand.u32 %v1310, 4294901760
        %1312 = vmatpush1.msra.mxu0 %v1311
        %1313 = vmatprep.subr.mxu0 0.0
        %v1314 = vand.u32 %v269, 4294901760
        %v1315 = vsub.f32 %v269, %v1314
        %v1316 = vand.u32 %v1315, 4294901760
        %v1317 = vsub.f32 %v1315, %v1316
        %v1318 = vand.u32 %v1317, 4294901760
        %1319 = vmatpush1.msra.mxu0 %v1318
        %1320 = vmatprep.subr.mxu0 0.0
        %1321 = vmatpush1.msra.mxu0 0.0
        %1322 = vmatprep.subr.mxu0 0.0
        %1323 = vmatpush1.msra.mxu0 0.0
        %1324 = vmatprep.subr.mxu0 0.0
        %1325 = vmatpush1.msra.mxu0 0.0
        %1326 = vmatprep.subr.mxu0 0.0
        %1327 = vmatpush1.msra.mxu0 0.0
        %1328 = vmatprep.subr.mxu0 0.0
        %1329 = vmatpush1.msra.mxu0 0.0
        %1330 = vmatprep.subr.mxu0 0.0
        %1331 = vmatpush1.msra.mxu0 0.0
        %1332 = vmatprep.subr.mxu0 0.0
        %1333 = vmatpush1.msra.mxu0 0.0
        %1334 = vmatprep.subr.mxu0 0.0
        %1335 = vmatpush1.msra.mxu0 0.0
        %1336 = vmatprep.subr.mxu0 0.0
        %1337 = vmatpush1.msra.mxu0 0.0
        %1338 = vmatprep.subr.mxu0 0.0
        %1339 = vmatpush1.msra.mxu0 0.0
        %1340 = vmatprep.subr.mxu0 0.0
        %1341 = vmatpush1.msra.mxu0 0.0
        %1342 = vmatprep.subr.mxu0 0.0
        %1343 = vmatpush1.msra.mxu0 0.0
        %1344 = vmatprep.subr.mxu0 0.0
        %1345 = vmatpush1.msra.mxu0 0.0
        %1346 = vmatprep.subr.mxu0 0.0
        %1347 = vmatpush1.msra.mxu0 0.0
        %1348 = vmatprep.subr.mxu0 0.0
        %1349 = vmatpush1.msra.mxu0 0.0
        %1350 = vmatprep.subr.mxu0 0.0
        %1351 = vmatpush1.msra.mxu0 0.0
        %1352 = vmatprep.mubr.f32.mxu0 0.0
        %v1353 = vand.u32 %v1105, 4294901760
        %1354 = vmatmul.mubr.f32.gmra.mrb[0].mxu0 %v1353
        %v1355 = vpop.f32.mrb[0].mxu0
        %v1356 = vadd.f32 %v1195, %v1355
        %v1357 = vpop.f32.mrb[0].mxu0
        %1358 = vmatprep.mubr.f32.mxu0 0.0
        %v1359 = vand.u32 %v1106, 4294901760
        %1360 = vmatmul.mubr.f32.gmra.mrb[0].mxu0 %v1359
        %v1361 = vpop.f32.mrb[0].mxu0
        %v1362 = vadd.f32 %v1205, %v1361
        %v1363 = vpop.f32.mrb[0].mxu0
        %1364 = vdwg.mxu0
        %1365 = vmatprep.subr.mxu0 0.0
        %v1366 = vand.u32 %v254, 4294901760
        %v1367 = vsub.f32 %v254, %v1366
        %1368 = vmatpush1.msra.mxu0 %v1367
        %1369 = vmatprep.subr.mxu0 0.0
        %v1370 = vand.u32 %v255, 4294901760
        %v1371 = vsub.f32 %v255, %v1370
        %1372 = vmatpush1.msra.mxu0 %v1371
        %1373 = vmatprep.subr.mxu0 0.0
        %v1374 = vand.u32 %v256, 4294901760
        %v1375 = vsub.f32 %v256, %v1374
        %1376 = vmatpush1.msra.mxu0 %v1375
        %1377 = vmatprep.subr.mxu0 0.0
        %v1378 = vand.u32 %v257, 4294901760
        %v1379 = vsub.f32 %v257, %v1378
        %1380 = vmatpush1.msra.mxu0 %v1379
        %1381 = vmatprep.subr.mxu0 0.0
        %v1382 = vand.u32 %v258, 4294901760
        %v1383 = vsub.f32 %v258, %v1382
        %1384 = vmatpush1.msra.mxu0 %v1383
        %1385 = vmatprep.subr.mxu0 0.0
        %v1386 = vand.u32 %v259, 4294901760
        %v1387 = vsub.f32 %v259, %v1386
        %1388 = vmatpush1.msra.mxu0 %v1387
        %1389 = vmatprep.subr.mxu0 0.0
        %v1390 = vand.u32 %v260, 4294901760
        %v1391 = vsub.f32 %v260, %v1390
        %1392 = vmatpush1.msra.mxu0 %v1391
        %1393 = vmatprep.subr.mxu0 0.0
        %v1394 = vand.u32 %v261, 4294901760
        %v1395 = vsub.f32 %v261, %v1394
        %1396 = vmatpush1.msra.mxu0 %v1395
        %1397 = vmatprep.subr.mxu0 0.0
        %v1398 = vand.u32 %v262, 4294901760
        %v1399 = vsub.f32 %v262, %v1398
        %1400 = vmatpush1.msra.mxu0 %v1399
        %1401 = vmatprep.subr.mxu0 0.0
        %v1402 = vand.u32 %v263, 4294901760
        %v1403 = vsub.f32 %v263, %v1402
        %1404 = vmatpush1.msra.mxu0 %v1403
        %1405 = vmatprep.subr.mxu0 0.0
        %v1406 = vand.u32 %v264, 4294901760
        %v1407 = vsub.f32 %v264, %v1406
        %1408 = vmatpush1.msra.mxu0 %v1407
        %1409 = vmatprep.subr.mxu0 0.0
        %v1410 = vand.u32 %v265, 4294901760
        %v1411 = vsub.f32 %v265, %v1410
        %1412 = vmatpush1.msra.mxu0 %v1411
        %1413 = vmatprep.subr.mxu0 0.0
        %v1414 = vand.u32 %v266, 4294901760
        %v1415 = vsub.f32 %v266, %v1414
        %1416 = vmatpush1.msra.mxu0 %v1415
        %1417 = vmatprep.subr.mxu0 0.0
        %v1418 = vand.u32 %v267, 4294901760
        %v1419 = vsub.f32 %v267, %v1418
        %1420 = vmatpush1.msra.mxu0 %v1419
        %1421 = vmatprep.subr.mxu0 0.0
        %v1422 = vand.u32 %v268, 4294901760
        %v1423 = vsub.f32 %v268, %v1422
        %1424 = vmatpush1.msra.mxu0 %v1423
        %1425 = vmatprep.subr.mxu0 0.0
        %v1426 = vand.u32 %v269, 4294901760
        %v1427 = vsub.f32 %v269, %v1426
        %1428 = vmatpush1.msra.mxu0 %v1427
        %1429 = vmatprep.subr.mxu0 0.0
        %1430 = vmatpush1.msra.mxu0 0.0
        %1431 = vmatprep.subr.mxu0 0.0
        %1432 = vmatpush1.msra.mxu0 0.0
        %1433 = vmatprep.subr.mxu0 0.0
        %1434 = vmatpush1.msra.mxu0 0.0
        %1435 = vmatprep.subr.mxu0 0.0
        %1436 = vmatpush1.msra.mxu0 0.0
        %1437 = vmatprep.subr.mxu0 0.0
        %1438 = vmatpush1.msra.mxu0 0.0
        %1439 = vmatprep.subr.mxu0 0.0
        %1440 = vmatpush1.msra.mxu0 0.0
        %1441 = vmatprep.subr.mxu0 0.0
        %1442 = vmatpush1.msra.mxu0 0.0
        %1443 = vmatprep.subr.mxu0 0.0
        %1444 = vmatpush1.msra.mxu0 0.0
        %1445 = vmatprep.subr.mxu0 0.0
        %1446 = vmatpush1.msra.mxu0 0.0
        %1447 = vmatprep.subr.mxu0 0.0
        %1448 = vmatpush1.msra.mxu0 0.0
        %1449 = vmatprep.subr.mxu0 0.0
        %1450 = vmatpush1.msra.mxu0 0.0
        %1451 = vmatprep.subr.mxu0 0.0
        %1452 = vmatpush1.msra.mxu0 0.0
        %1453 = vmatprep.subr.mxu0 0.0
        %1454 = vmatpush1.msra.mxu0 0.0
        %1455 = vmatprep.subr.mxu0 0.0
        %1456 = vmatpush1.msra.mxu0 0.0
        %1457 = vmatprep.subr.mxu0 0.0
        %1458 = vmatpush1.msra.mxu0 0.0
        %1459 = vmatprep.subr.mxu0 0.0
        %1460 = vmatpush1.msra.mxu0 0.0
        %1461 = vmatprep.mubr.f32.mxu0 0.0
        %v1462 = vand.u32 %v1105, 4294901760
        %v1463 = vsub.f32 %v1105, %v1462
        %1464 = vmatmul.mubr.f32.gmra.mrb[0].mxu0 %v1463
        %v1465 = vpop.f32.mrb[0].mxu0
        %v1466 = vadd.f32 %v1356, %v1465
        %v1467 = vpop.f32.mrb[0].mxu0
        %1468 = vmatprep.mubr.f32.mxu0 0.0
        %v1469 = vand.u32 %v1106, 4294901760
        %v1470 = vsub.f32 %v1106, %v1469
        %1471 = vmatmul.mubr.f32.gmra.mrb[0].mxu0 %v1470
        %v1472 = vpop.f32.mrb[0].mxu0
        %v1473 = vadd.f32 %v1362, %v1472
        %v1474 = vpop.f32.mrb[0].mxu0
        %1475 = vdwg.mxu0
        %1476 = vmatprep.subr.mxu0 0.0
        %v1477 = vand.u32 %v254, 4294901760
        %1478 = vmatpush1.msra.mxu0 %v1477
        %1479 = vmatprep.subr.mxu0 0.0
        %v1480 = vand.u32 %v255, 4294901760
        %1481 = vmatpush1.msra.mxu0 %v1480
        %1482 = vmatprep.subr.mxu0 0.0
        %v1483 = vand.u32 %v256, 4294901760
        %1484 = vmatpush1.msra.mxu0 %v1483
        %1485 = vmatprep.subr.mxu0 0.0
        %v1486 = vand.u32 %v257, 4294901760
        %1487 = vmatpush1.msra.mxu0 %v1486
        %1488 = vmatprep.subr.mxu0 0.0
        %v1489 = vand.u32 %v258, 4294901760
        %1490 = vmatpush1.msra.mxu0 %v1489
        %1491 = vmatprep.subr.mxu0 0.0
        %v1492 = vand.u32 %v259, 4294901760
        %1493 = vmatpush1.msra.mxu0 %v1492
        %1494 = vmatprep.subr.mxu0 0.0
        %v1495 = vand.u32 %v260, 4294901760
        %1496 = vmatpush1.msra.mxu0 %v1495
        %1497 = vmatprep.subr.mxu0 0.0
        %v1498 = vand.u32 %v261, 4294901760
        %1499 = vmatpush1.msra.mxu0 %v1498
        %1500 = vmatprep.subr.mxu0 0.0
        %v1501 = vand.u32 %v262, 4294901760
        %1502 = vmatpush1.msra.mxu0 %v1501
        %1503 = vmatprep.subr.mxu0 0.0
        %v1504 = vand.u32 %v263, 4294901760
        %1505 = vmatpush1.msra.mxu0 %v1504
        %1506 = vmatprep.subr.mxu0 0.0
        %v1507 = vand.u32 %v264, 4294901760
        %1508 = vmatpush1.msra.mxu0 %v1507
        %1509 = vmatprep.subr.mxu0 0.0
        %v1510 = vand.u32 %v265, 4294901760
        %1511 = vmatpush1.msra.mxu0 %v1510
        %1512 = vmatprep.subr.mxu0 0.0
        %v1513 = vand.u32 %v266, 4294901760
        %1514 = vmatpush1.msra.mxu0 %v1513
        %1515 = vmatprep.subr.mxu0 0.0
        %v1516 = vand.u32 %v267, 4294901760
        %1517 = vmatpush1.msra.mxu0 %v1516
        %1518 = vmatprep.subr.mxu0 0.0
        %v1519 = vand.u32 %v268, 4294901760
        %1520 = vmatpush1.msra.mxu0 %v1519
        %1521 = vmatprep.subr.mxu0 0.0
        %v1522 = vand.u32 %v269, 4294901760
        %1523 = vmatpush1.msra.mxu0 %v1522
        %1524 = vmatprep.subr.mxu0 0.0
        %1525 = vmatpush1.msra.mxu0 0.0
        %1526 = vmatprep.subr.mxu0 0.0
        %1527 = vmatpush1.msra.mxu0 0.0
        %1528 = vmatprep.subr.mxu0 0.0
        %1529 = vmatpush1.msra.mxu0 0.0
        %1530 = vmatprep.subr.mxu0 0.0
        %1531 = vmatpush1.msra.mxu0 0.0
        %1532 = vmatprep.subr.mxu0 0.0
        %1533 = vmatpush1.msra.mxu0 0.0
        %1534 = vmatprep.subr.mxu0 0.0
        %1535 = vmatpush1.msra.mxu0 0.0
        %1536 = vmatprep.subr.mxu0 0.0
        %1537 = vmatpush1.msra.mxu0 0.0
        %1538 = vmatprep.subr.mxu0 0.0
        %1539 = vmatpush1.msra.mxu0 0.0
        %1540 = vmatprep.subr.mxu0 0.0
        %1541 = vmatpush1.msra.mxu0 0.0
        %1542 = vmatprep.subr.mxu0 0.0
        %1543 = vmatpush1.msra.mxu0 0.0
        %1544 = vmatprep.subr.mxu0 0.0
        %1545 = vmatpush1.msra.mxu0 0.0
        %1546 = vmatprep.subr.mxu0 0.0
        %1547 = vmatpush1.msra.mxu0 0.0
        %1548 = vmatprep.subr.mxu0 0.0
        %1549 = vmatpush1.msra.mxu0 0.0
        %1550 = vmatprep.subr.mxu0 0.0
        %1551 = vmatpush1.msra.mxu0 0.0
        %1552 = vmatprep.subr.mxu0 0.0
        %1553 = vmatpush1.msra.mxu0 0.0
        %1554 = vmatprep.subr.mxu0 0.0
        %1555 = vmatpush1.msra.mxu0 0.0
        %1556 = vmatprep.mubr.f32.mxu0 0.0
        %v1557 = vand.u32 %v1105, 4294901760
        %v1558 = vsub.f32 %v1105, %v1557
        %v1559 = vand.u32 %v1558, 4294901760
        %1560 = vmatmul.mubr.f32.gmra.mrb[0].mxu0 %v1559
        %v1561 = vpop.f32.mrb[0].mxu0
        %v1562 = vadd.f32 %v1466, %v1561
        %v1563 = vpop.f32.mrb[0].mxu0
        %1564 = vmatprep.mubr.f32.mxu0 0.0
        %v1565 = vand.u32 %v1106, 4294901760
        %v1566 = vsub.f32 %v1106, %v1565
        %v1567 = vand.u32 %v1566, 4294901760
        %1568 = vmatmul.mubr.f32.gmra.mrb[0].mxu0 %v1567
        %v1569 = vpop.f32.mrb[0].mxu0
        %v1570 = vadd.f32 %v1473, %v1569
        %v1571 = vpop.f32.mrb[0].mxu0
        %1572 = vdwg.mxu0
        %1573 = vmatprep.subr.mxu0 0.0
        %v1574 = vand.u32 %v254, 4294901760
        %v1575 = vsub.f32 %v254, %v1574
        %v1576 = vand.u32 %v1575, 4294901760
        %1577 = vmatpush1.msra.mxu0 %v1576
        %1578 = vmatprep.subr.mxu0 0.0
        %v1579 = vand.u32 %v255, 4294901760
        %v1580 = vsub.f32 %v255, %v1579
        %v1581 = vand.u32 %v1580, 4294901760
        %1582 = vmatpush1.msra.mxu0 %v1581
        %1583 = vmatprep.subr.mxu0 0.0
        %v1584 = vand.u32 %v256, 4294901760
        %v1585 = vsub.f32 %v256, %v1584
        %v1586 = vand.u32 %v1585, 4294901760
        %1587 = vmatpush1.msra.mxu0 %v1586
        %1588 = vmatprep.subr.mxu0 0.0
        %v1589 = vand.u32 %v257, 4294901760
        %v1590 = vsub.f32 %v257, %v1589
        %v1591 = vand.u32 %v1590, 4294901760
        %1592 = vmatpush1.msra.mxu0 %v1591
        %1593 = vmatprep.subr.mxu0 0.0
        %v1594 = vand.u32 %v258, 4294901760
        %v1595 = vsub.f32 %v258, %v1594
        %v1596 = vand.u32 %v1595, 4294901760
        %1597 = vmatpush1.msra.mxu0 %v1596
        %1598 = vmatprep.subr.mxu0 0.0
        %v1599 = vand.u32 %v259, 4294901760
        %v1600 = vsub.f32 %v259, %v1599
        %v1601 = vand.u32 %v1600, 4294901760
        %1602 = vmatpush1.msra.mxu0 %v1601
        %1603 = vmatprep.subr.mxu0 0.0
        %v1604 = vand.u32 %v260, 4294901760
        %v1605 = vsub.f32 %v260, %v1604
        %v1606 = vand.u32 %v1605, 4294901760
        %1607 = vmatpush1.msra.mxu0 %v1606
        %1608 = vmatprep.subr.mxu0 0.0
        %v1609 = vand.u32 %v261, 4294901760
        %v1610 = vsub.f32 %v261, %v1609
        %v1611 = vand.u32 %v1610, 4294901760
        %1612 = vmatpush1.msra.mxu0 %v1611
        %1613 = vmatprep.subr.mxu0 0.0
        %v1614 = vand.u32 %v262, 4294901760
        %v1615 = vsub.f32 %v262, %v1614
        %v1616 = vand.u32 %v1615, 4294901760
        %1617 = vmatpush1.msra.mxu0 %v1616
        %1618 = vmatprep.subr.mxu0 0.0
        %v1619 = vand.u32 %v263, 4294901760
        %v1620 = vsub.f32 %v263, %v1619
        %v1621 = vand.u32 %v1620, 4294901760
        %1622 = vmatpush1.msra.mxu0 %v1621
        %1623 = vmatprep.subr.mxu0 0.0
        %v1624 = vand.u32 %v264, 4294901760
        %v1625 = vsub.f32 %v264, %v1624
        %v1626 = vand.u32 %v1625, 4294901760
        %1627 = vmatpush1.msra.mxu0 %v1626
        %1628 = vmatprep.subr.mxu0 0.0
        %v1629 = vand.u32 %v265, 4294901760
        %v1630 = vsub.f32 %v265, %v1629
        %v1631 = vand.u32 %v1630, 4294901760
        %1632 = vmatpush1.msra.mxu0 %v1631
        %1633 = vmatprep.subr.mxu0 0.0
        %v1634 = vand.u32 %v266, 4294901760
        %v1635 = vsub.f32 %v266, %v1634
        %v1636 = vand.u32 %v1635, 4294901760
        %1637 = vmatpush1.msra.mxu0 %v1636
        %1638 = vmatprep.subr.mxu0 0.0
        %v1639 = vand.u32 %v267, 4294901760
        %v1640 = vsub.f32 %v267, %v1639
        %v1641 = vand.u32 %v1640, 4294901760
        %1642 = vmatpush1.msra.mxu0 %v1641
        %1643 = vmatprep.subr.mxu0 0.0
        %v1644 = vand.u32 %v268, 4294901760
        %v1645 = vsub.f32 %v268, %v1644
        %v1646 = vand.u32 %v1645, 4294901760
        %1647 = vmatpush1.msra.mxu0 %v1646
        %1648 = vmatprep.subr.mxu0 0.0
        %v1649 = vand.u32 %v269, 4294901760
        %v1650 = vsub.f32 %v269, %v1649
        %v1651 = vand.u32 %v1650, 4294901760
        %1652 = vmatpush1.msra.mxu0 %v1651
        %1653 = vmatprep.subr.mxu0 0.0
        %1654 = vmatpush1.msra.mxu0 0.0
        %1655 = vmatprep.subr.mxu0 0.0
        %1656 = vmatpush1.msra.mxu0 0.0
        %1657 = vmatprep.subr.mxu0 0.0
        %1658 = vmatpush1.msra.mxu0 0.0
        %1659 = vmatprep.subr.mxu0 0.0
        %1660 = vmatpush1.msra.mxu0 0.0
        %1661 = vmatprep.subr.mxu0 0.0
        %1662 = vmatpush1.msra.mxu0 0.0
        %1663 = vmatprep.subr.mxu0 0.0
        %1664 = vmatpush1.msra.mxu0 0.0
        %1665 = vmatprep.subr.mxu0 0.0
        %1666 = vmatpush1.msra.mxu0 0.0
        %1667 = vmatprep.subr.mxu0 0.0
        %1668 = vmatpush1.msra.mxu0 0.0
        %1669 = vmatprep.subr.mxu0 0.0
        %1670 = vmatpush1.msra.mxu0 0.0
        %1671 = vmatprep.subr.mxu0 0.0
        %1672 = vmatpush1.msra.mxu0 0.0
        %1673 = vmatprep.subr.mxu0 0.0
        %1674 = vmatpush1.msra.mxu0 0.0
        %1675 = vmatprep.subr.mxu0 0.0
        %1676 = vmatpush1.msra.mxu0 0.0
        %1677 = vmatprep.subr.mxu0 0.0
        %1678 = vmatpush1.msra.mxu0 0.0
        %1679 = vmatprep.subr.mxu0 0.0
        %1680 = vmatpush1.msra.mxu0 0.0
        %1681 = vmatprep.subr.mxu0 0.0
        %1682 = vmatpush1.msra.mxu0 0.0
        %1683 = vmatprep.subr.mxu0 0.0
        %1684 = vmatpush1.msra.mxu0 0.0
        %1685 = vmatprep.mubr.f32.mxu0 0.0
        %v1686 = vand.u32 %v1105, 4294901760
        %1687 = vmatmul.mubr.f32.gmra.mrb[0].mxu0 %v1686
        %v1688 = vpop.f32.mrb[0].mxu0
        %v1689 = vadd.f32 %v1562, %v1688
        %v1690 = vpop.f32.mrb[0].mxu0
        %1691 = vmatprep.mubr.f32.mxu0 0.0
        %v1692 = vand.u32 %v1106, 4294901760
        %1693 = vmatmul.mubr.f32.gmra.mrb[0].mxu0 %v1692
        %v1694 = vpop.f32.mrb[0].mxu0
        %v1695 = vadd.f32 %v1570, %v1694
        %v1696 = vpop.f32.mrb[0].mxu0
        %1697 = vdwg.mxu0
        %1698 = vmatprep.subr.mxu0 0.0
        %v1699 = vand.u32 %v254, 4294901760
        %1700 = vmatpush1.msra.mxu0 %v1699
        %1701 = vmatprep.subr.mxu0 0.0
        %v1702 = vand.u32 %v255, 4294901760
        %1703 = vmatpush1.msra.mxu0 %v1702
        %1704 = vmatprep.subr.mxu0 0.0
        %v1705 = vand.u32 %v256, 4294901760
        %1706 = vmatpush1.msra.mxu0 %v1705
        %1707 = vmatprep.subr.mxu0 0.0
        %v1708 = vand.u32 %v257, 4294901760
        %1709 = vmatpush1.msra.mxu0 %v1708
        %1710 = vmatprep.subr.mxu0 0.0
        %v1711 = vand.u32 %v258, 4294901760
        %1712 = vmatpush1.msra.mxu0 %v1711
        %1713 = vmatprep.subr.mxu0 0.0
        %v1714 = vand.u32 %v259, 4294901760
        %1715 = vmatpush1.msra.mxu0 %v1714
        %1716 = vmatprep.subr.mxu0 0.0
        %v1717 = vand.u32 %v260, 4294901760
        %1718 = vmatpush1.msra.mxu0 %v1717
        %1719 = vmatprep.subr.mxu0 0.0
        %v1720 = vand.u32 %v261, 4294901760
        %1721 = vmatpush1.msra.mxu0 %v1720
        %1722 = vmatprep.subr.mxu0 0.0
        %v1723 = vand.u32 %v262, 4294901760
        %1724 = vmatpush1.msra.mxu0 %v1723
        %1725 = vmatprep.subr.mxu0 0.0
        %v1726 = vand.u32 %v263, 4294901760
        %1727 = vmatpush1.msra.mxu0 %v1726
        %1728 = vmatprep.subr.mxu0 0.0
        %v1729 = vand.u32 %v264, 4294901760
        %1730 = vmatpush1.msra.mxu0 %v1729
        %1731 = vmatprep.subr.mxu0 0.0
        %v1732 = vand.u32 %v265, 4294901760
        %1733 = vmatpush1.msra.mxu0 %v1732
        %1734 = vmatprep.subr.mxu0 0.0
        %v1735 = vand.u32 %v266, 4294901760
        %1736 = vmatpush1.msra.mxu0 %v1735
        %1737 = vmatprep.subr.mxu0 0.0
        %v1738 = vand.u32 %v267, 4294901760
        %1739 = vmatpush1.msra.mxu0 %v1738
        %1740 = vmatprep.subr.mxu0 0.0
        %v1741 = vand.u32 %v268, 4294901760
        %1742 = vmatpush1.msra.mxu0 %v1741
        %1743 = vmatprep.subr.mxu0 0.0
        %v1744 = vand.u32 %v269, 4294901760
        %1745 = vmatpush1.msra.mxu0 %v1744
        %1746 = vmatprep.subr.mxu0 0.0
        %1747 = vmatpush1.msra.mxu0 0.0
        %1748 = vmatprep.subr.mxu0 0.0
        %1749 = vmatpush1.msra.mxu0 0.0
        %1750 = vmatprep.subr.mxu0 0.0
        %1751 = vmatpush1.msra.mxu0 0.0
        %1752 = vmatprep.subr.mxu0 0.0
        %1753 = vmatpush1.msra.mxu0 0.0
        %1754 = vmatprep.subr.mxu0 0.0
        %1755 = vmatpush1.msra.mxu0 0.0
        %1756 = vmatprep.subr.mxu0 0.0
        %1757 = vmatpush1.msra.mxu0 0.0
        %1758 = vmatprep.subr.mxu0 0.0
        %1759 = vmatpush1.msra.mxu0 0.0
        %1760 = vmatprep.subr.mxu0 0.0
        %1761 = vmatpush1.msra.mxu0 0.0
        %1762 = vmatprep.subr.mxu0 0.0
        %1763 = vmatpush1.msra.mxu0 0.0
        %1764 = vmatprep.subr.mxu0 0.0
        %1765 = vmatpush1.msra.mxu0 0.0
        %1766 = vmatprep.subr.mxu0 0.0
        %1767 = vmatpush1.msra.mxu0 0.0
        %1768 = vmatprep.subr.mxu0 0.0
        %1769 = vmatpush1.msra.mxu0 0.0
        %1770 = vmatprep.subr.mxu0 0.0
        %1771 = vmatpush1.msra.mxu0 0.0
        %1772 = vmatprep.subr.mxu0 0.0
        %1773 = vmatpush1.msra.mxu0 0.0
        %1774 = vmatprep.subr.mxu0 0.0
        %1775 = vmatpush1.msra.mxu0 0.0
        %1776 = vmatprep.subr.mxu0 0.0
        %1777 = vmatpush1.msra.mxu0 0.0
        %1778 = vmatprep.mubr.f32.mxu0 0.0
        %v1779 = vand.u32 %v1105, 4294901760
        %1780 = vmatmul.mubr.f32.gmra.mrb[0].mxu0 %v1779
        %v1781 = vpop.f32.mrb[0].mxu0
        %v1782 = vadd.f32 %v1689, %v1781
        %v1783 = vpop.f32.mrb[0].mxu0
        %1784 = vmatprep.mubr.f32.mxu0 0.0
        %v1785 = vand.u32 %v1106, 4294901760
        %1786 = vmatmul.mubr.f32.gmra.mrb[0].mxu0 %v1785
        %v1787 = vpop.f32.mrb[0].mxu0
        %v1788 = vadd.f32 %v1695, %v1787
        %v1789 = vpop.f32.mrb[0].mxu0
        %1790 = vdwg.mxu0
        %s1791 = scalar_lea.vmem %s242, 16 [#allocation7]
        %1792 = vst [vmem:[%s1791] sm:$0xff] %v1782
        %1793 = vst [vmem:[%s1791 + $0x8] sm:$0xff] %v1788
        %v1794 = vld [vmem:[%s288] sm:$0xff]
        %v1795 = vld [vmem:[%s288 + $0x8] sm:$0xff]
        %s1796 = sld [smem:[#allocation2 + $0x10]]
        %v1797 = vld [vmem:[%s251] sm:$0xff]
        %v1798 = vld [vmem:[%s251 + $0x8] sm:$0xff]
        %v1799 = vstv %s1796
        %v1800 = vmul.f32 %v1799, %v1797
        %v1801 = vmul.f32 %v1799, %v1798
        %v1802 = vadd.f32 %v1794, %v1800
        %v1803 = vadd.f32 %v1795, %v1801
        %s1804 = sld [smem:[#allocation2 + $0x11]]
        %v1805 = vld [vmem:[%s279] sm:$0xff]
        %v1806 = vld [vmem:[%s279 + $0x8] sm:$0xff]
        %v1807 = vstv %s1804
        %v1808 = vmul.f32 %v1807, %v1805
        %v1809 = vmul.f32 %v1807, %v1806
        %v1810 = vadd.f32 %v1802, %v1808
        %v1811 = vadd.f32 %v1803, %v1809
        %s1812 = sld [smem:[#allocation2 + $0x12]]
        %v1813 = vstv %s1812
        %v1814 = vmul.f32 %v1813, %v1794
        %v1815 = vmul.f32 %v1813, %v1795
        %v1816 = vadd.f32 %v1810, %v1814
        %v1817 = vadd.f32 %v1811, %v1815
        %s1818 = sld [smem:[#allocation2 + $0x13]]
        %v1819 = vld [vmem:[%s297] sm:$0xff]
        %v1820 = vld [vmem:[%s297 + $0x8] sm:$0xff]
        %v1821 = vstv %s1818
        %v1822 = vmul.f32 %v1821, %v1819
        %v1823 = vmul.f32 %v1821, %v1820
        %v1824 = vadd.f32 %v1816, %v1822
        %v1825 = vadd.f32 %v1817, %v1823
        %s1826 = sld [smem:[#allocation2 + $0x14]]
        %v1827 = vld [vmem:[%s306] sm:$0xff]
        %v1828 = vld [vmem:[%s306 + $0x8] sm:$0xff]
        %v1829 = vstv %s1826
        %v1830 = vmul.f32 %v1829, %v1827
        %v1831 = vmul.f32 %v1829, %v1828
        %v1832 = vadd.f32 %v1824, %v1830
        %v1833 = vadd.f32 %v1825, %v1831
        %s1834 = sld [smem:[#allocation2 + $0x15]]
        %v1835 = vld [vmem:[%s315] sm:$0xff]
        %v1836 = vld [vmem:[%s315 + $0x8] sm:$0xff]
        %v1837 = vstv %s1834
        %v1838 = vmul.f32 %v1837, %v1835
        %v1839 = vmul.f32 %v1837, %v1836
        %v1840 = vadd.f32 %v1832, %v1838
        %v1841 = vadd.f32 %v1833, %v1839
        %s1842 = sld [smem:[#allocation2 + $0x16]]
        %v1843 = vld [vmem:[%s324] sm:$0xff]
        %v1844 = vld [vmem:[%s324 + $0x8] sm:$0xff]
        %v1845 = vstv %s1842
        %v1846 = vmul.f32 %v1845, %v1843
        %v1847 = vmul.f32 %v1845, %v1844
        %v1848 = vadd.f32 %v1840, %v1846
        %v1849 = vadd.f32 %v1841, %v1847
        %s1850 = sld [smem:[#allocation2 + $0x17]]
        %v1851 = vld [vmem:[%s333] sm:$0xff]
        %v1852 = vld [vmem:[%s333 + $0x8] sm:$0xff]
        %v1853 = vstv %s1850
        %v1854 = vmul.f32 %v1853, %v1851
        %v1855 = vmul.f32 %v1853, %v1852
        %v1856 = vadd.f32 %v1848, %v1854
        %v1857 = vadd.f32 %v1849, %v1855
        %s1858 = sld [smem:[#allocation5 + $0x2]]
        %vm1859 = vcmp.ge.f32.partialorder %v1856, 0.0
        %vm1860 = vcmp.ge.f32.partialorder %v1857, 0.0
        %v1861 = vstv %s1858
        %v1862 = vmul.f32 %v1861, %v1856
        %v1863 = vmul.f32 %v1861, %v1857
        %v1864 = vsel %vm1859, %v1856, %v1862
        %v1865 = vsel %vm1860, %v1857, %v1863
        %1866 = vmatprep.subr.mxu0 0.0
        %v1867 = vand.u32 %v254, 4294901760
        %1868 = vmatpush1.msra.mxu0 %v1867
        %1869 = vmatprep.subr.mxu0 0.0
        %v1870 = vand.u32 %v255, 4294901760
        %1871 = vmatpush1.msra.mxu0 %v1870
        %1872 = vmatprep.subr.mxu0 0.0
        %v1873 = vand.u32 %v256, 4294901760
        %1874 = vmatpush1.msra.mxu0 %v1873
        %1875 = vmatprep.subr.mxu0 0.0
        %v1876 = vand.u32 %v257, 4294901760
        %1877 = vmatpush1.msra.mxu0 %v1876
        %1878 = vmatprep.subr.mxu0 0.0
        %v1879 = vand.u32 %v258, 4294901760
        %1880 = vmatpush1.msra.mxu0 %v1879
        %1881 = vmatprep.subr.mxu0 0.0
        %v1882 = vand.u32 %v259, 4294901760
        %1883 = vmatpush1.msra.mxu0 %v1882
        %1884 = vmatprep.subr.mxu0 0.0
        %v1885 = vand.u32 %v260, 4294901760
        %1886 = vmatpush1.msra.mxu0 %v1885
        %1887 = vmatprep.subr.mxu0 0.0
        %v1888 = vand.u32 %v261, 4294901760
        %1889 = vmatpush1.msra.mxu0 %v1888
        %1890 = vmatprep.subr.mxu0 0.0
        %v1891 = vand.u32 %v262, 4294901760
        %1892 = vmatpush1.msra.mxu0 %v1891
        %1893 = vmatprep.subr.mxu0 0.0
        %v1894 = vand.u32 %v263, 4294901760
        %1895 = vmatpush1.msra.mxu0 %v1894
        %1896 = vmatprep.subr.mxu0 0.0
        %v1897 = vand.u32 %v264, 4294901760
        %1898 = vmatpush1.msra.mxu0 %v1897
        %1899 = vmatprep.subr.mxu0 0.0
        %v1900 = vand.u32 %v265, 4294901760
        %1901 = vmatpush1.msra.mxu0 %v1900
        %1902 = vmatprep.subr.mxu0 0.0
        %v1903 = vand.u32 %v266, 4294901760
        %1904 = vmatpush1.msra.mxu0 %v1903
        %1905 = vmatprep.subr.mxu0 0.0
        %v1906 = vand.u32 %v267, 4294901760
        %1907 = vmatpush1.msra.mxu0 %v1906
        %1908 = vmatprep.subr.mxu0 0.0
        %v1909 = vand.u32 %v268, 4294901760
        %1910 = vmatpush1.msra.mxu0 %v1909
        %1911 = vmatprep.subr.mxu0 0.0
        %v1912 = vand.u32 %v269, 4294901760
        %1913 = vmatpush1.msra.mxu0 %v1912
        %1914 = vmatprep.subr.mxu0 0.0
        %1915 = vmatpush1.msra.mxu0 0.0
        %1916 = vmatprep.subr.mxu0 0.0
        %1917 = vmatpush1.msra.mxu0 0.0
        %1918 = vmatprep.subr.mxu0 0.0
        %1919 = vmatpush1.msra.mxu0 0.0
        %1920 = vmatprep.subr.mxu0 0.0
        %1921 = vmatpush1.msra.mxu0 0.0
        %1922 = vmatprep.subr.mxu0 0.0
        %1923 = vmatpush1.msra.mxu0 0.0
        %1924 = vmatprep.subr.mxu0 0.0
        %1925 = vmatpush1.msra.mxu0 0.0
        %1926 = vmatprep.subr.mxu0 0.0
        %1927 = vmatpush1.msra.mxu0 0.0
        %1928 = vmatprep.subr.mxu0 0.0
        %1929 = vmatpush1.msra.mxu0 0.0
        %1930 = vmatprep.subr.mxu0 0.0
        %1931 = vmatpush1.msra.mxu0 0.0
        %1932 = vmatprep.subr.mxu0 0.0
        %1933 = vmatpush1.msra.mxu0 0.0
        %1934 = vmatprep.subr.mxu0 0.0
        %1935 = vmatpush1.msra.mxu0 0.0
        %1936 = vmatprep.subr.mxu0 0.0
        %1937 = vmatpush1.msra.mxu0 0.0
        %1938 = vmatprep.subr.mxu0 0.0
        %1939 = vmatpush1.msra.mxu0 0.0
        %1940 = vmatprep.subr.mxu0 0.0
        %1941 = vmatpush1.msra.mxu0 0.0
        %1942 = vmatprep.subr.mxu0 0.0
        %1943 = vmatpush1.msra.mxu0 0.0
        %1944 = vmatprep.subr.mxu0 0.0
        %1945 = vmatpush1.msra.mxu0 0.0
        %1946 = vmatprep.mubr.f32.mxu0 0.0
        %v1947 = vand.u32 %v1864, 4294901760
        %v1948 = vsub.f32 %v1864, %v1947
        %v1949 = vand.u32 %v1948, 4294901760
        %v1950 = vsub.f32 %v1948, %v1949
        %v1951 = vand.u32 %v1950, 4294901760
        %1952 = vmatmul.mubr.f32.gmra.mrb[0].mxu0 %v1951
        %v1953 = vpop.f32.mrb[0].mxu0
        %v1954 = vadd.f32 0.0, %v1953
        %v1955 = vpop.f32.mrb[0].mxu0
        %1956 = vmatprep.mubr.f32.mxu0 0.0
        %v1957 = vand.u32 %v1865, 4294901760
        %v1958 = vsub.f32 %v1865, %v1957
        %v1959 = vand.u32 %v1958, 4294901760
        %v1960 = vsub.f32 %v1958, %v1959
        %v1961 = vand.u32 %v1960, 4294901760
        %1962 = vmatmul.mubr.f32.gmra.mrb[0].mxu0 %v1961
        %v1963 = vpop.f32.mrb[0].mxu0
        %v1964 = vadd.f32 0.0, %v1963
        %v1965 = vpop.f32.mrb[0].mxu0
        %1966 = vdwg.mxu0
        %1967 = vmatprep.subr.mxu0 0.0
        %v1968 = vand.u32 %v254, 4294901760
        %v1969 = vsub.f32 %v254, %v1968
        %v1970 = vand.u32 %v1969, 4294901760
        %v1971 = vsub.f32 %v1969, %v1970
        %v1972 = vand.u32 %v1971, 4294901760
        %1973 = vmatpush1.msra.mxu0 %v1972
        %1974 = vmatprep.subr.mxu0 0.0
        %v1975 = vand.u32 %v255, 4294901760
        %v1976 = vsub.f32 %v255, %v1975
        %v1977 = vand.u32 %v1976, 4294901760
        %v1978 = vsub.f32 %v1976, %v1977
        %v1979 = vand.u32 %v1978, 4294901760
        %1980 = vmatpush1.msra.mxu0 %v1979
        %1981 = vmatprep.subr.mxu0 0.0
        %v1982 = vand.u32 %v256, 4294901760
        %v1983 = vsub.f32 %v256, %v1982
        %v1984 = vand.u32 %v1983, 4294901760
        %v1985 = vsub.f32 %v1983, %v1984
        %v1986 = vand.u32 %v1985, 4294901760
        %1987 = vmatpush1.msra.mxu0 %v1986
        %1988 = vmatprep.subr.mxu0 0.0
        %v1989 = vand.u32 %v257, 4294901760
        %v1990 = vsub.f32 %v257, %v1989
        %v1991 = vand.u32 %v1990, 4294901760
        %v1992 = vsub.f32 %v1990, %v1991
        %v1993 = vand.u32 %v1992, 4294901760
        %1994 = vmatpush1.msra.mxu0 %v1993
        %1995 = vmatprep.subr.mxu0 0.0
        %v1996 = vand.u32 %v258, 4294901760
        %v1997 = vsub.f32 %v258, %v1996
        %v1998 = vand.u32 %v1997, 4294901760
        %v1999 = vsub.f32 %v1997, %v1998
        %v2000 = vand.u32 %v1999, 4294901760
        %2001 = vmatpush1.msra.mxu0 %v2000
        %2002 = vmatprep.subr.mxu0 0.0
        %v2003 = vand.u32 %v259, 4294901760
        %v2004 = vsub.f32 %v259, %v2003
        %v2005 = vand.u32 %v2004, 4294901760
        %v2006 = vsub.f32 %v2004, %v2005
        %v2007 = vand.u32 %v2006, 4294901760
        %2008 = vmatpush1.msra.mxu0 %v2007
        %2009 = vmatprep.subr.mxu0 0.0
        %v2010 = vand.u32 %v260, 4294901760
        %v2011 = vsub.f32 %v260, %v2010
        %v2012 = vand.u32 %v2011, 4294901760
        %v2013 = vsub.f32 %v2011, %v2012
        %v2014 = vand.u32 %v2013, 4294901760
        %2015 = vmatpush1.msra.mxu0 %v2014
        %2016 = vmatprep.subr.mxu0 0.0
        %v2017 = vand.u32 %v261, 4294901760
        %v2018 = vsub.f32 %v261, %v2017
        %v2019 = vand.u32 %v2018, 4294901760
        %v2020 = vsub.f32 %v2018, %v2019
        %v2021 = vand.u32 %v2020, 4294901760
        %2022 = vmatpush1.msra.mxu0 %v2021
        %2023 = vmatprep.subr.mxu0 0.0
        %v2024 = vand.u32 %v262, 4294901760
        %v2025 = vsub.f32 %v262, %v2024
        %v2026 = vand.u32 %v2025, 4294901760
        %v2027 = vsub.f32 %v2025, %v2026
        %v2028 = vand.u32 %v2027, 4294901760
        %2029 = vmatpush1.msra.mxu0 %v2028
        %2030 = vmatprep.subr.mxu0 0.0
        %v2031 = vand.u32 %v263, 4294901760
        %v2032 = vsub.f32 %v263, %v2031
        %v2033 = vand.u32 %v2032, 4294901760
        %v2034 = vsub.f32 %v2032, %v2033
        %v2035 = vand.u32 %v2034, 4294901760
        %2036 = vmatpush1.msra.mxu0 %v2035
        %2037 = vmatprep.subr.mxu0 0.0
        %v2038 = vand.u32 %v264, 4294901760
        %v2039 = vsub.f32 %v264, %v2038
        %v2040 = vand.u32 %v2039, 4294901760
        %v2041 = vsub.f32 %v2039, %v2040
        %v2042 = vand.u32 %v2041, 4294901760
        %2043 = vmatpush1.msra.mxu0 %v2042
        %2044 = vmatprep.subr.mxu0 0.0
        %v2045 = vand.u32 %v265, 4294901760
        %v2046 = vsub.f32 %v265, %v2045
        %v2047 = vand.u32 %v2046, 4294901760
        %v2048 = vsub.f32 %v2046, %v2047
        %v2049 = vand.u32 %v2048, 4294901760
        %2050 = vmatpush1.msra.mxu0 %v2049
        %2051 = vmatprep.subr.mxu0 0.0
        %v2052 = vand.u32 %v266, 4294901760
        %v2053 = vsub.f32 %v266, %v2052
        %v2054 = vand.u32 %v2053, 4294901760
        %v2055 = vsub.f32 %v2053, %v2054
        %v2056 = vand.u32 %v2055, 4294901760
        %2057 = vmatpush1.msra.mxu0 %v2056
        %2058 = vmatprep.subr.mxu0 0.0
        %v2059 = vand.u32 %v267, 4294901760
        %v2060 = vsub.f32 %v267, %v2059
        %v2061 = vand.u32 %v2060, 4294901760
        %v2062 = vsub.f32 %v2060, %v2061
        %v2063 = vand.u32 %v2062, 4294901760
        %2064 = vmatpush1.msra.mxu0 %v2063
        %2065 = vmatprep.subr.mxu0 0.0
        %v2066 = vand.u32 %v268, 4294901760
        %v2067 = vsub.f32 %v268, %v2066
        %v2068 = vand.u32 %v2067, 4294901760
        %v2069 = vsub.f32 %v2067, %v2068
        %v2070 = vand.u32 %v2069, 4294901760
        %2071 = vmatpush1.msra.mxu0 %v2070
        %2072 = vmatprep.subr.mxu0 0.0
        %v2073 = vand.u32 %v269, 4294901760
        %v2074 = vsub.f32 %v269, %v2073
        %v2075 = vand.u32 %v2074, 4294901760
        %v2076 = vsub.f32 %v2074, %v2075
        %v2077 = vand.u32 %v2076, 4294901760
        %2078 = vmatpush1.msra.mxu0 %v2077
        %2079 = vmatprep.subr.mxu0 0.0
        %2080 = vmatpush1.msra.mxu0 0.0
        %2081 = vmatprep.subr.mxu0 0.0
        %2082 = vmatpush1.msra.mxu0 0.0
        %2083 = vmatprep.subr.mxu0 0.0
        %2084 = vmatpush1.msra.mxu0 0.0
        %2085 = vmatprep.subr.mxu0 0.0
        %2086 = vmatpush1.msra.mxu0 0.0
        %2087 = vmatprep.subr.mxu0 0.0
        %2088 = vmatpush1.msra.mxu0 0.0
        %2089 = vmatprep.subr.mxu0 0.0
        %2090 = vmatpush1.msra.mxu0 0.0
        %2091 = vmatprep.subr.mxu0 0.0
        %2092 = vmatpush1.msra.mxu0 0.0
        %2093 = vmatprep.subr.mxu0 0.0
        %2094 = vmatpush1.msra.mxu0 0.0
        %2095 = vmatprep.subr.mxu0 0.0
        %2096 = vmatpush1.msra.mxu0 0.0
        %2097 = vmatprep.subr.mxu0 0.0
        %2098 = vmatpush1.msra.mxu0 0.0
        %2099 = vmatprep.subr.mxu0 0.0
        %2100 = vmatpush1.msra.mxu0 0.0
        %2101 = vmatprep.subr.mxu0 0.0
        %2102 = vmatpush1.msra.mxu0 0.0
        %2103 = vmatprep.subr.mxu0 0.0
        %2104 = vmatpush1.msra.mxu0 0.0
        %2105 = vmatprep.subr.mxu0 0.0
        %2106 = vmatpush1.msra.mxu0 0.0
        %2107 = vmatprep.subr.mxu0 0.0
        %2108 = vmatpush1.msra.mxu0 0.0
        %2109 = vmatprep.subr.mxu0 0.0
        %2110 = vmatpush1.msra.mxu0 0.0
        %2111 = vmatprep.mubr.f32.mxu0 0.0
        %v2112 = vand.u32 %v1864, 4294901760
        %2113 = vmatmul.mubr.f32.gmra.mrb[0].mxu0 %v2112
        %v2114 = vpop.f32.mrb[0].mxu0
        %v2115 = vadd.f32 %v1954, %v2114
        %v2116 = vpop.f32.mrb[0].mxu0
        %2117 = vmatprep.mubr.f32.mxu0 0.0
        %v2118 = vand.u32 %v1865, 4294901760
        %2119 = vmatmul.mubr.f32.gmra.mrb[0].mxu0 %v2118
        %v2120 = vpop.f32.mrb[0].mxu0
        %v2121 = vadd.f32 %v1964, %v2120
        %v2122 = vpop.f32.mrb[0].mxu0
        %2123 = vdwg.mxu0
        %2124 = vmatprep.subr.mxu0 0.0
        %v2125 = vand.u32 %v254, 4294901760
        %v2126 = vsub.f32 %v254, %v2125
        %2127 = vmatpush1.msra.mxu0 %v2126
        %2128 = vmatprep.subr.mxu0 0.0
        %v2129 = vand.u32 %v255, 4294901760
        %v2130 = vsub.f32 %v255, %v2129
        %2131 = vmatpush1.msra.mxu0 %v2130
        %2132 = vmatprep.subr.mxu0 0.0
        %v2133 = vand.u32 %v256, 4294901760
        %v2134 = vsub.f32 %v256, %v2133
        %2135 = vmatpush1.msra.mxu0 %v2134
        %2136 = vmatprep.subr.mxu0 0.0
        %v2137 = vand.u32 %v257, 4294901760
        %v2138 = vsub.f32 %v257, %v2137
        %2139 = vmatpush1.msra.mxu0 %v2138
        %2140 = vmatprep.subr.mxu0 0.0
        %v2141 = vand.u32 %v258, 4294901760
        %v2142 = vsub.f32 %v258, %v2141
        %2143 = vmatpush1.msra.mxu0 %v2142
        %2144 = vmatprep.subr.mxu0 0.0
        %v2145 = vand.u32 %v259, 4294901760
        %v2146 = vsub.f32 %v259, %v2145
        %2147 = vmatpush1.msra.mxu0 %v2146
        %2148 = vmatprep.subr.mxu0 0.0
        %v2149 = vand.u32 %v260, 4294901760
        %v2150 = vsub.f32 %v260, %v2149
        %2151 = vmatpush1.msra.mxu0 %v2150
        %2152 = vmatprep.subr.mxu0 0.0
        %v2153 = vand.u32 %v261, 4294901760
        %v2154 = vsub.f32 %v261, %v2153
        %2155 = vmatpush1.msra.mxu0 %v2154
        %2156 = vmatprep.subr.mxu0 0.0
        %v2157 = vand.u32 %v262, 4294901760
        %v2158 = vsub.f32 %v262, %v2157
        %2159 = vmatpush1.msra.mxu0 %v2158
        %2160 = vmatprep.subr.mxu0 0.0
        %v2161 = vand.u32 %v263, 4294901760
        %v2162 = vsub.f32 %v263, %v2161
        %2163 = vmatpush1.msra.mxu0 %v2162
        %2164 = vmatprep.subr.mxu0 0.0
        %v2165 = vand.u32 %v264, 4294901760
        %v2166 = vsub.f32 %v264, %v2165
        %2167 = vmatpush1.msra.mxu0 %v2166
        %2168 = vmatprep.subr.mxu0 0.0
        %v2169 = vand.u32 %v265, 4294901760
        %v2170 = vsub.f32 %v265, %v2169
        %2171 = vmatpush1.msra.mxu0 %v2170
        %2172 = vmatprep.subr.mxu0 0.0
        %v2173 = vand.u32 %v266, 4294901760
        %v2174 = vsub.f32 %v266, %v2173
        %2175 = vmatpush1.msra.mxu0 %v2174
        %2176 = vmatprep.subr.mxu0 0.0
        %v2177 = vand.u32 %v267, 4294901760
        %v2178 = vsub.f32 %v267, %v2177
        %2179 = vmatpush1.msra.mxu0 %v2178
        %2180 = vmatprep.subr.mxu0 0.0
        %v2181 = vand.u32 %v268, 4294901760
        %v2182 = vsub.f32 %v268, %v2181
        %2183 = vmatpush1.msra.mxu0 %v2182
        %2184 = vmatprep.subr.mxu0 0.0
        %v2185 = vand.u32 %v269, 4294901760
        %v2186 = vsub.f32 %v269, %v2185
        %2187 = vmatpush1.msra.mxu0 %v2186
        %2188 = vmatprep.subr.mxu0 0.0
        %2189 = vmatpush1.msra.mxu0 0.0
        %2190 = vmatprep.subr.mxu0 0.0
        %2191 = vmatpush1.msra.mxu0 0.0
        %2192 = vmatprep.subr.mxu0 0.0
        %2193 = vmatpush1.msra.mxu0 0.0
        %2194 = vmatprep.subr.mxu0 0.0
        %2195 = vmatpush1.msra.mxu0 0.0
        %2196 = vmatprep.subr.mxu0 0.0
        %2197 = vmatpush1.msra.mxu0 0.0
        %2198 = vmatprep.subr.mxu0 0.0
        %2199 = vmatpush1.msra.mxu0 0.0
        %2200 = vmatprep.subr.mxu0 0.0
        %2201 = vmatpush1.msra.mxu0 0.0
        %2202 = vmatprep.subr.mxu0 0.0
        %2203 = vmatpush1.msra.mxu0 0.0
        %2204 = vmatprep.subr.mxu0 0.0
        %2205 = vmatpush1.msra.mxu0 0.0
        %2206 = vmatprep.subr.mxu0 0.0
        %2207 = vmatpush1.msra.mxu0 0.0
        %2208 = vmatprep.subr.mxu0 0.0
        %2209 = vmatpush1.msra.mxu0 0.0
        %2210 = vmatprep.subr.mxu0 0.0
        %2211 = vmatpush1.msra.mxu0 0.0
        %2212 = vmatprep.subr.mxu0 0.0
        %2213 = vmatpush1.msra.mxu0 0.0
        %2214 = vmatprep.subr.mxu0 0.0
        %2215 = vmatpush1.msra.mxu0 0.0
        %2216 = vmatprep.subr.mxu0 0.0
        %2217 = vmatpush1.msra.mxu0 0.0
        %2218 = vmatprep.subr.mxu0 0.0
        %2219 = vmatpush1.msra.mxu0 0.0
        %2220 = vmatprep.mubr.f32.mxu0 0.0
        %v2221 = vand.u32 %v1864, 4294901760
        %v2222 = vsub.f32 %v1864, %v2221
        %2223 = vmatmul.mubr.f32.gmra.mrb[0].mxu0 %v2222
        %v2224 = vpop.f32.mrb[0].mxu0
        %v2225 = vadd.f32 %v2115, %v2224
        %v2226 = vpop.f32.mrb[0].mxu0
        %2227 = vmatprep.mubr.f32.mxu0 0.0
        %v2228 = vand.u32 %v1865, 4294901760
        %v2229 = vsub.f32 %v1865, %v2228
        %2230 = vmatmul.mubr.f32.gmra.mrb[0].mxu0 %v2229
        %v2231 = vpop.f32.mrb[0].mxu0
        %v2232 = vadd.f32 %v2121, %v2231
        %v2233 = vpop.f32.mrb[0].mxu0
        %2234 = vdwg.mxu0
        %2235 = vmatprep.subr.mxu0 0.0
        %v2236 = vand.u32 %v254, 4294901760
        %2237 = vmatpush1.msra.mxu0 %v2236
        %2238 = vmatprep.subr.mxu0 0.0
        %v2239 = vand.u32 %v255, 4294901760
        %2240 = vmatpush1.msra.mxu0 %v2239
        %2241 = vmatprep.subr.mxu0 0.0
        %v2242 = vand.u32 %v256, 4294901760
        %2243 = vmatpush1.msra.mxu0 %v2242
        %2244 = vmatprep.subr.mxu0 0.0
        %v2245 = vand.u32 %v257, 4294901760
        %2246 = vmatpush1.msra.mxu0 %v2245
        %2247 = vmatprep.subr.mxu0 0.0
        %v2248 = vand.u32 %v258, 4294901760
        %2249 = vmatpush1.msra.mxu0 %v2248
        %2250 = vmatprep.subr.mxu0 0.0
        %v2251 = vand.u32 %v259, 4294901760
        %2252 = vmatpush1.msra.mxu0 %v2251
        %2253 = vmatprep.subr.mxu0 0.0
        %v2254 = vand.u32 %v260, 4294901760
        %2255 = vmatpush1.msra.mxu0 %v2254
        %2256 = vmatprep.subr.mxu0 0.0
        %v2257 = vand.u32 %v261, 4294901760
        %2258 = vmatpush1.msra.mxu0 %v2257
        %2259 = vmatprep.subr.mxu0 0.0
        %v2260 = vand.u32 %v262, 4294901760
        %2261 = vmatpush1.msra.mxu0 %v2260
        %2262 = vmatprep.subr.mxu0 0.0
        %v2263 = vand.u32 %v263, 4294901760
        %2264 = vmatpush1.msra.mxu0 %v2263
        %2265 = vmatprep.subr.mxu0 0.0
        %v2266 = vand.u32 %v264, 4294901760
        %2267 = vmatpush1.msra.mxu0 %v2266
        %2268 = vmatprep.subr.mxu0 0.0
        %v2269 = vand.u32 %v265, 4294901760
        %2270 = vmatpush1.msra.mxu0 %v2269
        %2271 = vmatprep.subr.mxu0 0.0
        %v2272 = vand.u32 %v266, 4294901760
        %2273 = vmatpush1.msra.mxu0 %v2272
        %2274 = vmatprep.subr.mxu0 0.0
        %v2275 = vand.u32 %v267, 4294901760
        %2276 = vmatpush1.msra.mxu0 %v2275
        %2277 = vmatprep.subr.mxu0 0.0
        %v2278 = vand.u32 %v268, 4294901760
        %2279 = vmatpush1.msra.mxu0 %v2278
        %2280 = vmatprep.subr.mxu0 0.0
        %v2281 = vand.u32 %v269, 4294901760
        %2282 = vmatpush1.msra.mxu0 %v2281
        %2283 = vmatprep.subr.mxu0 0.0
        %2284 = vmatpush1.msra.mxu0 0.0
        %2285 = vmatprep.subr.mxu0 0.0
        %2286 = vmatpush1.msra.mxu0 0.0
        %2287 = vmatprep.subr.mxu0 0.0
        %2288 = vmatpush1.msra.mxu0 0.0
        %2289 = vmatprep.subr.mxu0 0.0
        %2290 = vmatpush1.msra.mxu0 0.0
        %2291 = vmatprep.subr.mxu0 0.0
        %2292 = vmatpush1.msra.mxu0 0.0
        %2293 = vmatprep.subr.mxu0 0.0
        %2294 = vmatpush1.msra.mxu0 0.0
        %2295 = vmatprep.subr.mxu0 0.0
        %2296 = vmatpush1.msra.mxu0 0.0
        %2297 = vmatprep.subr.mxu0 0.0
        %2298 = vmatpush1.msra.mxu0 0.0
        %2299 = vmatprep.subr.mxu0 0.0
        %2300 = vmatpush1.msra.mxu0 0.0
        %2301 = vmatprep.subr.mxu0 0.0
        %2302 = vmatpush1.msra.mxu0 0.0
        %2303 = vmatprep.subr.mxu0 0.0
        %2304 = vmatpush1.msra.mxu0 0.0
        %2305 = vmatprep.subr.mxu0 0.0
        %2306 = vmatpush1.msra.mxu0 0.0
        %2307 = vmatprep.subr.mxu0 0.0
        %2308 = vmatpush1.msra.mxu0 0.0
        %2309 = vmatprep.subr.mxu0 0.0
        %2310 = vmatpush1.msra.mxu0 0.0
        %2311 = vmatprep.subr.mxu0 0.0
        %2312 = vmatpush1.msra.mxu0 0.0
        %2313 = vmatprep.subr.mxu0 0.0
        %2314 = vmatpush1.msra.mxu0 0.0
        %2315 = vmatprep.mubr.f32.mxu0 0.0
        %v2316 = vand.u32 %v1864, 4294901760
        %v2317 = vsub.f32 %v1864, %v2316
        %v2318 = vand.u32 %v2317, 4294901760
        %2319 = vmatmul.mubr.f32.gmra.mrb[0].mxu0 %v2318
        %v2320 = vpop.f32.mrb[0].mxu0
        %v2321 = vadd.f32 %v2225, %v2320
        %v2322 = vpop.f32.mrb[0].mxu0
        %2323 = vmatprep.mubr.f32.mxu0 0.0
        %v2324 = vand.u32 %v1865, 4294901760
        %v2325 = vsub.f32 %v1865, %v2324
        %v2326 = vand.u32 %v2325, 4294901760
        %2327 = vmatmul.mubr.f32.gmra.mrb[0].mxu0 %v2326
        %v2328 = vpop.f32.mrb[0].mxu0
        %v2329 = vadd.f32 %v2232, %v2328
        %v2330 = vpop.f32.mrb[0].mxu0
        %2331 = vdwg.mxu0
        %2332 = vmatprep.subr.mxu0 0.0
        %v2333 = vand.u32 %v254, 4294901760
        %v2334 = vsub.f32 %v254, %v2333
        %v2335 = vand.u32 %v2334, 4294901760
        %2336 = vmatpush1.msra.mxu0 %v2335
        %2337 = vmatprep.subr.mxu0 0.0
        %v2338 = vand.u32 %v255, 4294901760
        %v2339 = vsub.f32 %v255, %v2338
        %v2340 = vand.u32 %v2339, 4294901760
        %2341 = vmatpush1.msra.mxu0 %v2340
        %2342 = vmatprep.subr.mxu0 0.0
        %v2343 = vand.u32 %v256, 4294901760
        %v2344 = vsub.f32 %v256, %v2343
        %v2345 = vand.u32 %v2344, 4294901760
        %2346 = vmatpush1.msra.mxu0 %v2345
        %2347 = vmatprep.subr.mxu0 0.0
        %v2348 = vand.u32 %v257, 4294901760
        %v2349 = vsub.f32 %v257, %v2348
        %v2350 = vand.u32 %v2349, 4294901760
        %2351 = vmatpush1.msra.mxu0 %v2350
        %2352 = vmatprep.subr.mxu0 0.0
        %v2353 = vand.u32 %v258, 4294901760
        %v2354 = vsub.f32 %v258, %v2353
        %v2355 = vand.u32 %v2354, 4294901760
        %2356 = vmatpush1.msra.mxu0 %v2355
        %2357 = vmatprep.subr.mxu0 0.0
        %v2358 = vand.u32 %v259, 4294901760
        %v2359 = vsub.f32 %v259, %v2358
        %v2360 = vand.u32 %v2359, 4294901760
        %2361 = vmatpush1.msra.mxu0 %v2360
        %2362 = vmatprep.subr.mxu0 0.0
        %v2363 = vand.u32 %v260, 4294901760
        %v2364 = vsub.f32 %v260, %v2363
        %v2365 = vand.u32 %v2364, 4294901760
        %2366 = vmatpush1.msra.mxu0 %v2365
        %2367 = vmatprep.subr.mxu0 0.0
        %v2368 = vand.u32 %v261, 4294901760
        %v2369 = vsub.f32 %v261, %v2368
        %v2370 = vand.u32 %v2369, 4294901760
        %2371 = vmatpush1.msra.mxu0 %v2370
        %2372 = vmatprep.subr.mxu0 0.0
        %v2373 = vand.u32 %v262, 4294901760
        %v2374 = vsub.f32 %v262, %v2373
        %v2375 = vand.u32 %v2374, 4294901760
        %2376 = vmatpush1.msra.mxu0 %v2375
        %2377 = vmatprep.subr.mxu0 0.0
        %v2378 = vand.u32 %v263, 4294901760
        %v2379 = vsub.f32 %v263, %v2378
        %v2380 = vand.u32 %v2379, 4294901760
        %2381 = vmatpush1.msra.mxu0 %v2380
        %2382 = vmatprep.subr.mxu0 0.0
        %v2383 = vand.u32 %v264, 4294901760
        %v2384 = vsub.f32 %v264, %v2383
        %v2385 = vand.u32 %v2384, 4294901760
        %2386 = vmatpush1.msra.mxu0 %v2385
        %2387 = vmatprep.subr.mxu0 0.0
        %v2388 = vand.u32 %v265, 4294901760
        %v2389 = vsub.f32 %v265, %v2388
        %v2390 = vand.u32 %v2389, 4294901760
        %2391 = vmatpush1.msra.mxu0 %v2390
        %2392 = vmatprep.subr.mxu0 0.0
        %v2393 = vand.u32 %v266, 4294901760
        %v2394 = vsub.f32 %v266, %v2393
        %v2395 = vand.u32 %v2394, 4294901760
        %2396 = vmatpush1.msra.mxu0 %v2395
        %2397 = vmatprep.subr.mxu0 0.0
        %v2398 = vand.u32 %v267, 4294901760
        %v2399 = vsub.f32 %v267, %v2398
        %v2400 = vand.u32 %v2399, 4294901760
        %2401 = vmatpush1.msra.mxu0 %v2400
        %2402 = vmatprep.subr.mxu0 0.0
        %v2403 = vand.u32 %v268, 4294901760
        %v2404 = vsub.f32 %v268, %v2403
        %v2405 = vand.u32 %v2404, 4294901760
        %2406 = vmatpush1.msra.mxu0 %v2405
        %2407 = vmatprep.subr.mxu0 0.0
        %v2408 = vand.u32 %v269, 4294901760
        %v2409 = vsub.f32 %v269, %v2408
        %v2410 = vand.u32 %v2409, 4294901760
        %2411 = vmatpush1.msra.mxu0 %v2410
        %2412 = vmatprep.subr.mxu0 0.0
        %2413 = vmatpush1.msra.mxu0 0.0
        %2414 = vmatprep.subr.mxu0 0.0
        %2415 = vmatpush1.msra.mxu0 0.0
        %2416 = vmatprep.subr.mxu0 0.0
        %2417 = vmatpush1.msra.mxu0 0.0
        %2418 = vmatprep.subr.mxu0 0.0
        %2419 = vmatpush1.msra.mxu0 0.0
        %2420 = vmatprep.subr.mxu0 0.0
        %2421 = vmatpush1.msra.mxu0 0.0
        %2422 = vmatprep.subr.mxu0 0.0
        %2423 = vmatpush1.msra.mxu0 0.0
        %2424 = vmatprep.subr.mxu0 0.0
        %2425 = vmatpush1.msra.mxu0 0.0
        %2426 = vmatprep.subr.mxu0 0.0
        %2427 = vmatpush1.msra.mxu0 0.0
        %2428 = vmatprep.subr.mxu0 0.0
        %2429 = vmatpush1.msra.mxu0 0.0
        %2430 = vmatprep.subr.mxu0 0.0
        %2431 = vmatpush1.msra.mxu0 0.0
        %2432 = vmatprep.subr.mxu0 0.0
        %2433 = vmatpush1.msra.mxu0 0.0
        %2434 = vmatprep.subr.mxu0 0.0
        %2435 = vmatpush1.msra.mxu0 0.0
        %2436 = vmatprep.subr.mxu0 0.0
        %2437 = vmatpush1.msra.mxu0 0.0
        %2438 = vmatprep.subr.mxu0 0.0
        %2439 = vmatpush1.msra.mxu0 0.0
        %2440 = vmatprep.subr.mxu0 0.0
        %2441 = vmatpush1.msra.mxu0 0.0
        %2442 = vmatprep.subr.mxu0 0.0
        %2443 = vmatpush1.msra.mxu0 0.0
        %2444 = vmatprep.mubr.f32.mxu0 0.0
        %v2445 = vand.u32 %v1864, 4294901760
        %2446 = vmatmul.mubr.f32.gmra.mrb[0].mxu0 %v2445
        %v2447 = vpop.f32.mrb[0].mxu0
        %v2448 = vadd.f32 %v2321, %v2447
        %v2449 = vpop.f32.mrb[0].mxu0
        %2450 = vmatprep.mubr.f32.mxu0 0.0
        %v2451 = vand.u32 %v1865, 4294901760
        %2452 = vmatmul.mubr.f32.gmra.mrb[0].mxu0 %v2451
        %v2453 = vpop.f32.mrb[0].mxu0
        %v2454 = vadd.f32 %v2329, %v2453
        %v2455 = vpop.f32.mrb[0].mxu0
        %2456 = vdwg.mxu0
        %2457 = vmatprep.subr.mxu0 0.0
        %v2458 = vand.u32 %v254, 4294901760
        %2459 = vmatpush1.msra.mxu0 %v2458
        %2460 = vmatprep.subr.mxu0 0.0
        %v2461 = vand.u32 %v255, 4294901760
        %2462 = vmatpush1.msra.mxu0 %v2461
        %2463 = vmatprep.subr.mxu0 0.0
        %v2464 = vand.u32 %v256, 4294901760
        %2465 = vmatpush1.msra.mxu0 %v2464
        %2466 = vmatprep.subr.mxu0 0.0
        %v2467 = vand.u32 %v257, 4294901760
        %2468 = vmatpush1.msra.mxu0 %v2467
        %2469 = vmatprep.subr.mxu0 0.0
        %v2470 = vand.u32 %v258, 4294901760
        %2471 = vmatpush1.msra.mxu0 %v2470
        %2472 = vmatprep.subr.mxu0 0.0
        %v2473 = vand.u32 %v259, 4294901760
        %2474 = vmatpush1.msra.mxu0 %v2473
        %2475 = vmatprep.subr.mxu0 0.0
        %v2476 = vand.u32 %v260, 4294901760
        %2477 = vmatpush1.msra.mxu0 %v2476
        %2478 = vmatprep.subr.mxu0 0.0
        %v2479 = vand.u32 %v261, 4294901760
        %2480 = vmatpush1.msra.mxu0 %v2479
        %2481 = vmatprep.subr.mxu0 0.0
        %v2482 = vand.u32 %v262, 4294901760
        %2483 = vmatpush1.msra.mxu0 %v2482
        %2484 = vmatprep.subr.mxu0 0.0
        %v2485 = vand.u32 %v263, 4294901760
        %2486 = vmatpush1.msra.mxu0 %v2485
        %2487 = vmatprep.subr.mxu0 0.0
        %v2488 = vand.u32 %v264, 4294901760
        %2489 = vmatpush1.msra.mxu0 %v2488
        %2490 = vmatprep.subr.mxu0 0.0
        %v2491 = vand.u32 %v265, 4294901760
        %2492 = vmatpush1.msra.mxu0 %v2491
        %2493 = vmatprep.subr.mxu0 0.0
        %v2494 = vand.u32 %v266, 4294901760
        %2495 = vmatpush1.msra.mxu0 %v2494
        %2496 = vmatprep.subr.mxu0 0.0
        %v2497 = vand.u32 %v267, 4294901760
        %2498 = vmatpush1.msra.mxu0 %v2497
        %2499 = vmatprep.subr.mxu0 0.0
        %v2500 = vand.u32 %v268, 4294901760
        %2501 = vmatpush1.msra.mxu0 %v2500
        %2502 = vmatprep.subr.mxu0 0.0
        %v2503 = vand.u32 %v269, 4294901760
        %2504 = vmatpush1.msra.mxu0 %v2503
        %2505 = vmatprep.subr.mxu0 0.0
        %2506 = vmatpush1.msra.mxu0 0.0
        %2507 = vmatprep.subr.mxu0 0.0
        %2508 = vmatpush1.msra.mxu0 0.0
        %2509 = vmatprep.subr.mxu0 0.0
        %2510 = vmatpush1.msra.mxu0 0.0
        %2511 = vmatprep.subr.mxu0 0.0
        %2512 = vmatpush1.msra.mxu0 0.0
        %2513 = vmatprep.subr.mxu0 0.0
        %2514 = vmatpush1.msra.mxu0 0.0
        %2515 = vmatprep.subr.mxu0 0.0
        %2516 = vmatpush1.msra.mxu0 0.0
        %2517 = vmatprep.subr.mxu0 0.0
        %2518 = vmatpush1.msra.mxu0 0.0
        %2519 = vmatprep.subr.mxu0 0.0
        %2520 = vmatpush1.msra.mxu0 0.0
        %2521 = vmatprep.subr.mxu0 0.0
        %2522 = vmatpush1.msra.mxu0 0.0
        %2523 = vmatprep.subr.mxu0 0.0
        %2524 = vmatpush1.msra.mxu0 0.0
        %2525 = vmatprep.subr.mxu0 0.0
        %2526 = vmatpush1.msra.mxu0 0.0
        %2527 = vmatprep.subr.mxu0 0.0
        %2528 = vmatpush1.msra.mxu0 0.0
        %2529 = vmatprep.subr.mxu0 0.0
        %2530 = vmatpush1.msra.mxu0 0.0
        %2531 = vmatprep.subr.mxu0 0.0
        %2532 = vmatpush1.msra.mxu0 0.0
        %2533 = vmatprep.subr.mxu0 0.0
        %2534 = vmatpush1.msra.mxu0 0.0
        %2535 = vmatprep.subr.mxu0 0.0
        %2536 = vmatpush1.msra.mxu0 0.0
        %2537 = vmatprep.mubr.f32.mxu0 0.0
        %v2538 = vand.u32 %v1864, 4294901760
        %2539 = vmatmul.mubr.f32.gmra.mrb[0].mxu0 %v2538
        %v2540 = vpop.f32.mrb[0].mxu0
        %v2541 = vadd.f32 %v2448, %v2540
        %v2542 = vpop.f32.mrb[0].mxu0
        %2543 = vmatprep.mubr.f32.mxu0 0.0
        %v2544 = vand.u32 %v1865, 4294901760
        %2545 = vmatmul.mubr.f32.gmra.mrb[0].mxu0 %v2544
        %v2546 = vpop.f32.mrb[0].mxu0
        %v2547 = vadd.f32 %v2454, %v2546
        %v2548 = vpop.f32.mrb[0].mxu0
        %2549 = vdwg.mxu0
        %s2550 = scalar_lea.vmem %s242, 32 [#allocation7]
        %2551 = vst [vmem:[%s2550] sm:$0xff] %v2541
        %2552 = vst [vmem:[%s2550 + $0x8] sm:$0xff] %v2547
        %v2553 = vld [vmem:[%s297] sm:$0xff]
        %v2554 = vld [vmem:[%s297 + $0x8] sm:$0xff]
        %s2555 = sld [smem:[#allocation2 + $0x18]]
        %v2556 = vld [vmem:[%s251] sm:$0xff]
        %v2557 = vld [vmem:[%s251 + $0x8] sm:$0xff]
        %v2558 = vstv %s2555
        %v2559 = vmul.f32 %v2558, %v2556
        %v2560 = vmul.f32 %v2558, %v2557
        %v2561 = vadd.f32 %v2553, %v2559
        %v2562 = vadd.f32 %v2554, %v2560
        %s2563 = sld [smem:[#allocation2 + $0x19]]
        %v2564 = vld [vmem:[%s279] sm:$0xff]
        %v2565 = vld [vmem:[%s279 + $0x8] sm:$0xff]
        %v2566 = vstv %s2563
        %v2567 = vmul.f32 %v2566, %v2564
        %v2568 = vmul.f32 %v2566, %v2565
        %v2569 = vadd.f32 %v2561, %v2567
        %v2570 = vadd.f32 %v2562, %v2568
        %s2571 = sld [smem:[#allocation2 + $0x1a]]
        %v2572 = vld [vmem:[%s288] sm:$0xff]
        %v2573 = vld [vmem:[%s288 + $0x8] sm:$0xff]
        %v2574 = vstv %s2571
        %v2575 = vmul.f32 %v2574, %v2572
        %v2576 = vmul.f32 %v2574, %v2573
        %v2577 = vadd.f32 %v2569, %v2575
        %v2578 = vadd.f32 %v2570, %v2576
        %s2579 = sld [smem:[#allocation2 + $0x1b]]
        %v2580 = vstv %s2579
        %v2581 = vmul.f32 %v2580, %v2553
        %v2582 = vmul.f32 %v2580, %v2554
        %v2583 = vadd.f32 %v2577, %v2581
        %v2584 = vadd.f32 %v2578, %v2582
        %s2585 = sld [smem:[#allocation2 + $0x1c]]
        %v2586 = vld [vmem:[%s306] sm:$0xff]
        %v2587 = vld [vmem:[%s306 + $0x8] sm:$0xff]
        %v2588 = vstv %s2585
        %v2589 = vmul.f32 %v2588, %v2586
        %v2590 = vmul.f32 %v2588, %v2587
        %v2591 = vadd.f32 %v2583, %v2589
        %v2592 = vadd.f32 %v2584, %v2590
        %s2593 = sld [smem:[#allocation2 + $0x1d]]
        %v2594 = vld [vmem:[%s315] sm:$0xff]
        %v2595 = vld [vmem:[%s315 + $0x8] sm:$0xff]
        %v2596 = vstv %s2593
        %v2597 = vmul.f32 %v2596, %v2594
        %v2598 = vmul.f32 %v2596, %v2595
        %v2599 = vadd.f32 %v2591, %v2597
        %v2600 = vadd.f32 %v2592, %v2598
        %s2601 = sld [smem:[#allocation2 + $0x1e]]
        %v2602 = vld [vmem:[%s324] sm:$0xff]
        %v2603 = vld [vmem:[%s324 + $0x8] sm:$0xff]
        %v2604 = vstv %s2601
        %v2605 = vmul.f32 %v2604, %v2602
        %v2606 = vmul.f32 %v2604, %v2603
        %v2607 = vadd.f32 %v2599, %v2605
        %v2608 = vadd.f32 %v2600, %v2606
        %s2609 = sld [smem:[#allocation2 + $0x1f]]
        %v2610 = vld [vmem:[%s333] sm:$0xff]
        %v2611 = vld [vmem:[%s333 + $0x8] sm:$0xff]
        %v2612 = vstv %s2609
        %v2613 = vmul.f32 %v2612, %v2610
        %v2614 = vmul.f32 %v2612, %v2611
        %v2615 = vadd.f32 %v2607, %v2613
        %v2616 = vadd.f32 %v2608, %v2614
        %s2617 = sld [smem:[#allocation5 + $0x3]]
        %vm2618 = vcmp.ge.f32.partialorder %v2615, 0.0
        %vm2619 = vcmp.ge.f32.partialorder %v2616, 0.0
        %v2620 = vstv %s2617
        %v2621 = vmul.f32 %v2620, %v2615
        %v2622 = vmul.f32 %v2620, %v2616
        %v2623 = vsel %vm2618, %v2615, %v2621
        %v2624 = vsel %vm2619, %v2616, %v2622
        %2625 = vmatprep.subr.mxu0 0.0
        %v2626 = vand.u32 %v254, 4294901760
        %2627 = vmatpush1.msra.mxu0 %v2626
        %2628 = vmatprep.subr.mxu0 0.0
        %v2629 = vand.u32 %v255, 4294901760
        %2630 = vmatpush1.msra.mxu0 %v2629
        %2631 = vmatprep.subr.mxu0 0.0
        %v2632 = vand.u32 %v256, 4294901760
        %2633 = vmatpush1.msra.mxu0 %v2632
        %2634 = vmatprep.subr.mxu0 0.0
        %v2635 = vand.u32 %v257, 4294901760
        %2636 = vmatpush1.msra.mxu0 %v2635
        %2637 = vmatprep.subr.mxu0 0.0
        %v2638 = vand.u32 %v258, 4294901760
        %2639 = vmatpush1.msra.mxu0 %v2638
        %2640 = vmatprep.subr.mxu0 0.0
        %v2641 = vand.u32 %v259, 4294901760
        %2642 = vmatpush1.msra.mxu0 %v2641
        %2643 = vmatprep.subr.mxu0 0.0
        %v2644 = vand.u32 %v260, 4294901760
        %2645 = vmatpush1.msra.mxu0 %v2644
        %2646 = vmatprep.subr.mxu0 0.0
        %v2647 = vand.u32 %v261, 4294901760
        %2648 = vmatpush1.msra.mxu0 %v2647
        %2649 = vmatprep.subr.mxu0 0.0
        %v2650 = vand.u32 %v262, 4294901760
        %2651 = vmatpush1.msra.mxu0 %v2650
        %2652 = vmatprep.subr.mxu0 0.0
        %v2653 = vand.u32 %v263, 4294901760
        %2654 = vmatpush1.msra.mxu0 %v2653
        %2655 = vmatprep.subr.mxu0 0.0
        %v2656 = vand.u32 %v264, 4294901760
        %2657 = vmatpush1.msra.mxu0 %v2656
        %2658 = vmatprep.subr.mxu0 0.0
        %v2659 = vand.u32 %v265, 4294901760
        %2660 = vmatpush1.msra.mxu0 %v2659
        %2661 = vmatprep.subr.mxu0 0.0
        %v2662 = vand.u32 %v266, 4294901760
        %2663 = vmatpush1.msra.mxu0 %v2662
        %2664 = vmatprep.subr.mxu0 0.0
        %v2665 = vand.u32 %v267, 4294901760
        %2666 = vmatpush1.msra.mxu0 %v2665
        %2667 = vmatprep.subr.mxu0 0.0
        %v2668 = vand.u32 %v268, 4294901760
        %2669 = vmatpush1.msra.mxu0 %v2668
        %2670 = vmatprep.subr.mxu0 0.0
        %v2671 = vand.u32 %v269, 4294901760
        %2672 = vmatpush1.msra.mxu0 %v2671
        %2673 = vmatprep.subr.mxu0 0.0
        %2674 = vmatpush1.msra.mxu0 0.0
        %2675 = vmatprep.subr.mxu0 0.0
        %2676 = vmatpush1.msra.mxu0 0.0
        %2677 = vmatprep.subr.mxu0 0.0
        %2678 = vmatpush1.msra.mxu0 0.0
        %2679 = vmatprep.subr.mxu0 0.0
        %2680 = vmatpush1.msra.mxu0 0.0
        %2681 = vmatprep.subr.mxu0 0.0
        %2682 = vmatpush1.msra.mxu0 0.0
        %2683 = vmatprep.subr.mxu0 0.0
        %2684 = vmatpush1.msra.mxu0 0.0
        %2685 = vmatprep.subr.mxu0 0.0
        %2686 = vmatpush1.msra.mxu0 0.0
        %2687 = vmatprep.subr.mxu0 0.0
        %2688 = vmatpush1.msra.mxu0 0.0
        %2689 = vmatprep.subr.mxu0 0.0
        %2690 = vmatpush1.msra.mxu0 0.0
        %2691 = vmatprep.subr.mxu0 0.0
        %2692 = vmatpush1.msra.mxu0 0.0
        %2693 = vmatprep.subr.mxu0 0.0
        %2694 = vmatpush1.msra.mxu0 0.0
        %2695 = vmatprep.subr.mxu0 0.0
        %2696 = vmatpush1.msra.mxu0 0.0
        %2697 = vmatprep.subr.mxu0 0.0
        %2698 = vmatpush1.msra.mxu0 0.0
        %2699 = vmatprep.subr.mxu0 0.0
        %2700 = vmatpush1.msra.mxu0 0.0
        %2701 = vmatprep.subr.mxu0 0.0
        %2702 = vmatpush1.msra.mxu0 0.0
        %2703 = vmatprep.subr.mxu0 0.0
        %2704 = vmatpush1.msra.mxu0 0.0
        %2705 = vmatprep.mubr.f32.mxu0 0.0
        %v2706 = vand.u32 %v2623, 4294901760
        %v2707 = vsub.f32 %v2623, %v2706
        %v2708 = vand.u32 %v2707, 4294901760
        %v2709 = vsub.f32 %v2707, %v2708
        %v2710 = vand.u32 %v2709, 4294901760
        %2711 = vmatmul.mubr.f32.gmra.mrb[0].mxu0 %v2710
        %v2712 = vpop.f32.mrb[0].mxu0
        %v2713 = vadd.f32 0.0, %v2712
        %v2714 = vpop.f32.mrb[0].mxu0
        %2715 = vmatprep.mubr.f32.mxu0 0.0
        %v2716 = vand.u32 %v2624, 4294901760
        %v2717 = vsub.f32 %v2624, %v2716
        %v2718 = vand.u32 %v2717, 4294901760
        %v2719 = vsub.f32 %v2717, %v2718
        %v2720 = vand.u32 %v2719, 4294901760
        %2721 = vmatmul.mubr.f32.gmra.mrb[0].mxu0 %v2720
        %v2722 = vpop.f32.mrb[0].mxu0
        %v2723 = vadd.f32 0.0, %v2722
        %v2724 = vpop.f32.mrb[0].mxu0
        %2725 = vdwg.mxu0
        %2726 = vmatprep.subr.mxu0 0.0
        %v2727 = vand.u32 %v254, 4294901760
        %v2728 = vsub.f32 %v254, %v2727
        %v2729 = vand.u32 %v2728, 4294901760
        %v2730 = vsub.f32 %v2728, %v2729
        %v2731 = vand.u32 %v2730, 4294901760
        %2732 = vmatpush1.msra.mxu0 %v2731
        %2733 = vmatprep.subr.mxu0 0.0
        %v2734 = vand.u32 %v255, 4294901760
        %v2735 = vsub.f32 %v255, %v2734
        %v2736 = vand.u32 %v2735, 4294901760
        %v2737 = vsub.f32 %v2735, %v2736
        %v2738 = vand.u32 %v2737, 4294901760
        %2739 = vmatpush1.msra.mxu0 %v2738
        %2740 = vmatprep.subr.mxu0 0.0
        %v2741 = vand.u32 %v256, 4294901760
        %v2742 = vsub.f32 %v256, %v2741
        %v2743 = vand.u32 %v2742, 4294901760
        %v2744 = vsub.f32 %v2742, %v2743
        %v2745 = vand.u32 %v2744, 4294901760
        %2746 = vmatpush1.msra.mxu0 %v2745
        %2747 = vmatprep.subr.mxu0 0.0
        %v2748 = vand.u32 %v257, 4294901760
        %v2749 = vsub.f32 %v257, %v2748
        %v2750 = vand.u32 %v2749, 4294901760
        %v2751 = vsub.f32 %v2749, %v2750
        %v2752 = vand.u32 %v2751, 4294901760
        %2753 = vmatpush1.msra.mxu0 %v2752
        %2754 = vmatprep.subr.mxu0 0.0
        %v2755 = vand.u32 %v258, 4294901760
        %v2756 = vsub.f32 %v258, %v2755
        %v2757 = vand.u32 %v2756, 4294901760
        %v2758 = vsub.f32 %v2756, %v2757
        %v2759 = vand.u32 %v2758, 4294901760
        %2760 = vmatpush1.msra.mxu0 %v2759
        %2761 = vmatprep.subr.mxu0 0.0
        %v2762 = vand.u32 %v259, 4294901760
        %v2763 = vsub.f32 %v259, %v2762
        %v2764 = vand.u32 %v2763, 4294901760
        %v2765 = vsub.f32 %v2763, %v2764
        %v2766 = vand.u32 %v2765, 4294901760
        %2767 = vmatpush1.msra.mxu0 %v2766
        %2768 = vmatprep.subr.mxu0 0.0
        %v2769 = vand.u32 %v260, 4294901760
        %v2770 = vsub.f32 %v260, %v2769
        %v2771 = vand.u32 %v2770, 4294901760
        %v2772 = vsub.f32 %v2770, %v2771
        %v2773 = vand.u32 %v2772, 4294901760
        %2774 = vmatpush1.msra.mxu0 %v2773
        %2775 = vmatprep.subr.mxu0 0.0
        %v2776 = vand.u32 %v261, 4294901760
        %v2777 = vsub.f32 %v261, %v2776
        %v2778 = vand.u32 %v2777, 4294901760
        %v2779 = vsub.f32 %v2777, %v2778
        %v2780 = vand.u32 %v2779, 4294901760
        %2781 = vmatpush1.msra.mxu0 %v2780
        %2782 = vmatprep.subr.mxu0 0.0
        %v2783 = vand.u32 %v262, 4294901760
        %v2784 = vsub.f32 %v262, %v2783
        %v2785 = vand.u32 %v2784, 4294901760
        %v2786 = vsub.f32 %v2784, %v2785
        %v2787 = vand.u32 %v2786, 4294901760
        %2788 = vmatpush1.msra.mxu0 %v2787
        %2789 = vmatprep.subr.mxu0 0.0
        %v2790 = vand.u32 %v263, 4294901760
        %v2791 = vsub.f32 %v263, %v2790
        %v2792 = vand.u32 %v2791, 4294901760
        %v2793 = vsub.f32 %v2791, %v2792
        %v2794 = vand.u32 %v2793, 4294901760
        %2795 = vmatpush1.msra.mxu0 %v2794
        %2796 = vmatprep.subr.mxu0 0.0
        %v2797 = vand.u32 %v264, 4294901760
        %v2798 = vsub.f32 %v264, %v2797
        %v2799 = vand.u32 %v2798, 4294901760
        %v2800 = vsub.f32 %v2798, %v2799
        %v2801 = vand.u32 %v2800, 4294901760
        %2802 = vmatpush1.msra.mxu0 %v2801
        %2803 = vmatprep.subr.mxu0 0.0
        %v2804 = vand.u32 %v265, 4294901760
        %v2805 = vsub.f32 %v265, %v2804
        %v2806 = vand.u32 %v2805, 4294901760
        %v2807 = vsub.f32 %v2805, %v2806
        %v2808 = vand.u32 %v2807, 4294901760
        %2809 = vmatpush1.msra.mxu0 %v2808
        %2810 = vmatprep.subr.mxu0 0.0
        %v2811 = vand.u32 %v266, 4294901760
        %v2812 = vsub.f32 %v266, %v2811
        %v2813 = vand.u32 %v2812, 4294901760
        %v2814 = vsub.f32 %v2812, %v2813
        %v2815 = vand.u32 %v2814, 4294901760
        %2816 = vmatpush1.msra.mxu0 %v2815
        %2817 = vmatprep.subr.mxu0 0.0
        %v2818 = vand.u32 %v267, 4294901760
        %v2819 = vsub.f32 %v267, %v2818
        %v2820 = vand.u32 %v2819, 4294901760
        %v2821 = vsub.f32 %v2819, %v2820
        %v2822 = vand.u32 %v2821, 4294901760
        %2823 = vmatpush1.msra.mxu0 %v2822
        %2824 = vmatprep.subr.mxu0 0.0
        %v2825 = vand.u32 %v268, 4294901760
        %v2826 = vsub.f32 %v268, %v2825
        %v2827 = vand.u32 %v2826, 4294901760
        %v2828 = vsub.f32 %v2826, %v2827
        %v2829 = vand.u32 %v2828, 4294901760
        %2830 = vmatpush1.msra.mxu0 %v2829
        %2831 = vmatprep.subr.mxu0 0.0
        %v2832 = vand.u32 %v269, 4294901760
        %v2833 = vsub.f32 %v269, %v2832
        %v2834 = vand.u32 %v2833, 4294901760
        %v2835 = vsub.f32 %v2833, %v2834
        %v2836 = vand.u32 %v2835, 4294901760
        %2837 = vmatpush1.msra.mxu0 %v2836
        %2838 = vmatprep.subr.mxu0 0.0
        %2839 = vmatpush1.msra.mxu0 0.0
        %2840 = vmatprep.subr.mxu0 0.0
        %2841 = vmatpush1.msra.mxu0 0.0
        %2842 = vmatprep.subr.mxu0 0.0
        %2843 = vmatpush1.msra.mxu0 0.0
        %2844 = vmatprep.subr.mxu0 0.0
        %2845 = vmatpush1.msra.mxu0 0.0
        %2846 = vmatprep.subr.mxu0 0.0
        %2847 = vmatpush1.msra.mxu0 0.0
        %2848 = vmatprep.subr.mxu0 0.0
        %2849 = vmatpush1.msra.mxu0 0.0
        %2850 = vmatprep.subr.mxu0 0.0
        %2851 = vmatpush1.msra.mxu0 0.0
        %2852 = vmatprep.subr.mxu0 0.0
        %2853 = vmatpush1.msra.mxu0 0.0
        %2854 = vmatprep.subr.mxu0 0.0
        %2855 = vmatpush1.msra.mxu0 0.0
        %2856 = vmatprep.subr.mxu0 0.0
        %2857 = vmatpush1.msra.mxu0 0.0
        %2858 = vmatprep.subr.mxu0 0.0
        %2859 = vmatpush1.msra.mxu0 0.0
        %2860 = vmatprep.subr.mxu0 0.0
        %2861 = vmatpush1.msra.mxu0 0.0
        %2862 = vmatprep.subr.mxu0 0.0
        %2863 = vmatpush1.msra.mxu0 0.0
        %2864 = vmatprep.subr.mxu0 0.0
        %2865 = vmatpush1.msra.mxu0 0.0
        %2866 = vmatprep.subr.mxu0 0.0
        %2867 = vmatpush1.msra.mxu0 0.0
        %2868 = vmatprep.subr.mxu0 0.0
        %2869 = vmatpush1.msra.mxu0 0.0
        %2870 = vmatprep.mubr.f32.mxu0 0.0
        %v2871 = vand.u32 %v2623, 4294901760
        %2872 = vmatmul.mubr.f32.gmra.mrb[0].mxu0 %v2871
        %v2873 = vpop.f32.mrb[0].mxu0
        %v2874 = vadd.f32 %v2713, %v2873
        %v2875 = vpop.f32.mrb[0].mxu0
        %2876 = vmatprep.mubr.f32.mxu0 0.0
        %v2877 = vand.u32 %v2624, 4294901760
        %2878 = vmatmul.mubr.f32.gmra.mrb[0].mxu0 %v2877
        %v2879 = vpop.f32.mrb[0].mxu0
        %v2880 = vadd.f32 %v2723, %v2879
        %v2881 = vpop.f32.mrb[0].mxu0
        %2882 = vdwg.mxu0
        %2883 = vmatprep.subr.mxu0 0.0
        %v2884 = vand.u32 %v254, 4294901760
        %v2885 = vsub.f32 %v254, %v2884
        %2886 = vmatpush1.msra.mxu0 %v2885
        %2887 = vmatprep.subr.mxu0 0.0
        %v2888 = vand.u32 %v255, 4294901760
        %v2889 = vsub.f32 %v255, %v2888
        %2890 = vmatpush1.msra.mxu0 %v2889
        %2891 = vmatprep.subr.mxu0 0.0
        %v2892 = vand.u32 %v256, 4294901760
        %v2893 = vsub.f32 %v256, %v2892
        %2894 = vmatpush1.msra.mxu0 %v2893
        %2895 = vmatprep.subr.mxu0 0.0
        %v2896 = vand.u32 %v257, 4294901760
        %v2897 = vsub.f32 %v257, %v2896
        %2898 = vmatpush1.msra.mxu0 %v2897
        %2899 = vmatprep.subr.mxu0 0.0
        %v2900 = vand.u32 %v258, 4294901760
        %v2901 = vsub.f32 %v258, %v2900
        %2902 = vmatpush1.msra.mxu0 %v2901
        %2903 = vmatprep.subr.mxu0 0.0
        %v2904 = vand.u32 %v259, 4294901760
        %v2905 = vsub.f32 %v259, %v2904
        %2906 = vmatpush1.msra.mxu0 %v2905
        %2907 = vmatprep.subr.mxu0 0.0
        %v2908 = vand.u32 %v260, 4294901760
        %v2909 = vsub.f32 %v260, %v2908
        %2910 = vmatpush1.msra.mxu0 %v2909
        %2911 = vmatprep.subr.mxu0 0.0
        %v2912 = vand.u32 %v261, 4294901760
        %v2913 = vsub.f32 %v261, %v2912
        %2914 = vmatpush1.msra.mxu0 %v2913
        %2915 = vmatprep.subr.mxu0 0.0
        %v2916 = vand.u32 %v262, 4294901760
        %v2917 = vsub.f32 %v262, %v2916
        %2918 = vmatpush1.msra.mxu0 %v2917
        %2919 = vmatprep.subr.mxu0 0.0
        %v2920 = vand.u32 %v263, 4294901760
        %v2921 = vsub.f32 %v263, %v2920
        %2922 = vmatpush1.msra.mxu0 %v2921
        %2923 = vmatprep.subr.mxu0 0.0
        %v2924 = vand.u32 %v264, 4294901760
        %v2925 = vsub.f32 %v264, %v2924
        %2926 = vmatpush1.msra.mxu0 %v2925
        %2927 = vmatprep.subr.mxu0 0.0
        %v2928 = vand.u32 %v265, 4294901760
        %v2929 = vsub.f32 %v265, %v2928
        %2930 = vmatpush1.msra.mxu0 %v2929
        %2931 = vmatprep.subr.mxu0 0.0
        %v2932 = vand.u32 %v266, 4294901760
        %v2933 = vsub.f32 %v266, %v2932
        %2934 = vmatpush1.msra.mxu0 %v2933
        %2935 = vmatprep.subr.mxu0 0.0
        %v2936 = vand.u32 %v267, 4294901760
        %v2937 = vsub.f32 %v267, %v2936
        %2938 = vmatpush1.msra.mxu0 %v2937
        %2939 = vmatprep.subr.mxu0 0.0
        %v2940 = vand.u32 %v268, 4294901760
        %v2941 = vsub.f32 %v268, %v2940
        %2942 = vmatpush1.msra.mxu0 %v2941
        %2943 = vmatprep.subr.mxu0 0.0
        %v2944 = vand.u32 %v269, 4294901760
        %v2945 = vsub.f32 %v269, %v2944
        %2946 = vmatpush1.msra.mxu0 %v2945
        %2947 = vmatprep.subr.mxu0 0.0
        %2948 = vmatpush1.msra.mxu0 0.0
        %2949 = vmatprep.subr.mxu0 0.0
        %2950 = vmatpush1.msra.mxu0 0.0
        %2951 = vmatprep.subr.mxu0 0.0
        %2952 = vmatpush1.msra.mxu0 0.0
        %2953 = vmatprep.subr.mxu0 0.0
        %2954 = vmatpush1.msra.mxu0 0.0
        %2955 = vmatprep.subr.mxu0 0.0
        %2956 = vmatpush1.msra.mxu0 0.0
        %2957 = vmatprep.subr.mxu0 0.0
        %2958 = vmatpush1.msra.mxu0 0.0
        %2959 = vmatprep.subr.mxu0 0.0
        %2960 = vmatpush1.msra.mxu0 0.0
        %2961 = vmatprep.subr.mxu0 0.0
        %2962 = vmatpush1.msra.mxu0 0.0
        %2963 = vmatprep.subr.mxu0 0.0
        %2964 = vmatpush1.msra.mxu0 0.0
        %2965 = vmatprep.subr.mxu0 0.0
        %2966 = vmatpush1.msra.mxu0 0.0
        %2967 = vmatprep.subr.mxu0 0.0
        %2968 = vmatpush1.msra.mxu0 0.0
        %2969 = vmatprep.subr.mxu0 0.0
        %2970 = vmatpush1.msra.mxu0 0.0
        %2971 = vmatprep.subr.mxu0 0.0
        %2972 = vmatpush1.msra.mxu0 0.0
        %2973 = vmatprep.subr.mxu0 0.0
        %2974 = vmatpush1.msra.mxu0 0.0
        %2975 = vmatprep.subr.mxu0 0.0
        %2976 = vmatpush1.msra.mxu0 0.0
        %2977 = vmatprep.subr.mxu0 0.0
        %2978 = vmatpush1.msra.mxu0 0.0
        %2979 = vmatprep.mubr.f32.mxu0 0.0
        %v2980 = vand.u32 %v2623, 4294901760
        %v2981 = vsub.f32 %v2623, %v2980
        %2982 = vmatmul.mubr.f32.gmra.mrb[0].mxu0 %v2981
        %v2983 = vpop.f32.mrb[0].mxu0
        %v2984 = vadd.f32 %v2874, %v2983
        %v2985 = vpop.f32.mrb[0].mxu0
        %2986 = vmatprep.mubr.f32.mxu0 0.0
        %v2987 = vand.u32 %v2624, 4294901760
        %v2988 = vsub.f32 %v2624, %v2987
        %2989 = vmatmul.mubr.f32.gmra.mrb[0].mxu0 %v2988
        %v2990 = vpop.f32.mrb[0].mxu0
        %v2991 = vadd.f32 %v2880, %v2990
        %v2992 = vpop.f32.mrb[0].mxu0
        %2993 = vdwg.mxu0
        %2994 = vmatprep.subr.mxu0 0.0
        %v2995 = vand.u32 %v254, 4294901760
        %2996 = vmatpush1.msra.mxu0 %v2995
        %2997 = vmatprep.subr.mxu0 0.0
        %v2998 = vand.u32 %v255, 4294901760
        %2999 = vmatpush1.msra.mxu0 %v2998
        %3000 = vmatprep.subr.mxu0 0.0
        %v3001 = vand.u32 %v256, 4294901760
        %3002 = vmatpush1.msra.mxu0 %v3001
        %3003 = vmatprep.subr.mxu0 0.0
        %v3004 = vand.u32 %v257, 4294901760
        %3005 = vmatpush1.msra.mxu0 %v3004
        %3006 = vmatprep.subr.mxu0 0.0
        %v3007 = vand.u32 %v258, 4294901760
        %3008 = vmatpush1.msra.mxu0 %v3007
        %3009 = vmatprep.subr.mxu0 0.0
        %v3010 = vand.u32 %v259, 4294901760
        %3011 = vmatpush1.msra.mxu0 %v3010
        %3012 = vmatprep.subr.mxu0 0.0
        %v3013 = vand.u32 %v260, 4294901760
        %3014 = vmatpush1.msra.mxu0 %v3013
        %3015 = vmatprep.subr.mxu0 0.0
        %v3016 = vand.u32 %v261, 4294901760
        %3017 = vmatpush1.msra.mxu0 %v3016
        %3018 = vmatprep.subr.mxu0 0.0
        %v3019 = vand.u32 %v262, 4294901760
        %3020 = vmatpush1.msra.mxu0 %v3019
        %3021 = vmatprep.subr.mxu0 0.0
        %v3022 = vand.u32 %v263, 4294901760
        %3023 = vmatpush1.msra.mxu0 %v3022
        %3024 = vmatprep.subr.mxu0 0.0
        %v3025 = vand.u32 %v264, 4294901760
        %3026 = vmatpush1.msra.mxu0 %v3025
        %3027 = vmatprep.subr.mxu0 0.0
        %v3028 = vand.u32 %v265, 4294901760
        %3029 = vmatpush1.msra.mxu0 %v3028
        %3030 = vmatprep.subr.mxu0 0.0
        %v3031 = vand.u32 %v266, 4294901760
        %3032 = vmatpush1.msra.mxu0 %v3031
        %3033 = vmatprep.subr.mxu0 0.0
        %v3034 = vand.u32 %v267, 4294901760
        %3035 = vmatpush1.msra.mxu0 %v3034
        %3036 = vmatprep.subr.mxu0 0.0
        %v3037 = vand.u32 %v268, 4294901760
        %3038 = vmatpush1.msra.mxu0 %v3037
        %3039 = vmatprep.subr.mxu0 0.0
        %v3040 = vand.u32 %v269, 4294901760
        %3041 = vmatpush1.msra.mxu0 %v3040
        %3042 = vmatprep.subr.mxu0 0.0
        %3043 = vmatpush1.msra.mxu0 0.0
        %3044 = vmatprep.subr.mxu0 0.0
        %3045 = vmatpush1.msra.mxu0 0.0
        %3046 = vmatprep.subr.mxu0 0.0
        %3047 = vmatpush1.msra.mxu0 0.0
        %3048 = vmatprep.subr.mxu0 0.0
        %3049 = vmatpush1.msra.mxu0 0.0
        %3050 = vmatprep.subr.mxu0 0.0
        %3051 = vmatpush1.msra.mxu0 0.0
        %3052 = vmatprep.subr.mxu0 0.0
        %3053 = vmatpush1.msra.mxu0 0.0
        %3054 = vmatprep.subr.mxu0 0.0
        %3055 = vmatpush1.msra.mxu0 0.0
        %3056 = vmatprep.subr.mxu0 0.0
        %3057 = vmatpush1.msra.mxu0 0.0
        %3058 = vmatprep.subr.mxu0 0.0
        %3059 = vmatpush1.msra.mxu0 0.0
        %3060 = vmatprep.subr.mxu0 0.0
        %3061 = vmatpush1.msra.mxu0 0.0
        %3062 = vmatprep.subr.mxu0 0.0
        %3063 = vmatpush1.msra.mxu0 0.0
        %3064 = vmatprep.subr.mxu0 0.0
        %3065 = vmatpush1.msra.mxu0 0.0
        %3066 = vmatprep.subr.mxu0 0.0
        %3067 = vmatpush1.msra.mxu0 0.0
        %3068 = vmatprep.subr.mxu0 0.0
        %3069 = vmatpush1.msra.mxu0 0.0
        %3070 = vmatprep.subr.mxu0 0.0
        %3071 = vmatpush1.msra.mxu0 0.0
        %3072 = vmatprep.subr.mxu0 0.0
        %3073 = vmatpush1.msra.mxu0 0.0
        %3074 = vmatprep.mubr.f32.mxu0 0.0
        %v3075 = vand.u32 %v2623, 4294901760
        %v3076 = vsub.f32 %v2623, %v3075
        %v3077 = vand.u32 %v3076, 4294901760
        %3078 = vmatmul.mubr.f32.gmra.mrb[0].mxu0 %v3077
        %v3079 = vpop.f32.mrb[0].mxu0
        %v3080 = vadd.f32 %v2984, %v3079
        %v3081 = vpop.f32.mrb[0].mxu0
        %3082 = vmatprep.mubr.f32.mxu0 0.0
        %v3083 = vand.u32 %v2624, 4294901760
        %v3084 = vsub.f32 %v2624, %v3083
        %v3085 = vand.u32 %v3084, 4294901760
        %3086 = vmatmul.mubr.f32.gmra.mrb[0].mxu0 %v3085
        %v3087 = vpop.f32.mrb[0].mxu0
        %v3088 = vadd.f32 %v2991, %v3087
        %v3089 = vpop.f32.mrb[0].mxu0
        %3090 = vdwg.mxu0
        %3091 = vmatprep.subr.mxu0 0.0
        %v3092 = vand.u32 %v254, 4294901760
        %v3093 = vsub.f32 %v254, %v3092
        %v3094 = vand.u32 %v3093, 4294901760
        %3095 = vmatpush1.msra.mxu0 %v3094
        %3096 = vmatprep.subr.mxu0 0.0
        %v3097 = vand.u32 %v255, 4294901760
        %v3098 = vsub.f32 %v255, %v3097
        %v3099 = vand.u32 %v3098, 4294901760
        %3100 = vmatpush1.msra.mxu0 %v3099
        %3101 = vmatprep.subr.mxu0 0.0
        %v3102 = vand.u32 %v256, 4294901760
        %v3103 = vsub.f32 %v256, %v3102
        %v3104 = vand.u32 %v3103, 4294901760
        %3105 = vmatpush1.msra.mxu0 %v3104
        %3106 = vmatprep.subr.mxu0 0.0
        %v3107 = vand.u32 %v257, 4294901760
        %v3108 = vsub.f32 %v257, %v3107
        %v3109 = vand.u32 %v3108, 4294901760
        %3110 = vmatpush1.msra.mxu0 %v3109
        %3111 = vmatprep.subr.mxu0 0.0
        %v3112 = vand.u32 %v258, 4294901760
        %v3113 = vsub.f32 %v258, %v3112
        %v3114 = vand.u32 %v3113, 4294901760
        %3115 = vmatpush1.msra.mxu0 %v3114
        %3116 = vmatprep.subr.mxu0 0.0
        %v3117 = vand.u32 %v259, 4294901760
        %v3118 = vsub.f32 %v259, %v3117
        %v3119 = vand.u32 %v3118, 4294901760
        %3120 = vmatpush1.msra.mxu0 %v3119
        %3121 = vmatprep.subr.mxu0 0.0
        %v3122 = vand.u32 %v260, 4294901760
        %v3123 = vsub.f32 %v260, %v3122
        %v3124 = vand.u32 %v3123, 4294901760
        %3125 = vmatpush1.msra.mxu0 %v3124
        %3126 = vmatprep.subr.mxu0 0.0
        %v3127 = vand.u32 %v261, 4294901760
        %v3128 = vsub.f32 %v261, %v3127
        %v3129 = vand.u32 %v3128, 4294901760
        %3130 = vmatpush1.msra.mxu0 %v3129
        %3131 = vmatprep.subr.mxu0 0.0
        %v3132 = vand.u32 %v262, 4294901760
        %v3133 = vsub.f32 %v262, %v3132
        %v3134 = vand.u32 %v3133, 4294901760
        %3135 = vmatpush1.msra.mxu0 %v3134
        %3136 = vmatprep.subr.mxu0 0.0
        %v3137 = vand.u32 %v263, 4294901760
        %v3138 = vsub.f32 %v263, %v3137
        %v3139 = vand.u32 %v3138, 4294901760
        %3140 = vmatpush1.msra.mxu0 %v3139
        %3141 = vmatprep.subr.mxu0 0.0
        %v3142 = vand.u32 %v264, 4294901760
        %v3143 = vsub.f32 %v264, %v3142
        %v3144 = vand.u32 %v3143, 4294901760
        %3145 = vmatpush1.msra.mxu0 %v3144
        %3146 = vmatprep.subr.mxu0 0.0
        %v3147 = vand.u32 %v265, 4294901760
        %v3148 = vsub.f32 %v265, %v3147
        %v3149 = vand.u32 %v3148, 4294901760
        %3150 = vmatpush1.msra.mxu0 %v3149
        %3151 = vmatprep.subr.mxu0 0.0
        %v3152 = vand.u32 %v266, 4294901760
        %v3153 = vsub.f32 %v266, %v3152
        %v3154 = vand.u32 %v3153, 4294901760
        %3155 = vmatpush1.msra.mxu0 %v3154
        %3156 = vmatprep.subr.mxu0 0.0
        %v3157 = vand.u32 %v267, 4294901760
        %v3158 = vsub.f32 %v267, %v3157
        %v3159 = vand.u32 %v3158, 4294901760
        %3160 = vmatpush1.msra.mxu0 %v3159
        %3161 = vmatprep.subr.mxu0 0.0
        %v3162 = vand.u32 %v268, 4294901760
        %v3163 = vsub.f32 %v268, %v3162
        %v3164 = vand.u32 %v3163, 4294901760
        %3165 = vmatpush1.msra.mxu0 %v3164
        %3166 = vmatprep.subr.mxu0 0.0
        %v3167 = vand.u32 %v269, 4294901760
        %v3168 = vsub.f32 %v269, %v3167
        %v3169 = vand.u32 %v3168, 4294901760
        %3170 = vmatpush1.msra.mxu0 %v3169
        %3171 = vmatprep.subr.mxu0 0.0
        %3172 = vmatpush1.msra.mxu0 0.0
        %3173 = vmatprep.subr.mxu0 0.0
        %3174 = vmatpush1.msra.mxu0 0.0
        %3175 = vmatprep.subr.mxu0 0.0
        %3176 = vmatpush1.msra.mxu0 0.0
        %3177 = vmatprep.subr.mxu0 0.0
        %3178 = vmatpush1.msra.mxu0 0.0
        %3179 = vmatprep.subr.mxu0 0.0
        %3180 = vmatpush1.msra.mxu0 0.0
        %3181 = vmatprep.subr.mxu0 0.0
        %3182 = vmatpush1.msra.mxu0 0.0
        %3183 = vmatprep.subr.mxu0 0.0
        %3184 = vmatpush1.msra.mxu0 0.0
        %3185 = vmatprep.subr.mxu0 0.0
        %3186 = vmatpush1.msra.mxu0 0.0
        %3187 = vmatprep.subr.mxu0 0.0
        %3188 = vmatpush1.msra.mxu0 0.0
        %3189 = vmatprep.subr.mxu0 0.0
        %3190 = vmatpush1.msra.mxu0 0.0
        %3191 = vmatprep.subr.mxu0 0.0
        %3192 = vmatpush1.msra.mxu0 0.0
        %3193 = vmatprep.subr.mxu0 0.0
        %3194 = vmatpush1.msra.mxu0 0.0
        %3195 = vmatprep.subr.mxu0 0.0
        %3196 = vmatpush1.msra.mxu0 0.0
        %3197 = vmatprep.subr.mxu0 0.0
        %3198 = vmatpush1.msra.mxu0 0.0
        %3199 = vmatprep.subr.mxu0 0.0
        %3200 = vmatpush1.msra.mxu0 0.0
        %3201 = vmatprep.subr.mxu0 0.0
        %3202 = vmatpush1.msra.mxu0 0.0
        %3203 = vmatprep.mubr.f32.mxu0 0.0
        %v3204 = vand.u32 %v2623, 4294901760
        %3205 = vmatmul.mubr.f32.gmra.mrb[0].mxu0 %v3204
        %v3206 = vpop.f32.mrb[0].mxu0
        %v3207 = vadd.f32 %v3080, %v3206
        %v3208 = vpop.f32.mrb[0].mxu0
        %3209 = vmatprep.mubr.f32.mxu0 0.0
        %v3210 = vand.u32 %v2624, 4294901760
        %3211 = vmatmul.mubr.f32.gmra.mrb[0].mxu0 %v3210
        %v3212 = vpop.f32.mrb[0].mxu0
        %v3213 = vadd.f32 %v3088, %v3212
        %v3214 = vpop.f32.mrb[0].mxu0
        %3215 = vdwg.mxu0
        %3216 = vmatprep.subr.mxu0 0.0
        %v3217 = vand.u32 %v254, 4294901760
        %3218 = vmatpush1.msra.mxu0 %v3217
        %3219 = vmatprep.subr.mxu0 0.0
        %v3220 = vand.u32 %v255, 4294901760
        %3221 = vmatpush1.msra.mxu0 %v3220
        %3222 = vmatprep.subr.mxu0 0.0
        %v3223 = vand.u32 %v256, 4294901760
        %3224 = vmatpush1.msra.mxu0 %v3223
        %3225 = vmatprep.subr.mxu0 0.0
        %v3226 = vand.u32 %v257, 4294901760
        %3227 = vmatpush1.msra.mxu0 %v3226
        %3228 = vmatprep.subr.mxu0 0.0
        %v3229 = vand.u32 %v258, 4294901760
        %3230 = vmatpush1.msra.mxu0 %v3229
        %3231 = vmatprep.subr.mxu0 0.0
        %v3232 = vand.u32 %v259, 4294901760
        %3233 = vmatpush1.msra.mxu0 %v3232
        %3234 = vmatprep.subr.mxu0 0.0
        %v3235 = vand.u32 %v260, 4294901760
        %3236 = vmatpush1.msra.mxu0 %v3235
        %3237 = vmatprep.subr.mxu0 0.0
        %v3238 = vand.u32 %v261, 4294901760
        %3239 = vmatpush1.msra.mxu0 %v3238
        %3240 = vmatprep.subr.mxu0 0.0
        %v3241 = vand.u32 %v262, 4294901760
        %3242 = vmatpush1.msra.mxu0 %v3241
        %3243 = vmatprep.subr.mxu0 0.0
        %v3244 = vand.u32 %v263, 4294901760
        %3245 = vmatpush1.msra.mxu0 %v3244
        %3246 = vmatprep.subr.mxu0 0.0
        %v3247 = vand.u32 %v264, 4294901760
        %3248 = vmatpush1.msra.mxu0 %v3247
        %3249 = vmatprep.subr.mxu0 0.0
        %v3250 = vand.u32 %v265, 4294901760
        %3251 = vmatpush1.msra.mxu0 %v3250
        %3252 = vmatprep.subr.mxu0 0.0
        %v3253 = vand.u32 %v266, 4294901760
        %3254 = vmatpush1.msra.mxu0 %v3253
        %3255 = vmatprep.subr.mxu0 0.0
        %v3256 = vand.u32 %v267, 4294901760
        %3257 = vmatpush1.msra.mxu0 %v3256
        %3258 = vmatprep.subr.mxu0 0.0
        %v3259 = vand.u32 %v268, 4294901760
        %3260 = vmatpush1.msra.mxu0 %v3259
        %3261 = vmatprep.subr.mxu0 0.0
        %v3262 = vand.u32 %v269, 4294901760
        %3263 = vmatpush1.msra.mxu0 %v3262
        %3264 = vmatprep.subr.mxu0 0.0
        %3265 = vmatpush1.msra.mxu0 0.0
        %3266 = vmatprep.subr.mxu0 0.0
        %3267 = vmatpush1.msra.mxu0 0.0
        %3268 = vmatprep.subr.mxu0 0.0
        %3269 = vmatpush1.msra.mxu0 0.0
        %3270 = vmatprep.subr.mxu0 0.0
        %3271 = vmatpush1.msra.mxu0 0.0
        %3272 = vmatprep.subr.mxu0 0.0
        %3273 = vmatpush1.msra.mxu0 0.0
        %3274 = vmatprep.subr.mxu0 0.0
        %3275 = vmatpush1.msra.mxu0 0.0
        %3276 = vmatprep.subr.mxu0 0.0
        %3277 = vmatpush1.msra.mxu0 0.0
        %3278 = vmatprep.subr.mxu0 0.0
        %3279 = vmatpush1.msra.mxu0 0.0
        %3280 = vmatprep.subr.mxu0 0.0
        %3281 = vmatpush1.msra.mxu0 0.0
        %3282 = vmatprep.subr.mxu0 0.0
        %3283 = vmatpush1.msra.mxu0 0.0
        %3284 = vmatprep.subr.mxu0 0.0
        %3285 = vmatpush1.msra.mxu0 0.0
        %3286 = vmatprep.subr.mxu0 0.0
        %3287 = vmatpush1.msra.mxu0 0.0
        %3288 = vmatprep.subr.mxu0 0.0
        %3289 = vmatpush1.msra.mxu0 0.0
        %3290 = vmatprep.subr.mxu0 0.0
        %3291 = vmatpush1.msra.mxu0 0.0
        %3292 = vmatprep.subr.mxu0 0.0
        %3293 = vmatpush1.msra.mxu0 0.0
        %3294 = vmatprep.subr.mxu0 0.0
        %3295 = vmatpush1.msra.mxu0 0.0
        %3296 = vmatprep.mubr.f32.mxu0 0.0
        %v3297 = vand.u32 %v2623, 4294901760
        %3298 = vmatmul.mubr.f32.gmra.mrb[0].mxu0 %v3297
        %v3299 = vpop.f32.mrb[0].mxu0
        %v3300 = vadd.f32 %v3207, %v3299
        %v3301 = vpop.f32.mrb[0].mxu0
        %3302 = vmatprep.mubr.f32.mxu0 0.0
        %v3303 = vand.u32 %v2624, 4294901760
        %3304 = vmatmul.mubr.f32.gmra.mrb[0].mxu0 %v3303
        %v3305 = vpop.f32.mrb[0].mxu0
        %v3306 = vadd.f32 %v3213, %v3305
        %v3307 = vpop.f32.mrb[0].mxu0
        %3308 = vdwg.mxu0
        %s3309 = scalar_lea.vmem %s242, 48 [#allocation7]
        %3310 = vst [vmem:[%s3309] sm:$0xff] %v3300
        %3311 = vst [vmem:[%s3309 + $0x8] sm:$0xff] %v3306
        %v3312 = vld [vmem:[%s306] sm:$0xff]
        %v3313 = vld [vmem:[%s306 + $0x8] sm:$0xff]
        %s3314 = sld [smem:[#allocation2 + $0x20]]
        %v3315 = vld [vmem:[%s251] sm:$0xff]
        %v3316 = vld [vmem:[%s251 + $0x8] sm:$0xff]
        %v3317 = vstv %s3314
        %v3318 = vmul.f32 %v3317, %v3315
        %v3319 = vmul.f32 %v3317, %v3316
        %v3320 = vadd.f32 %v3312, %v3318
        %v3321 = vadd.f32 %v3313, %v3319
        %s3322 = sld [smem:[#allocation2 + $0x21]]
        %v3323 = vld [vmem:[%s279] sm:$0xff]
        %v3324 = vld [vmem:[%s279 + $0x8] sm:$0xff]
        %v3325 = vstv %s3322
        %v3326 = vmul.f32 %v3325, %v3323
        %v3327 = vmul.f32 %v3325, %v3324
        %v3328 = vadd.f32 %v3320, %v3326
        %v3329 = vadd.f32 %v3321, %v3327
        %s3330 = sld [smem:[#allocation2 + $0x22]]
        %v3331 = vld [vmem:[%s288] sm:$0xff]
        %v3332 = vld [vmem:[%s288 + $0x8] sm:$0xff]
        %v3333 = vstv %s3330
        %v3334 = vmul.f32 %v3333, %v3331
        %v3335 = vmul.f32 %v3333, %v3332
        %v3336 = vadd.f32 %v3328, %v3334
        %v3337 = vadd.f32 %v3329, %v3335
        %s3338 = sld [smem:[#allocation2 + $0x23]]
        %v3339 = vld [vmem:[%s297] sm:$0xff]
        %v3340 = vld [vmem:[%s297 + $0x8] sm:$0xff]
        %v3341 = vstv %s3338
        %v3342 = vmul.f32 %v3341, %v3339
        %v3343 = vmul.f32 %v3341, %v3340
        %v3344 = vadd.f32 %v3336, %v3342
        %v3345 = vadd.f32 %v3337, %v3343
        %s3346 = sld [smem:[#allocation2 + $0x24]]
        %v3347 = vstv %s3346
        %v3348 = vmul.f32 %v3347, %v3312
        %v3349 = vmul.f32 %v3347, %v3313
        %v3350 = vadd.f32 %v3344, %v3348
        %v3351 = vadd.f32 %v3345, %v3349
        %s3352 = sld [smem:[#allocation2 + $0x25]]
        %v3353 = vld [vmem:[%s315] sm:$0xff]
        %v3354 = vld [vmem:[%s315 + $0x8] sm:$0xff]
        %v3355 = vstv %s3352
        %v3356 = vmul.f32 %v3355, %v3353
        %v3357 = vmul.f32 %v3355, %v3354
        %v3358 = vadd.f32 %v3350, %v3356
        %v3359 = vadd.f32 %v3351, %v3357
        %s3360 = sld [smem:[#allocation2 + $0x26]]
        %v3361 = vld [vmem:[%s324] sm:$0xff]
        %v3362 = vld [vmem:[%s324 + $0x8] sm:$0xff]
        %v3363 = vstv %s3360
        %v3364 = vmul.f32 %v3363, %v3361
        %v3365 = vmul.f32 %v3363, %v3362
        %v3366 = vadd.f32 %v3358, %v3364
        %v3367 = vadd.f32 %v3359, %v3365
        %s3368 = sld [smem:[#allocation2 + $0x27]]
        %v3369 = vld [vmem:[%s333] sm:$0xff]
        %v3370 = vld [vmem:[%s333 + $0x8] sm:$0xff]
        %v3371 = vstv %s3368
        %v3372 = vmul.f32 %v3371, %v3369
        %v3373 = vmul.f32 %v3371, %v3370
        %v3374 = vadd.f32 %v3366, %v3372
        %v3375 = vadd.f32 %v3367, %v3373
        %s3376 = sld [smem:[#allocation5 + $0x4]]
        %vm3377 = vcmp.ge.f32.partialorder %v3374, 0.0
        %vm3378 = vcmp.ge.f32.partialorder %v3375, 0.0
        %v3379 = vstv %s3376
        %v3380 = vmul.f32 %v3379, %v3374
        %v3381 = vmul.f32 %v3379, %v3375
        %v3382 = vsel %vm3377, %v3374, %v3380
        %v3383 = vsel %vm3378, %v3375, %v3381
        %3384 = vmatprep.subr.mxu0 0.0
        %v3385 = vand.u32 %v254, 4294901760
        %3386 = vmatpush1.msra.mxu0 %v3385
        %3387 = vmatprep.subr.mxu0 0.0
        %v3388 = vand.u32 %v255, 4294901760
        %3389 = vmatpush1.msra.mxu0 %v3388
        %3390 = vmatprep.subr.mxu0 0.0
        %v3391 = vand.u32 %v256, 4294901760
        %3392 = vmatpush1.msra.mxu0 %v3391
        %3393 = vmatprep.subr.mxu0 0.0
        %v3394 = vand.u32 %v257, 4294901760
        %3395 = vmatpush1.msra.mxu0 %v3394
        %3396 = vmatprep.subr.mxu0 0.0
        %v3397 = vand.u32 %v258, 4294901760
        %3398 = vmatpush1.msra.mxu0 %v3397
        %3399 = vmatprep.subr.mxu0 0.0
        %v3400 = vand.u32 %v259, 4294901760
        %3401 = vmatpush1.msra.mxu0 %v3400
        %3402 = vmatprep.subr.mxu0 0.0
        %v3403 = vand.u32 %v260, 4294901760
        %3404 = vmatpush1.msra.mxu0 %v3403
        %3405 = vmatprep.subr.mxu0 0.0
        %v3406 = vand.u32 %v261, 4294901760
        %3407 = vmatpush1.msra.mxu0 %v3406
        %3408 = vmatprep.subr.mxu0 0.0
        %v3409 = vand.u32 %v262, 4294901760
        %3410 = vmatpush1.msra.mxu0 %v3409
        %3411 = vmatprep.subr.mxu0 0.0
        %v3412 = vand.u32 %v263, 4294901760
        %3413 = vmatpush1.msra.mxu0 %v3412
        %3414 = vmatprep.subr.mxu0 0.0
        %v3415 = vand.u32 %v264, 4294901760
        %3416 = vmatpush1.msra.mxu0 %v3415
        %3417 = vmatprep.subr.mxu0 0.0
        %v3418 = vand.u32 %v265, 4294901760
        %3419 = vmatpush1.msra.mxu0 %v3418
        %3420 = vmatprep.subr.mxu0 0.0
        %v3421 = vand.u32 %v266, 4294901760
        %3422 = vmatpush1.msra.mxu0 %v3421
        %3423 = vmatprep.subr.mxu0 0.0
        %v3424 = vand.u32 %v267, 4294901760
        %3425 = vmatpush1.msra.mxu0 %v3424
        %3426 = vmatprep.subr.mxu0 0.0
        %v3427 = vand.u32 %v268, 4294901760
        %3428 = vmatpush1.msra.mxu0 %v3427
        %3429 = vmatprep.subr.mxu0 0.0
        %v3430 = vand.u32 %v269, 4294901760
        %3431 = vmatpush1.msra.mxu0 %v3430
        %3432 = vmatprep.subr.mxu0 0.0
        %3433 = vmatpush1.msra.mxu0 0.0
        %3434 = vmatprep.subr.mxu0 0.0
        %3435 = vmatpush1.msra.mxu0 0.0
        %3436 = vmatprep.subr.mxu0 0.0
        %3437 = vmatpush1.msra.mxu0 0.0
        %3438 = vmatprep.subr.mxu0 0.0
        %3439 = vmatpush1.msra.mxu0 0.0
        %3440 = vmatprep.subr.mxu0 0.0
        %3441 = vmatpush1.msra.mxu0 0.0
        %3442 = vmatprep.subr.mxu0 0.0
        %3443 = vmatpush1.msra.mxu0 0.0
        %3444 = vmatprep.subr.mxu0 0.0
        %3445 = vmatpush1.msra.mxu0 0.0
        %3446 = vmatprep.subr.mxu0 0.0
        %3447 = vmatpush1.msra.mxu0 0.0
        %3448 = vmatprep.subr.mxu0 0.0
        %3449 = vmatpush1.msra.mxu0 0.0
        %3450 = vmatprep.subr.mxu0 0.0
        %3451 = vmatpush1.msra.mxu0 0.0
        %3452 = vmatprep.subr.mxu0 0.0
        %3453 = vmatpush1.msra.mxu0 0.0
        %3454 = vmatprep.subr.mxu0 0.0
        %3455 = vmatpush1.msra.mxu0 0.0
        %3456 = vmatprep.subr.mxu0 0.0
        %3457 = vmatpush1.msra.mxu0 0.0
        %3458 = vmatprep.subr.mxu0 0.0
        %3459 = vmatpush1.msra.mxu0 0.0
        %3460 = vmatprep.subr.mxu0 0.0
        %3461 = vmatpush1.msra.mxu0 0.0
        %3462 = vmatprep.subr.mxu0 0.0
        %3463 = vmatpush1.msra.mxu0 0.0
        %3464 = vmatprep.mubr.f32.mxu0 0.0
        %v3465 = vand.u32 %v3382, 4294901760
        %v3466 = vsub.f32 %v3382, %v3465
        %v3467 = vand.u32 %v3466, 4294901760
        %v3468 = vsub.f32 %v3466, %v3467
        %v3469 = vand.u32 %v3468, 4294901760
        %3470 = vmatmul.mubr.f32.gmra.mrb[0].mxu0 %v3469
        %v3471 = vpop.f32.mrb[0].mxu0
        %v3472 = vadd.f32 0.0, %v3471
        %v3473 = vpop.f32.mrb[0].mxu0
        %3474 = vmatprep.mubr.f32.mxu0 0.0
        %v3475 = vand.u32 %v3383, 4294901760
        %v3476 = vsub.f32 %v3383, %v3475
        %v3477 = vand.u32 %v3476, 4294901760
        %v3478 = vsub.f32 %v3476, %v3477
        %v3479 = vand.u32 %v3478, 4294901760
        %3480 = vmatmul.mubr.f32.gmra.mrb[0].mxu0 %v3479
        %v3481 = vpop.f32.mrb[0].mxu0
        %v3482 = vadd.f32 0.0, %v3481
        %v3483 = vpop.f32.mrb[0].mxu0
        %3484 = vdwg.mxu0
        %3485 = vmatprep.subr.mxu0 0.0
        %v3486 = vand.u32 %v254, 4294901760
        %v3487 = vsub.f32 %v254, %v3486
        %v3488 = vand.u32 %v3487, 4294901760
        %v3489 = vsub.f32 %v3487, %v3488
        %v3490 = vand.u32 %v3489, 4294901760
        %3491 = vmatpush1.msra.mxu0 %v3490
        %3492 = vmatprep.subr.mxu0 0.0
        %v3493 = vand.u32 %v255, 4294901760
        %v3494 = vsub.f32 %v255, %v3493
        %v3495 = vand.u32 %v3494, 4294901760
        %v3496 = vsub.f32 %v3494, %v3495
        %v3497 = vand.u32 %v3496, 4294901760
        %3498 = vmatpush1.msra.mxu0 %v3497
        %3499 = vmatprep.subr.mxu0 0.0
        %v3500 = vand.u32 %v256, 4294901760
        %v3501 = vsub.f32 %v256, %v3500
        %v3502 = vand.u32 %v3501, 4294901760
        %v3503 = vsub.f32 %v3501, %v3502
        %v3504 = vand.u32 %v3503, 4294901760
        %3505 = vmatpush1.msra.mxu0 %v3504
        %3506 = vmatprep.subr.mxu0 0.0
        %v3507 = vand.u32 %v257, 4294901760
        %v3508 = vsub.f32 %v257, %v3507
        %v3509 = vand.u32 %v3508, 4294901760
        %v3510 = vsub.f32 %v3508, %v3509
        %v3511 = vand.u32 %v3510, 4294901760
        %3512 = vmatpush1.msra.mxu0 %v3511
        %3513 = vmatprep.subr.mxu0 0.0
        %v3514 = vand.u32 %v258, 4294901760
        %v3515 = vsub.f32 %v258, %v3514
        %v3516 = vand.u32 %v3515, 4294901760
        %v3517 = vsub.f32 %v3515, %v3516
        %v3518 = vand.u32 %v3517, 4294901760
        %3519 = vmatpush1.msra.mxu0 %v3518
        %3520 = vmatprep.subr.mxu0 0.0
        %v3521 = vand.u32 %v259, 4294901760
        %v3522 = vsub.f32 %v259, %v3521
        %v3523 = vand.u32 %v3522, 4294901760
        %v3524 = vsub.f32 %v3522, %v3523
        %v3525 = vand.u32 %v3524, 4294901760
        %3526 = vmatpush1.msra.mxu0 %v3525
        %3527 = vmatprep.subr.mxu0 0.0
        %v3528 = vand.u32 %v260, 4294901760
        %v3529 = vsub.f32 %v260, %v3528
        %v3530 = vand.u32 %v3529, 4294901760
        %v3531 = vsub.f32 %v3529, %v3530
        %v3532 = vand.u32 %v3531, 4294901760
        %3533 = vmatpush1.msra.mxu0 %v3532
        %3534 = vmatprep.subr.mxu0 0.0
        %v3535 = vand.u32 %v261, 4294901760
        %v3536 = vsub.f32 %v261, %v3535
        %v3537 = vand.u32 %v3536, 4294901760
        %v3538 = vsub.f32 %v3536, %v3537
        %v3539 = vand.u32 %v3538, 4294901760
        %3540 = vmatpush1.msra.mxu0 %v3539
        %3541 = vmatprep.subr.mxu0 0.0
        %v3542 = vand.u32 %v262, 4294901760
        %v3543 = vsub.f32 %v262, %v3542
        %v3544 = vand.u32 %v3543, 4294901760
        %v3545 = vsub.f32 %v3543, %v3544
        %v3546 = vand.u32 %v3545, 4294901760
        %3547 = vmatpush1.msra.mxu0 %v3546
        %3548 = vmatprep.subr.mxu0 0.0
        %v3549 = vand.u32 %v263, 4294901760
        %v3550 = vsub.f32 %v263, %v3549
        %v3551 = vand.u32 %v3550, 4294901760
        %v3552 = vsub.f32 %v3550, %v3551
        %v3553 = vand.u32 %v3552, 4294901760
        %3554 = vmatpush1.msra.mxu0 %v3553
        %3555 = vmatprep.subr.mxu0 0.0
        %v3556 = vand.u32 %v264, 4294901760
        %v3557 = vsub.f32 %v264, %v3556
        %v3558 = vand.u32 %v3557, 4294901760
        %v3559 = vsub.f32 %v3557, %v3558
        %v3560 = vand.u32 %v3559, 4294901760
        %3561 = vmatpush1.msra.mxu0 %v3560
        %3562 = vmatprep.subr.mxu0 0.0
        %v3563 = vand.u32 %v265, 4294901760
        %v3564 = vsub.f32 %v265, %v3563
        %v3565 = vand.u32 %v3564, 4294901760
        %v3566 = vsub.f32 %v3564, %v3565
        %v3567 = vand.u32 %v3566, 4294901760
        %3568 = vmatpush1.msra.mxu0 %v3567
        %3569 = vmatprep.subr.mxu0 0.0
        %v3570 = vand.u32 %v266, 4294901760
        %v3571 = vsub.f32 %v266, %v3570
        %v3572 = vand.u32 %v3571, 4294901760
        %v3573 = vsub.f32 %v3571, %v3572
        %v3574 = vand.u32 %v3573, 4294901760
        %3575 = vmatpush1.msra.mxu0 %v3574
        %3576 = vmatprep.subr.mxu0 0.0
        %v3577 = vand.u32 %v267, 4294901760
        %v3578 = vsub.f32 %v267, %v3577
        %v3579 = vand.u32 %v3578, 4294901760
        %v3580 = vsub.f32 %v3578, %v3579
        %v3581 = vand.u32 %v3580, 4294901760
        %3582 = vmatpush1.msra.mxu0 %v3581
        %3583 = vmatprep.subr.mxu0 0.0
        %v3584 = vand.u32 %v268, 4294901760
        %v3585 = vsub.f32 %v268, %v3584
        %v3586 = vand.u32 %v3585, 4294901760
        %v3587 = vsub.f32 %v3585, %v3586
        %v3588 = vand.u32 %v3587, 4294901760
        %3589 = vmatpush1.msra.mxu0 %v3588
        %3590 = vmatprep.subr.mxu0 0.0
        %v3591 = vand.u32 %v269, 4294901760
        %v3592 = vsub.f32 %v269, %v3591
        %v3593 = vand.u32 %v3592, 4294901760
        %v3594 = vsub.f32 %v3592, %v3593
        %v3595 = vand.u32 %v3594, 4294901760
        %3596 = vmatpush1.msra.mxu0 %v3595
        %3597 = vmatprep.subr.mxu0 0.0
        %3598 = vmatpush1.msra.mxu0 0.0
        %3599 = vmatprep.subr.mxu0 0.0
        %3600 = vmatpush1.msra.mxu0 0.0
        %3601 = vmatprep.subr.mxu0 0.0
        %3602 = vmatpush1.msra.mxu0 0.0
        %3603 = vmatprep.subr.mxu0 0.0
        %3604 = vmatpush1.msra.mxu0 0.0
        %3605 = vmatprep.subr.mxu0 0.0
        %3606 = vmatpush1.msra.mxu0 0.0
        %3607 = vmatprep.subr.mxu0 0.0
        %3608 = vmatpush1.msra.mxu0 0.0
        %3609 = vmatprep.subr.mxu0 0.0
        %3610 = vmatpush1.msra.mxu0 0.0
        %3611 = vmatprep.subr.mxu0 0.0
        %3612 = vmatpush1.msra.mxu0 0.0
        %3613 = vmatprep.subr.mxu0 0.0
        %3614 = vmatpush1.msra.mxu0 0.0
        %3615 = vmatprep.subr.mxu0 0.0
        %3616 = vmatpush1.msra.mxu0 0.0
        %3617 = vmatprep.subr.mxu0 0.0
        %3618 = vmatpush1.msra.mxu0 0.0
        %3619 = vmatprep.subr.mxu0 0.0
        %3620 = vmatpush1.msra.mxu0 0.0
        %3621 = vmatprep.subr.mxu0 0.0
        %3622 = vmatpush1.msra.mxu0 0.0
        %3623 = vmatprep.subr.mxu0 0.0
        %3624 = vmatpush1.msra.mxu0 0.0
        %3625 = vmatprep.subr.mxu0 0.0
        %3626 = vmatpush1.msra.mxu0 0.0
        %3627 = vmatprep.subr.mxu0 0.0
        %3628 = vmatpush1.msra.mxu0 0.0
        %3629 = vmatprep.mubr.f32.mxu0 0.0
        %v3630 = vand.u32 %v3382, 4294901760
        %3631 = vmatmul.mubr.f32.gmra.mrb[0].mxu0 %v3630
        %v3632 = vpop.f32.mrb[0].mxu0
        %v3633 = vadd.f32 %v3472, %v3632
        %v3634 = vpop.f32.mrb[0].mxu0
        %3635 = vmatprep.mubr.f32.mxu0 0.0
        %v3636 = vand.u32 %v3383, 4294901760
        %3637 = vmatmul.mubr.f32.gmra.mrb[0].mxu0 %v3636
        %v3638 = vpop.f32.mrb[0].mxu0
        %v3639 = vadd.f32 %v3482, %v3638
        %v3640 = vpop.f32.mrb[0].mxu0
        %3641 = vdwg.mxu0
        %3642 = vmatprep.subr.mxu0 0.0
        %v3643 = vand.u32 %v254, 4294901760
        %v3644 = vsub.f32 %v254, %v3643
        %3645 = vmatpush1.msra.mxu0 %v3644
        %3646 = vmatprep.subr.mxu0 0.0
        %v3647 = vand.u32 %v255, 4294901760
        %v3648 = vsub.f32 %v255, %v3647
        %3649 = vmatpush1.msra.mxu0 %v3648
        %3650 = vmatprep.subr.mxu0 0.0
        %v3651 = vand.u32 %v256, 4294901760
        %v3652 = vsub.f32 %v256, %v3651
        %3653 = vmatpush1.msra.mxu0 %v3652
        %3654 = vmatprep.subr.mxu0 0.0
        %v3655 = vand.u32 %v257, 4294901760
        %v3656 = vsub.f32 %v257, %v3655
        %3657 = vmatpush1.msra.mxu0 %v3656
        %3658 = vmatprep.subr.mxu0 0.0
        %v3659 = vand.u32 %v258, 4294901760
        %v3660 = vsub.f32 %v258, %v3659
        %3661 = vmatpush1.msra.mxu0 %v3660
        %3662 = vmatprep.subr.mxu0 0.0
        %v3663 = vand.u32 %v259, 4294901760
        %v3664 = vsub.f32 %v259, %v3663
        %3665 = vmatpush1.msra.mxu0 %v3664
        %3666 = vmatprep.subr.mxu0 0.0
        %v3667 = vand.u32 %v260, 4294901760
        %v3668 = vsub.f32 %v260, %v3667
        %3669 = vmatpush1.msra.mxu0 %v3668
        %3670 = vmatprep.subr.mxu0 0.0
        %v3671 = vand.u32 %v261, 4294901760
        %v3672 = vsub.f32 %v261, %v3671
        %3673 = vmatpush1.msra.mxu0 %v3672
        %3674 = vmatprep.subr.mxu0 0.0
        %v3675 = vand.u32 %v262, 4294901760
        %v3676 = vsub.f32 %v262, %v3675
        %3677 = vmatpush1.msra.mxu0 %v3676
        %3678 = vmatprep.subr.mxu0 0.0
        %v3679 = vand.u32 %v263, 4294901760
        %v3680 = vsub.f32 %v263, %v3679
        %3681 = vmatpush1.msra.mxu0 %v3680
        %3682 = vmatprep.subr.mxu0 0.0
        %v3683 = vand.u32 %v264, 4294901760
        %v3684 = vsub.f32 %v264, %v3683
        %3685 = vmatpush1.msra.mxu0 %v3684
        %3686 = vmatprep.subr.mxu0 0.0
        %v3687 = vand.u32 %v265, 4294901760
        %v3688 = vsub.f32 %v265, %v3687
        %3689 = vmatpush1.msra.mxu0 %v3688
        %3690 = vmatprep.subr.mxu0 0.0
        %v3691 = vand.u32 %v266, 4294901760
        %v3692 = vsub.f32 %v266, %v3691
        %3693 = vmatpush1.msra.mxu0 %v3692
        %3694 = vmatprep.subr.mxu0 0.0
        %v3695 = vand.u32 %v267, 4294901760
        %v3696 = vsub.f32 %v267, %v3695
        %3697 = vmatpush1.msra.mxu0 %v3696
        %3698 = vmatprep.subr.mxu0 0.0
        %v3699 = vand.u32 %v268, 4294901760
        %v3700 = vsub.f32 %v268, %v3699
        %3701 = vmatpush1.msra.mxu0 %v3700
        %3702 = vmatprep.subr.mxu0 0.0
        %v3703 = vand.u32 %v269, 4294901760
        %v3704 = vsub.f32 %v269, %v3703
        %3705 = vmatpush1.msra.mxu0 %v3704
        %3706 = vmatprep.subr.mxu0 0.0
        %3707 = vmatpush1.msra.mxu0 0.0
        %3708 = vmatprep.subr.mxu0 0.0
        %3709 = vmatpush1.msra.mxu0 0.0
        %3710 = vmatprep.subr.mxu0 0.0
        %3711 = vmatpush1.msra.mxu0 0.0
        %3712 = vmatprep.subr.mxu0 0.0
        %3713 = vmatpush1.msra.mxu0 0.0
        %3714 = vmatprep.subr.mxu0 0.0
        %3715 = vmatpush1.msra.mxu0 0.0
        %3716 = vmatprep.subr.mxu0 0.0
        %3717 = vmatpush1.msra.mxu0 0.0
        %3718 = vmatprep.subr.mxu0 0.0
        %3719 = vmatpush1.msra.mxu0 0.0
        %3720 = vmatprep.subr.mxu0 0.0
        %3721 = vmatpush1.msra.mxu0 0.0
        %3722 = vmatprep.subr.mxu0 0.0
        %3723 = vmatpush1.msra.mxu0 0.0
        %3724 = vmatprep.subr.mxu0 0.0
        %3725 = vmatpush1.msra.mxu0 0.0
        %3726 = vmatprep.subr.mxu0 0.0
        %3727 = vmatpush1.msra.mxu0 0.0
        %3728 = vmatprep.subr.mxu0 0.0
        %3729 = vmatpush1.msra.mxu0 0.0
        %3730 = vmatprep.subr.mxu0 0.0
        %3731 = vmatpush1.msra.mxu0 0.0
        %3732 = vmatprep.subr.mxu0 0.0
        %3733 = vmatpush1.msra.mxu0 0.0
        %3734 = vmatprep.subr.mxu0 0.0
        %3735 = vmatpush1.msra.mxu0 0.0
        %3736 = vmatprep.subr.mxu0 0.0
        %3737 = vmatpush1.msra.mxu0 0.0
        %3738 = vmatprep.mubr.f32.mxu0 0.0
        %v3739 = vand.u32 %v3382, 4294901760
        %v3740 = vsub.f32 %v3382, %v3739
        %3741 = vmatmul.mubr.f32.gmra.mrb[0].mxu0 %v3740
        %v3742 = vpop.f32.mrb[0].mxu0
        %v3743 = vadd.f32 %v3633, %v3742
        %v3744 = vpop.f32.mrb[0].mxu0
        %3745 = vmatprep.mubr.f32.mxu0 0.0
        %v3746 = vand.u32 %v3383, 4294901760
        %v3747 = vsub.f32 %v3383, %v3746
        %3748 = vmatmul.mubr.f32.gmra.mrb[0].mxu0 %v3747
        %v3749 = vpop.f32.mrb[0].mxu0
        %v3750 = vadd.f32 %v3639, %v3749
        %v3751 = vpop.f32.mrb[0].mxu0
        %3752 = vdwg.mxu0
        %3753 = vmatprep.subr.mxu0 0.0
        %v3754 = vand.u32 %v254, 4294901760
        %3755 = vmatpush1.msra.mxu0 %v3754
        %3756 = vmatprep.subr.mxu0 0.0
        %v3757 = vand.u32 %v255, 4294901760
        %3758 = vmatpush1.msra.mxu0 %v3757
        %3759 = vmatprep.subr.mxu0 0.0
        %v3760 = vand.u32 %v256, 4294901760
        %3761 = vmatpush1.msra.mxu0 %v3760
        %3762 = vmatprep.subr.mxu0 0.0
        %v3763 = vand.u32 %v257, 4294901760
        %3764 = vmatpush1.msra.mxu0 %v3763
        %3765 = vmatprep.subr.mxu0 0.0
        %v3766 = vand.u32 %v258, 4294901760
        %3767 = vmatpush1.msra.mxu0 %v3766
        %3768 = vmatprep.subr.mxu0 0.0
        %v3769 = vand.u32 %v259, 4294901760
        %3770 = vmatpush1.msra.mxu0 %v3769
        %3771 = vmatprep.subr.mxu0 0.0
        %v3772 = vand.u32 %v260, 4294901760
        %3773 = vmatpush1.msra.mxu0 %v3772
        %3774 = vmatprep.subr.mxu0 0.0
        %v3775 = vand.u32 %v261, 4294901760
        %3776 = vmatpush1.msra.mxu0 %v3775
        %3777 = vmatprep.subr.mxu0 0.0
        %v3778 = vand.u32 %v262, 4294901760
        %3779 = vmatpush1.msra.mxu0 %v3778
        %3780 = vmatprep.subr.mxu0 0.0
        %v3781 = vand.u32 %v263, 4294901760
        %3782 = vmatpush1.msra.mxu0 %v3781
        %3783 = vmatprep.subr.mxu0 0.0
        %v3784 = vand.u32 %v264, 4294901760
        %3785 = vmatpush1.msra.mxu0 %v3784
        %3786 = vmatprep.subr.mxu0 0.0
        %v3787 = vand.u32 %v265, 4294901760
        %3788 = vmatpush1.msra.mxu0 %v3787
        %3789 = vmatprep.subr.mxu0 0.0
        %v3790 = vand.u32 %v266, 4294901760
        %3791 = vmatpush1.msra.mxu0 %v3790
        %3792 = vmatprep.subr.mxu0 0.0
        %v3793 = vand.u32 %v267, 4294901760
        %3794 = vmatpush1.msra.mxu0 %v3793
        %3795 = vmatprep.subr.mxu0 0.0
        %v3796 = vand.u32 %v268, 4294901760
        %3797 = vmatpush1.msra.mxu0 %v3796
        %3798 = vmatprep.subr.mxu0 0.0
        %v3799 = vand.u32 %v269, 4294901760
        %3800 = vmatpush1.msra.mxu0 %v3799
        %3801 = vmatprep.subr.mxu0 0.0
        %3802 = vmatpush1.msra.mxu0 0.0
        %3803 = vmatprep.subr.mxu0 0.0
        %3804 = vmatpush1.msra.mxu0 0.0
        %3805 = vmatprep.subr.mxu0 0.0
        %3806 = vmatpush1.msra.mxu0 0.0
        %3807 = vmatprep.subr.mxu0 0.0
        %3808 = vmatpush1.msra.mxu0 0.0
        %3809 = vmatprep.subr.mxu0 0.0
        %3810 = vmatpush1.msra.mxu0 0.0
        %3811 = vmatprep.subr.mxu0 0.0
        %3812 = vmatpush1.msra.mxu0 0.0
        %3813 = vmatprep.subr.mxu0 0.0
        %3814 = vmatpush1.msra.mxu0 0.0
        %3815 = vmatprep.subr.mxu0 0.0
        %3816 = vmatpush1.msra.mxu0 0.0
        %3817 = vmatprep.subr.mxu0 0.0
        %3818 = vmatpush1.msra.mxu0 0.0
        %3819 = vmatprep.subr.mxu0 0.0
        %3820 = vmatpush1.msra.mxu0 0.0
        %3821 = vmatprep.subr.mxu0 0.0
        %3822 = vmatpush1.msra.mxu0 0.0
        %3823 = vmatprep.subr.mxu0 0.0
        %3824 = vmatpush1.msra.mxu0 0.0
        %3825 = vmatprep.subr.mxu0 0.0
        %3826 = vmatpush1.msra.mxu0 0.0
        %3827 = vmatprep.subr.mxu0 0.0
        %3828 = vmatpush1.msra.mxu0 0.0
        %3829 = vmatprep.subr.mxu0 0.0
        %3830 = vmatpush1.msra.mxu0 0.0
        %3831 = vmatprep.subr.mxu0 0.0
        %3832 = vmatpush1.msra.mxu0 0.0
        %3833 = vmatprep.mubr.f32.mxu0 0.0
        %v3834 = vand.u32 %v3382, 4294901760
        %v3835 = vsub.f32 %v3382, %v3834
        %v3836 = vand.u32 %v3835, 4294901760
        %3837 = vmatmul.mubr.f32.gmra.mrb[0].mxu0 %v3836
        %v3838 = vpop.f32.mrb[0].mxu0
        %v3839 = vadd.f32 %v3743, %v3838
        %v3840 = vpop.f32.mrb[0].mxu0
        %3841 = vmatprep.mubr.f32.mxu0 0.0
        %v3842 = vand.u32 %v3383, 4294901760
        %v3843 = vsub.f32 %v3383, %v3842
        %v3844 = vand.u32 %v3843, 4294901760
        %3845 = vmatmul.mubr.f32.gmra.mrb[0].mxu0 %v3844
        %v3846 = vpop.f32.mrb[0].mxu0
        %v3847 = vadd.f32 %v3750, %v3846
        %v3848 = vpop.f32.mrb[0].mxu0
        %3849 = vdwg.mxu0
        %3850 = vmatprep.subr.mxu0 0.0
        %v3851 = vand.u32 %v254, 4294901760
        %v3852 = vsub.f32 %v254, %v3851
        %v3853 = vand.u32 %v3852, 4294901760
        %3854 = vmatpush1.msra.mxu0 %v3853
        %3855 = vmatprep.subr.mxu0 0.0
        %v3856 = vand.u32 %v255, 4294901760
        %v3857 = vsub.f32 %v255, %v3856
        %v3858 = vand.u32 %v3857, 4294901760
        %3859 = vmatpush1.msra.mxu0 %v3858
        %3860 = vmatprep.subr.mxu0 0.0
        %v3861 = vand.u32 %v256, 4294901760
        %v3862 = vsub.f32 %v256, %v3861
        %v3863 = vand.u32 %v3862, 4294901760
        %3864 = vmatpush1.msra.mxu0 %v3863
        %3865 = vmatprep.subr.mxu0 0.0
        %v3866 = vand.u32 %v257, 4294901760
        %v3867 = vsub.f32 %v257, %v3866
        %v3868 = vand.u32 %v3867, 4294901760
        %3869 = vmatpush1.msra.mxu0 %v3868
        %3870 = vmatprep.subr.mxu0 0.0
        %v3871 = vand.u32 %v258, 4294901760
        %v3872 = vsub.f32 %v258, %v3871
        %v3873 = vand.u32 %v3872, 4294901760
        %3874 = vmatpush1.msra.mxu0 %v3873
        %3875 = vmatprep.subr.mxu0 0.0
        %v3876 = vand.u32 %v259, 4294901760
        %v3877 = vsub.f32 %v259, %v3876
        %v3878 = vand.u32 %v3877, 4294901760
        %3879 = vmatpush1.msra.mxu0 %v3878
        %3880 = vmatprep.subr.mxu0 0.0
        %v3881 = vand.u32 %v260, 4294901760
        %v3882 = vsub.f32 %v260, %v3881
        %v3883 = vand.u32 %v3882, 4294901760
        %3884 = vmatpush1.msra.mxu0 %v3883
        %3885 = vmatprep.subr.mxu0 0.0
        %v3886 = vand.u32 %v261, 4294901760
        %v3887 = vsub.f32 %v261, %v3886
        %v3888 = vand.u32 %v3887, 4294901760
        %3889 = vmatpush1.msra.mxu0 %v3888
        %3890 = vmatprep.subr.mxu0 0.0
        %v3891 = vand.u32 %v262, 4294901760
        %v3892 = vsub.f32 %v262, %v3891
        %v3893 = vand.u32 %v3892, 4294901760
        %3894 = vmatpush1.msra.mxu0 %v3893
        %3895 = vmatprep.subr.mxu0 0.0
        %v3896 = vand.u32 %v263, 4294901760
        %v3897 = vsub.f32 %v263, %v3896
        %v3898 = vand.u32 %v3897, 4294901760
        %3899 = vmatpush1.msra.mxu0 %v3898
        %3900 = vmatprep.subr.mxu0 0.0
        %v3901 = vand.u32 %v264, 4294901760
        %v3902 = vsub.f32 %v264, %v3901
        %v3903 = vand.u32 %v3902, 4294901760
        %3904 = vmatpush1.msra.mxu0 %v3903
        %3905 = vmatprep.subr.mxu0 0.0
        %v3906 = vand.u32 %v265, 4294901760
        %v3907 = vsub.f32 %v265, %v3906
        %v3908 = vand.u32 %v3907, 4294901760
        %3909 = vmatpush1.msra.mxu0 %v3908
        %3910 = vmatprep.subr.mxu0 0.0
        %v3911 = vand.u32 %v266, 4294901760
        %v3912 = vsub.f32 %v266, %v3911
        %v3913 = vand.u32 %v3912, 4294901760
        %3914 = vmatpush1.msra.mxu0 %v3913
        %3915 = vmatprep.subr.mxu0 0.0
        %v3916 = vand.u32 %v267, 4294901760
        %v3917 = vsub.f32 %v267, %v3916
        %v3918 = vand.u32 %v3917, 4294901760
        %3919 = vmatpush1.msra.mxu0 %v3918
        %3920 = vmatprep.subr.mxu0 0.0
        %v3921 = vand.u32 %v268, 4294901760
        %v3922 = vsub.f32 %v268, %v3921
        %v3923 = vand.u32 %v3922, 4294901760
        %3924 = vmatpush1.msra.mxu0 %v3923
        %3925 = vmatprep.subr.mxu0 0.0
        %v3926 = vand.u32 %v269, 4294901760
        %v3927 = vsub.f32 %v269, %v3926
        %v3928 = vand.u32 %v3927, 4294901760
        %3929 = vmatpush1.msra.mxu0 %v3928
        %3930 = vmatprep.subr.mxu0 0.0
        %3931 = vmatpush1.msra.mxu0 0.0
        %3932 = vmatprep.subr.mxu0 0.0
        %3933 = vmatpush1.msra.mxu0 0.0
        %3934 = vmatprep.subr.mxu0 0.0
        %3935 = vmatpush1.msra.mxu0 0.0
        %3936 = vmatprep.subr.mxu0 0.0
        %3937 = vmatpush1.msra.mxu0 0.0
        %3938 = vmatprep.subr.mxu0 0.0
        %3939 = vmatpush1.msra.mxu0 0.0
        %3940 = vmatprep.subr.mxu0 0.0
        %3941 = vmatpush1.msra.mxu0 0.0
        %3942 = vmatprep.subr.mxu0 0.0
        %3943 = vmatpush1.msra.mxu0 0.0
        %3944 = vmatprep.subr.mxu0 0.0
        %3945 = vmatpush1.msra.mxu0 0.0
        %3946 = vmatprep.subr.mxu0 0.0
        %3947 = vmatpush1.msra.mxu0 0.0
        %3948 = vmatprep.subr.mxu0 0.0
        %3949 = vmatpush1.msra.mxu0 0.0
        %3950 = vmatprep.subr.mxu0 0.0
        %3951 = vmatpush1.msra.mxu0 0.0
        %3952 = vmatprep.subr.mxu0 0.0
        %3953 = vmatpush1.msra.mxu0 0.0
        %3954 = vmatprep.subr.mxu0 0.0
        %3955 = vmatpush1.msra.mxu0 0.0
        %3956 = vmatprep.subr.mxu0 0.0
        %3957 = vmatpush1.msra.mxu0 0.0
        %3958 = vmatprep.subr.mxu0 0.0
        %3959 = vmatpush1.msra.mxu0 0.0
        %3960 = vmatprep.subr.mxu0 0.0
        %3961 = vmatpush1.msra.mxu0 0.0
        %3962 = vmatprep.mubr.f32.mxu0 0.0
        %v3963 = vand.u32 %v3382, 4294901760
        %3964 = vmatmul.mubr.f32.gmra.mrb[0].mxu0 %v3963
        %v3965 = vpop.f32.mrb[0].mxu0
        %v3966 = vadd.f32 %v3839, %v3965
        %v3967 = vpop.f32.mrb[0].mxu0
        %3968 = vmatprep.mubr.f32.mxu0 0.0
        %v3969 = vand.u32 %v3383, 4294901760
        %3970 = vmatmul.mubr.f32.gmra.mrb[0].mxu0 %v3969
        %v3971 = vpop.f32.mrb[0].mxu0
        %v3972 = vadd.f32 %v3847, %v3971
        %v3973 = vpop.f32.mrb[0].mxu0
        %3974 = vdwg.mxu0
        %3975 = vmatprep.subr.mxu0 0.0
        %v3976 = vand.u32 %v254, 4294901760
        %3977 = vmatpush1.msra.mxu0 %v3976
        %3978 = vmatprep.subr.mxu0 0.0
        %v3979 = vand.u32 %v255, 4294901760
        %3980 = vmatpush1.msra.mxu0 %v3979
        %3981 = vmatprep.subr.mxu0 0.0
        %v3982 = vand.u32 %v256, 4294901760
        %3983 = vmatpush1.msra.mxu0 %v3982
        %3984 = vmatprep.subr.mxu0 0.0
        %v3985 = vand.u32 %v257, 4294901760
        %3986 = vmatpush1.msra.mxu0 %v3985
        %3987 = vmatprep.subr.mxu0 0.0
        %v3988 = vand.u32 %v258, 4294901760
        %3989 = vmatpush1.msra.mxu0 %v3988
        %3990 = vmatprep.subr.mxu0 0.0
        %v3991 = vand.u32 %v259, 4294901760
        %3992 = vmatpush1.msra.mxu0 %v3991
        %3993 = vmatprep.subr.mxu0 0.0
        %v3994 = vand.u32 %v260, 4294901760
        %3995 = vmatpush1.msra.mxu0 %v3994
        %3996 = vmatprep.subr.mxu0 0.0
        %v3997 = vand.u32 %v261, 4294901760
        %3998 = vmatpush1.msra.mxu0 %v3997
        %3999 = vmatprep.subr.mxu0 0.0
        %v4000 = vand.u32 %v262, 4294901760
        %4001 = vmatpush1.msra.mxu0 %v4000
        %4002 = vmatprep.subr.mxu0 0.0
        %v4003 = vand.u32 %v263, 4294901760
        %4004 = vmatpush1.msra.mxu0 %v4003
        %4005 = vmatprep.subr.mxu0 0.0
        %v4006 = vand.u32 %v264, 4294901760
        %4007 = vmatpush1.msra.mxu0 %v4006
        %4008 = vmatprep.subr.mxu0 0.0
        %v4009 = vand.u32 %v265, 4294901760
        %4010 = vmatpush1.msra.mxu0 %v4009
        %4011 = vmatprep.subr.mxu0 0.0
        %v4012 = vand.u32 %v266, 4294901760
        %4013 = vmatpush1.msra.mxu0 %v4012
        %4014 = vmatprep.subr.mxu0 0.0
        %v4015 = vand.u32 %v267, 4294901760
        %4016 = vmatpush1.msra.mxu0 %v4015
        %4017 = vmatprep.subr.mxu0 0.0
        %v4018 = vand.u32 %v268, 4294901760
        %4019 = vmatpush1.msra.mxu0 %v4018
        %4020 = vmatprep.subr.mxu0 0.0
        %v4021 = vand.u32 %v269, 4294901760
        %4022 = vmatpush1.msra.mxu0 %v4021
        %4023 = vmatprep.subr.mxu0 0.0
        %4024 = vmatpush1.msra.mxu0 0.0
        %4025 = vmatprep.subr.mxu0 0.0
        %4026 = vmatpush1.msra.mxu0 0.0
        %4027 = vmatprep.subr.mxu0 0.0
        %4028 = vmatpush1.msra.mxu0 0.0
        %4029 = vmatprep.subr.mxu0 0.0
        %4030 = vmatpush1.msra.mxu0 0.0
        %4031 = vmatprep.subr.mxu0 0.0
        %4032 = vmatpush1.msra.mxu0 0.0
        %4033 = vmatprep.subr.mxu0 0.0
        %4034 = vmatpush1.msra.mxu0 0.0
        %4035 = vmatprep.subr.mxu0 0.0
        %4036 = vmatpush1.msra.mxu0 0.0
        %4037 = vmatprep.subr.mxu0 0.0
        %4038 = vmatpush1.msra.mxu0 0.0
        %4039 = vmatprep.subr.mxu0 0.0
        %4040 = vmatpush1.msra.mxu0 0.0
        %4041 = vmatprep.subr.mxu0 0.0
        %4042 = vmatpush1.msra.mxu0 0.0
        %4043 = vmatprep.subr.mxu0 0.0
        %4044 = vmatpush1.msra.mxu0 0.0
        %4045 = vmatprep.subr.mxu0 0.0
        %4046 = vmatpush1.msra.mxu0 0.0
        %4047 = vmatprep.subr.mxu0 0.0
        %4048 = vmatpush1.msra.mxu0 0.0
        %4049 = vmatprep.subr.mxu0 0.0
        %4050 = vmatpush1.msra.mxu0 0.0
        %4051 = vmatprep.subr.mxu0 0.0
        %4052 = vmatpush1.msra.mxu0 0.0
        %4053 = vmatprep.subr.mxu0 0.0
        %4054 = vmatpush1.msra.mxu0 0.0
        %4055 = vmatprep.mubr.f32.mxu0 0.0
        %v4056 = vand.u32 %v3382, 4294901760
        %4057 = vmatmul.mubr.f32.gmra.mrb[0].mxu0 %v4056
        %v4058 = vpop.f32.mrb[0].mxu0
        %v4059 = vadd.f32 %v3966, %v4058
        %v4060 = vpop.f32.mrb[0].mxu0
        %4061 = vmatprep.mubr.f32.mxu0 0.0
        %v4062 = vand.u32 %v3383, 4294901760
        %4063 = vmatmul.mubr.f32.gmra.mrb[0].mxu0 %v4062
        %v4064 = vpop.f32.mrb[0].mxu0
        %v4065 = vadd.f32 %v3972, %v4064
        %v4066 = vpop.f32.mrb[0].mxu0
        %4067 = vdwg.mxu0
        %s4068 = scalar_lea.vmem %s242, 64 [#allocation7]
        %4069 = vst [vmem:[%s4068] sm:$0xff] %v4059
        %4070 = vst [vmem:[%s4068 + $0x8] sm:$0xff] %v4065
        %v4071 = vld [vmem:[%s315] sm:$0xff]
        %v4072 = vld [vmem:[%s315 + $0x8] sm:$0xff]
        %s4073 = sld [smem:[#allocation2 + $0x28]]
        %v4074 = vld [vmem:[%s251] sm:$0xff]
        %v4075 = vld [vmem:[%s251 + $0x8] sm:$0xff]
        %v4076 = vstv %s4073
        %v4077 = vmul.f32 %v4076, %v4074
        %v4078 = vmul.f32 %v4076, %v4075
        %v4079 = vadd.f32 %v4071, %v4077
        %v4080 = vadd.f32 %v4072, %v4078
        %s4081 = sld [smem:[#allocation2 + $0x29]]
        %v4082 = vld [vmem:[%s279] sm:$0xff]
        %v4083 = vld [vmem:[%s279 + $0x8] sm:$0xff]
        %v4084 = vstv %s4081
        %v4085 = vmul.f32 %v4084, %v4082
        %v4086 = vmul.f32 %v4084, %v4083
        %v4087 = vadd.f32 %v4079, %v4085
        %v4088 = vadd.f32 %v4080, %v4086
        %s4089 = sld [smem:[#allocation2 + $0x2a]]
        %v4090 = vld [vmem:[%s288] sm:$0xff]
        %v4091 = vld [vmem:[%s288 + $0x8] sm:$0xff]
        %v4092 = vstv %s4089
        %v4093 = vmul.f32 %v4092, %v4090
        %v4094 = vmul.f32 %v4092, %v4091
        %v4095 = vadd.f32 %v4087, %v4093
        %v4096 = vadd.f32 %v4088, %v4094
        %s4097 = sld [smem:[#allocation2 + $0x2b]]
        %v4098 = vld [vmem:[%s297] sm:$0xff]
        %v4099 = vld [vmem:[%s297 + $0x8] sm:$0xff]
        %v4100 = vstv %s4097
        %v4101 = vmul.f32 %v4100, %v4098
        %v4102 = vmul.f32 %v4100, %v4099
        %v4103 = vadd.f32 %v4095, %v4101
        %v4104 = vadd.f32 %v4096, %v4102
        %s4105 = sld [smem:[#allocation2 + $0x2c]]
        %v4106 = vld [vmem:[%s306] sm:$0xff]
        %v4107 = vld [vmem:[%s306 + $0x8] sm:$0xff]
        %v4108 = vstv %s4105
        %v4109 = vmul.f32 %v4108, %v4106
        %v4110 = vmul.f32 %v4108, %v4107
        %v4111 = vadd.f32 %v4103, %v4109
        %v4112 = vadd.f32 %v4104, %v4110
        %s4113 = sld [smem:[#allocation2 + $0x2d]]
        %v4114 = vstv %s4113
        %v4115 = vmul.f32 %v4114, %v4071
        %v4116 = vmul.f32 %v4114, %v4072
        %v4117 = vadd.f32 %v4111, %v4115
        %v4118 = vadd.f32 %v4112, %v4116
        %s4119 = sld [smem:[#allocation2 + $0x2e]]
        %v4120 = vld [vmem:[%s324] sm:$0xff]
        %v4121 = vld [vmem:[%s324 + $0x8] sm:$0xff]
        %v4122 = vstv %s4119
        %v4123 = vmul.f32 %v4122, %v4120
        %v4124 = vmul.f32 %v4122, %v4121
        %v4125 = vadd.f32 %v4117, %v4123
        %v4126 = vadd.f32 %v4118, %v4124
        %s4127 = sld [smem:[#allocation2 + $0x2f]]
        %v4128 = vld [vmem:[%s333] sm:$0xff]
        %v4129 = vld [vmem:[%s333 + $0x8] sm:$0xff]
        %v4130 = vstv %s4127
        %v4131 = vmul.f32 %v4130, %v4128
        %v4132 = vmul.f32 %v4130, %v4129
        %v4133 = vadd.f32 %v4125, %v4131
        %v4134 = vadd.f32 %v4126, %v4132
        %s4135 = sld [smem:[#allocation5 + $0x5]]
        %vm4136 = vcmp.ge.f32.partialorder %v4133, 0.0
        %vm4137 = vcmp.ge.f32.partialorder %v4134, 0.0
        %v4138 = vstv %s4135
        %v4139 = vmul.f32 %v4138, %v4133
        %v4140 = vmul.f32 %v4138, %v4134
        %v4141 = vsel %vm4136, %v4133, %v4139
        %v4142 = vsel %vm4137, %v4134, %v4140
        %4143 = vmatprep.subr.mxu0 0.0
        %v4144 = vand.u32 %v254, 4294901760
        %4145 = vmatpush1.msra.mxu0 %v4144
        %4146 = vmatprep.subr.mxu0 0.0
        %v4147 = vand.u32 %v255, 4294901760
        %4148 = vmatpush1.msra.mxu0 %v4147
        %4149 = vmatprep.subr.mxu0 0.0
        %v4150 = vand.u32 %v256, 4294901760
        %4151 = vmatpush1.msra.mxu0 %v4150
        %4152 = vmatprep.subr.mxu0 0.0
        %v4153 = vand.u32 %v257, 4294901760
        %4154 = vmatpush1.msra.mxu0 %v4153
        %4155 = vmatprep.subr.mxu0 0.0
        %v4156 = vand.u32 %v258, 4294901760
        %4157 = vmatpush1.msra.mxu0 %v4156
        %4158 = vmatprep.subr.mxu0 0.0
        %v4159 = vand.u32 %v259, 4294901760
        %4160 = vmatpush1.msra.mxu0 %v4159
        %4161 = vmatprep.subr.mxu0 0.0
        %v4162 = vand.u32 %v260, 4294901760
        %4163 = vmatpush1.msra.mxu0 %v4162
        %4164 = vmatprep.subr.mxu0 0.0
        %v4165 = vand.u32 %v261, 4294901760
        %4166 = vmatpush1.msra.mxu0 %v4165
        %4167 = vmatprep.subr.mxu0 0.0
        %v4168 = vand.u32 %v262, 4294901760
        %4169 = vmatpush1.msra.mxu0 %v4168
        %4170 = vmatprep.subr.mxu0 0.0
        %v4171 = vand.u32 %v263, 4294901760
        %4172 = vmatpush1.msra.mxu0 %v4171
        %4173 = vmatprep.subr.mxu0 0.0
        %v4174 = vand.u32 %v264, 4294901760
        %4175 = vmatpush1.msra.mxu0 %v4174
        %4176 = vmatprep.subr.mxu0 0.0
        %v4177 = vand.u32 %v265, 4294901760
        %4178 = vmatpush1.msra.mxu0 %v4177
        %4179 = vmatprep.subr.mxu0 0.0
        %v4180 = vand.u32 %v266, 4294901760
        %4181 = vmatpush1.msra.mxu0 %v4180
        %4182 = vmatprep.subr.mxu0 0.0
        %v4183 = vand.u32 %v267, 4294901760
        %4184 = vmatpush1.msra.mxu0 %v4183
        %4185 = vmatprep.subr.mxu0 0.0
        %v4186 = vand.u32 %v268, 4294901760
        %4187 = vmatpush1.msra.mxu0 %v4186
        %4188 = vmatprep.subr.mxu0 0.0
        %v4189 = vand.u32 %v269, 4294901760
        %4190 = vmatpush1.msra.mxu0 %v4189
        %4191 = vmatprep.subr.mxu0 0.0
        %4192 = vmatpush1.msra.mxu0 0.0
        %4193 = vmatprep.subr.mxu0 0.0
        %4194 = vmatpush1.msra.mxu0 0.0
        %4195 = vmatprep.subr.mxu0 0.0
        %4196 = vmatpush1.msra.mxu0 0.0
        %4197 = vmatprep.subr.mxu0 0.0
        %4198 = vmatpush1.msra.mxu0 0.0
        %4199 = vmatprep.subr.mxu0 0.0
        %4200 = vmatpush1.msra.mxu0 0.0
        %4201 = vmatprep.subr.mxu0 0.0
        %4202 = vmatpush1.msra.mxu0 0.0
        %4203 = vmatprep.subr.mxu0 0.0
        %4204 = vmatpush1.msra.mxu0 0.0
        %4205 = vmatprep.subr.mxu0 0.0
        %4206 = vmatpush1.msra.mxu0 0.0
        %4207 = vmatprep.subr.mxu0 0.0
        %4208 = vmatpush1.msra.mxu0 0.0
        %4209 = vmatprep.subr.mxu0 0.0
        %4210 = vmatpush1.msra.mxu0 0.0
        %4211 = vmatprep.subr.mxu0 0.0
        %4212 = vmatpush1.msra.mxu0 0.0
        %4213 = vmatprep.subr.mxu0 0.0
        %4214 = vmatpush1.msra.mxu0 0.0
        %4215 = vmatprep.subr.mxu0 0.0
        %4216 = vmatpush1.msra.mxu0 0.0
        %4217 = vmatprep.subr.mxu0 0.0
        %4218 = vmatpush1.msra.mxu0 0.0
        %4219 = vmatprep.subr.mxu0 0.0
        %4220 = vmatpush1.msra.mxu0 0.0
        %4221 = vmatprep.subr.mxu0 0.0
        %4222 = vmatpush1.msra.mxu0 0.0
        %4223 = vmatprep.mubr.f32.mxu0 0.0
        %v4224 = vand.u32 %v4141, 4294901760
        %v4225 = vsub.f32 %v4141, %v4224
        %v4226 = vand.u32 %v4225, 4294901760
        %v4227 = vsub.f32 %v4225, %v4226
        %v4228 = vand.u32 %v4227, 4294901760
        %4229 = vmatmul.mubr.f32.gmra.mrb[0].mxu0 %v4228
        %v4230 = vpop.f32.mrb[0].mxu0
        %v4231 = vadd.f32 0.0, %v4230
        %v4232 = vpop.f32.mrb[0].mxu0
        %4233 = vmatprep.mubr.f32.mxu0 0.0
        %v4234 = vand.u32 %v4142, 4294901760
        %v4235 = vsub.f32 %v4142, %v4234
        %v4236 = vand.u32 %v4235, 4294901760
        %v4237 = vsub.f32 %v4235, %v4236
        %v4238 = vand.u32 %v4237, 4294901760
        %4239 = vmatmul.mubr.f32.gmra.mrb[0].mxu0 %v4238
        %v4240 = vpop.f32.mrb[0].mxu0
        %v4241 = vadd.f32 0.0, %v4240
        %v4242 = vpop.f32.mrb[0].mxu0
        %4243 = vdwg.mxu0
        %4244 = vmatprep.subr.mxu0 0.0
        %v4245 = vand.u32 %v254, 4294901760
        %v4246 = vsub.f32 %v254, %v4245
        %v4247 = vand.u32 %v4246, 4294901760
        %v4248 = vsub.f32 %v4246, %v4247
        %v4249 = vand.u32 %v4248, 4294901760
        %4250 = vmatpush1.msra.mxu0 %v4249
        %4251 = vmatprep.subr.mxu0 0.0
        %v4252 = vand.u32 %v255, 4294901760
        %v4253 = vsub.f32 %v255, %v4252
        %v4254 = vand.u32 %v4253, 4294901760
        %v4255 = vsub.f32 %v4253, %v4254
        %v4256 = vand.u32 %v4255, 4294901760
        %4257 = vmatpush1.msra.mxu0 %v4256
        %4258 = vmatprep.subr.mxu0 0.0
        %v4259 = vand.u32 %v256, 4294901760
        %v4260 = vsub.f32 %v256, %v4259
        %v4261 = vand.u32 %v4260, 4294901760
        %v4262 = vsub.f32 %v4260, %v4261
        %v4263 = vand.u32 %v4262, 4294901760
        %4264 = vmatpush1.msra.mxu0 %v4263
        %4265 = vmatprep.subr.mxu0 0.0
        %v4266 = vand.u32 %v257, 4294901760
        %v4267 = vsub.f32 %v257, %v4266
        %v4268 = vand.u32 %v4267, 4294901760
        %v4269 = vsub.f32 %v4267, %v4268
        %v4270 = vand.u32 %v4269, 4294901760
        %4271 = vmatpush1.msra.mxu0 %v4270
        %4272 = vmatprep.subr.mxu0 0.0
        %v4273 = vand.u32 %v258, 4294901760
        %v4274 = vsub.f32 %v258, %v4273
        %v4275 = vand.u32 %v4274, 4294901760
        %v4276 = vsub.f32 %v4274, %v4275
        %v4277 = vand.u32 %v4276, 4294901760
        %4278 = vmatpush1.msra.mxu0 %v4277
        %4279 = vmatprep.subr.mxu0 0.0
        %v4280 = vand.u32 %v259, 4294901760
        %v4281 = vsub.f32 %v259, %v4280
        %v4282 = vand.u32 %v4281, 4294901760
        %v4283 = vsub.f32 %v4281, %v4282
        %v4284 = vand.u32 %v4283, 4294901760
        %4285 = vmatpush1.msra.mxu0 %v4284
        %4286 = vmatprep.subr.mxu0 0.0
        %v4287 = vand.u32 %v260, 4294901760
        %v4288 = vsub.f32 %v260, %v4287
        %v4289 = vand.u32 %v4288, 4294901760
        %v4290 = vsub.f32 %v4288, %v4289
        %v4291 = vand.u32 %v4290, 4294901760
        %4292 = vmatpush1.msra.mxu0 %v4291
        %4293 = vmatprep.subr.mxu0 0.0
        %v4294 = vand.u32 %v261, 4294901760
        %v4295 = vsub.f32 %v261, %v4294
        %v4296 = vand.u32 %v4295, 4294901760
        %v4297 = vsub.f32 %v4295, %v4296
        %v4298 = vand.u32 %v4297, 4294901760
        %4299 = vmatpush1.msra.mxu0 %v4298
        %4300 = vmatprep.subr.mxu0 0.0
        %v4301 = vand.u32 %v262, 4294901760
        %v4302 = vsub.f32 %v262, %v4301
        %v4303 = vand.u32 %v4302, 4294901760
        %v4304 = vsub.f32 %v4302, %v4303
        %v4305 = vand.u32 %v4304, 4294901760
        %4306 = vmatpush1.msra.mxu0 %v4305
        %4307 = vmatprep.subr.mxu0 0.0
        %v4308 = vand.u32 %v263, 4294901760
        %v4309 = vsub.f32 %v263, %v4308
        %v4310 = vand.u32 %v4309, 4294901760
        %v4311 = vsub.f32 %v4309, %v4310
        %v4312 = vand.u32 %v4311, 4294901760
        %4313 = vmatpush1.msra.mxu0 %v4312
        %4314 = vmatprep.subr.mxu0 0.0
        %v4315 = vand.u32 %v264, 4294901760
        %v4316 = vsub.f32 %v264, %v4315
        %v4317 = vand.u32 %v4316, 4294901760
        %v4318 = vsub.f32 %v4316, %v4317
        %v4319 = vand.u32 %v4318, 4294901760
        %4320 = vmatpush1.msra.mxu0 %v4319
        %4321 = vmatprep.subr.mxu0 0.0
        %v4322 = vand.u32 %v265, 4294901760
        %v4323 = vsub.f32 %v265, %v4322
        %v4324 = vand.u32 %v4323, 4294901760
        %v4325 = vsub.f32 %v4323, %v4324
        %v4326 = vand.u32 %v4325, 4294901760
        %4327 = vmatpush1.msra.mxu0 %v4326
        %4328 = vmatprep.subr.mxu0 0.0
        %v4329 = vand.u32 %v266, 4294901760
        %v4330 = vsub.f32 %v266, %v4329
        %v4331 = vand.u32 %v4330, 4294901760
        %v4332 = vsub.f32 %v4330, %v4331
        %v4333 = vand.u32 %v4332, 4294901760
        %4334 = vmatpush1.msra.mxu0 %v4333
        %4335 = vmatprep.subr.mxu0 0.0
        %v4336 = vand.u32 %v267, 4294901760
        %v4337 = vsub.f32 %v267, %v4336
        %v4338 = vand.u32 %v4337, 4294901760
        %v4339 = vsub.f32 %v4337, %v4338
        %v4340 = vand.u32 %v4339, 4294901760
        %4341 = vmatpush1.msra.mxu0 %v4340
        %4342 = vmatprep.subr.mxu0 0.0
        %v4343 = vand.u32 %v268, 4294901760
        %v4344 = vsub.f32 %v268, %v4343
        %v4345 = vand.u32 %v4344, 4294901760
        %v4346 = vsub.f32 %v4344, %v4345
        %v4347 = vand.u32 %v4346, 4294901760
        %4348 = vmatpush1.msra.mxu0 %v4347
        %4349 = vmatprep.subr.mxu0 0.0
        %v4350 = vand.u32 %v269, 4294901760
        %v4351 = vsub.f32 %v269, %v4350
        %v4352 = vand.u32 %v4351, 4294901760
        %v4353 = vsub.f32 %v4351, %v4352
        %v4354 = vand.u32 %v4353, 4294901760
        %4355 = vmatpush1.msra.mxu0 %v4354
        %4356 = vmatprep.subr.mxu0 0.0
        %4357 = vmatpush1.msra.mxu0 0.0
        %4358 = vmatprep.subr.mxu0 0.0
        %4359 = vmatpush1.msra.mxu0 0.0
        %4360 = vmatprep.subr.mxu0 0.0
        %4361 = vmatpush1.msra.mxu0 0.0
        %4362 = vmatprep.subr.mxu0 0.0
        %4363 = vmatpush1.msra.mxu0 0.0
        %4364 = vmatprep.subr.mxu0 0.0
        %4365 = vmatpush1.msra.mxu0 0.0
        %4366 = vmatprep.subr.mxu0 0.0
        %4367 = vmatpush1.msra.mxu0 0.0
        %4368 = vmatprep.subr.mxu0 0.0
        %4369 = vmatpush1.msra.mxu0 0.0
        %4370 = vmatprep.subr.mxu0 0.0
        %4371 = vmatpush1.msra.mxu0 0.0
        %4372 = vmatprep.subr.mxu0 0.0
        %4373 = vmatpush1.msra.mxu0 0.0
        %4374 = vmatprep.subr.mxu0 0.0
        %4375 = vmatpush1.msra.mxu0 0.0
        %4376 = vmatprep.subr.mxu0 0.0
        %4377 = vmatpush1.msra.mxu0 0.0
        %4378 = vmatprep.subr.mxu0 0.0
        %4379 = vmatpush1.msra.mxu0 0.0
        %4380 = vmatprep.subr.mxu0 0.0
        %4381 = vmatpush1.msra.mxu0 0.0
        %4382 = vmatprep.subr.mxu0 0.0
        %4383 = vmatpush1.msra.mxu0 0.0
        %4384 = vmatprep.subr.mxu0 0.0
        %4385 = vmatpush1.msra.mxu0 0.0
        %4386 = vmatprep.subr.mxu0 0.0
        %4387 = vmatpush1.msra.mxu0 0.0
        %4388 = vmatprep.mubr.f32.mxu0 0.0
        %v4389 = vand.u32 %v4141, 4294901760
        %4390 = vmatmul.mubr.f32.gmra.mrb[0].mxu0 %v4389
        %v4391 = vpop.f32.mrb[0].mxu0
        %v4392 = vadd.f32 %v4231, %v4391
        %v4393 = vpop.f32.mrb[0].mxu0
        %4394 = vmatprep.mubr.f32.mxu0 0.0
        %v4395 = vand.u32 %v4142, 4294901760
        %4396 = vmatmul.mubr.f32.gmra.mrb[0].mxu0 %v4395
        %v4397 = vpop.f32.mrb[0].mxu0
        %v4398 = vadd.f32 %v4241, %v4397
        %v4399 = vpop.f32.mrb[0].mxu0
        %4400 = vdwg.mxu0
        %4401 = vmatprep.subr.mxu0 0.0
        %v4402 = vand.u32 %v254, 4294901760
        %v4403 = vsub.f32 %v254, %v4402
        %4404 = vmatpush1.msra.mxu0 %v4403
        %4405 = vmatprep.subr.mxu0 0.0
        %v4406 = vand.u32 %v255, 4294901760
        %v4407 = vsub.f32 %v255, %v4406
        %4408 = vmatpush1.msra.mxu0 %v4407
        %4409 = vmatprep.subr.mxu0 0.0
        %v4410 = vand.u32 %v256, 4294901760
        %v4411 = vsub.f32 %v256, %v4410
        %4412 = vmatpush1.msra.mxu0 %v4411
        %4413 = vmatprep.subr.mxu0 0.0
        %v4414 = vand.u32 %v257, 4294901760
        %v4415 = vsub.f32 %v257, %v4414
        %4416 = vmatpush1.msra.mxu0 %v4415
        %4417 = vmatprep.subr.mxu0 0.0
        %v4418 = vand.u32 %v258, 4294901760
        %v4419 = vsub.f32 %v258, %v4418
        %4420 = vmatpush1.msra.mxu0 %v4419
        %4421 = vmatprep.subr.mxu0 0.0
        %v4422 = vand.u32 %v259, 4294901760
        %v4423 = vsub.f32 %v259, %v4422
        %4424 = vmatpush1.msra.mxu0 %v4423
        %4425 = vmatprep.subr.mxu0 0.0
        %v4426 = vand.u32 %v260, 4294901760
        %v4427 = vsub.f32 %v260, %v4426
        %4428 = vmatpush1.msra.mxu0 %v4427
        %4429 = vmatprep.subr.mxu0 0.0
        %v4430 = vand.u32 %v261, 4294901760
        %v4431 = vsub.f32 %v261, %v4430
        %4432 = vmatpush1.msra.mxu0 %v4431
        %4433 = vmatprep.subr.mxu0 0.0
        %v4434 = vand.u32 %v262, 4294901760
        %v4435 = vsub.f32 %v262, %v4434
        %4436 = vmatpush1.msra.mxu0 %v4435
        %4437 = vmatprep.subr.mxu0 0.0
        %v4438 = vand.u32 %v263, 4294901760
        %v4439 = vsub.f32 %v263, %v4438
        %4440 = vmatpush1.msra.mxu0 %v4439
        %4441 = vmatprep.subr.mxu0 0.0
        %v4442 = vand.u32 %v264, 4294901760
        %v4443 = vsub.f32 %v264, %v4442
        %4444 = vmatpush1.msra.mxu0 %v4443
        %4445 = vmatprep.subr.mxu0 0.0
        %v4446 = vand.u32 %v265, 4294901760
        %v4447 = vsub.f32 %v265, %v4446
        %4448 = vmatpush1.msra.mxu0 %v4447
        %4449 = vmatprep.subr.mxu0 0.0
        %v4450 = vand.u32 %v266, 4294901760
        %v4451 = vsub.f32 %v266, %v4450
        %4452 = vmatpush1.msra.mxu0 %v4451
        %4453 = vmatprep.subr.mxu0 0.0
        %v4454 = vand.u32 %v267, 4294901760
        %v4455 = vsub.f32 %v267, %v4454
        %4456 = vmatpush1.msra.mxu0 %v4455
        %4457 = vmatprep.subr.mxu0 0.0
        %v4458 = vand.u32 %v268, 4294901760
        %v4459 = vsub.f32 %v268, %v4458
        %4460 = vmatpush1.msra.mxu0 %v4459
        %4461 = vmatprep.subr.mxu0 0.0
        %v4462 = vand.u32 %v269, 4294901760
        %v4463 = vsub.f32 %v269, %v4462
        %4464 = vmatpush1.msra.mxu0 %v4463
        %4465 = vmatprep.subr.mxu0 0.0
        %4466 = vmatpush1.msra.mxu0 0.0
        %4467 = vmatprep.subr.mxu0 0.0
        %4468 = vmatpush1.msra.mxu0 0.0
        %4469 = vmatprep.subr.mxu0 0.0
        %4470 = vmatpush1.msra.mxu0 0.0
        %4471 = vmatprep.subr.mxu0 0.0
        %4472 = vmatpush1.msra.mxu0 0.0
        %4473 = vmatprep.subr.mxu0 0.0
        %4474 = vmatpush1.msra.mxu0 0.0
        %4475 = vmatprep.subr.mxu0 0.0
        %4476 = vmatpush1.msra.mxu0 0.0
        %4477 = vmatprep.subr.mxu0 0.0
        %4478 = vmatpush1.msra.mxu0 0.0
        %4479 = vmatprep.subr.mxu0 0.0
        %4480 = vmatpush1.msra.mxu0 0.0
        %4481 = vmatprep.subr.mxu0 0.0
        %4482 = vmatpush1.msra.mxu0 0.0
        %4483 = vmatprep.subr.mxu0 0.0
        %4484 = vmatpush1.msra.mxu0 0.0
        %4485 = vmatprep.subr.mxu0 0.0
        %4486 = vmatpush1.msra.mxu0 0.0
        %4487 = vmatprep.subr.mxu0 0.0
        %4488 = vmatpush1.msra.mxu0 0.0
        %4489 = vmatprep.subr.mxu0 0.0
        %4490 = vmatpush1.msra.mxu0 0.0
        %4491 = vmatprep.subr.mxu0 0.0
        %4492 = vmatpush1.msra.mxu0 0.0
        %4493 = vmatprep.subr.mxu0 0.0
        %4494 = vmatpush1.msra.mxu0 0.0
        %4495 = vmatprep.subr.mxu0 0.0
        %4496 = vmatpush1.msra.mxu0 0.0
        %4497 = vmatprep.mubr.f32.mxu0 0.0
        %v4498 = vand.u32 %v4141, 4294901760
        %v4499 = vsub.f32 %v4141, %v4498
        %4500 = vmatmul.mubr.f32.gmra.mrb[0].mxu0 %v4499
        %v4501 = vpop.f32.mrb[0].mxu0
        %v4502 = vadd.f32 %v4392, %v4501
        %v4503 = vpop.f32.mrb[0].mxu0
        %4504 = vmatprep.mubr.f32.mxu0 0.0
        %v4505 = vand.u32 %v4142, 4294901760
        %v4506 = vsub.f32 %v4142, %v4505
        %4507 = vmatmul.mubr.f32.gmra.mrb[0].mxu0 %v4506
        %v4508 = vpop.f32.mrb[0].mxu0
        %v4509 = vadd.f32 %v4398, %v4508
        %v4510 = vpop.f32.mrb[0].mxu0
        %4511 = vdwg.mxu0
        %4512 = vmatprep.subr.mxu0 0.0
        %v4513 = vand.u32 %v254, 4294901760
        %4514 = vmatpush1.msra.mxu0 %v4513
        %4515 = vmatprep.subr.mxu0 0.0
        %v4516 = vand.u32 %v255, 4294901760
        %4517 = vmatpush1.msra.mxu0 %v4516
        %4518 = vmatprep.subr.mxu0 0.0
        %v4519 = vand.u32 %v256, 4294901760
        %4520 = vmatpush1.msra.mxu0 %v4519
        %4521 = vmatprep.subr.mxu0 0.0
        %v4522 = vand.u32 %v257, 4294901760
        %4523 = vmatpush1.msra.mxu0 %v4522
        %4524 = vmatprep.subr.mxu0 0.0
        %v4525 = vand.u32 %v258, 4294901760
        %4526 = vmatpush1.msra.mxu0 %v4525
        %4527 = vmatprep.subr.mxu0 0.0
        %v4528 = vand.u32 %v259, 4294901760
        %4529 = vmatpush1.msra.mxu0 %v4528
        %4530 = vmatprep.subr.mxu0 0.0
        %v4531 = vand.u32 %v260, 4294901760
        %4532 = vmatpush1.msra.mxu0 %v4531
        %4533 = vmatprep.subr.mxu0 0.0
        %v4534 = vand.u32 %v261, 4294901760
        %4535 = vmatpush1.msra.mxu0 %v4534
        %4536 = vmatprep.subr.mxu0 0.0
        %v4537 = vand.u32 %v262, 4294901760
        %4538 = vmatpush1.msra.mxu0 %v4537
        %4539 = vmatprep.subr.mxu0 0.0
        %v4540 = vand.u32 %v263, 4294901760
        %4541 = vmatpush1.msra.mxu0 %v4540
        %4542 = vmatprep.subr.mxu0 0.0
        %v4543 = vand.u32 %v264, 4294901760
        %4544 = vmatpush1.msra.mxu0 %v4543
        %4545 = vmatprep.subr.mxu0 0.0
        %v4546 = vand.u32 %v265, 4294901760
        %4547 = vmatpush1.msra.mxu0 %v4546
        %4548 = vmatprep.subr.mxu0 0.0
        %v4549 = vand.u32 %v266, 4294901760
        %4550 = vmatpush1.msra.mxu0 %v4549
        %4551 = vmatprep.subr.mxu0 0.0
        %v4552 = vand.u32 %v267, 4294901760
        %4553 = vmatpush1.msra.mxu0 %v4552
        %4554 = vmatprep.subr.mxu0 0.0
        %v4555 = vand.u32 %v268, 4294901760
        %4556 = vmatpush1.msra.mxu0 %v4555
        %4557 = vmatprep.subr.mxu0 0.0
        %v4558 = vand.u32 %v269, 4294901760
        %4559 = vmatpush1.msra.mxu0 %v4558
        %4560 = vmatprep.subr.mxu0 0.0
        %4561 = vmatpush1.msra.mxu0 0.0
        %4562 = vmatprep.subr.mxu0 0.0
        %4563 = vmatpush1.msra.mxu0 0.0
        %4564 = vmatprep.subr.mxu0 0.0
        %4565 = vmatpush1.msra.mxu0 0.0
        %4566 = vmatprep.subr.mxu0 0.0
        %4567 = vmatpush1.msra.mxu0 0.0
        %4568 = vmatprep.subr.mxu0 0.0
        %4569 = vmatpush1.msra.mxu0 0.0
        %4570 = vmatprep.subr.mxu0 0.0
        %4571 = vmatpush1.msra.mxu0 0.0
        %4572 = vmatprep.subr.mxu0 0.0
        %4573 = vmatpush1.msra.mxu0 0.0
        %4574 = vmatprep.subr.mxu0 0.0
        %4575 = vmatpush1.msra.mxu0 0.0
        %4576 = vmatprep.subr.mxu0 0.0
        %4577 = vmatpush1.msra.mxu0 0.0
        %4578 = vmatprep.subr.mxu0 0.0
        %4579 = vmatpush1.msra.mxu0 0.0
        %4580 = vmatprep.subr.mxu0 0.0
        %4581 = vmatpush1.msra.mxu0 0.0
        %4582 = vmatprep.subr.mxu0 0.0
        %4583 = vmatpush1.msra.mxu0 0.0
        %4584 = vmatprep.subr.mxu0 0.0
        %4585 = vmatpush1.msra.mxu0 0.0
        %4586 = vmatprep.subr.mxu0 0.0
        %4587 = vmatpush1.msra.mxu0 0.0
        %4588 = vmatprep.subr.mxu0 0.0
        %4589 = vmatpush1.msra.mxu0 0.0
        %4590 = vmatprep.subr.mxu0 0.0
        %4591 = vmatpush1.msra.mxu0 0.0
        %4592 = vmatprep.mubr.f32.mxu0 0.0
        %v4593 = vand.u32 %v4141, 4294901760
        %v4594 = vsub.f32 %v4141, %v4593
        %v4595 = vand.u32 %v4594, 4294901760
        %4596 = vmatmul.mubr.f32.gmra.mrb[0].mxu0 %v4595
        %v4597 = vpop.f32.mrb[0].mxu0
        %v4598 = vadd.f32 %v4502, %v4597
        %v4599 = vpop.f32.mrb[0].mxu0
        %4600 = vmatprep.mubr.f32.mxu0 0.0
        %v4601 = vand.u32 %v4142, 4294901760
        %v4602 = vsub.f32 %v4142, %v4601
        %v4603 = vand.u32 %v4602, 4294901760
        %4604 = vmatmul.mubr.f32.gmra.mrb[0].mxu0 %v4603
        %v4605 = vpop.f32.mrb[0].mxu0
        %v4606 = vadd.f32 %v4509, %v4605
        %v4607 = vpop.f32.mrb[0].mxu0
        %4608 = vdwg.mxu0
        %4609 = vmatprep.subr.mxu0 0.0
        %v4610 = vand.u32 %v254, 4294901760
        %v4611 = vsub.f32 %v254, %v4610
        %v4612 = vand.u32 %v4611, 4294901760
        %4613 = vmatpush1.msra.mxu0 %v4612
        %4614 = vmatprep.subr.mxu0 0.0
        %v4615 = vand.u32 %v255, 4294901760
        %v4616 = vsub.f32 %v255, %v4615
        %v4617 = vand.u32 %v4616, 4294901760
        %4618 = vmatpush1.msra.mxu0 %v4617
        %4619 = vmatprep.subr.mxu0 0.0
        %v4620 = vand.u32 %v256, 4294901760
        %v4621 = vsub.f32 %v256, %v4620
        %v4622 = vand.u32 %v4621, 4294901760
        %4623 = vmatpush1.msra.mxu0 %v4622
        %4624 = vmatprep.subr.mxu0 0.0
        %v4625 = vand.u32 %v257, 4294901760
        %v4626 = vsub.f32 %v257, %v4625
        %v4627 = vand.u32 %v4626, 4294901760
        %4628 = vmatpush1.msra.mxu0 %v4627
        %4629 = vmatprep.subr.mxu0 0.0
        %v4630 = vand.u32 %v258, 4294901760
        %v4631 = vsub.f32 %v258, %v4630
        %v4632 = vand.u32 %v4631, 4294901760
        %4633 = vmatpush1.msra.mxu0 %v4632
        %4634 = vmatprep.subr.mxu0 0.0
        %v4635 = vand.u32 %v259, 4294901760
        %v4636 = vsub.f32 %v259, %v4635
        %v4637 = vand.u32 %v4636, 4294901760
        %4638 = vmatpush1.msra.mxu0 %v4637
        %4639 = vmatprep.subr.mxu0 0.0
        %v4640 = vand.u32 %v260, 4294901760
        %v4641 = vsub.f32 %v260, %v4640
        %v4642 = vand.u32 %v4641, 4294901760
        %4643 = vmatpush1.msra.mxu0 %v4642
        %4644 = vmatprep.subr.mxu0 0.0
        %v4645 = vand.u32 %v261, 4294901760
        %v4646 = vsub.f32 %v261, %v4645
        %v4647 = vand.u32 %v4646, 4294901760
        %4648 = vmatpush1.msra.mxu0 %v4647
        %4649 = vmatprep.subr.mxu0 0.0
        %v4650 = vand.u32 %v262, 4294901760
        %v4651 = vsub.f32 %v262, %v4650
        %v4652 = vand.u32 %v4651, 4294901760
        %4653 = vmatpush1.msra.mxu0 %v4652
        %4654 = vmatprep.subr.mxu0 0.0
        %v4655 = vand.u32 %v263, 4294901760
        %v4656 = vsub.f32 %v263, %v4655
        %v4657 = vand.u32 %v4656, 4294901760
        %4658 = vmatpush1.msra.mxu0 %v4657
        %4659 = vmatprep.subr.mxu0 0.0
        %v4660 = vand.u32 %v264, 4294901760
        %v4661 = vsub.f32 %v264, %v4660
        %v4662 = vand.u32 %v4661, 4294901760
        %4663 = vmatpush1.msra.mxu0 %v4662
        %4664 = vmatprep.subr.mxu0 0.0
        %v4665 = vand.u32 %v265, 4294901760
        %v4666 = vsub.f32 %v265, %v4665
        %v4667 = vand.u32 %v4666, 4294901760
        %4668 = vmatpush1.msra.mxu0 %v4667
        %4669 = vmatprep.subr.mxu0 0.0
        %v4670 = vand.u32 %v266, 4294901760
        %v4671 = vsub.f32 %v266, %v4670
        %v4672 = vand.u32 %v4671, 4294901760
        %4673 = vmatpush1.msra.mxu0 %v4672
        %4674 = vmatprep.subr.mxu0 0.0
        %v4675 = vand.u32 %v267, 4294901760
        %v4676 = vsub.f32 %v267, %v4675
        %v4677 = vand.u32 %v4676, 4294901760
        %4678 = vmatpush1.msra.mxu0 %v4677
        %4679 = vmatprep.subr.mxu0 0.0
        %v4680 = vand.u32 %v268, 4294901760
        %v4681 = vsub.f32 %v268, %v4680
        %v4682 = vand.u32 %v4681, 4294901760
        %4683 = vmatpush1.msra.mxu0 %v4682
        %4684 = vmatprep.subr.mxu0 0.0
        %v4685 = vand.u32 %v269, 4294901760
        %v4686 = vsub.f32 %v269, %v4685
        %v4687 = vand.u32 %v4686, 4294901760
        %4688 = vmatpush1.msra.mxu0 %v4687
        %4689 = vmatprep.subr.mxu0 0.0
        %4690 = vmatpush1.msra.mxu0 0.0
        %4691 = vmatprep.subr.mxu0 0.0
        %4692 = vmatpush1.msra.mxu0 0.0
        %4693 = vmatprep.subr.mxu0 0.0
        %4694 = vmatpush1.msra.mxu0 0.0
        %4695 = vmatprep.subr.mxu0 0.0
        %4696 = vmatpush1.msra.mxu0 0.0
        %4697 = vmatprep.subr.mxu0 0.0
        %4698 = vmatpush1.msra.mxu0 0.0
        %4699 = vmatprep.subr.mxu0 0.0
        %4700 = vmatpush1.msra.mxu0 0.0
        %4701 = vmatprep.subr.mxu0 0.0
        %4702 = vmatpush1.msra.mxu0 0.0
        %4703 = vmatprep.subr.mxu0 0.0
        %4704 = vmatpush1.msra.mxu0 0.0
        %4705 = vmatprep.subr.mxu0 0.0
        %4706 = vmatpush1.msra.mxu0 0.0
        %4707 = vmatprep.subr.mxu0 0.0
        %4708 = vmatpush1.msra.mxu0 0.0
        %4709 = vmatprep.subr.mxu0 0.0
        %4710 = vmatpush1.msra.mxu0 0.0
        %4711 = vmatprep.subr.mxu0 0.0
        %4712 = vmatpush1.msra.mxu0 0.0
        %4713 = vmatprep.subr.mxu0 0.0
        %4714 = vmatpush1.msra.mxu0 0.0
        %4715 = vmatprep.subr.mxu0 0.0
        %4716 = vmatpush1.msra.mxu0 0.0
        %4717 = vmatprep.subr.mxu0 0.0
        %4718 = vmatpush1.msra.mxu0 0.0
        %4719 = vmatprep.subr.mxu0 0.0
        %4720 = vmatpush1.msra.mxu0 0.0
        %4721 = vmatprep.mubr.f32.mxu0 0.0
        %v4722 = vand.u32 %v4141, 4294901760
        %4723 = vmatmul.mubr.f32.gmra.mrb[0].mxu0 %v4722
        %v4724 = vpop.f32.mrb[0].mxu0
        %v4725 = vadd.f32 %v4598, %v4724
        %v4726 = vpop.f32.mrb[0].mxu0
        %4727 = vmatprep.mubr.f32.mxu0 0.0
        %v4728 = vand.u32 %v4142, 4294901760
        %4729 = vmatmul.mubr.f32.gmra.mrb[0].mxu0 %v4728
        %v4730 = vpop.f32.mrb[0].mxu0
        %v4731 = vadd.f32 %v4606, %v4730
        %v4732 = vpop.f32.mrb[0].mxu0
        %4733 = vdwg.mxu0
        %4734 = vmatprep.subr.mxu0 0.0
        %v4735 = vand.u32 %v254, 4294901760
        %4736 = vmatpush1.msra.mxu0 %v4735
        %4737 = vmatprep.subr.mxu0 0.0
        %v4738 = vand.u32 %v255, 4294901760
        %4739 = vmatpush1.msra.mxu0 %v4738
        %4740 = vmatprep.subr.mxu0 0.0
        %v4741 = vand.u32 %v256, 4294901760
        %4742 = vmatpush1.msra.mxu0 %v4741
        %4743 = vmatprep.subr.mxu0 0.0
        %v4744 = vand.u32 %v257, 4294901760
        %4745 = vmatpush1.msra.mxu0 %v4744
        %4746 = vmatprep.subr.mxu0 0.0
        %v4747 = vand.u32 %v258, 4294901760
        %4748 = vmatpush1.msra.mxu0 %v4747
        %4749 = vmatprep.subr.mxu0 0.0
        %v4750 = vand.u32 %v259, 4294901760
        %4751 = vmatpush1.msra.mxu0 %v4750
        %4752 = vmatprep.subr.mxu0 0.0
        %v4753 = vand.u32 %v260, 4294901760
        %4754 = vmatpush1.msra.mxu0 %v4753
        %4755 = vmatprep.subr.mxu0 0.0
        %v4756 = vand.u32 %v261, 4294901760
        %4757 = vmatpush1.msra.mxu0 %v4756
        %4758 = vmatprep.subr.mxu0 0.0
        %v4759 = vand.u32 %v262, 4294901760
        %4760 = vmatpush1.msra.mxu0 %v4759
        %4761 = vmatprep.subr.mxu0 0.0
        %v4762 = vand.u32 %v263, 4294901760
        %4763 = vmatpush1.msra.mxu0 %v4762
        %4764 = vmatprep.subr.mxu0 0.0
        %v4765 = vand.u32 %v264, 4294901760
        %4766 = vmatpush1.msra.mxu0 %v4765
        %4767 = vmatprep.subr.mxu0 0.0
        %v4768 = vand.u32 %v265, 4294901760
        %4769 = vmatpush1.msra.mxu0 %v4768
        %4770 = vmatprep.subr.mxu0 0.0
        %v4771 = vand.u32 %v266, 4294901760
        %4772 = vmatpush1.msra.mxu0 %v4771
        %4773 = vmatprep.subr.mxu0 0.0
        %v4774 = vand.u32 %v267, 4294901760
        %4775 = vmatpush1.msra.mxu0 %v4774
        %4776 = vmatprep.subr.mxu0 0.0
        %v4777 = vand.u32 %v268, 4294901760
        %4778 = vmatpush1.msra.mxu0 %v4777
        %4779 = vmatprep.subr.mxu0 0.0
        %v4780 = vand.u32 %v269, 4294901760
        %4781 = vmatpush1.msra.mxu0 %v4780
        %4782 = vmatprep.subr.mxu0 0.0
        %4783 = vmatpush1.msra.mxu0 0.0
        %4784 = vmatprep.subr.mxu0 0.0
        %4785 = vmatpush1.msra.mxu0 0.0
        %4786 = vmatprep.subr.mxu0 0.0
        %4787 = vmatpush1.msra.mxu0 0.0
        %4788 = vmatprep.subr.mxu0 0.0
        %4789 = vmatpush1.msra.mxu0 0.0
        %4790 = vmatprep.subr.mxu0 0.0
        %4791 = vmatpush1.msra.mxu0 0.0
        %4792 = vmatprep.subr.mxu0 0.0
        %4793 = vmatpush1.msra.mxu0 0.0
        %4794 = vmatprep.subr.mxu0 0.0
        %4795 = vmatpush1.msra.mxu0 0.0
        %4796 = vmatprep.subr.mxu0 0.0
        %4797 = vmatpush1.msra.mxu0 0.0
        %4798 = vmatprep.subr.mxu0 0.0
        %4799 = vmatpush1.msra.mxu0 0.0
        %4800 = vmatprep.subr.mxu0 0.0
        %4801 = vmatpush1.msra.mxu0 0.0
        %4802 = vmatprep.subr.mxu0 0.0
        %4803 = vmatpush1.msra.mxu0 0.0
        %4804 = vmatprep.subr.mxu0 0.0
        %4805 = vmatpush1.msra.mxu0 0.0
        %4806 = vmatprep.subr.mxu0 0.0
        %4807 = vmatpush1.msra.mxu0 0.0
        %4808 = vmatprep.subr.mxu0 0.0
        %4809 = vmatpush1.msra.mxu0 0.0
        %4810 = vmatprep.subr.mxu0 0.0
        %4811 = vmatpush1.msra.mxu0 0.0
        %4812 = vmatprep.subr.mxu0 0.0
        %4813 = vmatpush1.msra.mxu0 0.0
        %4814 = vmatprep.mubr.f32.mxu0 0.0
        %v4815 = vand.u32 %v4141, 4294901760
        %4816 = vmatmul.mubr.f32.gmra.mrb[0].mxu0 %v4815
        %v4817 = vpop.f32.mrb[0].mxu0
        %v4818 = vadd.f32 %v4725, %v4817
        %v4819 = vpop.f32.mrb[0].mxu0
        %4820 = vmatprep.mubr.f32.mxu0 0.0
        %v4821 = vand.u32 %v4142, 4294901760
        %4822 = vmatmul.mubr.f32.gmra.mrb[0].mxu0 %v4821
        %v4823 = vpop.f32.mrb[0].mxu0
        %v4824 = vadd.f32 %v4731, %v4823
        %v4825 = vpop.f32.mrb[0].mxu0
        %4826 = vdwg.mxu0
        %s4827 = scalar_lea.vmem %s242, 80 [#allocation7]
        %4828 = vst [vmem:[%s4827] sm:$0xff] %v4818
        %4829 = vst [vmem:[%s4827 + $0x8] sm:$0xff] %v4824
        %v4830 = vld [vmem:[%s324] sm:$0xff]
        %v4831 = vld [vmem:[%s324 + $0x8] sm:$0xff]
        %s4832 = sld [smem:[#allocation2 + $0x30]]
        %v4833 = vld [vmem:[%s251] sm:$0xff]
        %v4834 = vld [vmem:[%s251 + $0x8] sm:$0xff]
        %v4835 = vstv %s4832
        %v4836 = vmul.f32 %v4835, %v4833
        %v4837 = vmul.f32 %v4835, %v4834
        %v4838 = vadd.f32 %v4830, %v4836
        %v4839 = vadd.f32 %v4831, %v4837
        %s4840 = sld [smem:[#allocation2 + $0x31]]
        %v4841 = vld [vmem:[%s279] sm:$0xff]
        %v4842 = vld [vmem:[%s279 + $0x8] sm:$0xff]
        %v4843 = vstv %s4840
        %v4844 = vmul.f32 %v4843, %v4841
        %v4845 = vmul.f32 %v4843, %v4842
        %v4846 = vadd.f32 %v4838, %v4844
        %v4847 = vadd.f32 %v4839, %v4845
        %s4848 = sld [smem:[#allocation2 + $0x32]]
        %v4849 = vld [vmem:[%s288] sm:$0xff]
        %v4850 = vld [vmem:[%s288 + $0x8] sm:$0xff]
        %v4851 = vstv %s4848
        %v4852 = vmul.f32 %v4851, %v4849
        %v4853 = vmul.f32 %v4851, %v4850
        %v4854 = vadd.f32 %v4846, %v4852
        %v4855 = vadd.f32 %v4847, %v4853
        %s4856 = sld [smem:[#allocation2 + $0x33]]
        %v4857 = vld [vmem:[%s297] sm:$0xff]
        %v4858 = vld [vmem:[%s297 + $0x8] sm:$0xff]
        %v4859 = vstv %s4856
        %v4860 = vmul.f32 %v4859, %v4857
        %v4861 = vmul.f32 %v4859, %v4858
        %v4862 = vadd.f32 %v4854, %v4860
        %v4863 = vadd.f32 %v4855, %v4861
        %s4864 = sld [smem:[#allocation2 + $0x34]]
        %v4865 = vld [vmem:[%s306] sm:$0xff]
        %v4866 = vld [vmem:[%s306 + $0x8] sm:$0xff]
        %v4867 = vstv %s4864
        %v4868 = vmul.f32 %v4867, %v4865
        %v4869 = vmul.f32 %v4867, %v4866
        %v4870 = vadd.f32 %v4862, %v4868
        %v4871 = vadd.f32 %v4863, %v4869
        %s4872 = sld [smem:[#allocation2 + $0x35]]
        %v4873 = vld [vmem:[%s315] sm:$0xff]
        %v4874 = vld [vmem:[%s315 + $0x8] sm:$0xff]
        %v4875 = vstv %s4872
        %v4876 = vmul.f32 %v4875, %v4873
        %v4877 = vmul.f32 %v4875, %v4874
        %v4878 = vadd.f32 %v4870, %v4876
        %v4879 = vadd.f32 %v4871, %v4877
        %s4880 = sld [smem:[#allocation2 + $0x36]]
        %v4881 = vstv %s4880
        %v4882 = vmul.f32 %v4881, %v4830
        %v4883 = vmul.f32 %v4881, %v4831
        %v4884 = vadd.f32 %v4878, %v4882
        %v4885 = vadd.f32 %v4879, %v4883
        %s4886 = sld [smem:[#allocation2 + $0x37]]
        %v4887 = vld [vmem:[%s333] sm:$0xff]
        %v4888 = vld [vmem:[%s333 + $0x8] sm:$0xff]
        %v4889 = vstv %s4886
        %v4890 = vmul.f32 %v4889, %v4887
        %v4891 = vmul.f32 %v4889, %v4888
        %v4892 = vadd.f32 %v4884, %v4890
        %v4893 = vadd.f32 %v4885, %v4891
        %s4894 = sld [smem:[#allocation5 + $0x6]]
        %vm4895 = vcmp.ge.f32.partialorder %v4892, 0.0
        %vm4896 = vcmp.ge.f32.partialorder %v4893, 0.0
        %v4897 = vstv %s4894
        %v4898 = vmul.f32 %v4897, %v4892
        %v4899 = vmul.f32 %v4897, %v4893
        %v4900 = vsel %vm4895, %v4892, %v4898
        %v4901 = vsel %vm4896, %v4893, %v4899
        %4902 = vmatprep.subr.mxu0 0.0
        %v4903 = vand.u32 %v254, 4294901760
        %4904 = vmatpush1.msra.mxu0 %v4903
        %4905 = vmatprep.subr.mxu0 0.0
        %v4906 = vand.u32 %v255, 4294901760
        %4907 = vmatpush1.msra.mxu0 %v4906
        %4908 = vmatprep.subr.mxu0 0.0
        %v4909 = vand.u32 %v256, 4294901760
        %4910 = vmatpush1.msra.mxu0 %v4909
        %4911 = vmatprep.subr.mxu0 0.0
        %v4912 = vand.u32 %v257, 4294901760
        %4913 = vmatpush1.msra.mxu0 %v4912
        %4914 = vmatprep.subr.mxu0 0.0
        %v4915 = vand.u32 %v258, 4294901760
        %4916 = vmatpush1.msra.mxu0 %v4915
        %4917 = vmatprep.subr.mxu0 0.0
        %v4918 = vand.u32 %v259, 4294901760
        %4919 = vmatpush1.msra.mxu0 %v4918
        %4920 = vmatprep.subr.mxu0 0.0
        %v4921 = vand.u32 %v260, 4294901760
        %4922 = vmatpush1.msra.mxu0 %v4921
        %4923 = vmatprep.subr.mxu0 0.0
        %v4924 = vand.u32 %v261, 4294901760
        %4925 = vmatpush1.msra.mxu0 %v4924
        %4926 = vmatprep.subr.mxu0 0.0
        %v4927 = vand.u32 %v262, 4294901760
        %4928 = vmatpush1.msra.mxu0 %v4927
        %4929 = vmatprep.subr.mxu0 0.0
        %v4930 = vand.u32 %v263, 4294901760
        %4931 = vmatpush1.msra.mxu0 %v4930
        %4932 = vmatprep.subr.mxu0 0.0
        %v4933 = vand.u32 %v264, 4294901760
        %4934 = vmatpush1.msra.mxu0 %v4933
        %4935 = vmatprep.subr.mxu0 0.0
        %v4936 = vand.u32 %v265, 4294901760
        %4937 = vmatpush1.msra.mxu0 %v4936
        %4938 = vmatprep.subr.mxu0 0.0
        %v4939 = vand.u32 %v266, 4294901760
        %4940 = vmatpush1.msra.mxu0 %v4939
        %4941 = vmatprep.subr.mxu0 0.0
        %v4942 = vand.u32 %v267, 4294901760
        %4943 = vmatpush1.msra.mxu0 %v4942
        %4944 = vmatprep.subr.mxu0 0.0
        %v4945 = vand.u32 %v268, 4294901760
        %4946 = vmatpush1.msra.mxu0 %v4945
        %4947 = vmatprep.subr.mxu0 0.0
        %v4948 = vand.u32 %v269, 4294901760
        %4949 = vmatpush1.msra.mxu0 %v4948
        %4950 = vmatprep.subr.mxu0 0.0
        %4951 = vmatpush1.msra.mxu0 0.0
        %4952 = vmatprep.subr.mxu0 0.0
        %4953 = vmatpush1.msra.mxu0 0.0
        %4954 = vmatprep.subr.mxu0 0.0
        %4955 = vmatpush1.msra.mxu0 0.0
        %4956 = vmatprep.subr.mxu0 0.0
        %4957 = vmatpush1.msra.mxu0 0.0
        %4958 = vmatprep.subr.mxu0 0.0
        %4959 = vmatpush1.msra.mxu0 0.0
        %4960 = vmatprep.subr.mxu0 0.0
        %4961 = vmatpush1.msra.mxu0 0.0
        %4962 = vmatprep.subr.mxu0 0.0
        %4963 = vmatpush1.msra.mxu0 0.0
        %4964 = vmatprep.subr.mxu0 0.0
        %4965 = vmatpush1.msra.mxu0 0.0
        %4966 = vmatprep.subr.mxu0 0.0
        %4967 = vmatpush1.msra.mxu0 0.0
        %4968 = vmatprep.subr.mxu0 0.0
        %4969 = vmatpush1.msra.mxu0 0.0
        %4970 = vmatprep.subr.mxu0 0.0
        %4971 = vmatpush1.msra.mxu0 0.0
        %4972 = vmatprep.subr.mxu0 0.0
        %4973 = vmatpush1.msra.mxu0 0.0
        %4974 = vmatprep.subr.mxu0 0.0
        %4975 = vmatpush1.msra.mxu0 0.0
        %4976 = vmatprep.subr.mxu0 0.0
        %4977 = vmatpush1.msra.mxu0 0.0
        %4978 = vmatprep.subr.mxu0 0.0
        %4979 = vmatpush1.msra.mxu0 0.0
        %4980 = vmatprep.subr.mxu0 0.0
        %4981 = vmatpush1.msra.mxu0 0.0
        %4982 = vmatprep.mubr.f32.mxu0 0.0
        %v4983 = vand.u32 %v4900, 4294901760
        %v4984 = vsub.f32 %v4900, %v4983
        %v4985 = vand.u32 %v4984, 4294901760
        %v4986 = vsub.f32 %v4984, %v4985
        %v4987 = vand.u32 %v4986, 4294901760
        %4988 = vmatmul.mubr.f32.gmra.mrb[0].mxu0 %v4987
        %v4989 = vpop.f32.mrb[0].mxu0
        %v4990 = vadd.f32 0.0, %v4989
        %v4991 = vpop.f32.mrb[0].mxu0
        %4992 = vmatprep.mubr.f32.mxu0 0.0
        %v4993 = vand.u32 %v4901, 4294901760
        %v4994 = vsub.f32 %v4901, %v4993
        %v4995 = vand.u32 %v4994, 4294901760
        %v4996 = vsub.f32 %v4994, %v4995
        %v4997 = vand.u32 %v4996, 4294901760
        %4998 = vmatmul.mubr.f32.gmra.mrb[0].mxu0 %v4997
        %v4999 = vpop.f32.mrb[0].mxu0
        %v5000 = vadd.f32 0.0, %v4999
        %v5001 = vpop.f32.mrb[0].mxu0
        %5002 = vdwg.mxu0
        %5003 = vmatprep.subr.mxu0 0.0
        %v5004 = vand.u32 %v254, 4294901760
        %v5005 = vsub.f32 %v254, %v5004
        %v5006 = vand.u32 %v5005, 4294901760
        %v5007 = vsub.f32 %v5005, %v5006
        %v5008 = vand.u32 %v5007, 4294901760
        %5009 = vmatpush1.msra.mxu0 %v5008
        %5010 = vmatprep.subr.mxu0 0.0
        %v5011 = vand.u32 %v255, 4294901760
        %v5012 = vsub.f32 %v255, %v5011
        %v5013 = vand.u32 %v5012, 4294901760
        %v5014 = vsub.f32 %v5012, %v5013
        %v5015 = vand.u32 %v5014, 4294901760
        %5016 = vmatpush1.msra.mxu0 %v5015
        %5017 = vmatprep.subr.mxu0 0.0
        %v5018 = vand.u32 %v256, 4294901760
        %v5019 = vsub.f32 %v256, %v5018
        %v5020 = vand.u32 %v5019, 4294901760
        %v5021 = vsub.f32 %v5019, %v5020
        %v5022 = vand.u32 %v5021, 4294901760
        %5023 = vmatpush1.msra.mxu0 %v5022
        %5024 = vmatprep.subr.mxu0 0.0
        %v5025 = vand.u32 %v257, 4294901760
        %v5026 = vsub.f32 %v257, %v5025
        %v5027 = vand.u32 %v5026, 4294901760
        %v5028 = vsub.f32 %v5026, %v5027
        %v5029 = vand.u32 %v5028, 4294901760
        %5030 = vmatpush1.msra.mxu0 %v5029
        %5031 = vmatprep.subr.mxu0 0.0
        %v5032 = vand.u32 %v258, 4294901760
        %v5033 = vsub.f32 %v258, %v5032
        %v5034 = vand.u32 %v5033, 4294901760
        %v5035 = vsub.f32 %v5033, %v5034
        %v5036 = vand.u32 %v5035, 4294901760
        %5037 = vmatpush1.msra.mxu0 %v5036
        %5038 = vmatprep.subr.mxu0 0.0
        %v5039 = vand.u32 %v259, 4294901760
        %v5040 = vsub.f32 %v259, %v5039
        %v5041 = vand.u32 %v5040, 4294901760
        %v5042 = vsub.f32 %v5040, %v5041
        %v5043 = vand.u32 %v5042, 4294901760
        %5044 = vmatpush1.msra.mxu0 %v5043
        %5045 = vmatprep.subr.mxu0 0.0
        %v5046 = vand.u32 %v260, 4294901760
        %v5047 = vsub.f32 %v260, %v5046
        %v5048 = vand.u32 %v5047, 4294901760
        %v5049 = vsub.f32 %v5047, %v5048
        %v5050 = vand.u32 %v5049, 4294901760
        %5051 = vmatpush1.msra.mxu0 %v5050
        %5052 = vmatprep.subr.mxu0 0.0
        %v5053 = vand.u32 %v261, 4294901760
        %v5054 = vsub.f32 %v261, %v5053
        %v5055 = vand.u32 %v5054, 4294901760
        %v5056 = vsub.f32 %v5054, %v5055
        %v5057 = vand.u32 %v5056, 4294901760
        %5058 = vmatpush1.msra.mxu0 %v5057
        %5059 = vmatprep.subr.mxu0 0.0
        %v5060 = vand.u32 %v262, 4294901760
        %v5061 = vsub.f32 %v262, %v5060
        %v5062 = vand.u32 %v5061, 4294901760
        %v5063 = vsub.f32 %v5061, %v5062
        %v5064 = vand.u32 %v5063, 4294901760
        %5065 = vmatpush1.msra.mxu0 %v5064
        %5066 = vmatprep.subr.mxu0 0.0
        %v5067 = vand.u32 %v263, 4294901760
        %v5068 = vsub.f32 %v263, %v5067
        %v5069 = vand.u32 %v5068, 4294901760
        %v5070 = vsub.f32 %v5068, %v5069
        %v5071 = vand.u32 %v5070, 4294901760
        %5072 = vmatpush1.msra.mxu0 %v5071
        %5073 = vmatprep.subr.mxu0 0.0
        %v5074 = vand.u32 %v264, 4294901760
        %v5075 = vsub.f32 %v264, %v5074
        %v5076 = vand.u32 %v5075, 4294901760
        %v5077 = vsub.f32 %v5075, %v5076
        %v5078 = vand.u32 %v5077, 4294901760
        %5079 = vmatpush1.msra.mxu0 %v5078
        %5080 = vmatprep.subr.mxu0 0.0
        %v5081 = vand.u32 %v265, 4294901760
        %v5082 = vsub.f32 %v265, %v5081
        %v5083 = vand.u32 %v5082, 4294901760
        %v5084 = vsub.f32 %v5082, %v5083
        %v5085 = vand.u32 %v5084, 4294901760
        %5086 = vmatpush1.msra.mxu0 %v5085
        %5087 = vmatprep.subr.mxu0 0.0
        %v5088 = vand.u32 %v266, 4294901760
        %v5089 = vsub.f32 %v266, %v5088
        %v5090 = vand.u32 %v5089, 4294901760
        %v5091 = vsub.f32 %v5089, %v5090
        %v5092 = vand.u32 %v5091, 4294901760
        %5093 = vmatpush1.msra.mxu0 %v5092
        %5094 = vmatprep.subr.mxu0 0.0
        %v5095 = vand.u32 %v267, 4294901760
        %v5096 = vsub.f32 %v267, %v5095
        %v5097 = vand.u32 %v5096, 4294901760
        %v5098 = vsub.f32 %v5096, %v5097
        %v5099 = vand.u32 %v5098, 4294901760
        %5100 = vmatpush1.msra.mxu0 %v5099
        %5101 = vmatprep.subr.mxu0 0.0
        %v5102 = vand.u32 %v268, 4294901760
        %v5103 = vsub.f32 %v268, %v5102
        %v5104 = vand.u32 %v5103, 4294901760
        %v5105 = vsub.f32 %v5103, %v5104
        %v5106 = vand.u32 %v5105, 4294901760
        %5107 = vmatpush1.msra.mxu0 %v5106
        %5108 = vmatprep.subr.mxu0 0.0
        %v5109 = vand.u32 %v269, 4294901760
        %v5110 = vsub.f32 %v269, %v5109
        %v5111 = vand.u32 %v5110, 4294901760
        %v5112 = vsub.f32 %v5110, %v5111
        %v5113 = vand.u32 %v5112, 4294901760
        %5114 = vmatpush1.msra.mxu0 %v5113
        %5115 = vmatprep.subr.mxu0 0.0
        %5116 = vmatpush1.msra.mxu0 0.0
        %5117 = vmatprep.subr.mxu0 0.0
        %5118 = vmatpush1.msra.mxu0 0.0
        %5119 = vmatprep.subr.mxu0 0.0
        %5120 = vmatpush1.msra.mxu0 0.0
        %5121 = vmatprep.subr.mxu0 0.0
        %5122 = vmatpush1.msra.mxu0 0.0
        %5123 = vmatprep.subr.mxu0 0.0
        %5124 = vmatpush1.msra.mxu0 0.0
        %5125 = vmatprep.subr.mxu0 0.0
        %5126 = vmatpush1.msra.mxu0 0.0
        %5127 = vmatprep.subr.mxu0 0.0
        %5128 = vmatpush1.msra.mxu0 0.0
        %5129 = vmatprep.subr.mxu0 0.0
        %5130 = vmatpush1.msra.mxu0 0.0
        %5131 = vmatprep.subr.mxu0 0.0
        %5132 = vmatpush1.msra.mxu0 0.0
        %5133 = vmatprep.subr.mxu0 0.0
        %5134 = vmatpush1.msra.mxu0 0.0
        %5135 = vmatprep.subr.mxu0 0.0
        %5136 = vmatpush1.msra.mxu0 0.0
        %5137 = vmatprep.subr.mxu0 0.0
        %5138 = vmatpush1.msra.mxu0 0.0
        %5139 = vmatprep.subr.mxu0 0.0
        %5140 = vmatpush1.msra.mxu0 0.0
        %5141 = vmatprep.subr.mxu0 0.0
        %5142 = vmatpush1.msra.mxu0 0.0
        %5143 = vmatprep.subr.mxu0 0.0
        %5144 = vmatpush1.msra.mxu0 0.0
        %5145 = vmatprep.subr.mxu0 0.0
        %5146 = vmatpush1.msra.mxu0 0.0
        %5147 = vmatprep.mubr.f32.mxu0 0.0
        %v5148 = vand.u32 %v4900, 4294901760
        %5149 = vmatmul.mubr.f32.gmra.mrb[0].mxu0 %v5148
        %v5150 = vpop.f32.mrb[0].mxu0
        %v5151 = vadd.f32 %v4990, %v5150
        %v5152 = vpop.f32.mrb[0].mxu0
        %5153 = vmatprep.mubr.f32.mxu0 0.0
        %v5154 = vand.u32 %v4901, 4294901760
        %5155 = vmatmul.mubr.f32.gmra.mrb[0].mxu0 %v5154
        %v5156 = vpop.f32.mrb[0].mxu0
        %v5157 = vadd.f32 %v5000, %v5156
        %v5158 = vpop.f32.mrb[0].mxu0
        %5159 = vdwg.mxu0
        %5160 = vmatprep.subr.mxu0 0.0
        %v5161 = vand.u32 %v254, 4294901760
        %v5162 = vsub.f32 %v254, %v5161
        %5163 = vmatpush1.msra.mxu0 %v5162
        %5164 = vmatprep.subr.mxu0 0.0
        %v5165 = vand.u32 %v255, 4294901760
        %v5166 = vsub.f32 %v255, %v5165
        %5167 = vmatpush1.msra.mxu0 %v5166
        %5168 = vmatprep.subr.mxu0 0.0
        %v5169 = vand.u32 %v256, 4294901760
        %v5170 = vsub.f32 %v256, %v5169
        %5171 = vmatpush1.msra.mxu0 %v5170
        %5172 = vmatprep.subr.mxu0 0.0
        %v5173 = vand.u32 %v257, 4294901760
        %v5174 = vsub.f32 %v257, %v5173
        %5175 = vmatpush1.msra.mxu0 %v5174
        %5176 = vmatprep.subr.mxu0 0.0
        %v5177 = vand.u32 %v258, 4294901760
        %v5178 = vsub.f32 %v258, %v5177
        %5179 = vmatpush1.msra.mxu0 %v5178
        %5180 = vmatprep.subr.mxu0 0.0
        %v5181 = vand.u32 %v259, 4294901760
        %v5182 = vsub.f32 %v259, %v5181
        %5183 = vmatpush1.msra.mxu0 %v5182
        %5184 = vmatprep.subr.mxu0 0.0
        %v5185 = vand.u32 %v260, 4294901760
        %v5186 = vsub.f32 %v260, %v5185
        %5187 = vmatpush1.msra.mxu0 %v5186
        %5188 = vmatprep.subr.mxu0 0.0
        %v5189 = vand.u32 %v261, 4294901760
        %v5190 = vsub.f32 %v261, %v5189
        %5191 = vmatpush1.msra.mxu0 %v5190
        %5192 = vmatprep.subr.mxu0 0.0
        %v5193 = vand.u32 %v262, 4294901760
        %v5194 = vsub.f32 %v262, %v5193
        %5195 = vmatpush1.msra.mxu0 %v5194
        %5196 = vmatprep.subr.mxu0 0.0
        %v5197 = vand.u32 %v263, 4294901760
        %v5198 = vsub.f32 %v263, %v5197
        %5199 = vmatpush1.msra.mxu0 %v5198
        %5200 = vmatprep.subr.mxu0 0.0
        %v5201 = vand.u32 %v264, 4294901760
        %v5202 = vsub.f32 %v264, %v5201
        %5203 = vmatpush1.msra.mxu0 %v5202
        %5204 = vmatprep.subr.mxu0 0.0
        %v5205 = vand.u32 %v265, 4294901760
        %v5206 = vsub.f32 %v265, %v5205
        %5207 = vmatpush1.msra.mxu0 %v5206
        %5208 = vmatprep.subr.mxu0 0.0
        %v5209 = vand.u32 %v266, 4294901760
        %v5210 = vsub.f32 %v266, %v5209
        %5211 = vmatpush1.msra.mxu0 %v5210
        %5212 = vmatprep.subr.mxu0 0.0
        %v5213 = vand.u32 %v267, 4294901760
        %v5214 = vsub.f32 %v267, %v5213
        %5215 = vmatpush1.msra.mxu0 %v5214
        %5216 = vmatprep.subr.mxu0 0.0
        %v5217 = vand.u32 %v268, 4294901760
        %v5218 = vsub.f32 %v268, %v5217
        %5219 = vmatpush1.msra.mxu0 %v5218
        %5220 = vmatprep.subr.mxu0 0.0
        %v5221 = vand.u32 %v269, 4294901760
        %v5222 = vsub.f32 %v269, %v5221
        %5223 = vmatpush1.msra.mxu0 %v5222
        %5224 = vmatprep.subr.mxu0 0.0
        %5225 = vmatpush1.msra.mxu0 0.0
        %5226 = vmatprep.subr.mxu0 0.0
        %5227 = vmatpush1.msra.mxu0 0.0
        %5228 = vmatprep.subr.mxu0 0.0
        %5229 = vmatpush1.msra.mxu0 0.0
        %5230 = vmatprep.subr.mxu0 0.0
        %5231 = vmatpush1.msra.mxu0 0.0
        %5232 = vmatprep.subr.mxu0 0.0
        %5233 = vmatpush1.msra.mxu0 0.0
        %5234 = vmatprep.subr.mxu0 0.0
        %5235 = vmatpush1.msra.mxu0 0.0
        %5236 = vmatprep.subr.mxu0 0.0
        %5237 = vmatpush1.msra.mxu0 0.0
        %5238 = vmatprep.subr.mxu0 0.0
        %5239 = vmatpush1.msra.mxu0 0.0
        %5240 = vmatprep.subr.mxu0 0.0
        %5241 = vmatpush1.msra.mxu0 0.0
        %5242 = vmatprep.subr.mxu0 0.0
        %5243 = vmatpush1.msra.mxu0 0.0
        %5244 = vmatprep.subr.mxu0 0.0
        %5245 = vmatpush1.msra.mxu0 0.0
        %5246 = vmatprep.subr.mxu0 0.0
        %5247 = vmatpush1.msra.mxu0 0.0
        %5248 = vmatprep.subr.mxu0 0.0
        %5249 = vmatpush1.msra.mxu0 0.0
        %5250 = vmatprep.subr.mxu0 0.0
        %5251 = vmatpush1.msra.mxu0 0.0
        %5252 = vmatprep.subr.mxu0 0.0
        %5253 = vmatpush1.msra.mxu0 0.0
        %5254 = vmatprep.subr.mxu0 0.0
        %5255 = vmatpush1.msra.mxu0 0.0
        %5256 = vmatprep.mubr.f32.mxu0 0.0
        %v5257 = vand.u32 %v4900, 4294901760
        %v5258 = vsub.f32 %v4900, %v5257
        %5259 = vmatmul.mubr.f32.gmra.mrb[0].mxu0 %v5258
        %v5260 = vpop.f32.mrb[0].mxu0
        %v5261 = vadd.f32 %v5151, %v5260
        %v5262 = vpop.f32.mrb[0].mxu0
        %5263 = vmatprep.mubr.f32.mxu0 0.0
        %v5264 = vand.u32 %v4901, 4294901760
        %v5265 = vsub.f32 %v4901, %v5264
        %5266 = vmatmul.mubr.f32.gmra.mrb[0].mxu0 %v5265
        %v5267 = vpop.f32.mrb[0].mxu0
        %v5268 = vadd.f32 %v5157, %v5267
        %v5269 = vpop.f32.mrb[0].mxu0
        %5270 = vdwg.mxu0
        %5271 = vmatprep.subr.mxu0 0.0
        %v5272 = vand.u32 %v254, 4294901760
        %5273 = vmatpush1.msra.mxu0 %v5272
        %5274 = vmatprep.subr.mxu0 0.0
        %v5275 = vand.u32 %v255, 4294901760
        %5276 = vmatpush1.msra.mxu0 %v5275
        %5277 = vmatprep.subr.mxu0 0.0
        %v5278 = vand.u32 %v256, 4294901760
        %5279 = vmatpush1.msra.mxu0 %v5278
        %5280 = vmatprep.subr.mxu0 0.0
        %v5281 = vand.u32 %v257, 4294901760
        %5282 = vmatpush1.msra.mxu0 %v5281
        %5283 = vmatprep.subr.mxu0 0.0
        %v5284 = vand.u32 %v258, 4294901760
        %5285 = vmatpush1.msra.mxu0 %v5284
        %5286 = vmatprep.subr.mxu0 0.0
        %v5287 = vand.u32 %v259, 4294901760
        %5288 = vmatpush1.msra.mxu0 %v5287
        %5289 = vmatprep.subr.mxu0 0.0
        %v5290 = vand.u32 %v260, 4294901760
        %5291 = vmatpush1.msra.mxu0 %v5290
        %5292 = vmatprep.subr.mxu0 0.0
        %v5293 = vand.u32 %v261, 4294901760
        %5294 = vmatpush1.msra.mxu0 %v5293
        %5295 = vmatprep.subr.mxu0 0.0
        %v5296 = vand.u32 %v262, 4294901760
        %5297 = vmatpush1.msra.mxu0 %v5296
        %5298 = vmatprep.subr.mxu0 0.0
        %v5299 = vand.u32 %v263, 4294901760
        %5300 = vmatpush1.msra.mxu0 %v5299
        %5301 = vmatprep.subr.mxu0 0.0
        %v5302 = vand.u32 %v264, 4294901760
        %5303 = vmatpush1.msra.mxu0 %v5302
        %5304 = vmatprep.subr.mxu0 0.0
        %v5305 = vand.u32 %v265, 4294901760
        %5306 = vmatpush1.msra.mxu0 %v5305
        %5307 = vmatprep.subr.mxu0 0.0
        %v5308 = vand.u32 %v266, 4294901760
        %5309 = vmatpush1.msra.mxu0 %v5308
        %5310 = vmatprep.subr.mxu0 0.0
        %v5311 = vand.u32 %v267, 4294901760
        %5312 = vmatpush1.msra.mxu0 %v5311
        %5313 = vmatprep.subr.mxu0 0.0
        %v5314 = vand.u32 %v268, 4294901760
        %5315 = vmatpush1.msra.mxu0 %v5314
        %5316 = vmatprep.subr.mxu0 0.0
        %v5317 = vand.u32 %v269, 4294901760
        %5318 = vmatpush1.msra.mxu0 %v5317
        %5319 = vmatprep.subr.mxu0 0.0
        %5320 = vmatpush1.msra.mxu0 0.0
        %5321 = vmatprep.subr.mxu0 0.0
        %5322 = vmatpush1.msra.mxu0 0.0
        %5323 = vmatprep.subr.mxu0 0.0
        %5324 = vmatpush1.msra.mxu0 0.0
        %5325 = vmatprep.subr.mxu0 0.0
        %5326 = vmatpush1.msra.mxu0 0.0
        %5327 = vmatprep.subr.mxu0 0.0
        %5328 = vmatpush1.msra.mxu0 0.0
        %5329 = vmatprep.subr.mxu0 0.0
        %5330 = vmatpush1.msra.mxu0 0.0
        %5331 = vmatprep.subr.mxu0 0.0
        %5332 = vmatpush1.msra.mxu0 0.0
        %5333 = vmatprep.subr.mxu0 0.0
        %5334 = vmatpush1.msra.mxu0 0.0
        %5335 = vmatprep.subr.mxu0 0.0
        %5336 = vmatpush1.msra.mxu0 0.0
        %5337 = vmatprep.subr.mxu0 0.0
        %5338 = vmatpush1.msra.mxu0 0.0
        %5339 = vmatprep.subr.mxu0 0.0
        %5340 = vmatpush1.msra.mxu0 0.0
        %5341 = vmatprep.subr.mxu0 0.0
        %5342 = vmatpush1.msra.mxu0 0.0
        %5343 = vmatprep.subr.mxu0 0.0
        %5344 = vmatpush1.msra.mxu0 0.0
        %5345 = vmatprep.subr.mxu0 0.0
        %5346 = vmatpush1.msra.mxu0 0.0
        %5347 = vmatprep.subr.mxu0 0.0
        %5348 = vmatpush1.msra.mxu0 0.0
        %5349 = vmatprep.subr.mxu0 0.0
        %5350 = vmatpush1.msra.mxu0 0.0
        %5351 = vmatprep.mubr.f32.mxu0 0.0
        %v5352 = vand.u32 %v4900, 4294901760
        %v5353 = vsub.f32 %v4900, %v5352
        %v5354 = vand.u32 %v5353, 4294901760
        %5355 = vmatmul.mubr.f32.gmra.mrb[0].mxu0 %v5354
        %v5356 = vpop.f32.mrb[0].mxu0
        %v5357 = vadd.f32 %v5261, %v5356
        %v5358 = vpop.f32.mrb[0].mxu0
        %5359 = vmatprep.mubr.f32.mxu0 0.0
        %v5360 = vand.u32 %v4901, 4294901760
        %v5361 = vsub.f32 %v4901, %v5360
        %v5362 = vand.u32 %v5361, 4294901760
        %5363 = vmatmul.mubr.f32.gmra.mrb[0].mxu0 %v5362
        %v5364 = vpop.f32.mrb[0].mxu0
        %v5365 = vadd.f32 %v5268, %v5364
        %v5366 = vpop.f32.mrb[0].mxu0
        %5367 = vdwg.mxu0
        %5368 = vmatprep.subr.mxu0 0.0
        %v5369 = vand.u32 %v254, 4294901760
        %v5370 = vsub.f32 %v254, %v5369
        %v5371 = vand.u32 %v5370, 4294901760
        %5372 = vmatpush1.msra.mxu0 %v5371
        %5373 = vmatprep.subr.mxu0 0.0
        %v5374 = vand.u32 %v255, 4294901760
        %v5375 = vsub.f32 %v255, %v5374
        %v5376 = vand.u32 %v5375, 4294901760
        %5377 = vmatpush1.msra.mxu0 %v5376
        %5378 = vmatprep.subr.mxu0 0.0
        %v5379 = vand.u32 %v256, 4294901760
        %v5380 = vsub.f32 %v256, %v5379
        %v5381 = vand.u32 %v5380, 4294901760
        %5382 = vmatpush1.msra.mxu0 %v5381
        %5383 = vmatprep.subr.mxu0 0.0
        %v5384 = vand.u32 %v257, 4294901760
        %v5385 = vsub.f32 %v257, %v5384
        %v5386 = vand.u32 %v5385, 4294901760
        %5387 = vmatpush1.msra.mxu0 %v5386
        %5388 = vmatprep.subr.mxu0 0.0
        %v5389 = vand.u32 %v258, 4294901760
        %v5390 = vsub.f32 %v258, %v5389
        %v5391 = vand.u32 %v5390, 4294901760
        %5392 = vmatpush1.msra.mxu0 %v5391
        %5393 = vmatprep.subr.mxu0 0.0
        %v5394 = vand.u32 %v259, 4294901760
        %v5395 = vsub.f32 %v259, %v5394
        %v5396 = vand.u32 %v5395, 4294901760
        %5397 = vmatpush1.msra.mxu0 %v5396
        %5398 = vmatprep.subr.mxu0 0.0
        %v5399 = vand.u32 %v260, 4294901760
        %v5400 = vsub.f32 %v260, %v5399
        %v5401 = vand.u32 %v5400, 4294901760
        %5402 = vmatpush1.msra.mxu0 %v5401
        %5403 = vmatprep.subr.mxu0 0.0
        %v5404 = vand.u32 %v261, 4294901760
        %v5405 = vsub.f32 %v261, %v5404
        %v5406 = vand.u32 %v5405, 4294901760
        %5407 = vmatpush1.msra.mxu0 %v5406
        %5408 = vmatprep.subr.mxu0 0.0
        %v5409 = vand.u32 %v262, 4294901760
        %v5410 = vsub.f32 %v262, %v5409
        %v5411 = vand.u32 %v5410, 4294901760
        %5412 = vmatpush1.msra.mxu0 %v5411
        %5413 = vmatprep.subr.mxu0 0.0
        %v5414 = vand.u32 %v263, 4294901760
        %v5415 = vsub.f32 %v263, %v5414
        %v5416 = vand.u32 %v5415, 4294901760
        %5417 = vmatpush1.msra.mxu0 %v5416
        %5418 = vmatprep.subr.mxu0 0.0
        %v5419 = vand.u32 %v264, 4294901760
        %v5420 = vsub.f32 %v264, %v5419
        %v5421 = vand.u32 %v5420, 4294901760
        %5422 = vmatpush1.msra.mxu0 %v5421
        %5423 = vmatprep.subr.mxu0 0.0
        %v5424 = vand.u32 %v265, 4294901760
        %v5425 = vsub.f32 %v265, %v5424
        %v5426 = vand.u32 %v5425, 4294901760
        %5427 = vmatpush1.msra.mxu0 %v5426
        %5428 = vmatprep.subr.mxu0 0.0
        %v5429 = vand.u32 %v266, 4294901760
        %v5430 = vsub.f32 %v266, %v5429
        %v5431 = vand.u32 %v5430, 4294901760
        %5432 = vmatpush1.msra.mxu0 %v5431
        %5433 = vmatprep.subr.mxu0 0.0
        %v5434 = vand.u32 %v267, 4294901760
        %v5435 = vsub.f32 %v267, %v5434
        %v5436 = vand.u32 %v5435, 4294901760
        %5437 = vmatpush1.msra.mxu0 %v5436
        %5438 = vmatprep.subr.mxu0 0.0
        %v5439 = vand.u32 %v268, 4294901760
        %v5440 = vsub.f32 %v268, %v5439
        %v5441 = vand.u32 %v5440, 4294901760
        %5442 = vmatpush1.msra.mxu0 %v5441
        %5443 = vmatprep.subr.mxu0 0.0
        %v5444 = vand.u32 %v269, 4294901760
        %v5445 = vsub.f32 %v269, %v5444
        %v5446 = vand.u32 %v5445, 4294901760
        %5447 = vmatpush1.msra.mxu0 %v5446
        %5448 = vmatprep.subr.mxu0 0.0
        %5449 = vmatpush1.msra.mxu0 0.0
        %5450 = vmatprep.subr.mxu0 0.0
        %5451 = vmatpush1.msra.mxu0 0.0
        %5452 = vmatprep.subr.mxu0 0.0
        %5453 = vmatpush1.msra.mxu0 0.0
        %5454 = vmatprep.subr.mxu0 0.0
        %5455 = vmatpush1.msra.mxu0 0.0
        %5456 = vmatprep.subr.mxu0 0.0
        %5457 = vmatpush1.msra.mxu0 0.0
        %5458 = vmatprep.subr.mxu0 0.0
        %5459 = vmatpush1.msra.mxu0 0.0
        %5460 = vmatprep.subr.mxu0 0.0
        %5461 = vmatpush1.msra.mxu0 0.0
        %5462 = vmatprep.subr.mxu0 0.0
        %5463 = vmatpush1.msra.mxu0 0.0
        %5464 = vmatprep.subr.mxu0 0.0
        %5465 = vmatpush1.msra.mxu0 0.0
        %5466 = vmatprep.subr.mxu0 0.0
        %5467 = vmatpush1.msra.mxu0 0.0
        %5468 = vmatprep.subr.mxu0 0.0
        %5469 = vmatpush1.msra.mxu0 0.0
        %5470 = vmatprep.subr.mxu0 0.0
        %5471 = vmatpush1.msra.mxu0 0.0
        %5472 = vmatprep.subr.mxu0 0.0
        %5473 = vmatpush1.msra.mxu0 0.0
        %5474 = vmatprep.subr.mxu0 0.0
        %5475 = vmatpush1.msra.mxu0 0.0
        %5476 = vmatprep.subr.mxu0 0.0
        %5477 = vmatpush1.msra.mxu0 0.0
        %5478 = vmatprep.subr.mxu0 0.0
        %5479 = vmatpush1.msra.mxu0 0.0
        %5480 = vmatprep.mubr.f32.mxu0 0.0
        %v5481 = vand.u32 %v4900, 4294901760
        %5482 = vmatmul.mubr.f32.gmra.mrb[0].mxu0 %v5481
        %v5483 = vpop.f32.mrb[0].mxu0
        %v5484 = vadd.f32 %v5357, %v5483
        %v5485 = vpop.f32.mrb[0].mxu0
        %5486 = vmatprep.mubr.f32.mxu0 0.0
        %v5487 = vand.u32 %v4901, 4294901760
        %5488 = vmatmul.mubr.f32.gmra.mrb[0].mxu0 %v5487
        %v5489 = vpop.f32.mrb[0].mxu0
        %v5490 = vadd.f32 %v5365, %v5489
        %v5491 = vpop.f32.mrb[0].mxu0
        %5492 = vdwg.mxu0
        %5493 = vmatprep.subr.mxu0 0.0
        %v5494 = vand.u32 %v254, 4294901760
        %5495 = vmatpush1.msra.mxu0 %v5494
        %5496 = vmatprep.subr.mxu0 0.0
        %v5497 = vand.u32 %v255, 4294901760
        %5498 = vmatpush1.msra.mxu0 %v5497
        %5499 = vmatprep.subr.mxu0 0.0
        %v5500 = vand.u32 %v256, 4294901760
        %5501 = vmatpush1.msra.mxu0 %v5500
        %5502 = vmatprep.subr.mxu0 0.0
        %v5503 = vand.u32 %v257, 4294901760
        %5504 = vmatpush1.msra.mxu0 %v5503
        %5505 = vmatprep.subr.mxu0 0.0
        %v5506 = vand.u32 %v258, 4294901760
        %5507 = vmatpush1.msra.mxu0 %v5506
        %5508 = vmatprep.subr.mxu0 0.0
        %v5509 = vand.u32 %v259, 4294901760
        %5510 = vmatpush1.msra.mxu0 %v5509
        %5511 = vmatprep.subr.mxu0 0.0
        %v5512 = vand.u32 %v260, 4294901760
        %5513 = vmatpush1.msra.mxu0 %v5512
        %5514 = vmatprep.subr.mxu0 0.0
        %v5515 = vand.u32 %v261, 4294901760
        %5516 = vmatpush1.msra.mxu0 %v5515
        %5517 = vmatprep.subr.mxu0 0.0
        %v5518 = vand.u32 %v262, 4294901760
        %5519 = vmatpush1.msra.mxu0 %v5518
        %5520 = vmatprep.subr.mxu0 0.0
        %v5521 = vand.u32 %v263, 4294901760
        %5522 = vmatpush1.msra.mxu0 %v5521
        %5523 = vmatprep.subr.mxu0 0.0
        %v5524 = vand.u32 %v264, 4294901760
        %5525 = vmatpush1.msra.mxu0 %v5524
        %5526 = vmatprep.subr.mxu0 0.0
        %v5527 = vand.u32 %v265, 4294901760
        %5528 = vmatpush1.msra.mxu0 %v5527
        %5529 = vmatprep.subr.mxu0 0.0
        %v5530 = vand.u32 %v266, 4294901760
        %5531 = vmatpush1.msra.mxu0 %v5530
        %5532 = vmatprep.subr.mxu0 0.0
        %v5533 = vand.u32 %v267, 4294901760
        %5534 = vmatpush1.msra.mxu0 %v5533
        %5535 = vmatprep.subr.mxu0 0.0
        %v5536 = vand.u32 %v268, 4294901760
        %5537 = vmatpush1.msra.mxu0 %v5536
        %5538 = vmatprep.subr.mxu0 0.0
        %v5539 = vand.u32 %v269, 4294901760
        %5540 = vmatpush1.msra.mxu0 %v5539
        %5541 = vmatprep.subr.mxu0 0.0
        %5542 = vmatpush1.msra.mxu0 0.0
        %5543 = vmatprep.subr.mxu0 0.0
        %5544 = vmatpush1.msra.mxu0 0.0
        %5545 = vmatprep.subr.mxu0 0.0
        %5546 = vmatpush1.msra.mxu0 0.0
        %5547 = vmatprep.subr.mxu0 0.0
        %5548 = vmatpush1.msra.mxu0 0.0
        %5549 = vmatprep.subr.mxu0 0.0
        %5550 = vmatpush1.msra.mxu0 0.0
        %5551 = vmatprep.subr.mxu0 0.0
        %5552 = vmatpush1.msra.mxu0 0.0
        %5553 = vmatprep.subr.mxu0 0.0
        %5554 = vmatpush1.msra.mxu0 0.0
        %5555 = vmatprep.subr.mxu0 0.0
        %5556 = vmatpush1.msra.mxu0 0.0
        %5557 = vmatprep.subr.mxu0 0.0
        %5558 = vmatpush1.msra.mxu0 0.0
        %5559 = vmatprep.subr.mxu0 0.0
        %5560 = vmatpush1.msra.mxu0 0.0
        %5561 = vmatprep.subr.mxu0 0.0
        %5562 = vmatpush1.msra.mxu0 0.0
        %5563 = vmatprep.subr.mxu0 0.0
        %5564 = vmatpush1.msra.mxu0 0.0
        %5565 = vmatprep.subr.mxu0 0.0
        %5566 = vmatpush1.msra.mxu0 0.0
        %5567 = vmatprep.subr.mxu0 0.0
        %5568 = vmatpush1.msra.mxu0 0.0
        %5569 = vmatprep.subr.mxu0 0.0
        %5570 = vmatpush1.msra.mxu0 0.0
        %5571 = vmatprep.subr.mxu0 0.0
        %5572 = vmatpush1.msra.mxu0 0.0
        %5573 = vmatprep.mubr.f32.mxu0 0.0
        %v5574 = vand.u32 %v4900, 4294901760
        %5575 = vmatmul.mubr.f32.gmra.mrb[0].mxu0 %v5574
        %v5576 = vpop.f32.mrb[0].mxu0
        %v5577 = vadd.f32 %v5484, %v5576
        %v5578 = vpop.f32.mrb[0].mxu0
        %5579 = vmatprep.mubr.f32.mxu0 0.0
        %v5580 = vand.u32 %v4901, 4294901760
        %5581 = vmatmul.mubr.f32.gmra.mrb[0].mxu0 %v5580
        %v5582 = vpop.f32.mrb[0].mxu0
        %v5583 = vadd.f32 %v5490, %v5582
        %v5584 = vpop.f32.mrb[0].mxu0
        %5585 = vdwg.mxu0
        %s5586 = scalar_lea.vmem %s242, 96 [#allocation7]
        %5587 = vst [vmem:[%s5586] sm:$0xff] %v5577
        %5588 = vst [vmem:[%s5586 + $0x8] sm:$0xff] %v5583
        %v5589 = vld [vmem:[%s333] sm:$0xff]
        %v5590 = vld [vmem:[%s333 + $0x8] sm:$0xff]
        %s5591 = sld [smem:[#allocation2 + $0x38]]
        %v5592 = vld [vmem:[%s251] sm:$0xff]
        %v5593 = vld [vmem:[%s251 + $0x8] sm:$0xff]
        %v5594 = vstv %s5591
        %v5595 = vmul.f32 %v5594, %v5592
        %v5596 = vmul.f32 %v5594, %v5593
        %v5597 = vadd.f32 %v5589, %v5595
        %v5598 = vadd.f32 %v5590, %v5596
        %s5599 = sld [smem:[#allocation2 + $0x39]]
        %v5600 = vld [vmem:[%s279] sm:$0xff]
        %v5601 = vld [vmem:[%s279 + $0x8] sm:$0xff]
        %v5602 = vstv %s5599
        %v5603 = vmul.f32 %v5602, %v5600
        %v5604 = vmul.f32 %v5602, %v5601
        %v5605 = vadd.f32 %v5597, %v5603
        %v5606 = vadd.f32 %v5598, %v5604
        %s5607 = sld [smem:[#allocation2 + $0x3a]]
        %v5608 = vld [vmem:[%s288] sm:$0xff]
        %v5609 = vld [vmem:[%s288 + $0x8] sm:$0xff]
        %v5610 = vstv %s5607
        %v5611 = vmul.f32 %v5610, %v5608
        %v5612 = vmul.f32 %v5610, %v5609
        %v5613 = vadd.f32 %v5605, %v5611
        %v5614 = vadd.f32 %v5606, %v5612
        %s5615 = sld [smem:[#allocation2 + $0x3b]]
        %v5616 = vld [vmem:[%s297] sm:$0xff]
        %v5617 = vld [vmem:[%s297 + $0x8] sm:$0xff]
        %v5618 = vstv %s5615
        %v5619 = vmul.f32 %v5618, %v5616
        %v5620 = vmul.f32 %v5618, %v5617
        %v5621 = vadd.f32 %v5613, %v5619
        %v5622 = vadd.f32 %v5614, %v5620
        %s5623 = sld [smem:[#allocation2 + $0x3c]]
        %v5624 = vld [vmem:[%s306] sm:$0xff]
        %v5625 = vld [vmem:[%s306 + $0x8] sm:$0xff]
        %v5626 = vstv %s5623
        %v5627 = vmul.f32 %v5626, %v5624
        %v5628 = vmul.f32 %v5626, %v5625
        %v5629 = vadd.f32 %v5621, %v5627
        %v5630 = vadd.f32 %v5622, %v5628
        %s5631 = sld [smem:[#allocation2 + $0x3d]]
        %v5632 = vld [vmem:[%s315] sm:$0xff]
        %v5633 = vld [vmem:[%s315 + $0x8] sm:$0xff]
        %v5634 = vstv %s5631
        %v5635 = vmul.f32 %v5634, %v5632
        %v5636 = vmul.f32 %v5634, %v5633
        %v5637 = vadd.f32 %v5629, %v5635
        %v5638 = vadd.f32 %v5630, %v5636
        %s5639 = sld [smem:[#allocation2 + $0x3e]]
        %v5640 = vld [vmem:[%s324] sm:$0xff]
        %v5641 = vld [vmem:[%s324 + $0x8] sm:$0xff]
        %v5642 = vstv %s5639
        %v5643 = vmul.f32 %v5642, %v5640
        %v5644 = vmul.f32 %v5642, %v5641
        %v5645 = vadd.f32 %v5637, %v5643
        %v5646 = vadd.f32 %v5638, %v5644
        %s5647 = sld [smem:[#allocation2 + $0x3f]]
        %v5648 = vstv %s5647
        %v5649 = vmul.f32 %v5648, %v5589
        %v5650 = vmul.f32 %v5648, %v5590
        %v5651 = vadd.f32 %v5645, %v5649
        %v5652 = vadd.f32 %v5646, %v5650
        %s5653 = sld [smem:[#allocation5 + $0x7]]
        %vm5654 = vcmp.ge.f32.partialorder %v5651, 0.0
        %vm5655 = vcmp.ge.f32.partialorder %v5652, 0.0
        %v5656 = vstv %s5653
        %v5657 = vmul.f32 %v5656, %v5651
        %v5658 = vmul.f32 %v5656, %v5652
        %v5659 = vsel %vm5654, %v5651, %v5657
        %v5660 = vsel %vm5655, %v5652, %v5658
        %5661 = vmatprep.subr.mxu0 0.0
        %v5662 = vand.u32 %v254, 4294901760
        %5663 = vmatpush1.msra.mxu0 %v5662
        %5664 = vmatprep.subr.mxu0 0.0
        %v5665 = vand.u32 %v255, 4294901760
        %5666 = vmatpush1.msra.mxu0 %v5665
        %5667 = vmatprep.subr.mxu0 0.0
        %v5668 = vand.u32 %v256, 4294901760
        %5669 = vmatpush1.msra.mxu0 %v5668
        %5670 = vmatprep.subr.mxu0 0.0
        %v5671 = vand.u32 %v257, 4294901760
        %5672 = vmatpush1.msra.mxu0 %v5671
        %5673 = vmatprep.subr.mxu0 0.0
        %v5674 = vand.u32 %v258, 4294901760
        %5675 = vmatpush1.msra.mxu0 %v5674
        %5676 = vmatprep.subr.mxu0 0.0
        %v5677 = vand.u32 %v259, 4294901760
        %5678 = vmatpush1.msra.mxu0 %v5677
        %5679 = vmatprep.subr.mxu0 0.0
        %v5680 = vand.u32 %v260, 4294901760
        %5681 = vmatpush1.msra.mxu0 %v5680
        %5682 = vmatprep.subr.mxu0 0.0
        %v5683 = vand.u32 %v261, 4294901760
        %5684 = vmatpush1.msra.mxu0 %v5683
        %5685 = vmatprep.subr.mxu0 0.0
        %v5686 = vand.u32 %v262, 4294901760
        %5687 = vmatpush1.msra.mxu0 %v5686
        %5688 = vmatprep.subr.mxu0 0.0
        %v5689 = vand.u32 %v263, 4294901760
        %5690 = vmatpush1.msra.mxu0 %v5689
        %5691 = vmatprep.subr.mxu0 0.0
        %v5692 = vand.u32 %v264, 4294901760
        %5693 = vmatpush1.msra.mxu0 %v5692
        %5694 = vmatprep.subr.mxu0 0.0
        %v5695 = vand.u32 %v265, 4294901760
        %5696 = vmatpush1.msra.mxu0 %v5695
        %5697 = vmatprep.subr.mxu0 0.0
        %v5698 = vand.u32 %v266, 4294901760
        %5699 = vmatpush1.msra.mxu0 %v5698
        %5700 = vmatprep.subr.mxu0 0.0
        %v5701 = vand.u32 %v267, 4294901760
        %5702 = vmatpush1.msra.mxu0 %v5701
        %5703 = vmatprep.subr.mxu0 0.0
        %v5704 = vand.u32 %v268, 4294901760
        %5705 = vmatpush1.msra.mxu0 %v5704
        %5706 = vmatprep.subr.mxu0 0.0
        %v5707 = vand.u32 %v269, 4294901760
        %5708 = vmatpush1.msra.mxu0 %v5707
        %5709 = vmatprep.subr.mxu0 0.0
        %5710 = vmatpush1.msra.mxu0 0.0
        %5711 = vmatprep.subr.mxu0 0.0
        %5712 = vmatpush1.msra.mxu0 0.0
        %5713 = vmatprep.subr.mxu0 0.0
        %5714 = vmatpush1.msra.mxu0 0.0
        %5715 = vmatprep.subr.mxu0 0.0
        %5716 = vmatpush1.msra.mxu0 0.0
        %5717 = vmatprep.subr.mxu0 0.0
        %5718 = vmatpush1.msra.mxu0 0.0
        %5719 = vmatprep.subr.mxu0 0.0
        %5720 = vmatpush1.msra.mxu0 0.0
        %5721 = vmatprep.subr.mxu0 0.0
        %5722 = vmatpush1.msra.mxu0 0.0
        %5723 = vmatprep.subr.mxu0 0.0
        %5724 = vmatpush1.msra.mxu0 0.0
        %5725 = vmatprep.subr.mxu0 0.0
        %5726 = vmatpush1.msra.mxu0 0.0
        %5727 = vmatprep.subr.mxu0 0.0
        %5728 = vmatpush1.msra.mxu0 0.0
        %5729 = vmatprep.subr.mxu0 0.0
        %5730 = vmatpush1.msra.mxu0 0.0
        %5731 = vmatprep.subr.mxu0 0.0
        %5732 = vmatpush1.msra.mxu0 0.0
        %5733 = vmatprep.subr.mxu0 0.0
        %5734 = vmatpush1.msra.mxu0 0.0
        %5735 = vmatprep.subr.mxu0 0.0
        %5736 = vmatpush1.msra.mxu0 0.0
        %5737 = vmatprep.subr.mxu0 0.0
        %5738 = vmatpush1.msra.mxu0 0.0
        %5739 = vmatprep.subr.mxu0 0.0
        %5740 = vmatpush1.msra.mxu0 0.0
        %5741 = vmatprep.mubr.f32.mxu0 0.0
        %v5742 = vand.u32 %v5659, 4294901760
        %v5743 = vsub.f32 %v5659, %v5742
        %v5744 = vand.u32 %v5743, 4294901760
        %v5745 = vsub.f32 %v5743, %v5744
        %v5746 = vand.u32 %v5745, 4294901760
        %5747 = vmatmul.mubr.f32.gmra.mrb[0].mxu0 %v5746
        %v5748 = vpop.f32.mrb[0].mxu0
        %v5749 = vadd.f32 0.0, %v5748
        %v5750 = vpop.f32.mrb[0].mxu0
        %5751 = vmatprep.mubr.f32.mxu0 0.0
        %v5752 = vand.u32 %v5660, 4294901760
        %v5753 = vsub.f32 %v5660, %v5752
        %v5754 = vand.u32 %v5753, 4294901760
        %v5755 = vsub.f32 %v5753, %v5754
        %v5756 = vand.u32 %v5755, 4294901760
        %5757 = vmatmul.mubr.f32.gmra.mrb[0].mxu0 %v5756
        %v5758 = vpop.f32.mrb[0].mxu0
        %v5759 = vadd.f32 0.0, %v5758
        %v5760 = vpop.f32.mrb[0].mxu0
        %5761 = vdwg.mxu0
        %5762 = vmatprep.subr.mxu0 0.0
        %v5763 = vand.u32 %v254, 4294901760
        %v5764 = vsub.f32 %v254, %v5763
        %v5765 = vand.u32 %v5764, 4294901760
        %v5766 = vsub.f32 %v5764, %v5765
        %v5767 = vand.u32 %v5766, 4294901760
        %5768 = vmatpush1.msra.mxu0 %v5767
        %5769 = vmatprep.subr.mxu0 0.0
        %v5770 = vand.u32 %v255, 4294901760
        %v5771 = vsub.f32 %v255, %v5770
        %v5772 = vand.u32 %v5771, 4294901760
        %v5773 = vsub.f32 %v5771, %v5772
        %v5774 = vand.u32 %v5773, 4294901760
        %5775 = vmatpush1.msra.mxu0 %v5774
        %5776 = vmatprep.subr.mxu0 0.0
        %v5777 = vand.u32 %v256, 4294901760
        %v5778 = vsub.f32 %v256, %v5777
        %v5779 = vand.u32 %v5778, 4294901760
        %v5780 = vsub.f32 %v5778, %v5779
        %v5781 = vand.u32 %v5780, 4294901760
        %5782 = vmatpush1.msra.mxu0 %v5781
        %5783 = vmatprep.subr.mxu0 0.0
        %v5784 = vand.u32 %v257, 4294901760
        %v5785 = vsub.f32 %v257, %v5784
        %v5786 = vand.u32 %v5785, 4294901760
        %v5787 = vsub.f32 %v5785, %v5786
        %v5788 = vand.u32 %v5787, 4294901760
        %5789 = vmatpush1.msra.mxu0 %v5788
        %5790 = vmatprep.subr.mxu0 0.0
        %v5791 = vand.u32 %v258, 4294901760
        %v5792 = vsub.f32 %v258, %v5791
        %v5793 = vand.u32 %v5792, 4294901760
        %v5794 = vsub.f32 %v5792, %v5793
        %v5795 = vand.u32 %v5794, 4294901760
        %5796 = vmatpush1.msra.mxu0 %v5795
        %5797 = vmatprep.subr.mxu0 0.0
        %v5798 = vand.u32 %v259, 4294901760
        %v5799 = vsub.f32 %v259, %v5798
        %v5800 = vand.u32 %v5799, 4294901760
        %v5801 = vsub.f32 %v5799, %v5800
        %v5802 = vand.u32 %v5801, 4294901760
        %5803 = vmatpush1.msra.mxu0 %v5802
        %5804 = vmatprep.subr.mxu0 0.0
        %v5805 = vand.u32 %v260, 4294901760
        %v5806 = vsub.f32 %v260, %v5805
        %v5807 = vand.u32 %v5806, 4294901760
        %v5808 = vsub.f32 %v5806, %v5807
        %v5809 = vand.u32 %v5808, 4294901760
        %5810 = vmatpush1.msra.mxu0 %v5809
        %5811 = vmatprep.subr.mxu0 0.0
        %v5812 = vand.u32 %v261, 4294901760
        %v5813 = vsub.f32 %v261, %v5812
        %v5814 = vand.u32 %v5813, 4294901760
        %v5815 = vsub.f32 %v5813, %v5814
        %v5816 = vand.u32 %v5815, 4294901760
        %5817 = vmatpush1.msra.mxu0 %v5816
        %5818 = vmatprep.subr.mxu0 0.0
        %v5819 = vand.u32 %v262, 4294901760
        %v5820 = vsub.f32 %v262, %v5819
        %v5821 = vand.u32 %v5820, 4294901760
        %v5822 = vsub.f32 %v5820, %v5821
        %v5823 = vand.u32 %v5822, 4294901760
        %5824 = vmatpush1.msra.mxu0 %v5823
        %5825 = vmatprep.subr.mxu0 0.0
        %v5826 = vand.u32 %v263, 4294901760
        %v5827 = vsub.f32 %v263, %v5826
        %v5828 = vand.u32 %v5827, 4294901760
        %v5829 = vsub.f32 %v5827, %v5828
        %v5830 = vand.u32 %v5829, 4294901760
        %5831 = vmatpush1.msra.mxu0 %v5830
        %5832 = vmatprep.subr.mxu0 0.0
        %v5833 = vand.u32 %v264, 4294901760
        %v5834 = vsub.f32 %v264, %v5833
        %v5835 = vand.u32 %v5834, 4294901760
        %v5836 = vsub.f32 %v5834, %v5835
        %v5837 = vand.u32 %v5836, 4294901760
        %5838 = vmatpush1.msra.mxu0 %v5837
        %5839 = vmatprep.subr.mxu0 0.0
        %v5840 = vand.u32 %v265, 4294901760
        %v5841 = vsub.f32 %v265, %v5840
        %v5842 = vand.u32 %v5841, 4294901760
        %v5843 = vsub.f32 %v5841, %v5842
        %v5844 = vand.u32 %v5843, 4294901760
        %5845 = vmatpush1.msra.mxu0 %v5844
        %5846 = vmatprep.subr.mxu0 0.0
        %v5847 = vand.u32 %v266, 4294901760
        %v5848 = vsub.f32 %v266, %v5847
        %v5849 = vand.u32 %v5848, 4294901760
        %v5850 = vsub.f32 %v5848, %v5849
        %v5851 = vand.u32 %v5850, 4294901760
        %5852 = vmatpush1.msra.mxu0 %v5851
        %5853 = vmatprep.subr.mxu0 0.0
        %v5854 = vand.u32 %v267, 4294901760
        %v5855 = vsub.f32 %v267, %v5854
        %v5856 = vand.u32 %v5855, 4294901760
        %v5857 = vsub.f32 %v5855, %v5856
        %v5858 = vand.u32 %v5857, 4294901760
        %5859 = vmatpush1.msra.mxu0 %v5858
        %5860 = vmatprep.subr.mxu0 0.0
        %v5861 = vand.u32 %v268, 4294901760
        %v5862 = vsub.f32 %v268, %v5861
        %v5863 = vand.u32 %v5862, 4294901760
        %v5864 = vsub.f32 %v5862, %v5863
        %v5865 = vand.u32 %v5864, 4294901760
        %5866 = vmatpush1.msra.mxu0 %v5865
        %5867 = vmatprep.subr.mxu0 0.0
        %v5868 = vand.u32 %v269, 4294901760
        %v5869 = vsub.f32 %v269, %v5868
        %v5870 = vand.u32 %v5869, 4294901760
        %v5871 = vsub.f32 %v5869, %v5870
        %v5872 = vand.u32 %v5871, 4294901760
        %5873 = vmatpush1.msra.mxu0 %v5872
        %5874 = vmatprep.subr.mxu0 0.0
        %5875 = vmatpush1.msra.mxu0 0.0
        %5876 = vmatprep.subr.mxu0 0.0
        %5877 = vmatpush1.msra.mxu0 0.0
        %5878 = vmatprep.subr.mxu0 0.0
        %5879 = vmatpush1.msra.mxu0 0.0
        %5880 = vmatprep.subr.mxu0 0.0
        %5881 = vmatpush1.msra.mxu0 0.0
        %5882 = vmatprep.subr.mxu0 0.0
        %5883 = vmatpush1.msra.mxu0 0.0
        %5884 = vmatprep.subr.mxu0 0.0
        %5885 = vmatpush1.msra.mxu0 0.0
        %5886 = vmatprep.subr.mxu0 0.0
        %5887 = vmatpush1.msra.mxu0 0.0
        %5888 = vmatprep.subr.mxu0 0.0
        %5889 = vmatpush1.msra.mxu0 0.0
        %5890 = vmatprep.subr.mxu0 0.0
        %5891 = vmatpush1.msra.mxu0 0.0
        %5892 = vmatprep.subr.mxu0 0.0
        %5893 = vmatpush1.msra.mxu0 0.0
        %5894 = vmatprep.subr.mxu0 0.0
        %5895 = vmatpush1.msra.mxu0 0.0
        %5896 = vmatprep.subr.mxu0 0.0
        %5897 = vmatpush1.msra.mxu0 0.0
        %5898 = vmatprep.subr.mxu0 0.0
        %5899 = vmatpush1.msra.mxu0 0.0
        %5900 = vmatprep.subr.mxu0 0.0
        %5901 = vmatpush1.msra.mxu0 0.0
        %5902 = vmatprep.subr.mxu0 0.0
        %5903 = vmatpush1.msra.mxu0 0.0
        %5904 = vmatprep.subr.mxu0 0.0
        %5905 = vmatpush1.msra.mxu0 0.0
        %5906 = vmatprep.mubr.f32.mxu0 0.0
        %v5907 = vand.u32 %v5659, 4294901760
        %5908 = vmatmul.mubr.f32.gmra.mrb[0].mxu0 %v5907
        %v5909 = vpop.f32.mrb[0].mxu0
        %v5910 = vadd.f32 %v5749, %v5909
        %v5911 = vpop.f32.mrb[0].mxu0
        %5912 = vmatprep.mubr.f32.mxu0 0.0
        %v5913 = vand.u32 %v5660, 4294901760
        %5914 = vmatmul.mubr.f32.gmra.mrb[0].mxu0 %v5913
        %v5915 = vpop.f32.mrb[0].mxu0
        %v5916 = vadd.f32 %v5759, %v5915
        %v5917 = vpop.f32.mrb[0].mxu0
        %5918 = vdwg.mxu0
        %5919 = vmatprep.subr.mxu0 0.0
        %v5920 = vand.u32 %v254, 4294901760
        %v5921 = vsub.f32 %v254, %v5920
        %5922 = vmatpush1.msra.mxu0 %v5921
        %5923 = vmatprep.subr.mxu0 0.0
        %v5924 = vand.u32 %v255, 4294901760
        %v5925 = vsub.f32 %v255, %v5924
        %5926 = vmatpush1.msra.mxu0 %v5925
        %5927 = vmatprep.subr.mxu0 0.0
        %v5928 = vand.u32 %v256, 4294901760
        %v5929 = vsub.f32 %v256, %v5928
        %5930 = vmatpush1.msra.mxu0 %v5929
        %5931 = vmatprep.subr.mxu0 0.0
        %v5932 = vand.u32 %v257, 4294901760
        %v5933 = vsub.f32 %v257, %v5932
        %5934 = vmatpush1.msra.mxu0 %v5933
        %5935 = vmatprep.subr.mxu0 0.0
        %v5936 = vand.u32 %v258, 4294901760
        %v5937 = vsub.f32 %v258, %v5936
        %5938 = vmatpush1.msra.mxu0 %v5937
        %5939 = vmatprep.subr.mxu0 0.0
        %v5940 = vand.u32 %v259, 4294901760
        %v5941 = vsub.f32 %v259, %v5940
        %5942 = vmatpush1.msra.mxu0 %v5941
        %5943 = vmatprep.subr.mxu0 0.0
        %v5944 = vand.u32 %v260, 4294901760
        %v5945 = vsub.f32 %v260, %v5944
        %5946 = vmatpush1.msra.mxu0 %v5945
        %5947 = vmatprep.subr.mxu0 0.0
        %v5948 = vand.u32 %v261, 4294901760
        %v5949 = vsub.f32 %v261, %v5948
        %5950 = vmatpush1.msra.mxu0 %v5949
        %5951 = vmatprep.subr.mxu0 0.0
        %v5952 = vand.u32 %v262, 4294901760
        %v5953 = vsub.f32 %v262, %v5952
        %5954 = vmatpush1.msra.mxu0 %v5953
        %5955 = vmatprep.subr.mxu0 0.0
        %v5956 = vand.u32 %v263, 4294901760
        %v5957 = vsub.f32 %v263, %v5956
        %5958 = vmatpush1.msra.mxu0 %v5957
        %5959 = vmatprep.subr.mxu0 0.0
        %v5960 = vand.u32 %v264, 4294901760
        %v5961 = vsub.f32 %v264, %v5960
        %5962 = vmatpush1.msra.mxu0 %v5961
        %5963 = vmatprep.subr.mxu0 0.0
        %v5964 = vand.u32 %v265, 4294901760
        %v5965 = vsub.f32 %v265, %v5964
        %5966 = vmatpush1.msra.mxu0 %v5965
        %5967 = vmatprep.subr.mxu0 0.0
        %v5968 = vand.u32 %v266, 4294901760
        %v5969 = vsub.f32 %v266, %v5968
        %5970 = vmatpush1.msra.mxu0 %v5969
        %5971 = vmatprep.subr.mxu0 0.0
        %v5972 = vand.u32 %v267, 4294901760
        %v5973 = vsub.f32 %v267, %v5972
        %5974 = vmatpush1.msra.mxu0 %v5973
        %5975 = vmatprep.subr.mxu0 0.0
        %v5976 = vand.u32 %v268, 4294901760
        %v5977 = vsub.f32 %v268, %v5976
        %5978 = vmatpush1.msra.mxu0 %v5977
        %5979 = vmatprep.subr.mxu0 0.0
        %v5980 = vand.u32 %v269, 4294901760
        %v5981 = vsub.f32 %v269, %v5980
        %5982 = vmatpush1.msra.mxu0 %v5981
        %5983 = vmatprep.subr.mxu0 0.0
        %5984 = vmatpush1.msra.mxu0 0.0
        %5985 = vmatprep.subr.mxu0 0.0
        %5986 = vmatpush1.msra.mxu0 0.0
        %5987 = vmatprep.subr.mxu0 0.0
        %5988 = vmatpush1.msra.mxu0 0.0
        %5989 = vmatprep.subr.mxu0 0.0
        %5990 = vmatpush1.msra.mxu0 0.0
        %5991 = vmatprep.subr.mxu0 0.0
        %5992 = vmatpush1.msra.mxu0 0.0
        %5993 = vmatprep.subr.mxu0 0.0
        %5994 = vmatpush1.msra.mxu0 0.0
        %5995 = vmatprep.subr.mxu0 0.0
        %5996 = vmatpush1.msra.mxu0 0.0
        %5997 = vmatprep.subr.mxu0 0.0
        %5998 = vmatpush1.msra.mxu0 0.0
        %5999 = vmatprep.subr.mxu0 0.0
        %6000 = vmatpush1.msra.mxu0 0.0
        %6001 = vmatprep.subr.mxu0 0.0
        %6002 = vmatpush1.msra.mxu0 0.0
        %6003 = vmatprep.subr.mxu0 0.0
        %6004 = vmatpush1.msra.mxu0 0.0
        %6005 = vmatprep.subr.mxu0 0.0
        %6006 = vmatpush1.msra.mxu0 0.0
        %6007 = vmatprep.subr.mxu0 0.0
        %6008 = vmatpush1.msra.mxu0 0.0
        %6009 = vmatprep.subr.mxu0 0.0
        %6010 = vmatpush1.msra.mxu0 0.0
        %6011 = vmatprep.subr.mxu0 0.0
        %6012 = vmatpush1.msra.mxu0 0.0
        %6013 = vmatprep.subr.mxu0 0.0
        %6014 = vmatpush1.msra.mxu0 0.0
        %6015 = vmatprep.mubr.f32.mxu0 0.0
        %v6016 = vand.u32 %v5659, 4294901760
        %v6017 = vsub.f32 %v5659, %v6016
        %6018 = vmatmul.mubr.f32.gmra.mrb[0].mxu0 %v6017
        %v6019 = vpop.f32.mrb[0].mxu0
        %v6020 = vadd.f32 %v5910, %v6019
        %v6021 = vpop.f32.mrb[0].mxu0
        %6022 = vmatprep.mubr.f32.mxu0 0.0
        %v6023 = vand.u32 %v5660, 4294901760
        %v6024 = vsub.f32 %v5660, %v6023
        %6025 = vmatmul.mubr.f32.gmra.mrb[0].mxu0 %v6024
        %v6026 = vpop.f32.mrb[0].mxu0
        %v6027 = vadd.f32 %v5916, %v6026
        %v6028 = vpop.f32.mrb[0].mxu0
        %6029 = vdwg.mxu0
        %6030 = vmatprep.subr.mxu0 0.0
        %v6031 = vand.u32 %v254, 4294901760
        %6032 = vmatpush1.msra.mxu0 %v6031
        %6033 = vmatprep.subr.mxu0 0.0
        %v6034 = vand.u32 %v255, 4294901760
        %6035 = vmatpush1.msra.mxu0 %v6034
        %6036 = vmatprep.subr.mxu0 0.0
        %v6037 = vand.u32 %v256, 4294901760
        %6038 = vmatpush1.msra.mxu0 %v6037
        %6039 = vmatprep.subr.mxu0 0.0
        %v6040 = vand.u32 %v257, 4294901760
        %6041 = vmatpush1.msra.mxu0 %v6040
        %6042 = vmatprep.subr.mxu0 0.0
        %v6043 = vand.u32 %v258, 4294901760
        %6044 = vmatpush1.msra.mxu0 %v6043
        %6045 = vmatprep.subr.mxu0 0.0
        %v6046 = vand.u32 %v259, 4294901760
        %6047 = vmatpush1.msra.mxu0 %v6046
        %6048 = vmatprep.subr.mxu0 0.0
        %v6049 = vand.u32 %v260, 4294901760
        %6050 = vmatpush1.msra.mxu0 %v6049
        %6051 = vmatprep.subr.mxu0 0.0
        %v6052 = vand.u32 %v261, 4294901760
        %6053 = vmatpush1.msra.mxu0 %v6052
        %6054 = vmatprep.subr.mxu0 0.0
        %v6055 = vand.u32 %v262, 4294901760
        %6056 = vmatpush1.msra.mxu0 %v6055
        %6057 = vmatprep.subr.mxu0 0.0
        %v6058 = vand.u32 %v263, 4294901760
        %6059 = vmatpush1.msra.mxu0 %v6058
        %6060 = vmatprep.subr.mxu0 0.0
        %v6061 = vand.u32 %v264, 4294901760
        %6062 = vmatpush1.msra.mxu0 %v6061
        %6063 = vmatprep.subr.mxu0 0.0
        %v6064 = vand.u32 %v265, 4294901760
        %6065 = vmatpush1.msra.mxu0 %v6064
        %6066 = vmatprep.subr.mxu0 0.0
        %v6067 = vand.u32 %v266, 4294901760
        %6068 = vmatpush1.msra.mxu0 %v6067
        %6069 = vmatprep.subr.mxu0 0.0
        %v6070 = vand.u32 %v267, 4294901760
        %6071 = vmatpush1.msra.mxu0 %v6070
        %6072 = vmatprep.subr.mxu0 0.0
        %v6073 = vand.u32 %v268, 4294901760
        %6074 = vmatpush1.msra.mxu0 %v6073
        %6075 = vmatprep.subr.mxu0 0.0
        %v6076 = vand.u32 %v269, 4294901760
        %6077 = vmatpush1.msra.mxu0 %v6076
        %6078 = vmatprep.subr.mxu0 0.0
        %6079 = vmatpush1.msra.mxu0 0.0
        %6080 = vmatprep.subr.mxu0 0.0
        %6081 = vmatpush1.msra.mxu0 0.0
        %6082 = vmatprep.subr.mxu0 0.0
        %6083 = vmatpush1.msra.mxu0 0.0
        %6084 = vmatprep.subr.mxu0 0.0
        %6085 = vmatpush1.msra.mxu0 0.0
        %6086 = vmatprep.subr.mxu0 0.0
        %6087 = vmatpush1.msra.mxu0 0.0
        %6088 = vmatprep.subr.mxu0 0.0
        %6089 = vmatpush1.msra.mxu0 0.0
        %6090 = vmatprep.subr.mxu0 0.0
        %6091 = vmatpush1.msra.mxu0 0.0
        %6092 = vmatprep.subr.mxu0 0.0
        %6093 = vmatpush1.msra.mxu0 0.0
        %6094 = vmatprep.subr.mxu0 0.0
        %6095 = vmatpush1.msra.mxu0 0.0
        %6096 = vmatprep.subr.mxu0 0.0
        %6097 = vmatpush1.msra.mxu0 0.0
        %6098 = vmatprep.subr.mxu0 0.0
        %6099 = vmatpush1.msra.mxu0 0.0
        %6100 = vmatprep.subr.mxu0 0.0
        %6101 = vmatpush1.msra.mxu0 0.0
        %6102 = vmatprep.subr.mxu0 0.0
        %6103 = vmatpush1.msra.mxu0 0.0
        %6104 = vmatprep.subr.mxu0 0.0
        %6105 = vmatpush1.msra.mxu0 0.0
        %6106 = vmatprep.subr.mxu0 0.0
        %6107 = vmatpush1.msra.mxu0 0.0
        %6108 = vmatprep.subr.mxu0 0.0
        %6109 = vmatpush1.msra.mxu0 0.0
        %6110 = vmatprep.mubr.f32.mxu0 0.0
        %v6111 = vand.u32 %v5659, 4294901760
        %v6112 = vsub.f32 %v5659, %v6111
        %v6113 = vand.u32 %v6112, 4294901760
        %6114 = vmatmul.mubr.f32.gmra.mrb[0].mxu0 %v6113
        %v6115 = vpop.f32.mrb[0].mxu0
        %v6116 = vadd.f32 %v6020, %v6115
        %v6117 = vpop.f32.mrb[0].mxu0
        %6118 = vmatprep.mubr.f32.mxu0 0.0
        %v6119 = vand.u32 %v5660, 4294901760
        %v6120 = vsub.f32 %v5660, %v6119
        %v6121 = vand.u32 %v6120, 4294901760
        %6122 = vmatmul.mubr.f32.gmra.mrb[0].mxu0 %v6121
        %v6123 = vpop.f32.mrb[0].mxu0
        %v6124 = vadd.f32 %v6027, %v6123
        %v6125 = vpop.f32.mrb[0].mxu0
        %6126 = vdwg.mxu0
        %6127 = vmatprep.subr.mxu0 0.0
        %v6128 = vand.u32 %v254, 4294901760
        %v6129 = vsub.f32 %v254, %v6128
        %v6130 = vand.u32 %v6129, 4294901760
        %6131 = vmatpush1.msra.mxu0 %v6130
        %6132 = vmatprep.subr.mxu0 0.0
        %v6133 = vand.u32 %v255, 4294901760
        %v6134 = vsub.f32 %v255, %v6133
        %v6135 = vand.u32 %v6134, 4294901760
        %6136 = vmatpush1.msra.mxu0 %v6135
        %6137 = vmatprep.subr.mxu0 0.0
        %v6138 = vand.u32 %v256, 4294901760
        %v6139 = vsub.f32 %v256, %v6138
        %v6140 = vand.u32 %v6139, 4294901760
        %6141 = vmatpush1.msra.mxu0 %v6140
        %6142 = vmatprep.subr.mxu0 0.0
        %v6143 = vand.u32 %v257, 4294901760
        %v6144 = vsub.f32 %v257, %v6143
        %v6145 = vand.u32 %v6144, 4294901760
        %6146 = vmatpush1.msra.mxu0 %v6145
        %6147 = vmatprep.subr.mxu0 0.0
        %v6148 = vand.u32 %v258, 4294901760
        %v6149 = vsub.f32 %v258, %v6148
        %v6150 = vand.u32 %v6149, 4294901760
        %6151 = vmatpush1.msra.mxu0 %v6150
        %6152 = vmatprep.subr.mxu0 0.0
        %v6153 = vand.u32 %v259, 4294901760
        %v6154 = vsub.f32 %v259, %v6153
        %v6155 = vand.u32 %v6154, 4294901760
        %6156 = vmatpush1.msra.mxu0 %v6155
        %6157 = vmatprep.subr.mxu0 0.0
        %v6158 = vand.u32 %v260, 4294901760
        %v6159 = vsub.f32 %v260, %v6158
        %v6160 = vand.u32 %v6159, 4294901760
        %6161 = vmatpush1.msra.mxu0 %v6160
        %6162 = vmatprep.subr.mxu0 0.0
        %v6163 = vand.u32 %v261, 4294901760
        %v6164 = vsub.f32 %v261, %v6163
        %v6165 = vand.u32 %v6164, 4294901760
        %6166 = vmatpush1.msra.mxu0 %v6165
        %6167 = vmatprep.subr.mxu0 0.0
        %v6168 = vand.u32 %v262, 4294901760
        %v6169 = vsub.f32 %v262, %v6168
        %v6170 = vand.u32 %v6169, 4294901760
        %6171 = vmatpush1.msra.mxu0 %v6170
        %6172 = vmatprep.subr.mxu0 0.0
        %v6173 = vand.u32 %v263, 4294901760
        %v6174 = vsub.f32 %v263, %v6173
        %v6175 = vand.u32 %v6174, 4294901760
        %6176 = vmatpush1.msra.mxu0 %v6175
        %6177 = vmatprep.subr.mxu0 0.0
        %v6178 = vand.u32 %v264, 4294901760
        %v6179 = vsub.f32 %v264, %v6178
        %v6180 = vand.u32 %v6179, 4294901760
        %6181 = vmatpush1.msra.mxu0 %v6180
        %6182 = vmatprep.subr.mxu0 0.0
        %v6183 = vand.u32 %v265, 4294901760
        %v6184 = vsub.f32 %v265, %v6183
        %v6185 = vand.u32 %v6184, 4294901760
        %6186 = vmatpush1.msra.mxu0 %v6185
        %6187 = vmatprep.subr.mxu0 0.0
        %v6188 = vand.u32 %v266, 4294901760
        %v6189 = vsub.f32 %v266, %v6188
        %v6190 = vand.u32 %v6189, 4294901760
        %6191 = vmatpush1.msra.mxu0 %v6190
        %6192 = vmatprep.subr.mxu0 0.0
        %v6193 = vand.u32 %v267, 4294901760
        %v6194 = vsub.f32 %v267, %v6193
        %v6195 = vand.u32 %v6194, 4294901760
        %6196 = vmatpush1.msra.mxu0 %v6195
        %6197 = vmatprep.subr.mxu0 0.0
        %v6198 = vand.u32 %v268, 4294901760
        %v6199 = vsub.f32 %v268, %v6198
        %v6200 = vand.u32 %v6199, 4294901760
        %6201 = vmatpush1.msra.mxu0 %v6200
        %6202 = vmatprep.subr.mxu0 0.0
        %v6203 = vand.u32 %v269, 4294901760
        %v6204 = vsub.f32 %v269, %v6203
        %v6205 = vand.u32 %v6204, 4294901760
        %6206 = vmatpush1.msra.mxu0 %v6205
        %6207 = vmatprep.subr.mxu0 0.0
        %6208 = vmatpush1.msra.mxu0 0.0
        %6209 = vmatprep.subr.mxu0 0.0
        %6210 = vmatpush1.msra.mxu0 0.0
        %6211 = vmatprep.subr.mxu0 0.0
        %6212 = vmatpush1.msra.mxu0 0.0
        %6213 = vmatprep.subr.mxu0 0.0
        %6214 = vmatpush1.msra.mxu0 0.0
        %6215 = vmatprep.subr.mxu0 0.0
        %6216 = vmatpush1.msra.mxu0 0.0
        %6217 = vmatprep.subr.mxu0 0.0
        %6218 = vmatpush1.msra.mxu0 0.0
        %6219 = vmatprep.subr.mxu0 0.0
        %6220 = vmatpush1.msra.mxu0 0.0
        %6221 = vmatprep.subr.mxu0 0.0
        %6222 = vmatpush1.msra.mxu0 0.0
        %6223 = vmatprep.subr.mxu0 0.0
        %6224 = vmatpush1.msra.mxu0 0.0
        %6225 = vmatprep.subr.mxu0 0.0
        %6226 = vmatpush1.msra.mxu0 0.0
        %6227 = vmatprep.subr.mxu0 0.0
        %6228 = vmatpush1.msra.mxu0 0.0
        %6229 = vmatprep.subr.mxu0 0.0
        %6230 = vmatpush1.msra.mxu0 0.0
        %6231 = vmatprep.subr.mxu0 0.0
        %6232 = vmatpush1.msra.mxu0 0.0
        %6233 = vmatprep.subr.mxu0 0.0
        %6234 = vmatpush1.msra.mxu0 0.0
        %6235 = vmatprep.subr.mxu0 0.0
        %6236 = vmatpush1.msra.mxu0 0.0
        %6237 = vmatprep.subr.mxu0 0.0
        %6238 = vmatpush1.msra.mxu0 0.0
        %6239 = vmatprep.mubr.f32.mxu0 0.0
        %v6240 = vand.u32 %v5659, 4294901760
        %6241 = vmatmul.mubr.f32.gmra.mrb[0].mxu0 %v6240
        %v6242 = vpop.f32.mrb[0].mxu0
        %v6243 = vadd.f32 %v6116, %v6242
        %v6244 = vpop.f32.mrb[0].mxu0
        %6245 = vmatprep.mubr.f32.mxu0 0.0
        %v6246 = vand.u32 %v5660, 4294901760
        %6247 = vmatmul.mubr.f32.gmra.mrb[0].mxu0 %v6246
        %v6248 = vpop.f32.mrb[0].mxu0
        %v6249 = vadd.f32 %v6124, %v6248
        %v6250 = vpop.f32.mrb[0].mxu0
        %6251 = vdwg.mxu0
        %6252 = vmatprep.subr.mxu0 0.0
        %v6253 = vand.u32 %v254, 4294901760
        %6254 = vmatpush1.msra.mxu0 %v6253
        %6255 = vmatprep.subr.mxu0 0.0
        %v6256 = vand.u32 %v255, 4294901760
        %6257 = vmatpush1.msra.mxu0 %v6256
        %6258 = vmatprep.subr.mxu0 0.0
        %v6259 = vand.u32 %v256, 4294901760
        %6260 = vmatpush1.msra.mxu0 %v6259
        %6261 = vmatprep.subr.mxu0 0.0
        %v6262 = vand.u32 %v257, 4294901760
        %6263 = vmatpush1.msra.mxu0 %v6262
        %6264 = vmatprep.subr.mxu0 0.0
        %v6265 = vand.u32 %v258, 4294901760
        %6266 = vmatpush1.msra.mxu0 %v6265
        %6267 = vmatprep.subr.mxu0 0.0
        %v6268 = vand.u32 %v259, 4294901760
        %6269 = vmatpush1.msra.mxu0 %v6268
        %6270 = vmatprep.subr.mxu0 0.0
        %v6271 = vand.u32 %v260, 4294901760
        %6272 = vmatpush1.msra.mxu0 %v6271
        %6273 = vmatprep.subr.mxu0 0.0
        %v6274 = vand.u32 %v261, 4294901760
        %6275 = vmatpush1.msra.mxu0 %v6274
        %6276 = vmatprep.subr.mxu0 0.0
        %v6277 = vand.u32 %v262, 4294901760
        %6278 = vmatpush1.msra.mxu0 %v6277
        %6279 = vmatprep.subr.mxu0 0.0
        %v6280 = vand.u32 %v263, 4294901760
        %6281 = vmatpush1.msra.mxu0 %v6280
        %6282 = vmatprep.subr.mxu0 0.0
        %v6283 = vand.u32 %v264, 4294901760
        %6284 = vmatpush1.msra.mxu0 %v6283
        %6285 = vmatprep.subr.mxu0 0.0
        %v6286 = vand.u32 %v265, 4294901760
        %6287 = vmatpush1.msra.mxu0 %v6286
        %6288 = vmatprep.subr.mxu0 0.0
        %v6289 = vand.u32 %v266, 4294901760
        %6290 = vmatpush1.msra.mxu0 %v6289
        %6291 = vmatprep.subr.mxu0 0.0
        %v6292 = vand.u32 %v267, 4294901760
        %6293 = vmatpush1.msra.mxu0 %v6292
        %6294 = vmatprep.subr.mxu0 0.0
        %v6295 = vand.u32 %v268, 4294901760
        %6296 = vmatpush1.msra.mxu0 %v6295
        %6297 = vmatprep.subr.mxu0 0.0
        %v6298 = vand.u32 %v269, 4294901760
        %6299 = vmatpush1.msra.mxu0 %v6298
        %6300 = vmatprep.subr.mxu0 0.0
        %6301 = vmatpush1.msra.mxu0 0.0
        %6302 = vmatprep.subr.mxu0 0.0
        %6303 = vmatpush1.msra.mxu0 0.0
        %6304 = vmatprep.subr.mxu0 0.0
        %6305 = vmatpush1.msra.mxu0 0.0
        %6306 = vmatprep.subr.mxu0 0.0
        %6307 = vmatpush1.msra.mxu0 0.0
        %6308 = vmatprep.subr.mxu0 0.0
        %6309 = vmatpush1.msra.mxu0 0.0
        %6310 = vmatprep.subr.mxu0 0.0
        %6311 = vmatpush1.msra.mxu0 0.0
        %6312 = vmatprep.subr.mxu0 0.0
        %6313 = vmatpush1.msra.mxu0 0.0
        %6314 = vmatprep.subr.mxu0 0.0
        %6315 = vmatpush1.msra.mxu0 0.0
        %6316 = vmatprep.subr.mxu0 0.0
        %6317 = vmatpush1.msra.mxu0 0.0
        %6318 = vmatprep.subr.mxu0 0.0
        %6319 = vmatpush1.msra.mxu0 0.0
        %6320 = vmatprep.subr.mxu0 0.0
        %6321 = vmatpush1.msra.mxu0 0.0
        %6322 = vmatprep.subr.mxu0 0.0
        %6323 = vmatpush1.msra.mxu0 0.0
        %6324 = vmatprep.subr.mxu0 0.0
        %6325 = vmatpush1.msra.mxu0 0.0
        %6326 = vmatprep.subr.mxu0 0.0
        %6327 = vmatpush1.msra.mxu0 0.0
        %6328 = vmatprep.subr.mxu0 0.0
        %6329 = vmatpush1.msra.mxu0 0.0
        %6330 = vmatprep.subr.mxu0 0.0
        %6331 = vmatpush1.msra.mxu0 0.0
        %6332 = vmatprep.mubr.f32.mxu0 0.0
        %v6333 = vand.u32 %v5659, 4294901760
        %6334 = vmatmul.mubr.f32.gmra.mrb[0].mxu0 %v6333
        %v6335 = vpop.f32.mrb[0].mxu0
        %v6336 = vadd.f32 %v6243, %v6335
        %v6337 = vpop.f32.mrb[0].mxu0
        %6338 = vmatprep.mubr.f32.mxu0 0.0
        %v6339 = vand.u32 %v5660, 4294901760
        %6340 = vmatmul.mubr.f32.gmra.mrb[0].mxu0 %v6339
        %v6341 = vpop.f32.mrb[0].mxu0
        %v6342 = vadd.f32 %v6249, %v6341
        %v6343 = vpop.f32.mrb[0].mxu0
        %6344 = vdwg.mxu0
        %s6345 = scalar_lea.vmem %s242, 112 [#allocation7]
        %6346 = vst [vmem:[%s6345] sm:$0xff] %v6336
        %6347 = vst [vmem:[%s6345 + $0x8] sm:$0xff] %v6342
        %s6348 = sand.u32 %s133, 1
        %s6349 = scalar_lea.sflag [#allocation3], %s6348
        %s6350 = sand.u32 %s133, 1
        %s6351 = smul.addr %s6350, 128
        %s6352 = scalar_lea.vmem [#allocation7], %s6351
        // Predicated region
        $region45: #{gcn_forward.1} parent=35 // pred_check
          %p6353 = pneg %p143
        $region46: #{gcn_forward.1} parent=35 // pred_check_branch
          %6355 = sbr.rel (%p6353) target = $region48
        $region47: #{gcn_forward.1} parent=35 // pred_region
          %s6356 = smul.u32 2, %s25
          %s6358 = ssub.s32 2048, 2048
          %6359 = vsyncadd %s6349, %s6358
          %s6360 = smul.addr %s24, 16
          %s6361 = sadd.s32 %s6356, %s6360
          %s6362 = smul.addr %s6361, 128
          %s6363 = scalar_lea.hbm %s4, %s6362
          %s6364 = sshll.u32 %s6352, 4
          %s6365 = int_to_ptr.vmem [resolvable:$true] %s6364
          %6370 = dma.vmem_to_hbm [thread:$0]  %s6365, 2048, %s6363, %s6349, 128, 128, 8
        $region48: #{gcn_forward.1} parent=35 // pred_fallthru
          _
      $region36: #{gcn_forward.1} parent=5 // pred_fallthru
        _
      %p6371 = scmp.le.s32.totalorder 2, %s15
      // Predicated region
      $region49: #{gcn_forward.1} parent=5 // pred_check
        %p6372 = pneg %p6371
      $region50: #{gcn_forward.1} parent=5 // pred_check_branch
        %6374 = sbr.rel (%p6372) target = $region52
      $region51: #{gcn_forward.1} parent=5 // pred_region
        %s6375 = ssub.s32 %s15, 2
        // Predicated region
        $region53: #{gcn_forward.1} parent=51 // pred_check
          %p6376 = pneg %p149
        $region54: #{gcn_forward.1} parent=51 // pred_check_branch
          %6378 = sbr.rel (%p6376) target = $region56
        $region55: #{gcn_forward.1} parent=51 // pred_region
          %s6379 = sand.u32 %s134, 1
          %s6380 = scalar_lea.sflag [#allocation3], %s6379
          %s6381 = sand.u32 %s134, 1
          %s6382 = smul.addr %s6381, 128
          %s6383 = scalar_lea.vmem [#allocation7], %s6382
          %6384 = dma.done %s6380, 2048
        $region56: #{gcn_forward.1} parent=51 // pred_fallthru
          _
      $region52: #{gcn_forward.1} parent=5 // pred_fallthru
        _
    $region6: #{gcn_forward.1} parent=1 // loop_footer
      %s19 = sadd.s32 1, %s15
    $region7: #{gcn_forward.1} parent=1 // loop_footer_branch
      %14 = sbr.rel target = $region3
    $region8: #{gcn_forward.1} parent=1 // loop_exit
      _
    %6385 = vsyncpa [#allocation3], 1
    %s6386 = scalar_lea.sflag [#allocation3], 1
    %6387 = vsyncpa %s6386, 1
    %6388 = vsyncpa [#allocation4], 1
    %s6389 = scalar_lea.sflag [#allocation4], 1
    %6390 = vsyncpa %s6389, 1
    %6391 = vsyncpa [#allocation6], 1

</llo_original>
